<compile_context>
chip_gen: v6e
topology: v6e:2x2x1
jax: 0.10.0
libtpu: 0.0.40
codegen_flags: <defaults>
</compile_context>

<pallas_src>
import functools

import jax
import jax.numpy as jnp
from jax.experimental import pallas as pl
from jax.experimental.pallas import tpu as pltpu


# -----------------------------------------------------------------------------
# Pallas kernel: fused Head conv stack
#   3 x [conv3x3(stride=1, pad=1, bias) + PReLU(num_parameters=Cout)]
# -----------------------------------------------------------------------------
def _head_conv_kernel(x_ref, w1_ref, b1_ref, a1_ref, w2_ref, b2_ref, a2_ref,
                      w3_ref, b3_ref, a3_ref, o_ref, padx_ref, padh_ref):
    # x_ref : (1, H, W, Cin)        un-padded NHWC input tile (one batch element)
    # w*    : (9*Cin_l, Cout_l)     im2col-flattened conv weights, bf16
    # b*,a* : (1, Cout_l)           bias / PReLU per-channel slope, f32
    # o_ref : (1, H*W, Cout3)       2D output slab (reshaped to NHWC outside)
    # padx  : (1, H+2, W+2, Cin)    VMEM scratch (zero border), layer 1
    # padh  : (1, H+2, W+2, Chid)   VMEM scratch, reused for layers 2 and 3
    H = x_ref.shape[1]
    W = x_ref.shape[2]

    def conv3x3_prelu(pad_ref, w_ref, b_ref, a_ref):
        C = pad_ref.shape[3]
        # Hoist the 3 sublane (kx) shifts once, reuse across ky (the ky slice
        # is a cheap leading-dim slice), then ONE im2col matmul instead of 9
        # skinny dots.  Columns go bf16 before the lane concat (half traffic).
        xs = [pad_ref[0, :, kx:kx + W, :] for kx in range(3)]       # (H+2, W, C)
        cols = []
        for ky in range(3):
            for kx in range(3):
                cols.append(
                    xs[kx][ky:ky + H].reshape(H * W, C).astype(jnp.bfloat16))
        pmat = jnp.concatenate(cols, axis=-1)                        # (H*W, 9*C)
        y = jnp.dot(pmat, w_ref[...], preferred_element_type=jnp.float32)
        y = y + b_ref[...]                                           # bias (f32)
        return jnp.where(y > 0, y, a_ref[...] * y)                   # PReLU (f32)

    # ---- layer 1: zero-pad the input inside VMEM (no padded HBM copy) -------
    padx_ref[...] = jnp.zeros_like(padx_ref)
    padx_ref[0, 1:H + 1, 1:W + 1, :] = x_ref[0]
    h1 = conv3x3_prelu(padx_ref, w1_ref, b1_ref, a1_ref)             # (H*W, C1)

    # ---- layer 2: intermediate never leaves VMEM -----------------------------
    padh_ref[...] = jnp.zeros_like(padh_ref)
    padh_ref[0, 1:H + 1, 1:W + 1, :] = h1.reshape(H, W, h1.shape[1])
    h2 = conv3x3_prelu(padh_ref, w2_ref, b2_ref, a2_ref)             # (H*W, C2)

    # ---- layer 3: reuse padh (border still zero, interior overwritten) ------
    padh_ref[0, 1:H + 1, 1:W + 1, :] = h2.reshape(H, W, h2.shape[1])
    h3 = conv3x3_prelu(padh_ref, w3_ref, b3_ref, a3_ref)             # (H*W, C3)

    o_ref[0] = h3.astype(o_ref.dtype)


def head_conv_fused(x_nhwc, p):
    """x: (B, H, W, Cin) f32  ->  (B, H, W, 4+fc) f32.  One pallas_call per Head."""
    B, H, W, Cin = x_nhwc.shape
    K1, C1 = p["w1"].shape
    K2, C2 = p["w2"].shape
    K3, C3 = p["w3"].shape
    assert K1 == 9 * Cin and K2 == 9 * C1 and K3 == 9 * C2 and C1 == C2

    rep2 = lambda b: (0, 0)   # weights / bias / slope replicated across the grid
    out2d = pl.pallas_call(
        _head_conv_kernel,
        out_shape=jax.ShapeDtypeStruct((B, H * W, C3), jnp.float32),
        grid=(B,),
        in_specs=[
            pl.BlockSpec((1, H, W, Cin), lambda b: (b, 0, 0, 0)),
            pl.BlockSpec((K1, C1), rep2),
            pl.BlockSpec((1, C1), rep2),
            pl.BlockSpec((1, C1), rep2),
            pl.BlockSpec((K2, C2), rep2),
            pl.BlockSpec((1, C2), rep2),
            pl.BlockSpec((1, C2), rep2),
            pl.BlockSpec((K3, C3), rep2),
            pl.BlockSpec((1, C3), rep2),
            pl.BlockSpec((1, C3), rep2),
        ],
        out_specs=pl.BlockSpec((1, H * W, C3), lambda b: (b, 0, 0)),
        scratch_shapes=[
            pltpu.VMEM((1, H + 2, W + 2, Cin), jnp.float32),
            pltpu.VMEM((1, H + 2, W + 2, C1), jnp.float32),
        ],
        compiler_params=pltpu.CompilerParams(
            dimension_semantics=("parallel",)),
    )(x_nhwc, p["w1"], p["b1"], p["a1"], p["w2"], p["b2"], p["a2"],
      p["w3"], p["b3"], p["a3"])
    # TODO(synk): at real (non-16x16) resolutions add a row-tile grid axis with
    # a 2-row halo so blocks fit v7x's 64 MiB VMEM and expose more parallel steps.
    return out2d.reshape(B, H, W, C3)


# -----------------------------------------------------------------------------
# Plain-JAX glue (NHWC)
# -----------------------------------------------------------------------------
def pixel_shuffle(x, r=2):
    """nn.PixelShuffle(r) semantics, on NHWC tensors."""
    B, H, W, C = x.shape
    co = C // (r * r)
    x = x.reshape(B, H, W, co, r, r)
    x = jnp.transpose(x, (0, 1, 4, 2, 5, 3))
    return x.reshape(B, H * r, W * r, co)


def warp(img, flow):
    """EMA-VFI backwarp == F.grid_sample(bilinear, padding_mode='border',
    align_corners=True), NHWC.  Data-dependent gather -> plain JAX.
    TODO(synk): at real resolutions this gather should become a Pallas
    manual-DMA row-gather kernel; at 16x16 XLA gather is fine."""
    B, H, W, C = img.shape
    gx = jnp.linspace(-1.0, 1.0, W)[None, None, :]
    gy = jnp.linspace(-1.0, 1.0, H)[None, :, None]
    sx = gx + flow[..., 0] / ((W - 1.0) / 2.0)
    sy = gy + flow[..., 1] / ((H - 1.0) / 2.0)

    px = jnp.clip((sx + 1.0) * (W - 1) / 2.0, 0.0, W - 1.0)
    py = jnp.clip((sy + 1.0) * (H - 1) / 2.0, 0.0, H - 1.0)

    x0 = jnp.floor(px)
    y0 = jnp.floor(py)
    wx = (px - x0)[..., None]                 # (B, H, W, 1)
    wy = (py - y0)[..., None]
    x0c = x0.astype(jnp.int32)
    x1c = jnp.minimum(x0c + 1, W - 1)
    y0c = y0.astype(jnp.int32)
    y1c = jnp.minimum(y0c + 1, H - 1)

    flat = img.reshape(B, H * W, C)

    def gather(yi, xi):
        idx = (yi * W + xi).reshape(B, H * W, 1)
        idx = jnp.broadcast_to(idx, (B, H * W, C))
        return jnp.take_along_axis(flat, idx, axis=1).reshape(B, H, W, C)

    Ia = gather(y0c, x0c)
    Ib = gather(y0c, x1c)
    Ic = gather(y1c, x0c)
    Id = gather(y1c, x1c)
    return (Ia * (1 - wx) * (1 - wy) + Ib * wx * (1 - wy)
            + Ic * (1 - wx) * wy + Id * wx * wy)


# -----------------------------------------------------------------------------
# Head + EMA_Backbone forward (NHWC internally, NCHW at the module boundary)
# -----------------------------------------------------------------------------
def head_forward(p, motion_feature, x, flow):
    """Matches Head.forward for scale == 4 (NHWC tensors)."""
    mf = pixel_shuffle(pixel_shuffle(motion_feature))    # nn.PixelShuffle(2) x2
    # TODO(synk): the scale != 4 F.interpolate branches are not exercised with
    # scales=[4, 4]; bilinear resize would be plain-JAX glue if needed.
    if flow is not None:
        x = jnp.concatenate([x, flow], axis=-1)
    x = jnp.concatenate([mf, x], axis=-1)
    out = head_conv_fused(x, p)                          # fused 3-conv kernel
    return out[..., :4], out[..., 4:]                    # flow, feature


def ema_backbone_forward(params, x, af, mf):
    # Module entry: NCHW -> NHWC once.
    x = jnp.transpose(x, (0, 2, 3, 1))
    af = [jnp.transpose(a, (0, 2, 3, 1)) for a in af]
    mf = [jnp.transpose(m, (0, 2, 3, 1)) for m in mf]

    img0 = x[..., :3]
    img1 = x[..., 3:6]
    B = x.shape[0]
    flow = None
    feature = None
    warped_img0 = warped_img1 = None
    n_stage = len(params["blocks"])
    for i in range(n_stage):
        motion_feature = jnp.concatenate(
            [mf[-1 - i][:B], mf[-1 - i][B:], af[-1 - i][:B], af[-1 - i][B:]],
            axis=-1)
        if flow is not None:
            xx = jnp.concatenate(
                [img0, img1, warped_img0, warped_img1, feature], axis=-1)
            flow_d, feature_d = head_forward(params["blocks"][i],
                                             motion_feature, xx, flow)
            flow = flow + flow_d
            feature = feature + feature_d
        else:
            flow, feature = head_forward(
                params["blocks"][i], motion_feature,
                jnp.concatenate([img0, img1], axis=-1), None)
        warped_img0 = warp(img0, flow[..., :2])
        warped_img1 = warp(img1, flow[..., 2:4])

    # Module exit: back to NCHW to match the PyTorch reference outputs.
    return (jnp.transpose(flow, (0, 3, 1, 2)),
            jnp.transpose(feature, (0, 3, 1, 2)))


# -----------------------------------------------------------------------------
# Deterministic parameter / input construction
# -----------------------------------------------------------------------------
def init_head_params(key, cin, c, cout):
    ks = jax.random.split(key, 6)

    def conv_init(kw, kb, ci, co):
        # PyTorch layout (Cout, Cin, 3, 3) -> im2col (9*Cin, Cout); bf16 for MXU.
        w = 0.1 * jax.random.normal(kw, (co, ci, 3, 3), jnp.float32)
        b = 0.01 * jax.random.normal(kb, (co,), jnp.float32)
        a = jnp.full((co,), 0.25, jnp.float32)          # PReLU default init
        w_im2col = jnp.transpose(w, (2, 3, 1, 0)).reshape(9 * ci, co)
        return (w_im2col.astype(jnp.bfloat16),
                b.reshape(1, co), a.reshape(1, co))

    w1, b1, a1 = conv_init(ks[0], ks[1], cin, c)
    w2, b2, a2 = conv_init(ks[2], ks[3], c, c)
    w3, b3, a3 = conv_init(ks[4], ks[5], c, cout)
    return dict(w1=w1, b1=b1, a1=a1, w2=w2, b2=b2, a2=a2, w3=w3, b3=b3, a3=a3)


if __name__ == "__main__":
    # Module hyper-parameters (small, consistent with EMA_Backbone.__init__)
    kargs = dict(embed_dims=[16, 16], motion_dims=[8, 8], depths=[1, 1],
                 hidden_dims=[32, 32], scales=[4, 4], fc=8)
    flow_num_stage = len(kargs["hidden_dims"])
    B, H, W = 2, 16, 16
    fc = kargs["fc"]

    key = jax.random.PRNGKey(0)
    kx, kf, *kb = jax.random.split(key, 2 + flow_num_stage)

    # Input: x = cat(img0, img1) on channel dim -> (B, 6, H, W) NCHW, as in PyTorch.
    x = jax.random.normal(kx, (B, 6, H, W), jnp.float32)

    # TODO(synk): MotionFormer backbone source was not provided; af/mf are
    # deterministic synthetic features with the shapes its forward implies
    # (batch 2B from the stacked img0/img1, spatial H/4 with scale=4).
    kaf = jax.random.split(kf, 2 * flow_num_stage)
    af, mf = [], []
    for s in range(flow_num_stage):
        af.append(0.5 * jax.random.normal(
            kaf[2 * s], (2 * B, kargs["embed_dims"][s], H // 4, W // 4),
            jnp.float32))
        mf.append(0.5 * jax.random.normal(
            kaf[2 * s + 1],
            (2 * B, kargs["motion_dims"][s] * kargs["depths"][s],
             H // 4, W // 4), jnp.float32))

    # Head parameters for each refinement stage.
    blocks = []
    for i in range(flow_num_stage):
        in_planes = (kargs["motion_dims"][-1 - i] * kargs["depths"][-1 - i]
                     + kargs["embed_dims"][-1 - i])
        in_else = 6 if i == 0 else 3 * 4 + 4 + fc
        cin = in_planes * 2 // (4 * 4) + in_else
        c = kargs["hidden_dims"][-1 - i]
        blocks.append(init_head_params(kb[i], cin, c, 4 + fc))
    params = dict(blocks=blocks)

    fwd = jax.jit(functools.partial(ema_backbone_forward, params))
    flow, feature = fwd(x, af, mf)
    jax.block_until_ready((flow, feature))

    assert flow.shape == (B, 4, H, W) and feature.shape == (B, fc, H, W)
    print("KERNEL_OK")
</pallas_src>

<mosaic_0001>
module attributes {stable_mosaic.version = 11 : i64} {
  func.func @_head_conv_kernel(%arg0: i32, %arg1: memref<1x16x16x9xf32, #tpu.memory_space<vmem>>, %arg2: memref<81x32xbf16, #tpu.memory_space<vmem>>, %arg3: memref<1x32xf32, #tpu.memory_space<vmem>>, %arg4: memref<1x32xf32, #tpu.memory_space<vmem>>, %arg5: memref<288x32xbf16, #tpu.memory_space<vmem>>, %arg6: memref<1x32xf32, #tpu.memory_space<vmem>>, %arg7: memref<1x32xf32, #tpu.memory_space<vmem>>, %arg8: memref<288x12xbf16, #tpu.memory_space<vmem>>, %arg9: memref<1x12xf32, #tpu.memory_space<vmem>>, %arg10: memref<1x12xf32, #tpu.memory_space<vmem>>, %arg11: memref<1x256x12xf32, #tpu.memory_space<vmem>>, %arg12: memref<1x18x18x9xf32, #tpu.memory_space<vmem>>, %arg13: memref<1x18x18x32xf32, #tpu.memory_space<vmem>>) attributes {dimension_semantics = [#tpu.dimension_semantics<parallel>], iteration_bounds = array<i64: 2>, scalar_prefetch = 0 : i64, scratch_operands = 2 : i64, tpu.core_type = #tpu.core_type<tc>, window_params = [{transform_indices = @transform_0, window_bounds = array<i64: 1, 16, 16, 9>}, {pipeline_mode = #tpu.pipeline_mode<synchronous>, transform_indices = @transform_1, window_bounds = array<i64: 81, 32>}, {pipeline_mode = #tpu.pipeline_mode<synchronous>, transform_indices = @transform_2, window_bounds = array<i64: 1, 32>}, {pipeline_mode = #tpu.pipeline_mode<synchronous>, transform_indices = @transform_3, window_bounds = array<i64: 1, 32>}, {pipeline_mode = #tpu.pipeline_mode<synchronous>, transform_indices = @transform_4, window_bounds = array<i64: 288, 32>}, {pipeline_mode = #tpu.pipeline_mode<synchronous>, transform_indices = @transform_5, window_bounds = array<i64: 1, 32>}, {pipeline_mode = #tpu.pipeline_mode<synchronous>, transform_indices = @transform_6, window_bounds = array<i64: 1, 32>}, {pipeline_mode = #tpu.pipeline_mode<synchronous>, transform_indices = @transform_7, window_bounds = array<i64: 288, 12>}, {pipeline_mode = #tpu.pipeline_mode<synchronous>, transform_indices = @transform_8, window_bounds = array<i64: 1, 12>}, {pipeline_mode = #tpu.pipeline_mode<synchronous>, transform_indices = @transform_9, window_bounds = array<i64: 1, 12>}, {transform_indices = @transform_10, window_bounds = array<i64: 1, 256, 12>}]} {
    %cst = arith.constant 0.000000e+00 : f32
    %0 = vector.broadcast %cst : f32 to vector<1x18x18x9xf32>
    %c0 = arith.constant 0 : index
    %c0_0 = arith.constant 0 : index
    %c0_1 = arith.constant 0 : index
    %c0_2 = arith.constant 0 : index
    %1 = vector.load %arg12[%c0, %c0_0, %c0_1, %c0_2] : memref<1x18x18x9xf32, #tpu.memory_space<vmem>>, vector<1x18x18x9xf32>
    tpu.vector_store %arg12[%c0, %c0_0, %c0_1, %c0_2], %0 {strides = array<i32>} : memref<1x18x18x9xf32, #tpu.memory_space<vmem>>, vector<1x18x18x9xf32>,
    %c0_3 = arith.constant 0 : index
    %c0_4 = arith.constant 0 : index
    %c0_5 = arith.constant 0 : index
    %c0_6 = arith.constant 0 : index
    %2 = vector.load %arg1[%c0_3, %c0_4, %c0_5, %c0_6] : memref<1x16x16x9xf32, #tpu.memory_space<vmem>>, vector<1x16x16x9xf32>
    %3 = vector.shape_cast %2 : vector<1x16x16x9xf32> to vector<16x16x9xf32>
    %c0_7 = arith.constant 0 : index
    %c1 = arith.constant 1 : index
    %c1_8 = arith.constant 1 : index
    %c0_9 = arith.constant 0 : index
    %4 = vector.load %arg12[%c0_7, %c1, %c1_8, %c0_9] : memref<1x18x18x9xf32, #tpu.memory_space<vmem>>, vector<1x16x16x9xf32>
    %5 = vector.shape_cast %4 : vector<1x16x16x9xf32> to vector<16x16x9xf32>
    %6 = vector.shape_cast %3 : vector<16x16x9xf32> to vector<1x16x16x9xf32>
    tpu.vector_store %arg12[%c0_7, %c1, %c1_8, %c0_9], %6 {strides = array<i32>} : memref<1x18x18x9xf32, #tpu.memory_space<vmem>>, vector<1x16x16x9xf32>,
    %c0_10 = arith.constant 0 : index
    %c0_11 = arith.constant 0 : index
    %c0_12 = arith.constant 0 : index
    %c0_13 = arith.constant 0 : index
    %7 = vector.load %arg12[%c0_10, %c0_11, %c0_12, %c0_13] : memref<1x18x18x9xf32, #tpu.memory_space<vmem>>, vector<1x18x16x9xf32>
    %8 = vector.shape_cast %7 : vector<1x18x16x9xf32> to vector<18x16x9xf32>
    %c0_14 = arith.constant 0 : index
    %c0_15 = arith.constant 0 : index
    %c1_16 = arith.constant 1 : index
    %c0_17 = arith.constant 0 : index
    %9 = vector.load %arg12[%c0_14, %c0_15, %c1_16, %c0_17] : memref<1x18x18x9xf32, #tpu.memory_space<vmem>>, vector<1x18x16x9xf32>
    %10 = vector.shape_cast %9 : vector<1x18x16x9xf32> to vector<18x16x9xf32>
    %c0_18 = arith.constant 0 : index
    %c0_19 = arith.constant 0 : index
    %c2 = arith.constant 2 : index
    %c0_20 = arith.constant 0 : index
    %11 = vector.load %arg12[%c0_18, %c0_19, %c2, %c0_20] : memref<1x18x18x9xf32, #tpu.memory_space<vmem>>, vector<1x18x16x9xf32>
    %12 = vector.shape_cast %11 : vector<1x18x16x9xf32> to vector<18x16x9xf32>
    %13 = vector.extract_strided_slice %8 {offsets = [0, 0, 0], sizes = [16, 16, 9], strides = [1, 1, 1]} : vector<18x16x9xf32> to vector<16x16x9xf32>
    %14 = vector.shape_cast %13 : vector<16x16x9xf32> to vector<256x9xf32>
    %15 = arith.truncf %14 : vector<256x9xf32> to vector<256x9xbf16>
    %16 = vector.extract_strided_slice %10 {offsets = [0, 0, 0], sizes = [16, 16, 9], strides = [1, 1, 1]} : vector<18x16x9xf32> to vector<16x16x9xf32>
    %17 = vector.shape_cast %16 : vector<16x16x9xf32> to vector<256x9xf32>
    %18 = arith.truncf %17 : vector<256x9xf32> to vector<256x9xbf16>
    %19 = vector.extract_strided_slice %12 {offsets = [0, 0, 0], sizes = [16, 16, 9], strides = [1, 1, 1]} : vector<18x16x9xf32> to vector<16x16x9xf32>
    %20 = vector.shape_cast %19 : vector<16x16x9xf32> to vector<256x9xf32>
    %21 = arith.truncf %20 : vector<256x9xf32> to vector<256x9xbf16>
    %22 = vector.extract_strided_slice %8 {offsets = [1, 0, 0], sizes = [16, 16, 9], strides = [1, 1, 1]} : vector<18x16x9xf32> to vector<16x16x9xf32>
    %23 = vector.shape_cast %22 : vector<16x16x9xf32> to vector<256x9xf32>
    %24 = arith.truncf %23 : vector<256x9xf32> to vector<256x9xbf16>
    %25 = vector.extract_strided_slice %10 {offsets = [1, 0, 0], sizes = [16, 16, 9], strides = [1, 1, 1]} : vector<18x16x9xf32> to vector<16x16x9xf32>
    %26 = vector.shape_cast %25 : vector<16x16x9xf32> to vector<256x9xf32>
    %27 = arith.truncf %26 : vector<256x9xf32> to vector<256x9xbf16>
    %28 = vector.extract_strided_slice %12 {offsets = [1, 0, 0], sizes = [16, 16, 9], strides = [1, 1, 1]} : vector<18x16x9xf32> to vector<16x16x9xf32>
    %29 = vector.shape_cast %28 : vector<16x16x9xf32> to vector<256x9xf32>
    %30 = arith.truncf %29 : vector<256x9xf32> to vector<256x9xbf16>
    %31 = vector.extract_strided_slice %8 {offsets = [2, 0, 0], sizes = [16, 16, 9], strides = [1, 1, 1]} : vector<18x16x9xf32> to vector<16x16x9xf32>
    %32 = vector.shape_cast %31 : vector<16x16x9xf32> to vector<256x9xf32>
    %33 = arith.truncf %32 : vector<256x9xf32> to vector<256x9xbf16>
    %34 = vector.extract_strided_slice %10 {offsets = [2, 0, 0], sizes = [16, 16, 9], strides = [1, 1, 1]} : vector<18x16x9xf32> to vector<16x16x9xf32>
    %35 = vector.shape_cast %34 : vector<16x16x9xf32> to vector<256x9xf32>
    %36 = arith.truncf %35 : vector<256x9xf32> to vector<256x9xbf16>
    %37 = vector.extract_strided_slice %12 {offsets = [2, 0, 0], sizes = [16, 16, 9], strides = [1, 1, 1]} : vector<18x16x9xf32> to vector<16x16x9xf32>
    %38 = vector.shape_cast %37 : vector<16x16x9xf32> to vector<256x9xf32>
    %39 = arith.truncf %38 : vector<256x9xf32> to vector<256x9xbf16>
    %40 = tpu.concatenate %15, %18, %21, %24, %27, %30, %33, %36, %39 in 1 : vector<256x9xbf16>, vector<256x9xbf16>, vector<256x9xbf16>, vector<256x9xbf16>, vector<256x9xbf16>, vector<256x9xbf16>, vector<256x9xbf16>, vector<256x9xbf16>, vector<256x9xbf16> -> vector<256x81xbf16>
    %c0_21 = arith.constant 0 : index
    %c0_22 = arith.constant 0 : index
    %41 = vector.load %arg2[%c0_21, %c0_22] : memref<81x32xbf16, #tpu.memory_space<vmem>>, vector<81x32xbf16>
    %cst_23 = arith.constant dense<0.000000e+00> : vector<256x32xf32>
    %42 = tpu.matmul %40, %41, %cst_23 {dimension_numbers = #tpu.dot_dimension_numbers<[1], [0], [0], [1], [0, 0, 1, 1], [], []>} : vector<256x81xbf16>, vector<81x32xbf16>, vector<256x32xf32> -> vector<256x32xf32>
    %c0_24 = arith.constant 0 : index
    %c0_25 = arith.constant 0 : index
    %43 = vector.load %arg3[%c0_24, %c0_25] : memref<1x32xf32, #tpu.memory_space<vmem>>, vector<1x32xf32>
    %44 = vector.broadcast %43 : vector<1x32xf32> to vector<256x32xf32>
    %45 = arith.addf %42, %44 : vector<256x32xf32>
    %cst_26 = arith.constant 0.000000e+00 : f32
    %46 = vector.broadcast %cst_26 : f32 to vector<256x32xf32>
    %47 = arith.cmpf ogt, %45, %46 : vector<256x32xf32>
    %c0_27 = arith.constant 0 : index
    %c0_28 = arith.constant 0 : index
    %48 = vector.load %arg4[%c0_27, %c0_28] : memref<1x32xf32, #tpu.memory_space<vmem>>, vector<1x32xf32>
    %49 = vector.broadcast %48 : vector<1x32xf32> to vector<256x32xf32>
    %50 = arith.mulf %49, %45 : vector<256x32xf32>
    %51 = arith.select %47, %45, %50 : vector<256x32xi1>, vector<256x32xf32>
    %cst_29 = arith.constant 0.000000e+00 : f32
    %52 = vector.broadcast %cst_29 : f32 to vector<1x18x18x32xf32>
    %c0_30 = arith.constant 0 : index
    %c0_31 = arith.constant 0 : index
    %c0_32 = arith.constant 0 : index
    %c0_33 = arith.constant 0 : index
    %53 = vector.load %arg13[%c0_30, %c0_31, %c0_32, %c0_33] : memref<1x18x18x32xf32, #tpu.memory_space<vmem>>, vector<1x18x18x32xf32>
    tpu.vector_store %arg13[%c0_30, %c0_31, %c0_32, %c0_33], %52 {strides = array<i32>} : memref<1x18x18x32xf32, #tpu.memory_space<vmem>>, vector<1x18x18x32xf32>,
    %54 = vector.shape_cast %51 : vector<256x32xf32> to vector<16x16x32xf32>
    %c0_34 = arith.constant 0 : index
    %c1_35 = arith.constant 1 : index
    %c1_36 = arith.constant 1 : index
    %c0_37 = arith.constant 0 : index
    %55 = vector.load %arg13[%c0_34, %c1_35, %c1_36, %c0_37] : memref<1x18x18x32xf32, #tpu.memory_space<vmem>>, vector<1x16x16x32xf32>
    %56 = vector.shape_cast %55 : vector<1x16x16x32xf32> to vector<16x16x32xf32>
    %57 = vector.shape_cast %54 : vector<16x16x32xf32> to vector<1x16x16x32xf32>
    tpu.vector_store %arg13[%c0_34, %c1_35, %c1_36, %c0_37], %57 {strides = array<i32>} : memref<1x18x18x32xf32, #tpu.memory_space<vmem>>, vector<1x16x16x32xf32>,
    %c0_38 = arith.constant 0 : index
    %c0_39 = arith.constant 0 : index
    %c0_40 = arith.constant 0 : index
    %c0_41 = arith.constant 0 : index
    %58 = vector.load %arg13[%c0_38, %c0_39, %c0_40, %c0_41] : memref<1x18x18x32xf32, #tpu.memory_space<vmem>>, vector<1x18x16x32xf32>
    %59 = vector.shape_cast %58 : vector<1x18x16x32xf32> to vector<18x16x32xf32>
    %c0_42 = arith.constant 0 : index
    %c0_43 = arith.constant 0 : index
    %c1_44 = arith.constant 1 : index
    %c0_45 = arith.constant 0 : index
    %60 = vector.load %arg13[%c0_42, %c0_43, %c1_44, %c0_45] : memref<1x18x18x32xf32, #tpu.memory_space<vmem>>, vector<1x18x16x32xf32>
    %61 = vector.shape_cast %60 : vector<1x18x16x32xf32> to vector<18x16x32xf32>
    %c0_46 = arith.constant 0 : index
    %c0_47 = arith.constant 0 : index
    %c2_48 = arith.constant 2 : index
    %c0_49 = arith.constant 0 : index
    %62 = vector.load %arg13[%c0_46, %c0_47, %c2_48, %c0_49] : memref<1x18x18x32xf32, #tpu.memory_space<vmem>>, vector<1x18x16x32xf32>
    %63 = vector.shape_cast %62 : vector<1x18x16x32xf32> to vector<18x16x32xf32>
    %64 = vector.extract_strided_slice %59 {offsets = [0, 0, 0], sizes = [16, 16, 32], strides = [1, 1, 1]} : vector<18x16x32xf32> to vector<16x16x32xf32>
    %65 = vector.shape_cast %64 : vector<16x16x32xf32> to vector<256x32xf32>
    %66 = arith.truncf %65 : vector<256x32xf32> to vector<256x32xbf16>
    %67 = vector.extract_strided_slice %61 {offsets = [0, 0, 0], sizes = [16, 16, 32], strides = [1, 1, 1]} : vector<18x16x32xf32> to vector<16x16x32xf32>
    %68 = vector.shape_cast %67 : vector<16x16x32xf32> to vector<256x32xf32>
    %69 = arith.truncf %68 : vector<256x32xf32> to vector<256x32xbf16>
    %70 = vector.extract_strided_slice %63 {offsets = [0, 0, 0], sizes = [16, 16, 32], strides = [1, 1, 1]} : vector<18x16x32xf32> to vector<16x16x32xf32>
    %71 = vector.shape_cast %70 : vector<16x16x32xf32> to vector<256x32xf32>
    %72 = arith.truncf %71 : vector<256x32xf32> to vector<256x32xbf16>
    %73 = vector.extract_strided_slice %59 {offsets = [1, 0, 0], sizes = [16, 16, 32], strides = [1, 1, 1]} : vector<18x16x32xf32> to vector<16x16x32xf32>
    %74 = vector.shape_cast %73 : vector<16x16x32xf32> to vector<256x32xf32>
    %75 = arith.truncf %74 : vector<256x32xf32> to vector<256x32xbf16>
    %76 = vector.extract_strided_slice %61 {offsets = [1, 0, 0], sizes = [16, 16, 32], strides = [1, 1, 1]} : vector<18x16x32xf32> to vector<16x16x32xf32>
    %77 = vector.shape_cast %76 : vector<16x16x32xf32> to vector<256x32xf32>
    %78 = arith.truncf %77 : vector<256x32xf32> to vector<256x32xbf16>
    %79 = vector.extract_strided_slice %63 {offsets = [1, 0, 0], sizes = [16, 16, 32], strides = [1, 1, 1]} : vector<18x16x32xf32> to vector<16x16x32xf32>
    %80 = vector.shape_cast %79 : vector<16x16x32xf32> to vector<256x32xf32>
    %81 = arith.truncf %80 : vector<256x32xf32> to vector<256x32xbf16>
    %82 = vector.extract_strided_slice %59 {offsets = [2, 0, 0], sizes = [16, 16, 32], strides = [1, 1, 1]} : vector<18x16x32xf32> to vector<16x16x32xf32>
    %83 = vector.shape_cast %82 : vector<16x16x32xf32> to vector<256x32xf32>
    %84 = arith.truncf %83 : vector<256x32xf32> to vector<256x32xbf16>
    %85 = vector.extract_strided_slice %61 {offsets = [2, 0, 0], sizes = [16, 16, 32], strides = [1, 1, 1]} : vector<18x16x32xf32> to vector<16x16x32xf32>
    %86 = vector.shape_cast %85 : vector<16x16x32xf32> to vector<256x32xf32>
    %87 = arith.truncf %86 : vector<256x32xf32> to vector<256x32xbf16>
    %88 = vector.extract_strided_slice %63 {offsets = [2, 0, 0], sizes = [16, 16, 32], strides = [1, 1, 1]} : vector<18x16x32xf32> to vector<16x16x32xf32>
    %89 = vector.shape_cast %88 : vector<16x16x32xf32> to vector<256x32xf32>
    %90 = arith.truncf %89 : vector<256x32xf32> to vector<256x32xbf16>
    %91 = tpu.concatenate %66, %69, %72, %75, %78, %81, %84, %87, %90 in 1 : vector<256x32xbf16>, vector<256x32xbf16>, vector<256x32xbf16>, vector<256x32xbf16>, vector<256x32xbf16>, vector<256x32xbf16>, vector<256x32xbf16>, vector<256x32xbf16>, vector<256x32xbf16> -> vector<256x288xbf16>
    %c0_50 = arith.constant 0 : index
    %c0_51 = arith.constant 0 : index
    %92 = vector.load %arg5[%c0_50, %c0_51] : memref<288x32xbf16, #tpu.memory_space<vmem>>, vector<288x32xbf16>
    %cst_52 = arith.constant dense<0.000000e+00> : vector<256x32xf32>
    %93 = tpu.matmul %91, %92, %cst_52 {dimension_numbers = #tpu.dot_dimension_numbers<[1], [0], [0], [1], [0, 0, 1, 1], [], []>} : vector<256x288xbf16>, vector<288x32xbf16>, vector<256x32xf32> -> vector<256x32xf32>
    %c0_53 = arith.constant 0 : index
    %c0_54 = arith.constant 0 : index
    %94 = vector.load %arg6[%c0_53, %c0_54] : memref<1x32xf32, #tpu.memory_space<vmem>>, vector<1x32xf32>
    %95 = vector.broadcast %94 : vector<1x32xf32> to vector<256x32xf32>
    %96 = arith.addf %93, %95 : vector<256x32xf32>
    %cst_55 = arith.constant 0.000000e+00 : f32
    %97 = vector.broadcast %cst_55 : f32 to vector<256x32xf32>
    %98 = arith.cmpf ogt, %96, %97 : vector<256x32xf32>
    %c0_56 = arith.constant 0 : index
    %c0_57 = arith.constant 0 : index
    %99 = vector.load %arg7[%c0_56, %c0_57] : memref<1x32xf32, #tpu.memory_space<vmem>>, vector<1x32xf32>
    %100 = vector.broadcast %99 : vector<1x32xf32> to vector<256x32xf32>
    %101 = arith.mulf %100, %96 : vector<256x32xf32>
    %102 = arith.select %98, %96, %101 : vector<256x32xi1>, vector<256x32xf32>
    %103 = vector.shape_cast %102 : vector<256x32xf32> to vector<16x16x32xf32>
    %c0_58 = arith.constant 0 : index
    %c1_59 = arith.constant 1 : index
    %c1_60 = arith.constant 1 : index
    %c0_61 = arith.constant 0 : index
    %104 = vector.load %arg13[%c0_58, %c1_59, %c1_60, %c0_61] : memref<1x18x18x32xf32, #tpu.memory_space<vmem>>, vector<1x16x16x32xf32>
    %105 = vector.shape_cast %104 : vector<1x16x16x32xf32> to vector<16x16x32xf32>
    %106 = vector.shape_cast %103 : vector<16x16x32xf32> to vector<1x16x16x32xf32>
    tpu.vector_store %arg13[%c0_58, %c1_59, %c1_60, %c0_61], %106 {strides = array<i32>} : memref<1x18x18x32xf32, #tpu.memory_space<vmem>>, vector<1x16x16x32xf32>,
    %c0_62 = arith.constant 0 : index
    %c0_63 = arith.constant 0 : index
    %c0_64 = arith.constant 0 : index
    %c0_65 = arith.constant 0 : index
    %107 = vector.load %arg13[%c0_62, %c0_63, %c0_64, %c0_65] : memref<1x18x18x32xf32, #tpu.memory_space<vmem>>, vector<1x18x16x32xf32>
    %108 = vector.shape_cast %107 : vector<1x18x16x32xf32> to vector<18x16x32xf32>
    %c0_66 = arith.constant 0 : index
    %c0_67 = arith.constant 0 : index
    %c1_68 = arith.constant 1 : index
    %c0_69 = arith.constant 0 : index
    %109 = vector.load %arg13[%c0_66, %c0_67, %c1_68, %c0_69] : memref<1x18x18x32xf32, #tpu.memory_space<vmem>>, vector<1x18x16x32xf32>
    %110 = vector.shape_cast %109 : vector<1x18x16x32xf32> to vector<18x16x32xf32>
    %c0_70 = arith.constant 0 : index
    %c0_71 = arith.constant 0 : index
    %c2_72 = arith.constant 2 : index
    %c0_73 = arith.constant 0 : index
    %111 = vector.load %arg13[%c0_70, %c0_71, %c2_72, %c0_73] : memref<1x18x18x32xf32, #tpu.memory_space<vmem>>, vector<1x18x16x32xf32>
    %112 = vector.shape_cast %111 : vector<1x18x16x32xf32> to vector<18x16x32xf32>
    %113 = vector.extract_strided_slice %108 {offsets = [0, 0, 0], sizes = [16, 16, 32], strides = [1, 1, 1]} : vector<18x16x32xf32> to vector<16x16x32xf32>
    %114 = vector.shape_cast %113 : vector<16x16x32xf32> to vector<256x32xf32>
    %115 = arith.truncf %114 : vector<256x32xf32> to vector<256x32xbf16>
    %116 = vector.extract_strided_slice %110 {offsets = [0, 0, 0], sizes = [16, 16, 32], strides = [1, 1, 1]} : vector<18x16x32xf32> to vector<16x16x32xf32>
    %117 = vector.shape_cast %116 : vector<16x16x32xf32> to vector<256x32xf32>
    %118 = arith.truncf %117 : vector<256x32xf32> to vector<256x32xbf16>
    %119 = vector.extract_strided_slice %112 {offsets = [0, 0, 0], sizes = [16, 16, 32], strides = [1, 1, 1]} : vector<18x16x32xf32> to vector<16x16x32xf32>
    %120 = vector.shape_cast %119 : vector<16x16x32xf32> to vector<256x32xf32>
    %121 = arith.truncf %120 : vector<256x32xf32> to vector<256x32xbf16>
    %122 = vector.extract_strided_slice %108 {offsets = [1, 0, 0], sizes = [16, 16, 32], strides = [1, 1, 1]} : vector<18x16x32xf32> to vector<16x16x32xf32>
    %123 = vector.shape_cast %122 : vector<16x16x32xf32> to vector<256x32xf32>
    %124 = arith.truncf %123 : vector<256x32xf32> to vector<256x32xbf16>
    %125 = vector.extract_strided_slice %110 {offsets = [1, 0, 0], sizes = [16, 16, 32], strides = [1, 1, 1]} : vector<18x16x32xf32> to vector<16x16x32xf32>
    %126 = vector.shape_cast %125 : vector<16x16x32xf32> to vector<256x32xf32>
    %127 = arith.truncf %126 : vector<256x32xf32> to vector<256x32xbf16>
    %128 = vector.extract_strided_slice %112 {offsets = [1, 0, 0], sizes = [16, 16, 32], strides = [1, 1, 1]} : vector<18x16x32xf32> to vector<16x16x32xf32>
    %129 = vector.shape_cast %128 : vector<16x16x32xf32> to vector<256x32xf32>
    %130 = arith.truncf %129 : vector<256x32xf32> to vector<256x32xbf16>
    %131 = vector.extract_strided_slice %108 {offsets = [2, 0, 0], sizes = [16, 16, 32], strides = [1, 1, 1]} : vector<18x16x32xf32> to vector<16x16x32xf32>
    %132 = vector.shape_cast %131 : vector<16x16x32xf32> to vector<256x32xf32>
    %133 = arith.truncf %132 : vector<256x32xf32> to vector<256x32xbf16>
    %134 = vector.extract_strided_slice %110 {offsets = [2, 0, 0], sizes = [16, 16, 32], strides = [1, 1, 1]} : vector<18x16x32xf32> to vector<16x16x32xf32>
    %135 = vector.shape_cast %134 : vector<16x16x32xf32> to vector<256x32xf32>
    %136 = arith.truncf %135 : vector<256x32xf32> to vector<256x32xbf16>
    %137 = vector.extract_strided_slice %112 {offsets = [2, 0, 0], sizes = [16, 16, 32], strides = [1, 1, 1]} : vector<18x16x32xf32> to vector<16x16x32xf32>
    %138 = vector.shape_cast %137 : vector<16x16x32xf32> to vector<256x32xf32>
    %139 = arith.truncf %138 : vector<256x32xf32> to vector<256x32xbf16>
    %140 = tpu.concatenate %115, %118, %121, %124, %127, %130, %133, %136, %139 in 1 : vector<256x32xbf16>, vector<256x32xbf16>, vector<256x32xbf16>, vector<256x32xbf16>, vector<256x32xbf16>, vector<256x32xbf16>, vector<256x32xbf16>, vector<256x32xbf16>, vector<256x32xbf16> -> vector<256x288xbf16>
    %c0_74 = arith.constant 0 : index
    %c0_75 = arith.constant 0 : index
    %141 = vector.load %arg8[%c0_74, %c0_75] : memref<288x12xbf16, #tpu.memory_space<vmem>>, vector<288x12xbf16>
    %cst_76 = arith.constant dense<0.000000e+00> : vector<256x12xf32>
    %142 = tpu.matmul %140, %141, %cst_76 {dimension_numbers = #tpu.dot_dimension_numbers<[1], [0], [0], [1], [0, 0, 1, 1], [], []>} : vector<256x288xbf16>, vector<288x12xbf16>, vector<256x12xf32> -> vector<256x12xf32>
    %c0_77 = arith.constant 0 : index
    %c0_78 = arith.constant 0 : index
    %143 = vector.load %arg9[%c0_77, %c0_78] : memref<1x12xf32, #tpu.memory_space<vmem>>, vector<1x12xf32>
    %144 = vector.broadcast %143 : vector<1x12xf32> to vector<256x12xf32>
    %145 = arith.addf %142, %144 : vector<256x12xf32>
    %cst_79 = arith.constant 0.000000e+00 : f32
    %146 = vector.broadcast %cst_79 : f32 to vector<256x12xf32>
    %147 = arith.cmpf ogt, %145, %146 : vector<256x12xf32>
    %c0_80 = arith.constant 0 : index
    %c0_81 = arith.constant 0 : index
    %148 = vector.load %arg10[%c0_80, %c0_81] : memref<1x12xf32, #tpu.memory_space<vmem>>, vector<1x12xf32>
    %149 = vector.broadcast %148 : vector<1x12xf32> to vector<256x12xf32>
    %150 = arith.mulf %149, %145 : vector<256x12xf32>
    %151 = arith.select %147, %145, %150 : vector<256x12xi1>, vector<256x12xf32>
    %c0_82 = arith.constant 0 : index
    %c0_83 = arith.constant 0 : index
    %c0_84 = arith.constant 0 : index
    %152 = vector.load %arg11[%c0_82, %c0_83, %c0_84] : memref<1x256x12xf32, #tpu.memory_space<vmem>>, vector<1x256x12xf32>
    %153 = vector.shape_cast %152 : vector<1x256x12xf32> to vector<256x12xf32>
    %154 = vector.shape_cast %151 : vector<256x12xf32> to vector<1x256x12xf32>
    tpu.vector_store %arg11[%c0_82, %c0_83, %c0_84], %154 {strides = array<i32>} : memref<1x256x12xf32, #tpu.memory_space<vmem>>, vector<1x256x12xf32>,
    return
  }
  func.func @transform_0(%arg0: i32) -> (i32, i32, i32, i32) {
    %c0_i32 = arith.constant 0 : i32
    %c0_i32_0 = arith.constant 0 : i32
    %c0_i32_1 = arith.constant 0 : i32
    %c0_i32_2 = arith.constant 0 : i32
    return %arg0, %c0_i32, %c0_i32_0, %c0_i32_1 : i32, i32, i32, i32
  }
  func.func @transform_1(%arg0: i32) -> (i32, i32) {
    %c0_i32 = arith.constant 0 : i32
    %c0_i32_0 = arith.constant 0 : i32
    %c0_i32_1 = arith.constant 0 : i32
    return %c0_i32, %c0_i32_0 : i32, i32
  }
  func.func @transform_2(%arg0: i32) -> (i32, i32) {
    %c0_i32 = arith.constant 0 : i32
    %c0_i32_0 = arith.constant 0 : i32
    %c0_i32_1 = arith.constant 0 : i32
    return %c0_i32, %c0_i32_0 : i32, i32
  }
  func.func @transform_3(%arg0: i32) -> (i32, i32) {
    %c0_i32 = arith.constant 0 : i32
    %c0_i32_0 = arith.constant 0 : i32
    %c0_i32_1 = arith.constant 0 : i32
    return %c0_i32, %c0_i32_0 : i32, i32
  }
  func.func @transform_4(%arg0: i32) -> (i32, i32) {
    %c0_i32 = arith.constant 0 : i32
    %c0_i32_0 = arith.constant 0 : i32
    %c0_i32_1 = arith.constant 0 : i32
    return %c0_i32, %c0_i32_0 : i32, i32
  }
  func.func @transform_5(%arg0: i32) -> (i32, i32) {
    %c0_i32 = arith.constant 0 : i32
    %c0_i32_0 = arith.constant 0 : i32
    %c0_i32_1 = arith.constant 0 : i32
    return %c0_i32, %c0_i32_0 : i32, i32
  }
  func.func @transform_6(%arg0: i32) -> (i32, i32) {
    %c0_i32 = arith.constant 0 : i32
    %c0_i32_0 = arith.constant 0 : i32
    %c0_i32_1 = arith.constant 0 : i32
    return %c0_i32, %c0_i32_0 : i32, i32
  }
  func.func @transform_7(%arg0: i32) -> (i32, i32) {
    %c0_i32 = arith.constant 0 : i32
    %c0_i32_0 = arith.constant 0 : i32
    %c0_i32_1 = arith.constant 0 : i32
    return %c0_i32, %c0_i32_0 : i32, i32
  }
  func.func @transform_8(%arg0: i32) -> (i32, i32) {
    %c0_i32 = arith.constant 0 : i32
    %c0_i32_0 = arith.constant 0 : i32
    %c0_i32_1 = arith.constant 0 : i32
    return %c0_i32, %c0_i32_0 : i32, i32
  }
  func.func @transform_9(%arg0: i32) -> (i32, i32) {
    %c0_i32 = arith.constant 0 : i32
    %c0_i32_0 = arith.constant 0 : i32
    %c0_i32_1 = arith.constant 0 : i32
    return %c0_i32, %c0_i32_0 : i32, i32
  }
  func.func @transform_10(%arg0: i32) -> (i32, i32, i32) {
    %c0_i32 = arith.constant 0 : i32
    %c0_i32_0 = arith.constant 0 : i32
    %c0_i32_1 = arith.constant 0 : i32
    return %arg0, %c0_i32, %c0_i32_0 : i32, i32, i32
  }
}

module attributes {stable_mosaic.version = 11 : i64} {
  func.func @_head_conv_kernel(%arg0: i32, %arg1: memref<1x16x16x27xf32, #tpu.memory_space<vmem>>, %arg2: memref<243x32xbf16, #tpu.memory_space<vmem>>, %arg3: memref<1x32xf32, #tpu.memory_space<vmem>>, %arg4: memref<1x32xf32, #tpu.memory_space<vmem>>, %arg5: memref<288x32xbf16, #tpu.memory_space<vmem>>, %arg6: memref<1x32xf32, #tpu.memory_space<vmem>>, %arg7: memref<1x32xf32, #tpu.memory_space<vmem>>, %arg8: memref<288x12xbf16, #tpu.memory_space<vmem>>, %arg9: memref<1x12xf32, #tpu.memory_space<vmem>>, %arg10: memref<1x12xf32, #tpu.memory_space<vmem>>, %arg11: memref<1x256x12xf32, #tpu.memory_space<vmem>>, %arg12: memref<1x18x18x27xf32, #tpu.memory_space<vmem>>, %arg13: memref<1x18x18x32xf32, #tpu.memory_space<vmem>>) attributes {dimension_semantics = [#tpu.dimension_semantics<parallel>], iteration_bounds = array<i64: 2>, scalar_prefetch = 0 : i64, scratch_operands = 2 : i64, tpu.core_type = #tpu.core_type<tc>, window_params = [{transform_indices = @transform_0, window_bounds = array<i64: 1, 16, 16, 27>}, {pipeline_mode = #tpu.pipeline_mode<synchronous>, transform_indices = @transform_1, window_bounds = array<i64: 243, 32>}, {pipeline_mode = #tpu.pipeline_mode<synchronous>, transform_indices = @transform_2, window_bounds = array<i64: 1, 32>}, {pipeline_mode = #tpu.pipeline_mode<synchronous>, transform_indices = @transform_3, window_bounds = array<i64: 1, 32>}, {pipeline_mode = #tpu.pipeline_mode<synchronous>, transform_indices = @transform_4, window_bounds = array<i64: 288, 32>}, {pipeline_mode = #tpu.pipeline_mode<synchronous>, transform_indices = @transform_5, window_bounds = array<i64: 1, 32>}, {pipeline_mode = #tpu.pipeline_mode<synchronous>, transform_indices = @transform_6, window_bounds = array<i64: 1, 32>}, {pipeline_mode = #tpu.pipeline_mode<synchronous>, transform_indices = @transform_7, window_bounds = array<i64: 288, 12>}, {pipeline_mode = #tpu.pipeline_mode<synchronous>, transform_indices = @transform_8, window_bounds = array<i64: 1, 12>}, {pipeline_mode = #tpu.pipeline_mode<synchronous>, transform_indices = @transform_9, window_bounds = array<i64: 1, 12>}, {transform_indices = @transform_10, window_bounds = array<i64: 1, 256, 12>}]} {
    %cst = arith.constant 0.000000e+00 : f32
    %0 = vector.broadcast %cst : f32 to vector<1x18x18x27xf32>
    %c0 = arith.constant 0 : index
    %c0_0 = arith.constant 0 : index
    %c0_1 = arith.constant 0 : index
    %c0_2 = arith.constant 0 : index
    %1 = vector.load %arg12[%c0, %c0_0, %c0_1, %c0_2] : memref<1x18x18x27xf32, #tpu.memory_space<vmem>>, vector<1x18x18x27xf32>
    tpu.vector_store %arg12[%c0, %c0_0, %c0_1, %c0_2], %0 {strides = array<i32>} : memref<1x18x18x27xf32, #tpu.memory_space<vmem>>, vector<1x18x18x27xf32>,
    %c0_3 = arith.constant 0 : index
    %c0_4 = arith.constant 0 : index
    %c0_5 = arith.constant 0 : index
    %c0_6 = arith.constant 0 : index
    %2 = vector.load %arg1[%c0_3, %c0_4, %c0_5, %c0_6] : memref<1x16x16x27xf32, #tpu.memory_space<vmem>>, vector<1x16x16x27xf32>
    %3 = vector.shape_cast %2 : vector<1x16x16x27xf32> to vector<16x16x27xf32>
    %c0_7 = arith.constant 0 : index
    %c1 = arith.constant 1 : index
    %c1_8 = arith.constant 1 : index
    %c0_9 = arith.constant 0 : index
    %4 = vector.load %arg12[%c0_7, %c1, %c1_8, %c0_9] : memref<1x18x18x27xf32, #tpu.memory_space<vmem>>, vector<1x16x16x27xf32>
    %5 = vector.shape_cast %4 : vector<1x16x16x27xf32> to vector<16x16x27xf32>
    %6 = vector.shape_cast %3 : vector<16x16x27xf32> to vector<1x16x16x27xf32>
    tpu.vector_store %arg12[%c0_7, %c1, %c1_8, %c0_9], %6 {strides = array<i32>} : memref<1x18x18x27xf32, #tpu.memory_space<vmem>>, vector<1x16x16x27xf32>,
    %c0_10 = arith.constant 0 : index
    %c0_11 = arith.constant 0 : index
    %c0_12 = arith.constant 0 : index
    %c0_13 = arith.constant 0 : index
    %7 = vector.load %arg12[%c0_10, %c0_11, %c0_12, %c0_13] : memref<1x18x18x27xf32, #tpu.memory_space<vmem>>, vector<1x18x16x27xf32>
    %8 = vector.shape_cast %7 : vector<1x18x16x27xf32> to vector<18x16x27xf32>
    %c0_14 = arith.constant 0 : index
    %c0_15 = arith.constant 0 : index
    %c1_16 = arith.constant 1 : index
    %c0_17 = arith.constant 0 : index
    %9 = vector.load %arg12[%c0_14, %c0_15, %c1_16, %c0_17] : memref<1x18x18x27xf32, #tpu.memory_space<vmem>>, vector<1x18x16x27xf32>
    %10 = vector.shape_cast %9 : vector<1x18x16x27xf32> to vector<18x16x27xf32>
    %c0_18 = arith.constant 0 : index
    %c0_19 = arith.constant 0 : index
    %c2 = arith.constant 2 : index
    %c0_20 = arith.constant 0 : index
    %11 = vector.load %arg12[%c0_18, %c0_19, %c2, %c0_20] : memref<1x18x18x27xf32, #tpu.memory_space<vmem>>, vector<1x18x16x27xf32>
    %12 = vector.shape_cast %11 : vector<1x18x16x27xf32> to vector<18x16x27xf32>
    %13 = vector.extract_strided_slice %8 {offsets = [0, 0, 0], sizes = [16, 16, 27], strides = [1, 1, 1]} : vector<18x16x27xf32> to vector<16x16x27xf32>
    %14 = vector.shape_cast %13 : vector<16x16x27xf32> to vector<256x27xf32>
    %15 = arith.truncf %14 : vector<256x27xf32> to vector<256x27xbf16>
    %16 = vector.extract_strided_slice %10 {offsets = [0, 0, 0], sizes = [16, 16, 27], strides = [1, 1, 1]} : vector<18x16x27xf32> to vector<16x16x27xf32>
    %17 = vector.shape_cast %16 : vector<16x16x27xf32> to vector<256x27xf32>
    %18 = arith.truncf %17 : vector<256x27xf32> to vector<256x27xbf16>
    %19 = vector.extract_strided_slice %12 {offsets = [0, 0, 0], sizes = [16, 16, 27], strides = [1, 1, 1]} : vector<18x16x27xf32> to vector<16x16x27xf32>
    %20 = vector.shape_cast %19 : vector<16x16x27xf32> to vector<256x27xf32>
    %21 = arith.truncf %20 : vector<256x27xf32> to vector<256x27xbf16>
    %22 = vector.extract_strided_slice %8 {offsets = [1, 0, 0], sizes = [16, 16, 27], strides = [1, 1, 1]} : vector<18x16x27xf32> to vector<16x16x27xf32>
    %23 = vector.shape_cast %22 : vector<16x16x27xf32> to vector<256x27xf32>
    %24 = arith.truncf %23 : vector<256x27xf32> to vector<256x27xbf16>
    %25 = vector.extract_strided_slice %10 {offsets = [1, 0, 0], sizes = [16, 16, 27], strides = [1, 1, 1]} : vector<18x16x27xf32> to vector<16x16x27xf32>
    %26 = vector.shape_cast %25 : vector<16x16x27xf32> to vector<256x27xf32>
    %27 = arith.truncf %26 : vector<256x27xf32> to vector<256x27xbf16>
    %28 = vector.extract_strided_slice %12 {offsets = [1, 0, 0], sizes = [16, 16, 27], strides = [1, 1, 1]} : vector<18x16x27xf32> to vector<16x16x27xf32>
    %29 = vector.shape_cast %28 : vector<16x16x27xf32> to vector<256x27xf32>
    %30 = arith.truncf %29 : vector<256x27xf32> to vector<256x27xbf16>
    %31 = vector.extract_strided_slice %8 {offsets = [2, 0, 0], sizes = [16, 16, 27], strides = [1, 1, 1]} : vector<18x16x27xf32> to vector<16x16x27xf32>
    %32 = vector.shape_cast %31 : vector<16x16x27xf32> to vector<256x27xf32>
    %33 = arith.truncf %32 : vector<256x27xf32> to vector<256x27xbf16>
    %34 = vector.extract_strided_slice %10 {offsets = [2, 0, 0], sizes = [16, 16, 27], strides = [1, 1, 1]} : vector<18x16x27xf32> to vector<16x16x27xf32>
    %35 = vector.shape_cast %34 : vector<16x16x27xf32> to vector<256x27xf32>
    %36 = arith.truncf %35 : vector<256x27xf32> to vector<256x27xbf16>
    %37 = vector.extract_strided_slice %12 {offsets = [2, 0, 0], sizes = [16, 16, 27], strides = [1, 1, 1]} : vector<18x16x27xf32> to vector<16x16x27xf32>
    %38 = vector.shape_cast %37 : vector<16x16x27xf32> to vector<256x27xf32>
    %39 = arith.truncf %38 : vector<256x27xf32> to vector<256x27xbf16>
    %40 = tpu.concatenate %15, %18, %21, %24, %27, %30, %33, %36, %39 in 1 : vector<256x27xbf16>, vector<256x27xbf16>, vector<256x27xbf16>, vector<256x27xbf16>, vector<256x27xbf16>, vector<256x27xbf16>, vector<256x27xbf16>, vector<256x27xbf16>, vector<256x27xbf16> -> vector<256x243xbf16>
    %c0_21 = arith.constant 0 : index
    %c0_22 = arith.constant 0 : index
    %41 = vector.load %arg2[%c0_21, %c0_22] : memref<243x32xbf16, #tpu.memory_space<vmem>>, vector<243x32xbf16>
    %cst_23 = arith.constant dense<0.000000e+00> : vector<256x32xf32>
    %42 = tpu.matmul %40, %41, %cst_23 {dimension_numbers = #tpu.dot_dimension_numbers<[1], [0], [0], [1], [0, 0, 1, 1], [], []>} : vector<256x243xbf16>, vector<243x32xbf16>, vector<256x32xf32> -> vector<256x32xf32>
    %c0_24 = arith.constant 0 : index
    %c0_25 = arith.constant 0 : index
    %43 = vector.load %arg3[%c0_24, %c0_25] : memref<1x32xf32, #tpu.memory_space<vmem>>, vector<1x32xf32>
    %44 = vector.broadcast %43 : vector<1x32xf32> to vector<256x32xf32>
    %45 = arith.addf %42, %44 : vector<256x32xf32>
    %cst_26 = arith.constant 0.000000e+00 : f32
    %46 = vector.broadcast %cst_26 : f32 to vector<256x32xf32>
    %47 = arith.cmpf ogt, %45, %46 : vector<256x32xf32>
    %c0_27 = arith.constant 0 : index
    %c0_28 = arith.constant 0 : index
    %48 = vector.load %arg4[%c0_27, %c0_28] : memref<1x32xf32, #tpu.memory_space<vmem>>, vector<1x32xf32>
    %49 = vector.broadcast %48 : vector<1x32xf32> to vector<256x32xf32>
    %50 = arith.mulf %49, %45 : vector<256x32xf32>
    %51 = arith.select %47, %45, %50 : vector<256x32xi1>, vector<256x32xf32>
    %cst_29 = arith.constant 0.000000e+00 : f32
    %52 = vector.broadcast %cst_29 : f32 to vector<1x18x18x32xf32>
    %c0_30 = arith.constant 0 : index
    %c0_31 = arith.constant 0 : index
    %c0_32 = arith.constant 0 : index
    %c0_33 = arith.constant 0 : index
    %53 = vector.load %arg13[%c0_30, %c0_31, %c0_32, %c0_33] : memref<1x18x18x32xf32, #tpu.memory_space<vmem>>, vector<1x18x18x32xf32>
    tpu.vector_store %arg13[%c0_30, %c0_31, %c0_32, %c0_33], %52 {strides = array<i32>} : memref<1x18x18x32xf32, #tpu.memory_space<vmem>>, vector<1x18x18x32xf32>,
    %54 = vector.shape_cast %51 : vector<256x32xf32> to vector<16x16x32xf32>
    %c0_34 = arith.constant 0 : index
    %c1_35 = arith.constant 1 : index
    %c1_36 = arith.constant 1 : index
    %c0_37 = arith.constant 0 : index
    %55 = vector.load %arg13[%c0_34, %c1_35, %c1_36, %c0_37] : memref<1x18x18x32xf32, #tpu.memory_space<vmem>>, vector<1x16x16x32xf32>
    %56 = vector.shape_cast %55 : vector<1x16x16x32xf32> to vector<16x16x32xf32>
    %57 = vector.shape_cast %54 : vector<16x16x32xf32> to vector<1x16x16x32xf32>
    tpu.vector_store %arg13[%c0_34, %c1_35, %c1_36, %c0_37], %57 {strides = array<i32>} : memref<1x18x18x32xf32, #tpu.memory_space<vmem>>, vector<1x16x16x32xf32>,
    %c0_38 = arith.constant 0 : index
    %c0_39 = arith.constant 0 : index
    %c0_40 = arith.constant 0 : index
    %c0_41 = arith.constant 0 : index
    %58 = vector.load %arg13[%c0_38, %c0_39, %c0_40, %c0_41] : memref<1x18x18x32xf32, #tpu.memory_space<vmem>>, vector<1x18x16x32xf32>
    %59 = vector.shape_cast %58 : vector<1x18x16x32xf32> to vector<18x16x32xf32>
    %c0_42 = arith.constant 0 : index
    %c0_43 = arith.constant 0 : index
    %c1_44 = arith.constant 1 : index
    %c0_45 = arith.constant 0 : index
    %60 = vector.load %arg13[%c0_42, %c0_43, %c1_44, %c0_45] : memref<1x18x18x32xf32, #tpu.memory_space<vmem>>, vector<1x18x16x32xf32>
    %61 = vector.shape_cast %60 : vector<1x18x16x32xf32> to vector<18x16x32xf32>
    %c0_46 = arith.constant 0 : index
    %c0_47 = arith.constant 0 : index
    %c2_48 = arith.constant 2 : index
    %c0_49 = arith.constant 0 : index
    %62 = vector.load %arg13[%c0_46, %c0_47, %c2_48, %c0_49] : memref<1x18x18x32xf32, #tpu.memory_space<vmem>>, vector<1x18x16x32xf32>
    %63 = vector.shape_cast %62 : vector<1x18x16x32xf32> to vector<18x16x32xf32>
    %64 = vector.extract_strided_slice %59 {offsets = [0, 0, 0], sizes = [16, 16, 32], strides = [1, 1, 1]} : vector<18x16x32xf32> to vector<16x16x32xf32>
    %65 = vector.shape_cast %64 : vector<16x16x32xf32> to vector<256x32xf32>
    %66 = arith.truncf %65 : vector<256x32xf32> to vector<256x32xbf16>
    %67 = vector.extract_strided_slice %61 {offsets = [0, 0, 0], sizes = [16, 16, 32], strides = [1, 1, 1]} : vector<18x16x32xf32> to vector<16x16x32xf32>
    %68 = vector.shape_cast %67 : vector<16x16x32xf32> to vector<256x32xf32>
    %69 = arith.truncf %68 : vector<256x32xf32> to vector<256x32xbf16>
    %70 = vector.extract_strided_slice %63 {offsets = [0, 0, 0], sizes = [16, 16, 32], strides = [1, 1, 1]} : vector<18x16x32xf32> to vector<16x16x32xf32>
    %71 = vector.shape_cast %70 : vector<16x16x32xf32> to vector<256x32xf32>
    %72 = arith.truncf %71 : vector<256x32xf32> to vector<256x32xbf16>
    %73 = vector.extract_strided_slice %59 {offsets = [1, 0, 0], sizes = [16, 16, 32], strides = [1, 1, 1]} : vector<18x16x32xf32> to vector<16x16x32xf32>
    %74 = vector.shape_cast %73 : vector<16x16x32xf32> to vector<256x32xf32>
    %75 = arith.truncf %74 : vector<256x32xf32> to vector<256x32xbf16>
    %76 = vector.extract_strided_slice %61 {offsets = [1, 0, 0], sizes = [16, 16, 32], strides = [1, 1, 1]} : vector<18x16x32xf32> to vector<16x16x32xf32>
    %77 = vector.shape_cast %76 : vector<16x16x32xf32> to vector<256x32xf32>
    %78 = arith.truncf %77 : vector<256x32xf32> to vector<256x32xbf16>
    %79 = vector.extract_strided_slice %63 {offsets = [1, 0, 0], sizes = [16, 16, 32], strides = [1, 1, 1]} : vector<18x16x32xf32> to vector<16x16x32xf32>
    %80 = vector.shape_cast %79 : vector<16x16x32xf32> to vector<256x32xf32>
    %81 = arith.truncf %80 : vector<256x32xf32> to vector<256x32xbf16>
    %82 = vector.extract_strided_slice %59 {offsets = [2, 0, 0], sizes = [16, 16, 32], strides = [1, 1, 1]} : vector<18x16x32xf32> to vector<16x16x32xf32>
    %83 = vector.shape_cast %82 : vector<16x16x32xf32> to vector<256x32xf32>
    %84 = arith.truncf %83 : vector<256x32xf32> to vector<256x32xbf16>
    %85 = vector.extract_strided_slice %61 {offsets = [2, 0, 0], sizes = [16, 16, 32], strides = [1, 1, 1]} : vector<18x16x32xf32> to vector<16x16x32xf32>
    %86 = vector.shape_cast %85 : vector<16x16x32xf32> to vector<256x32xf32>
    %87 = arith.truncf %86 : vector<256x32xf32> to vector<256x32xbf16>
    %88 = vector.extract_strided_slice %63 {offsets = [2, 0, 0], sizes = [16, 16, 32], strides = [1, 1, 1]} : vector<18x16x32xf32> to vector<16x16x32xf32>
    %89 = vector.shape_cast %88 : vector<16x16x32xf32> to vector<256x32xf32>
    %90 = arith.truncf %89 : vector<256x32xf32> to vector<256x32xbf16>
    %91 = tpu.concatenate %66, %69, %72, %75, %78, %81, %84, %87, %90 in 1 : vector<256x32xbf16>, vector<256x32xbf16>, vector<256x32xbf16>, vector<256x32xbf16>, vector<256x32xbf16>, vector<256x32xbf16>, vector<256x32xbf16>, vector<256x32xbf16>, vector<256x32xbf16> -> vector<256x288xbf16>
    %c0_50 = arith.constant 0 : index
    %c0_51 = arith.constant 0 : index
    %92 = vector.load %arg5[%c0_50, %c0_51] : memref<288x32xbf16, #tpu.memory_space<vmem>>, vector<288x32xbf16>
    %cst_52 = arith.constant dense<0.000000e+00> : vector<256x32xf32>
    %93 = tpu.matmul %91, %92, %cst_52 {dimension_numbers = #tpu.dot_dimension_numbers<[1], [0], [0], [1], [0, 0, 1, 1], [], []>} : vector<256x288xbf16>, vector<288x32xbf16>, vector<256x32xf32> -> vector<256x32xf32>
    %c0_53 = arith.constant 0 : index
    %c0_54 = arith.constant 0 : index
    %94 = vector.load %arg6[%c0_53, %c0_54] : memref<1x32xf32, #tpu.memory_space<vmem>>, vector<1x32xf32>
    %95 = vector.broadcast %94 : vector<1x32xf32> to vector<256x32xf32>
    %96 = arith.addf %93, %95 : vector<256x32xf32>
    %cst_55 = arith.constant 0.000000e+00 : f32
    %97 = vector.broadcast %cst_55 : f32 to vector<256x32xf32>
    %98 = arith.cmpf ogt, %96, %97 : vector<256x32xf32>
    %c0_56 = arith.constant 0 : index
    %c0_57 = arith.constant 0 : index
    %99 = vector.load %arg7[%c0_56, %c0_57] : memref<1x32xf32, #tpu.memory_space<vmem>>, vector<1x32xf32>
    %100 = vector.broadcast %99 : vector<1x32xf32> to vector<256x32xf32>
    %101 = arith.mulf %100, %96 : vector<256x32xf32>
    %102 = arith.select %98, %96, %101 : vector<256x32xi1>, vector<256x32xf32>
    %103 = vector.shape_cast %102 : vector<256x32xf32> to vector<16x16x32xf32>
    %c0_58 = arith.constant 0 : index
    %c1_59 = arith.constant 1 : index
    %c1_60 = arith.constant 1 : index
    %c0_61 = arith.constant 0 : index
    %104 = vector.load %arg13[%c0_58, %c1_59, %c1_60, %c0_61] : memref<1x18x18x32xf32, #tpu.memory_space<vmem>>, vector<1x16x16x32xf32>
    %105 = vector.shape_cast %104 : vector<1x16x16x32xf32> to vector<16x16x32xf32>
    %106 = vector.shape_cast %103 : vector<16x16x32xf32> to vector<1x16x16x32xf32>
    tpu.vector_store %arg13[%c0_58, %c1_59, %c1_60, %c0_61], %106 {strides = array<i32>} : memref<1x18x18x32xf32, #tpu.memory_space<vmem>>, vector<1x16x16x32xf32>,
    %c0_62 = arith.constant 0 : index
    %c0_63 = arith.constant 0 : index
    %c0_64 = arith.constant 0 : index
    %c0_65 = arith.constant 0 : index
    %107 = vector.load %arg13[%c0_62, %c0_63, %c0_64, %c0_65] : memref<1x18x18x32xf32, #tpu.memory_space<vmem>>, vector<1x18x16x32xf32>
    %108 = vector.shape_cast %107 : vector<1x18x16x32xf32> to vector<18x16x32xf32>
    %c0_66 = arith.constant 0 : index
    %c0_67 = arith.constant 0 : index
    %c1_68 = arith.constant 1 : index
    %c0_69 = arith.constant 0 : index
    %109 = vector.load %arg13[%c0_66, %c0_67, %c1_68, %c0_69] : memref<1x18x18x32xf32, #tpu.memory_space<vmem>>, vector<1x18x16x32xf32>
    %110 = vector.shape_cast %109 : vector<1x18x16x32xf32> to vector<18x16x32xf32>
    %c0_70 = arith.constant 0 : index
    %c0_71 = arith.constant 0 : index
    %c2_72 = arith.constant 2 : index
    %c0_73 = arith.constant 0 : index
    %111 = vector.load %arg13[%c0_70, %c0_71, %c2_72, %c0_73] : memref<1x18x18x32xf32, #tpu.memory_space<vmem>>, vector<1x18x16x32xf32>
    %112 = vector.shape_cast %111 : vector<1x18x16x32xf32> to vector<18x16x32xf32>
    %113 = vector.extract_strided_slice %108 {offsets = [0, 0, 0], sizes = [16, 16, 32], strides = [1, 1, 1]} : vector<18x16x32xf32> to vector<16x16x32xf32>
    %114 = vector.shape_cast %113 : vector<16x16x32xf32> to vector<256x32xf32>
    %115 = arith.truncf %114 : vector<256x32xf32> to vector<256x32xbf16>
    %116 = vector.extract_strided_slice %110 {offsets = [0, 0, 0], sizes = [16, 16, 32], strides = [1, 1, 1]} : vector<18x16x32xf32> to vector<16x16x32xf32>
    %117 = vector.shape_cast %116 : vector<16x16x32xf32> to vector<256x32xf32>
    %118 = arith.truncf %117 : vector<256x32xf32> to vector<256x32xbf16>
    %119 = vector.extract_strided_slice %112 {offsets = [0, 0, 0], sizes = [16, 16, 32], strides = [1, 1, 1]} : vector<18x16x32xf32> to vector<16x16x32xf32>
    %120 = vector.shape_cast %119 : vector<16x16x32xf32> to vector<256x32xf32>
    %121 = arith.truncf %120 : vector<256x32xf32> to vector<256x32xbf16>
    %122 = vector.extract_strided_slice %108 {offsets = [1, 0, 0], sizes = [16, 16, 32], strides = [1, 1, 1]} : vector<18x16x32xf32> to vector<16x16x32xf32>
    %123 = vector.shape_cast %122 : vector<16x16x32xf32> to vector<256x32xf32>
    %124 = arith.truncf %123 : vector<256x32xf32> to vector<256x32xbf16>
    %125 = vector.extract_strided_slice %110 {offsets = [1, 0, 0], sizes = [16, 16, 32], strides = [1, 1, 1]} : vector<18x16x32xf32> to vector<16x16x32xf32>
    %126 = vector.shape_cast %125 : vector<16x16x32xf32> to vector<256x32xf32>
    %127 = arith.truncf %126 : vector<256x32xf32> to vector<256x32xbf16>
    %128 = vector.extract_strided_slice %112 {offsets = [1, 0, 0], sizes = [16, 16, 32], strides = [1, 1, 1]} : vector<18x16x32xf32> to vector<16x16x32xf32>
    %129 = vector.shape_cast %128 : vector<16x16x32xf32> to vector<256x32xf32>
    %130 = arith.truncf %129 : vector<256x32xf32> to vector<256x32xbf16>
    %131 = vector.extract_strided_slice %108 {offsets = [2, 0, 0], sizes = [16, 16, 32], strides = [1, 1, 1]} : vector<18x16x32xf32> to vector<16x16x32xf32>
    %132 = vector.shape_cast %131 : vector<16x16x32xf32> to vector<256x32xf32>
    %133 = arith.truncf %132 : vector<256x32xf32> to vector<256x32xbf16>
    %134 = vector.extract_strided_slice %110 {offsets = [2, 0, 0], sizes = [16, 16, 32], strides = [1, 1, 1]} : vector<18x16x32xf32> to vector<16x16x32xf32>
    %135 = vector.shape_cast %134 : vector<16x16x32xf32> to vector<256x32xf32>
    %136 = arith.truncf %135 : vector<256x32xf32> to vector<256x32xbf16>
    %137 = vector.extract_strided_slice %112 {offsets = [2, 0, 0], sizes = [16, 16, 32], strides = [1, 1, 1]} : vector<18x16x32xf32> to vector<16x16x32xf32>
    %138 = vector.shape_cast %137 : vector<16x16x32xf32> to vector<256x32xf32>
    %139 = arith.truncf %138 : vector<256x32xf32> to vector<256x32xbf16>
    %140 = tpu.concatenate %115, %118, %121, %124, %127, %130, %133, %136, %139 in 1 : vector<256x32xbf16>, vector<256x32xbf16>, vector<256x32xbf16>, vector<256x32xbf16>, vector<256x32xbf16>, vector<256x32xbf16>, vector<256x32xbf16>, vector<256x32xbf16>, vector<256x32xbf16> -> vector<256x288xbf16>
    %c0_74 = arith.constant 0 : index
    %c0_75 = arith.constant 0 : index
    %141 = vector.load %arg8[%c0_74, %c0_75] : memref<288x12xbf16, #tpu.memory_space<vmem>>, vector<288x12xbf16>
    %cst_76 = arith.constant dense<0.000000e+00> : vector<256x12xf32>
    %142 = tpu.matmul %140, %141, %cst_76 {dimension_numbers = #tpu.dot_dimension_numbers<[1], [0], [0], [1], [0, 0, 1, 1], [], []>} : vector<256x288xbf16>, vector<288x12xbf16>, vector<256x12xf32> -> vector<256x12xf32>
    %c0_77 = arith.constant 0 : index
    %c0_78 = arith.constant 0 : index
    %143 = vector.load %arg9[%c0_77, %c0_78] : memref<1x12xf32, #tpu.memory_space<vmem>>, vector<1x12xf32>
    %144 = vector.broadcast %143 : vector<1x12xf32> to vector<256x12xf32>
    %145 = arith.addf %142, %144 : vector<256x12xf32>
    %cst_79 = arith.constant 0.000000e+00 : f32
    %146 = vector.broadcast %cst_79 : f32 to vector<256x12xf32>
    %147 = arith.cmpf ogt, %145, %146 : vector<256x12xf32>
    %c0_80 = arith.constant 0 : index
    %c0_81 = arith.constant 0 : index
    %148 = vector.load %arg10[%c0_80, %c0_81] : memref<1x12xf32, #tpu.memory_space<vmem>>, vector<1x12xf32>
    %149 = vector.broadcast %148 : vector<1x12xf32> to vector<256x12xf32>
    %150 = arith.mulf %149, %145 : vector<256x12xf32>
    %151 = arith.select %147, %145, %150 : vector<256x12xi1>, vector<256x12xf32>
    %c0_82 = arith.constant 0 : index
    %c0_83 = arith.constant 0 : index
    %c0_84 = arith.constant 0 : index
    %152 = vector.load %arg11[%c0_82, %c0_83, %c0_84] : memref<1x256x12xf32, #tpu.memory_space<vmem>>, vector<1x256x12xf32>
    %153 = vector.shape_cast %152 : vector<1x256x12xf32> to vector<256x12xf32>
    %154 = vector.shape_cast %151 : vector<256x12xf32> to vector<1x256x12xf32>
    tpu.vector_store %arg11[%c0_82, %c0_83, %c0_84], %154 {strides = array<i32>} : memref<1x256x12xf32, #tpu.memory_space<vmem>>, vector<1x256x12xf32>,
    return
  }
  func.func @transform_0(%arg0: i32) -> (i32, i32, i32, i32) {
    %c0_i32 = arith.constant 0 : i32
    %c0_i32_0 = arith.constant 0 : i32
    %c0_i32_1 = arith.constant 0 : i32
    %c0_i32_2 = arith.constant 0 : i32
    return %arg0, %c0_i32, %c0_i32_0, %c0_i32_1 : i32, i32, i32, i32
  }
  func.func @transform_1(%arg0: i32) -> (i32, i32) {
    %c0_i32 = arith.constant 0 : i32
    %c0_i32_0 = arith.constant 0 : i32
    %c0_i32_1 = arith.constant 0 : i32
    return %c0_i32, %c0_i32_0 : i32, i32
  }
  func.func @transform_2(%arg0: i32) -> (i32, i32) {
    %c0_i32 = arith.constant 0 : i32
    %c0_i32_0 = arith.constant 0 : i32
    %c0_i32_1 = arith.constant 0 : i32
    return %c0_i32, %c0_i32_0 : i32, i32
  }
  func.func @transform_3(%arg0: i32) -> (i32, i32) {
    %c0_i32 = arith.constant 0 : i32
    %c0_i32_0 = arith.constant 0 : i32
    %c0_i32_1 = arith.constant 0 : i32
    return %c0_i32, %c0_i32_0 : i32, i32
  }
  func.func @transform_4(%arg0: i32) -> (i32, i32) {
    %c0_i32 = arith.constant 0 : i32
    %c0_i32_0 = arith.constant 0 : i32
    %c0_i32_1 = arith.constant 0 : i32
    return %c0_i32, %c0_i32_0 : i32, i32
  }
  func.func @transform_5(%arg0: i32) -> (i32, i32) {
    %c0_i32 = arith.constant 0 : i32
    %c0_i32_0 = arith.constant 0 : i32
    %c0_i32_1 = arith.constant 0 : i32
    return %c0_i32, %c0_i32_0 : i32, i32
  }
  func.func @transform_6(%arg0: i32) -> (i32, i32) {
    %c0_i32 = arith.constant 0 : i32
    %c0_i32_0 = arith.constant 0 : i32
    %c0_i32_1 = arith.constant 0 : i32
    return %c0_i32, %c0_i32_0 : i32, i32
  }
  func.func @transform_7(%arg0: i32) -> (i32, i32) {
    %c0_i32 = arith.constant 0 : i32
    %c0_i32_0 = arith.constant 0 : i32
    %c0_i32_1 = arith.constant 0 : i32
    return %c0_i32, %c0_i32_0 : i32, i32
  }
  func.func @transform_8(%arg0: i32) -> (i32, i32) {
    %c0_i32 = arith.constant 0 : i32
    %c0_i32_0 = arith.constant 0 : i32
    %c0_i32_1 = arith.constant 0 : i32
    return %c0_i32, %c0_i32_0 : i32, i32
  }
  func.func @transform_9(%arg0: i32) -> (i32, i32) {
    %c0_i32 = arith.constant 0 : i32
    %c0_i32_0 = arith.constant 0 : i32
    %c0_i32_1 = arith.constant 0 : i32
    return %c0_i32, %c0_i32_0 : i32, i32
  }
  func.func @transform_10(%arg0: i32) -> (i32, i32, i32) {
    %c0_i32 = arith.constant 0 : i32
    %c0_i32_0 = arith.constant 0 : i32
    %c0_i32_1 = arith.constant 0 : i32
    return %arg0, %c0_i32, %c0_i32_0 : i32, i32, i32
  }
}

</mosaic_0001>

<llo_original>
// kernel: ema_backbone_forward.2
$region0: #{ema_backbone_forward.2}
  #allocation0 [shape = 'u32[]', space=smem, size = 0x4, offset = 0x4, fixed_abs, tag = 'smem constant byte address 0x4 - core index']
  #allocation1 [shape = 'u32[144,128]{1,0:T(1,128)}', space=vmem, size = 0x12000, scoped, tag = 'internal scratch']
  #allocation2 [shape = 'f32[1,18,18,9]{3,2,1,0:T(8,128)}', space=vmem, size = 0x36000, scoped, tag = 'scratch operand']
  #allocation3 [shape = 'f32[1,18,18,32]{3,2,1,0:T(8,128)}', space=vmem, size = 0x36000, scoped, tag = 'scratch operand']
  %s0 = inlined_call_operand.vmem [shape: f32[2,16,16,9], index: 0, kind: input, shape index: {}]
  %s1 = inlined_call_operand.vmem [shape: bf16[81,32], index: 1, kind: input, shape index: {}]
  %s2 = inlined_call_operand.vmem [shape: f32[1,32], index: 2, kind: input, shape index: {}]
  %s3 = inlined_call_operand.vmem [shape: f32[1,32], index: 3, kind: input, shape index: {}, may-alias: {3,6}]
  %s4 = inlined_call_operand.vmem [shape: bf16[288,32], index: 4, kind: input, shape index: {}]
  %s5 = inlined_call_operand.vmem [shape: f32[1,32], index: 5, kind: input, shape index: {}]
  %s6 = inlined_call_operand.vmem [shape: f32[1,32], index: 6, kind: input, shape index: {}, may-alias: {3,6}]
  %s7 = inlined_call_operand.vmem [shape: bf16[288,12], index: 7, kind: input, shape index: {}]
  %s8 = inlined_call_operand.vmem [shape: f32[1,12], index: 8, kind: input, shape index: {}]
  %s9 = inlined_call_operand.vmem [shape: f32[1,12], index: 9, kind: input, shape index: {}]
  %s10 = inlined_call_operand.vmem [shape: f32[2,256,12], index: 10, kind: output, shape index: {}]
  %s11 = sld [smem:[#allocation0]]
  $region73: #{ema_backbone_forward.2} parent=0
    _
  %s13 = ssub.s32 1, %s11
  %s14 = scalar_select 0, %s13, %s11
  loop: start=0, step=1, limit=4
  $region2: #{ema_backbone_forward.2} parent=0 // loop_pre_header
    _
  $region3: #{ema_backbone_forward.2} parent=0 // loop_header
    %s16 = sphi 0, %s20
    %p17 = scmp.ge.s32.totalorder %s16, 4
    %s26 = sphi 0, %s28
    %s29 = sphi 0, %s26
    %s30 = sphi 0, %s29
    %s46 = sphi 0, %s30
    %s50 = sphi 0, %s50
    %s52 = sphi 0, %s50
    %s53 = sphi 0, %s52
    %s67 = sphi 0, %s53
    %s71 = sphi 0, %s71
    %s73 = sphi 0, %s71
    %s74 = sphi 0, %s73
    %s88 = sphi 0, %s74
    %s92 = sphi 0, %s92
    %s94 = sphi 0, %s92
    %s95 = sphi 0, %s94
    %s109 = sphi 0, %s95
    %s113 = sphi 0, %s113
    %s115 = sphi 0, %s113
    %s116 = sphi 0, %s115
    %s130 = sphi 0, %s116
    %s134 = sphi 0, %s134
    %s136 = sphi 0, %s134
    %s137 = sphi 0, %s136
    %s151 = sphi 0, %s137
    %s155 = sphi 0, %s155
    %s157 = sphi 0, %s155
    %s158 = sphi 0, %s157
    %s172 = sphi 0, %s158
    %s176 = sphi 0, %s176
    %s178 = sphi 0, %s176
    %s179 = sphi 0, %s178
    %s193 = sphi 0, %s179
    %s197 = sphi 0, %s197
    %s199 = sphi 0, %s197
    %s200 = sphi 0, %s199
    %s214 = sphi 0, %s200
    %s218 = sphi 0, %s218
    %s220 = sphi 0, %s218
    %s221 = sphi 0, %s220
    %s235 = sphi 0, %s221
    %s241 = sphi 0, %s243
    %s244 = sphi 0, %s241
    %s245 = sphi 0, %s244
    %s261 = sphi 0, %s245
  $region4: #{ema_backbone_forward.2} parent=0 // loop_header_branch
    %19 = sbr.rel (%p17) target = $region8
  $region5: #{ema_backbone_forward.2} parent=0 // loop_body
    %s21 = ssub.s32 %s16, 1
    %s22 = ssub.s32 %s16, 2
    %s23 = sadd.s32 %s16, 1
    %s24 = ssub.s32 %s16, %s23
    %p25 = scmp.eq.s32.totalorder %s24, 0
    %s27 = sadd.s32 %s26, 1
    %s28 = scalar_select %p25, %s26, %s27
    %p31 = pneg %p25
    %p32 = scmp.eq.s32.totalorder %s16, 1
    %p33 = por %p31, %p32
    %p34 = scmp.ne.s32.totalorder %s26, %s29
    %p35 = scmp.eq.s32.totalorder %s16, 0
    %p36 = por %p34, %p35
    %p37 = scmp.ne.s32.totalorder %s26, %s29
    %p38 = scmp.eq.s32.totalorder %s21, 1
    %p39 = por %p37, %p38
    %p40 = scmp.ne.s32.totalorder %s29, %s30
    %p41 = scmp.eq.s32.totalorder %s21, 0
    %p42 = por %p40, %p41
    %p43 = scmp.ne.s32.totalorder %s29, %s30
    %p44 = scmp.eq.s32.totalorder %s22, 1
    %p45 = por %p43, %p44
    %p47 = scmp.ne.s32.totalorder %s30, %s46
    %p48 = scmp.eq.s32.totalorder %s22, 0
    %p49 = por %p47, %p48
    %s51 = sadd.s32 %s50, 1
    %p54 = scmp.eq.s32.totalorder %s16, 1
    %p55 = scmp.ne.s32.totalorder %s50, %s52
    %p56 = scmp.eq.s32.totalorder %s16, 0
    %p57 = por %p55, %p56
    %p58 = scmp.ne.s32.totalorder %s50, %s52
    %p59 = scmp.eq.s32.totalorder %s21, 1
    %p60 = por %p58, %p59
    %p61 = scmp.ne.s32.totalorder %s52, %s53
    %p62 = scmp.eq.s32.totalorder %s21, 0
    %p63 = por %p61, %p62
    %p64 = scmp.ne.s32.totalorder %s52, %s53
    %p65 = scmp.eq.s32.totalorder %s22, 1
    %p66 = por %p64, %p65
    %p68 = scmp.ne.s32.totalorder %s53, %s67
    %p69 = scmp.eq.s32.totalorder %s22, 0
    %p70 = por %p68, %p69
    %s72 = sadd.s32 %s71, 1
    %p75 = scmp.eq.s32.totalorder %s16, 1
    %p76 = scmp.ne.s32.totalorder %s71, %s73
    %p77 = scmp.eq.s32.totalorder %s16, 0
    %p78 = por %p76, %p77
    %p79 = scmp.ne.s32.totalorder %s71, %s73
    %p80 = scmp.eq.s32.totalorder %s21, 1
    %p81 = por %p79, %p80
    %p82 = scmp.ne.s32.totalorder %s73, %s74
    %p83 = scmp.eq.s32.totalorder %s21, 0
    %p84 = por %p82, %p83
    %p85 = scmp.ne.s32.totalorder %s73, %s74
    %p86 = scmp.eq.s32.totalorder %s22, 1
    %p87 = por %p85, %p86
    %p89 = scmp.ne.s32.totalorder %s74, %s88
    %p90 = scmp.eq.s32.totalorder %s22, 0
    %p91 = por %p89, %p90
    %s93 = sadd.s32 %s92, 1
    %p96 = scmp.eq.s32.totalorder %s16, 1
    %p97 = scmp.ne.s32.totalorder %s92, %s94
    %p98 = scmp.eq.s32.totalorder %s16, 0
    %p99 = por %p97, %p98
    %p100 = scmp.ne.s32.totalorder %s92, %s94
    %p101 = scmp.eq.s32.totalorder %s21, 1
    %p102 = por %p100, %p101
    %p103 = scmp.ne.s32.totalorder %s94, %s95
    %p104 = scmp.eq.s32.totalorder %s21, 0
    %p105 = por %p103, %p104
    %p106 = scmp.ne.s32.totalorder %s94, %s95
    %p107 = scmp.eq.s32.totalorder %s22, 1
    %p108 = por %p106, %p107
    %p110 = scmp.ne.s32.totalorder %s95, %s109
    %p111 = scmp.eq.s32.totalorder %s22, 0
    %p112 = por %p110, %p111
    %s114 = sadd.s32 %s113, 1
    %p117 = scmp.eq.s32.totalorder %s16, 1
    %p118 = scmp.ne.s32.totalorder %s113, %s115
    %p119 = scmp.eq.s32.totalorder %s16, 0
    %p120 = por %p118, %p119
    %p121 = scmp.ne.s32.totalorder %s113, %s115
    %p122 = scmp.eq.s32.totalorder %s21, 1
    %p123 = por %p121, %p122
    %p124 = scmp.ne.s32.totalorder %s115, %s116
    %p125 = scmp.eq.s32.totalorder %s21, 0
    %p126 = por %p124, %p125
    %p127 = scmp.ne.s32.totalorder %s115, %s116
    %p128 = scmp.eq.s32.totalorder %s22, 1
    %p129 = por %p127, %p128
    %p131 = scmp.ne.s32.totalorder %s116, %s130
    %p132 = scmp.eq.s32.totalorder %s22, 0
    %p133 = por %p131, %p132
    %s135 = sadd.s32 %s134, 1
    %p138 = scmp.eq.s32.totalorder %s16, 1
    %p139 = scmp.ne.s32.totalorder %s134, %s136
    %p140 = scmp.eq.s32.totalorder %s16, 0
    %p141 = por %p139, %p140
    %p142 = scmp.ne.s32.totalorder %s134, %s136
    %p143 = scmp.eq.s32.totalorder %s21, 1
    %p144 = por %p142, %p143
    %p145 = scmp.ne.s32.totalorder %s136, %s137
    %p146 = scmp.eq.s32.totalorder %s21, 0
    %p147 = por %p145, %p146
    %p148 = scmp.ne.s32.totalorder %s136, %s137
    %p149 = scmp.eq.s32.totalorder %s22, 1
    %p150 = por %p148, %p149
    %p152 = scmp.ne.s32.totalorder %s137, %s151
    %p153 = scmp.eq.s32.totalorder %s22, 0
    %p154 = por %p152, %p153
    %s156 = sadd.s32 %s155, 1
    %p159 = scmp.eq.s32.totalorder %s16, 1
    %p160 = scmp.ne.s32.totalorder %s155, %s157
    %p161 = scmp.eq.s32.totalorder %s16, 0
    %p162 = por %p160, %p161
    %p163 = scmp.ne.s32.totalorder %s155, %s157
    %p164 = scmp.eq.s32.totalorder %s21, 1
    %p165 = por %p163, %p164
    %p166 = scmp.ne.s32.totalorder %s157, %s158
    %p167 = scmp.eq.s32.totalorder %s21, 0
    %p168 = por %p166, %p167
    %p169 = scmp.ne.s32.totalorder %s157, %s158
    %p170 = scmp.eq.s32.totalorder %s22, 1
    %p171 = por %p169, %p170
    %p173 = scmp.ne.s32.totalorder %s158, %s172
    %p174 = scmp.eq.s32.totalorder %s22, 0
    %p175 = por %p173, %p174
    %s177 = sadd.s32 %s176, 1
    %p180 = scmp.eq.s32.totalorder %s16, 1
    %p181 = scmp.ne.s32.totalorder %s176, %s178
    %p182 = scmp.eq.s32.totalorder %s16, 0
    %p183 = por %p181, %p182
    %p184 = scmp.ne.s32.totalorder %s176, %s178
    %p185 = scmp.eq.s32.totalorder %s21, 1
    %p186 = por %p184, %p185
    %p187 = scmp.ne.s32.totalorder %s178, %s179
    %p188 = scmp.eq.s32.totalorder %s21, 0
    %p189 = por %p187, %p188
    %p190 = scmp.ne.s32.totalorder %s178, %s179
    %p191 = scmp.eq.s32.totalorder %s22, 1
    %p192 = por %p190, %p191
    %p194 = scmp.ne.s32.totalorder %s179, %s193
    %p195 = scmp.eq.s32.totalorder %s22, 0
    %p196 = por %p194, %p195
    %s198 = sadd.s32 %s197, 1
    %p201 = scmp.eq.s32.totalorder %s16, 1
    %p202 = scmp.ne.s32.totalorder %s197, %s199
    %p203 = scmp.eq.s32.totalorder %s16, 0
    %p204 = por %p202, %p203
    %p205 = scmp.ne.s32.totalorder %s197, %s199
    %p206 = scmp.eq.s32.totalorder %s21, 1
    %p207 = por %p205, %p206
    %p208 = scmp.ne.s32.totalorder %s199, %s200
    %p209 = scmp.eq.s32.totalorder %s21, 0
    %p210 = por %p208, %p209
    %p211 = scmp.ne.s32.totalorder %s199, %s200
    %p212 = scmp.eq.s32.totalorder %s22, 1
    %p213 = por %p211, %p212
    %p215 = scmp.ne.s32.totalorder %s200, %s214
    %p216 = scmp.eq.s32.totalorder %s22, 0
    %p217 = por %p215, %p216
    %s219 = sadd.s32 %s218, 1
    %p222 = scmp.eq.s32.totalorder %s16, 1
    %p223 = scmp.ne.s32.totalorder %s218, %s220
    %p224 = scmp.eq.s32.totalorder %s16, 0
    %p225 = por %p223, %p224
    %p226 = scmp.ne.s32.totalorder %s218, %s220
    %p227 = scmp.eq.s32.totalorder %s21, 1
    %p228 = por %p226, %p227
    %p229 = scmp.ne.s32.totalorder %s220, %s221
    %p230 = scmp.eq.s32.totalorder %s21, 0
    %p231 = por %p229, %p230
    %p232 = scmp.ne.s32.totalorder %s220, %s221
    %p233 = scmp.eq.s32.totalorder %s22, 1
    %p234 = por %p232, %p233
    %p236 = scmp.ne.s32.totalorder %s221, %s235
    %p237 = scmp.eq.s32.totalorder %s22, 0
    %p238 = por %p236, %p237
    %s239 = ssub.s32 %s16, %s23
    %p240 = scmp.eq.s32.totalorder %s239, 0
    %s242 = sadd.s32 %s241, 1
    %s243 = scalar_select %p240, %s241, %s242
    %p246 = pneg %p240
    %p247 = scmp.eq.s32.totalorder %s16, 1
    %p248 = por %p246, %p247
    %p249 = scmp.ne.s32.totalorder %s241, %s244
    %p250 = scmp.eq.s32.totalorder %s16, 0
    %p251 = por %p249, %p250
    %p252 = scmp.ne.s32.totalorder %s241, %s244
    %p253 = scmp.eq.s32.totalorder %s21, 1
    %p254 = por %p252, %p253
    %p255 = scmp.ne.s32.totalorder %s244, %s245
    %p256 = scmp.eq.s32.totalorder %s21, 0
    %p257 = por %p255, %p256
    %p258 = scmp.ne.s32.totalorder %s244, %s245
    %p259 = scmp.eq.s32.totalorder %s22, 1
    %p260 = por %p258, %p259
    %p262 = scmp.ne.s32.totalorder %s245, %s261
    %p263 = scmp.eq.s32.totalorder %s22, 0
    %p264 = por %p262, %p263
    %p265 = scmp.le.s32.totalorder 1, %s16
    %p266 = scmp.lt.s32.totalorder %s16, 3
    %p267 = pnand %p265, %p266
    %p268 = pneg %p267
    // Predicated region
    $region9: #{ema_backbone_forward.2} parent=5 // pred_check
      _
    $region10: #{ema_backbone_forward.2} parent=5 // pred_check_branch
      %270 = sbr.rel (%p267) target = $region12
    $region11: #{ema_backbone_forward.2} parent=5 // pred_region
      %s271 = ssub.s32 %s16, 1
      // Predicated region
      $region13: #{ema_backbone_forward.2} parent=11 // pred_check
        %p272 = pneg %p63
      $region14: #{ema_backbone_forward.2} parent=11 // pred_check_branch
        %274 = sbr.rel (%p272) target = $region16
      $region15: #{ema_backbone_forward.2} parent=11 // pred_region
        _
      $region16: #{ema_backbone_forward.2} parent=11 // pred_fallthru
        _
      // Predicated region
      $region17: #{ema_backbone_forward.2} parent=11 // pred_check
        %p275 = pneg %p84
      $region18: #{ema_backbone_forward.2} parent=11 // pred_check_branch
        %277 = sbr.rel (%p275) target = $region20
      $region19: #{ema_backbone_forward.2} parent=11 // pred_region
        _
      $region20: #{ema_backbone_forward.2} parent=11 // pred_fallthru
        _
      // Predicated region
      $region21: #{ema_backbone_forward.2} parent=11 // pred_check
        %p278 = pneg %p105
      $region22: #{ema_backbone_forward.2} parent=11 // pred_check_branch
        %280 = sbr.rel (%p278) target = $region24
      $region23: #{ema_backbone_forward.2} parent=11 // pred_region
        _
      $region24: #{ema_backbone_forward.2} parent=11 // pred_fallthru
        _
      // Predicated region
      $region25: #{ema_backbone_forward.2} parent=11 // pred_check
        %p281 = pneg %p126
      $region26: #{ema_backbone_forward.2} parent=11 // pred_check_branch
        %283 = sbr.rel (%p281) target = $region28
      $region27: #{ema_backbone_forward.2} parent=11 // pred_region
        _
      $region28: #{ema_backbone_forward.2} parent=11 // pred_fallthru
        _
      // Predicated region
      $region29: #{ema_backbone_forward.2} parent=11 // pred_check
        %p284 = pneg %p147
      $region30: #{ema_backbone_forward.2} parent=11 // pred_check_branch
        %286 = sbr.rel (%p284) target = $region32
      $region31: #{ema_backbone_forward.2} parent=11 // pred_region
        _
      $region32: #{ema_backbone_forward.2} parent=11 // pred_fallthru
        _
      // Predicated region
      $region33: #{ema_backbone_forward.2} parent=11 // pred_check
        %p287 = pneg %p168
      $region34: #{ema_backbone_forward.2} parent=11 // pred_check_branch
        %289 = sbr.rel (%p287) target = $region36
      $region35: #{ema_backbone_forward.2} parent=11 // pred_region
        _
      $region36: #{ema_backbone_forward.2} parent=11 // pred_fallthru
        _
      // Predicated region
      $region37: #{ema_backbone_forward.2} parent=11 // pred_check
        %p290 = pneg %p189
      $region38: #{ema_backbone_forward.2} parent=11 // pred_check_branch
        %292 = sbr.rel (%p290) target = $region40
      $region39: #{ema_backbone_forward.2} parent=11 // pred_region
        _
      $region40: #{ema_backbone_forward.2} parent=11 // pred_fallthru
        _
      // Predicated region
      $region41: #{ema_backbone_forward.2} parent=11 // pred_check
        %p293 = pneg %p210
      $region42: #{ema_backbone_forward.2} parent=11 // pred_check_branch
        %295 = sbr.rel (%p293) target = $region44
      $region43: #{ema_backbone_forward.2} parent=11 // pred_region
        _
      $region44: #{ema_backbone_forward.2} parent=11 // pred_fallthru
        _
      // Predicated region
      $region45: #{ema_backbone_forward.2} parent=11 // pred_check
        %p296 = pneg %p231
      $region46: #{ema_backbone_forward.2} parent=11 // pred_check_branch
        %298 = sbr.rel (%p296) target = $region48
      $region47: #{ema_backbone_forward.2} parent=11 // pred_region
        _
      $region48: #{ema_backbone_forward.2} parent=11 // pred_fallthru
        _
    $region12: #{ema_backbone_forward.2} parent=5 // pred_fallthru
      _
    %p299 = scmp.lt.s32.totalorder %s16, 2
    // Predicated region
    $region49: #{ema_backbone_forward.2} parent=5 // pred_check
      %p300 = pneg %p299
    $region50: #{ema_backbone_forward.2} parent=5 // pred_check_branch
      %302 = sbr.rel (%p300) target = $region52
    $region51: #{ema_backbone_forward.2} parent=5 // pred_region
      // Predicated region
      $region53: #{ema_backbone_forward.2} parent=51 // pred_check
        %p303 = pneg %p36
      $region54: #{ema_backbone_forward.2} parent=51 // pred_check_branch
        %305 = sbr.rel (%p303) target = $region56
      $region55: #{ema_backbone_forward.2} parent=51 // pred_region
        %p306 = scmp.lt.s32.totalorder %s16, 1
        %s307 = scalar_select %p306, %s16, 1
        %s308 = smul.addr %s307, 32
        %s309 = smul.addr %s308, 8
        %s310 = scalar_lea.vmem %s0, %s309
      $region56: #{ema_backbone_forward.2} parent=51 // pred_fallthru
        _
    $region52: #{ema_backbone_forward.2} parent=5 // pred_fallthru
      _
    %p311 = scmp.le.s32.totalorder 1, %s16
    %p312 = scmp.lt.s32.totalorder %s16, 3
    %p313 = pnand %p311, %p312
    %p314 = pneg %p313
    // Predicated region
    $region57: #{ema_backbone_forward.2} parent=5 // pred_check
      _
    $region58: #{ema_backbone_forward.2} parent=5 // pred_check_branch
      %316 = sbr.rel (%p313) target = $region60
    $region59: #{ema_backbone_forward.2} parent=5 // pred_region
      %s317 = ssub.s32 %s16, 1
      %p318 = scmp.lt.s32.totalorder %s21, 1
      %s319 = scalar_select %p318, %s21, 1
      %s320 = smul.addr %s319, 32
      %s321 = smul.addr %s320, 8
      %s322 = scalar_lea.vmem %s0, %s321
      %p323 = pneg %p42
      %p324 = pneg %p39
      %p325 = pneg %p63
      %p326 = pneg %p60
      %p327 = pneg %p84
      %p328 = pneg %p81
      %p329 = pneg %p105
      %p330 = pneg %p102
      %p331 = pneg %p126
      %p332 = pneg %p123
      %p333 = pneg %p147
      %p334 = pneg %p144
      %p335 = pneg %p168
      %p336 = pneg %p165
      %p337 = pneg %p189
      %p338 = pneg %p186
      %p339 = pneg %p210
      %p340 = pneg %p207
      %p341 = pneg %p231
      %p342 = pneg %p228
      %p343 = pneg %p257
      %p344 = pneg %p254
      %p345 = scmp.lt.s32.totalorder %s21, 1
      %s346 = scalar_select %p345, %s21, 1
      %s347 = smul.addr %s346, 32
      %s348 = smul.addr %s347, 8
      %s349 = scalar_lea.vmem %s10, %s348
      %p350 = scmp.lt.s32.totalorder %s21, 1
      %s351 = scalar_select %p350, %s21, 1
      %s352 = smul.addr %s351, 32
      %s353 = smul.addr %s352, 8
      %s354 = scalar_lea.vmem %s0, %s353
      %p355 = scmp.lt.s32.totalorder %s21, 1
      %s356 = scalar_select %p355, %s21, 1
      %s357 = smul.addr %s356, 32
      %s358 = smul.addr %s357, 8
      %s359 = scalar_lea.vmem %s10, %s358
      %vm361 = vcmask 72704
      %362 = vst.msk [vmem:[#allocation2] sm:$0xff] %vm361, 0.0
      %363 = vst.msk [vmem:[#allocation2 + $0x8] sm:$0xff] %vm361, 0.0
      %vm364 = vcmask 66560
      %365 = vst.msk [vmem:[#allocation2 + $0x10] sm:$0x3] %vm364, 0.0
      %366 = vst.msk [vmem:[#allocation2 + $0x18] sm:$0xff] %vm361, 0.0
      %367 = vst.msk [vmem:[#allocation2 + $0x20] sm:$0xff] %vm361, 0.0
      %368 = vst.msk [vmem:[#allocation2 + $0x28] sm:$0x3] %vm364, 0.0
      %369 = vst.msk [vmem:[#allocation2 + $0x30] sm:$0xff] %vm361, 0.0
      %370 = vst.msk [vmem:[#allocation2 + $0x38] sm:$0xff] %vm361, 0.0
      %371 = vst.msk [vmem:[#allocation2 + $0x40] sm:$0x3] %vm364, 0.0
      %372 = vst.msk [vmem:[#allocation2 + $0x48] sm:$0xff] %vm361, 0.0
      %373 = vst.msk [vmem:[#allocation2 + $0x50] sm:$0xff] %vm361, 0.0
      %374 = vst.msk [vmem:[#allocation2 + $0x58] sm:$0x3] %vm364, 0.0
      %375 = vst.msk [vmem:[#allocation2 + $0x60] sm:$0xff] %vm361, 0.0
      %376 = vst.msk [vmem:[#allocation2 + $0x68] sm:$0xff] %vm361, 0.0
      %377 = vst.msk [vmem:[#allocation2 + $0x70] sm:$0x3] %vm364, 0.0
      %378 = vst.msk [vmem:[#allocation2 + $0x78] sm:$0xff] %vm361, 0.0
      %379 = vst.msk [vmem:[#allocation2 + $0x80] sm:$0xff] %vm361, 0.0
      %380 = vst.msk [vmem:[#allocation2 + $0x88] sm:$0x3] %vm364, 0.0
      %381 = vst.msk [vmem:[#allocation2 + $0x90] sm:$0xff] %vm361, 0.0
      %382 = vst.msk [vmem:[#allocation2 + $0x98] sm:$0xff] %vm361, 0.0
      %383 = vst.msk [vmem:[#allocation2 + $0xa0] sm:$0x3] %vm364, 0.0
      %384 = vst.msk [vmem:[#allocation2 + $0xa8] sm:$0xff] %vm361, 0.0
      %385 = vst.msk [vmem:[#allocation2 + $0xb0] sm:$0xff] %vm361, 0.0
      %386 = vst.msk [vmem:[#allocation2 + $0xb8] sm:$0x3] %vm364, 0.0
      %387 = vst.msk [vmem:[#allocation2 + $0xc0] sm:$0xff] %vm361, 0.0
      %388 = vst.msk [vmem:[#allocation2 + $0xc8] sm:$0xff] %vm361, 0.0
      %389 = vst.msk [vmem:[#allocation2 + $0xd0] sm:$0x3] %vm364, 0.0
      %390 = vst.msk [vmem:[#allocation2 + $0xd8] sm:$0xff] %vm361, 0.0
      %391 = vst.msk [vmem:[#allocation2 + $0xe0] sm:$0xff] %vm361, 0.0
      %392 = vst.msk [vmem:[#allocation2 + $0xe8] sm:$0x3] %vm364, 0.0
      %393 = vst.msk [vmem:[#allocation2 + $0xf0] sm:$0xff] %vm361, 0.0
      %394 = vst.msk [vmem:[#allocation2 + $0xf8] sm:$0xff] %vm361, 0.0
      %395 = vst.msk [vmem:[#allocation2 + $0x100] sm:$0x3] %vm364, 0.0
      %396 = vst.msk [vmem:[#allocation2 + $0x108] sm:$0xff] %vm361, 0.0
      %397 = vst.msk [vmem:[#allocation2 + $0x110] sm:$0xff] %vm361, 0.0
      %398 = vst.msk [vmem:[#allocation2 + $0x118] sm:$0x3] %vm364, 0.0
      %399 = vst.msk [vmem:[#allocation2 + $0x120] sm:$0xff] %vm361, 0.0
      %400 = vst.msk [vmem:[#allocation2 + $0x128] sm:$0xff] %vm361, 0.0
      %401 = vst.msk [vmem:[#allocation2 + $0x130] sm:$0x3] %vm364, 0.0
      %402 = vst.msk [vmem:[#allocation2 + $0x138] sm:$0xff] %vm361, 0.0
      %403 = vst.msk [vmem:[#allocation2 + $0x140] sm:$0xff] %vm361, 0.0
      %404 = vst.msk [vmem:[#allocation2 + $0x148] sm:$0x3] %vm364, 0.0
      %405 = vst.msk [vmem:[#allocation2 + $0x150] sm:$0xff] %vm361, 0.0
      %406 = vst.msk [vmem:[#allocation2 + $0x158] sm:$0xff] %vm361, 0.0
      %407 = vst.msk [vmem:[#allocation2 + $0x160] sm:$0x3] %vm364, 0.0
      %408 = vst.msk [vmem:[#allocation2 + $0x168] sm:$0xff] %vm361, 0.0
      %409 = vst.msk [vmem:[#allocation2 + $0x170] sm:$0xff] %vm361, 0.0
      %410 = vst.msk [vmem:[#allocation2 + $0x178] sm:$0x3] %vm364, 0.0
      %411 = vst.msk [vmem:[#allocation2 + $0x180] sm:$0xff] %vm361, 0.0
      %412 = vst.msk [vmem:[#allocation2 + $0x188] sm:$0xff] %vm361, 0.0
      %413 = vst.msk [vmem:[#allocation2 + $0x190] sm:$0x3] %vm364, 0.0
      %414 = vst.msk [vmem:[#allocation2 + $0x198] sm:$0xff] %vm361, 0.0
      %415 = vst.msk [vmem:[#allocation2 + $0x1a0] sm:$0xff] %vm361, 0.0
      %416 = vst.msk [vmem:[#allocation2 + $0x1a8] sm:$0x3] %vm364, 0.0
      %v417 = vld [vmem:[%s354] sm:$0xff]
      %v418 = vld [vmem:[%s354 + $0x8] sm:$0xff]
      %v419 = vld [vmem:[%s354 + $0x10] sm:$0xff]
      %v420 = vld [vmem:[%s354 + $0x18] sm:$0xff]
      %v421 = vld [vmem:[%s354 + $0x20] sm:$0xff]
      %v422 = vld [vmem:[%s354 + $0x28] sm:$0xff]
      %v423 = vld [vmem:[%s354 + $0x30] sm:$0xff]
      %v424 = vld [vmem:[%s354 + $0x38] sm:$0xff]
      %v425 = vld [vmem:[%s354 + $0x40] sm:$0xff]
      %v426 = vld [vmem:[%s354 + $0x48] sm:$0xff]
      %v427 = vld [vmem:[%s354 + $0x50] sm:$0xff]
      %v428 = vld [vmem:[%s354 + $0x58] sm:$0xff]
      %v429 = vld [vmem:[%s354 + $0x60] sm:$0xff]
      %v430 = vld [vmem:[%s354 + $0x68] sm:$0xff]
      %v431 = vld [vmem:[%s354 + $0x70] sm:$0xff]
      %v432 = vld [vmem:[%s354 + $0x78] sm:$0xff]
      %v433 = vld [vmem:[%s354 + $0x80] sm:$0xff]
      %v434 = vld [vmem:[%s354 + $0x88] sm:$0xff]
      %v435 = vld [vmem:[%s354 + $0x90] sm:$0xff]
      %v436 = vld [vmem:[%s354 + $0x98] sm:$0xff]
      %v437 = vld [vmem:[%s354 + $0xa0] sm:$0xff]
      %v438 = vld [vmem:[%s354 + $0xa8] sm:$0xff]
      %v439 = vld [vmem:[%s354 + $0xb0] sm:$0xff]
      %v440 = vld [vmem:[%s354 + $0xb8] sm:$0xff]
      %v441 = vld [vmem:[%s354 + $0xc0] sm:$0xff]
      %v442 = vld [vmem:[%s354 + $0xc8] sm:$0xff]
      %v443 = vld [vmem:[%s354 + $0xd0] sm:$0xff]
      %v444 = vld [vmem:[%s354 + $0xd8] sm:$0xff]
      %v445 = vld [vmem:[%s354 + $0xe0] sm:$0xff]
      %v446 = vld [vmem:[%s354 + $0xe8] sm:$0xff]
      %v447 = vld [vmem:[%s354 + $0xf0] sm:$0xff]
      %v448 = vld [vmem:[%s354 + $0xf8] sm:$0xff]
      %s449 = scalar_lea.vmem [#allocation2], 24
      %450 = vst.msk [vmem:[%s449 + $0x1] sm:$0xff] %vm361, %v417
      %451 = vst.msk [vmem:[%s449 + $0x9] sm:$0xff] %vm361, %v418
      %452 = vst.msk [vmem:[%s449 + $0x19] sm:$0xff] %vm361, %v419
      %453 = vst.msk [vmem:[%s449 + $0x21] sm:$0xff] %vm361, %v420
      %454 = vst.msk [vmem:[%s449 + $0x31] sm:$0xff] %vm361, %v421
      %455 = vst.msk [vmem:[%s449 + $0x39] sm:$0xff] %vm361, %v422
      %456 = vst.msk [vmem:[%s449 + $0x49] sm:$0xff] %vm361, %v423
      %457 = vst.msk [vmem:[%s449 + $0x51] sm:$0xff] %vm361, %v424
      %458 = vst.msk [vmem:[%s449 + $0x61] sm:$0xff] %vm361, %v425
      %459 = vst.msk [vmem:[%s449 + $0x69] sm:$0xff] %vm361, %v426
      %460 = vst.msk [vmem:[%s449 + $0x79] sm:$0xff] %vm361, %v427
      %461 = vst.msk [vmem:[%s449 + $0x81] sm:$0xff] %vm361, %v428
      %462 = vst.msk [vmem:[%s449 + $0x91] sm:$0xff] %vm361, %v429
      %463 = vst.msk [vmem:[%s449 + $0x99] sm:$0xff] %vm361, %v430
      %464 = vst.msk [vmem:[%s449 + $0xa9] sm:$0xff] %vm361, %v431
      %465 = vst.msk [vmem:[%s449 + $0xb1] sm:$0xff] %vm361, %v432
      %466 = vst.msk [vmem:[%s449 + $0xc1] sm:$0xff] %vm361, %v433
      %467 = vst.msk [vmem:[%s449 + $0xc9] sm:$0xff] %vm361, %v434
      %468 = vst.msk [vmem:[%s449 + $0xd9] sm:$0xff] %vm361, %v435
      %469 = vst.msk [vmem:[%s449 + $0xe1] sm:$0xff] %vm361, %v436
      %470 = vst.msk [vmem:[%s449 + $0xf1] sm:$0xff] %vm361, %v437
      %471 = vst.msk [vmem:[%s449 + $0xf9] sm:$0xff] %vm361, %v438
      %472 = vst.msk [vmem:[%s449 + $0x109] sm:$0xff] %vm361, %v439
      %473 = vst.msk [vmem:[%s449 + $0x111] sm:$0xff] %vm361, %v440
      %474 = vst.msk [vmem:[%s449 + $0x121] sm:$0xff] %vm361, %v441
      %475 = vst.msk [vmem:[%s449 + $0x129] sm:$0xff] %vm361, %v442
      %476 = vst.msk [vmem:[%s449 + $0x139] sm:$0xff] %vm361, %v443
      %477 = vst.msk [vmem:[%s449 + $0x141] sm:$0xff] %vm361, %v444
      %478 = vst.msk [vmem:[%s449 + $0x151] sm:$0xff] %vm361, %v445
      %479 = vst.msk [vmem:[%s449 + $0x159] sm:$0xff] %vm361, %v446
      %480 = vst.msk [vmem:[%s449 + $0x169] sm:$0xff] %vm361, %v447
      %481 = vst.msk [vmem:[%s449 + $0x171] sm:$0xff] %vm361, %v448
      %v482 = vld [vmem:[#allocation2] sm:$0xff]
      %v483 = vld [vmem:[#allocation2 + $0x8] sm:$0xff]
      %v484 = vld [vmem:[#allocation2 + $0x18] sm:$0xff]
      %v485 = vld [vmem:[#allocation2 + $0x20] sm:$0xff]
      %v486 = vld [vmem:[#allocation2 + $0x30] sm:$0xff]
      %v487 = vld [vmem:[#allocation2 + $0x38] sm:$0xff]
      %v488 = vld [vmem:[#allocation2 + $0x48] sm:$0xff]
      %v489 = vld [vmem:[#allocation2 + $0x50] sm:$0xff]
      %v490 = vld [vmem:[#allocation2 + $0x60] sm:$0xff]
      %v491 = vld [vmem:[#allocation2 + $0x68] sm:$0xff]
      %v492 = vld [vmem:[#allocation2 + $0x78] sm:$0xff]
      %v493 = vld [vmem:[#allocation2 + $0x80] sm:$0xff]
      %v494 = vld [vmem:[#allocation2 + $0x90] sm:$0xff]
      %v495 = vld [vmem:[#allocation2 + $0x98] sm:$0xff]
      %v496 = vld [vmem:[#allocation2 + $0xa8] sm:$0xff]
      %v497 = vld [vmem:[#allocation2 + $0xb0] sm:$0xff]
      %v498 = vld [vmem:[#allocation2 + $0xc0] sm:$0xff]
      %v499 = vld [vmem:[#allocation2 + $0xc8] sm:$0xff]
      %v500 = vld [vmem:[#allocation2 + $0xd8] sm:$0xff]
      %v501 = vld [vmem:[#allocation2 + $0xe0] sm:$0xff]
      %v502 = vld [vmem:[#allocation2 + $0xf0] sm:$0xff]
      %v503 = vld [vmem:[#allocation2 + $0xf8] sm:$0xff]
      %v504 = vld [vmem:[#allocation2 + $0x108] sm:$0xff]
      %v505 = vld [vmem:[#allocation2 + $0x110] sm:$0xff]
      %v506 = vld [vmem:[#allocation2 + $0x120] sm:$0xff]
      %v507 = vld [vmem:[#allocation2 + $0x128] sm:$0xff]
      %v508 = vld [vmem:[#allocation2 + $0x138] sm:$0xff]
      %v509 = vld [vmem:[#allocation2 + $0x140] sm:$0xff]
      %v510 = vld [vmem:[#allocation2 + $0x150] sm:$0xff]
      %v511 = vld [vmem:[#allocation2 + $0x158] sm:$0xff]
      %v512 = vld [vmem:[#allocation2 + $0x168] sm:$0xff]
      %v513 = vld [vmem:[#allocation2 + $0x170] sm:$0xff]
      %v514 = vld [vmem:[#allocation2 + $0x180] sm:$0xff]
      %v515 = vld [vmem:[#allocation2 + $0x188] sm:$0xff]
      %v516 = vld [vmem:[#allocation2 + $0x198] sm:$0xff]
      %v517 = vld [vmem:[#allocation2 + $0x1a0] sm:$0xff]
      %v518 = vld [vmem:[#allocation2 + $0x1] sm:$0xff]
      %v519 = vld [vmem:[#allocation2 + $0x9] sm:$0xff]
      %v520 = vld [vmem:[#allocation2 + $0x19] sm:$0xff]
      %v521 = vld [vmem:[#allocation2 + $0x21] sm:$0xff]
      %v522 = vld [vmem:[#allocation2 + $0x31] sm:$0xff]
      %v523 = vld [vmem:[#allocation2 + $0x39] sm:$0xff]
      %v524 = vld [vmem:[#allocation2 + $0x49] sm:$0xff]
      %v525 = vld [vmem:[#allocation2 + $0x51] sm:$0xff]
      %v526 = vld [vmem:[#allocation2 + $0x61] sm:$0xff]
      %v527 = vld [vmem:[#allocation2 + $0x69] sm:$0xff]
      %v528 = vld [vmem:[#allocation2 + $0x79] sm:$0xff]
      %v529 = vld [vmem:[#allocation2 + $0x81] sm:$0xff]
      %v530 = vld [vmem:[#allocation2 + $0x91] sm:$0xff]
      %v531 = vld [vmem:[#allocation2 + $0x99] sm:$0xff]
      %v532 = vld [vmem:[#allocation2 + $0xa9] sm:$0xff]
      %v533 = vld [vmem:[#allocation2 + $0xb1] sm:$0xff]
      %v534 = vld [vmem:[#allocation2 + $0xc1] sm:$0xff]
      %v535 = vld [vmem:[#allocation2 + $0xc9] sm:$0xff]
      %v536 = vld [vmem:[#allocation2 + $0xd9] sm:$0xff]
      %v537 = vld [vmem:[#allocation2 + $0xe1] sm:$0xff]
      %v538 = vld [vmem:[#allocation2 + $0xf1] sm:$0xff]
      %v539 = vld [vmem:[#allocation2 + $0xf9] sm:$0xff]
      %v540 = vld [vmem:[#allocation2 + $0x109] sm:$0xff]
      %v541 = vld [vmem:[#allocation2 + $0x111] sm:$0xff]
      %v542 = vld [vmem:[#allocation2 + $0x121] sm:$0xff]
      %v543 = vld [vmem:[#allocation2 + $0x129] sm:$0xff]
      %v544 = vld [vmem:[#allocation2 + $0x139] sm:$0xff]
      %v545 = vld [vmem:[#allocation2 + $0x141] sm:$0xff]
      %v546 = vld [vmem:[#allocation2 + $0x151] sm:$0xff]
      %v547 = vld [vmem:[#allocation2 + $0x159] sm:$0xff]
      %v548 = vld [vmem:[#allocation2 + $0x169] sm:$0xff]
      %v549 = vld [vmem:[#allocation2 + $0x171] sm:$0xff]
      %v550 = vld [vmem:[#allocation2 + $0x181] sm:$0xff]
      %v551 = vld [vmem:[#allocation2 + $0x189] sm:$0xff]
      %v552 = vld [vmem:[#allocation2 + $0x199] sm:$0xff]
      %v553 = vld [vmem:[#allocation2 + $0x1a1] sm:$0xff]
      %v554 = vld [vmem:[#allocation2 + $0x2] sm:$0xff]
      %v555 = vld [vmem:[#allocation2 + $0xa] sm:$0xff]
      %v556 = vld [vmem:[#allocation2 + $0x1a] sm:$0xff]
      %v557 = vld [vmem:[#allocation2 + $0x22] sm:$0xff]
      %v558 = vld [vmem:[#allocation2 + $0x32] sm:$0xff]
      %v559 = vld [vmem:[#allocation2 + $0x3a] sm:$0xff]
      %v560 = vld [vmem:[#allocation2 + $0x4a] sm:$0xff]
      %v561 = vld [vmem:[#allocation2 + $0x52] sm:$0xff]
      %v562 = vld [vmem:[#allocation2 + $0x62] sm:$0xff]
      %v563 = vld [vmem:[#allocation2 + $0x6a] sm:$0xff]
      %v564 = vld [vmem:[#allocation2 + $0x7a] sm:$0xff]
      %v565 = vld [vmem:[#allocation2 + $0x82] sm:$0xff]
      %v566 = vld [vmem:[#allocation2 + $0x92] sm:$0xff]
      %v567 = vld [vmem:[#allocation2 + $0x9a] sm:$0xff]
      %v568 = vld [vmem:[#allocation2 + $0xaa] sm:$0xff]
      %v569 = vld [vmem:[#allocation2 + $0xb2] sm:$0xff]
      %v570 = vld [vmem:[#allocation2 + $0xc2] sm:$0xff]
      %v571 = vld [vmem:[#allocation2 + $0xca] sm:$0xff]
      %v572 = vld [vmem:[#allocation2 + $0xda] sm:$0xff]
      %v573 = vld [vmem:[#allocation2 + $0xe2] sm:$0xff]
      %v574 = vld [vmem:[#allocation2 + $0xf2] sm:$0xff]
      %v575 = vld [vmem:[#allocation2 + $0xfa] sm:$0xff]
      %v576 = vld [vmem:[#allocation2 + $0x10a] sm:$0xff]
      %v577 = vld [vmem:[#allocation2 + $0x112] sm:$0xff]
      %v578 = vld [vmem:[#allocation2 + $0x122] sm:$0xff]
      %v579 = vld [vmem:[#allocation2 + $0x12a] sm:$0xff]
      %v580 = vld [vmem:[#allocation2 + $0x13a] sm:$0xff]
      %v581 = vld [vmem:[#allocation2 + $0x142] sm:$0xff]
      %v582 = vld [vmem:[#allocation2 + $0x152] sm:$0xff]
      %v583 = vld [vmem:[#allocation2 + $0x15a] sm:$0xff]
      %v584 = vld [vmem:[#allocation2 + $0x16a] sm:$0xff]
      %v585 = vld [vmem:[#allocation2 + $0x172] sm:$0xff]
      %v586 = vld [vmem:[#allocation2 + $0x182] sm:$0xff]
      %v587 = vld [vmem:[#allocation2 + $0x18a] sm:$0xff]
      %v588 = vld [vmem:[#allocation2 + $0x19a] sm:$0xff]
      %v589 = vld [vmem:[#allocation2 + $0x1a2] sm:$0xff]
      %v590 = vpack.c.bf16 %v483, %v482
      %v591 = vpack.c.bf16 %v485, %v484
      %v592 = vpack.c.bf16 %v487, %v486
      %v593 = vpack.c.bf16 %v489, %v488
      %v594 = vpack.c.bf16 %v491, %v490
      %v595 = vpack.c.bf16 %v493, %v492
      %v596 = vpack.c.bf16 %v495, %v494
      %v597 = vpack.c.bf16 %v497, %v496
      %v598 = vpack.c.bf16 %v499, %v498
      %v599 = vpack.c.bf16 %v501, %v500
      %v600 = vpack.c.bf16 %v503, %v502
      %v601 = vpack.c.bf16 %v505, %v504
      %v602 = vpack.c.bf16 %v507, %v506
      %v603 = vpack.c.bf16 %v509, %v508
      %v604 = vpack.c.bf16 %v511, %v510
      %v605 = vpack.c.bf16 %v513, %v512
      %v606 = vpack.c.bf16 %v519, %v518
      %v607 = vpack.c.bf16 %v521, %v520
      %v608 = vpack.c.bf16 %v523, %v522
      %v609 = vpack.c.bf16 %v525, %v524
      %v610 = vpack.c.bf16 %v527, %v526
      %v611 = vpack.c.bf16 %v529, %v528
      %v612 = vpack.c.bf16 %v531, %v530
      %v613 = vpack.c.bf16 %v533, %v532
      %v614 = vpack.c.bf16 %v535, %v534
      %v615 = vpack.c.bf16 %v537, %v536
      %v616 = vpack.c.bf16 %v539, %v538
      %v617 = vpack.c.bf16 %v541, %v540
      %v618 = vpack.c.bf16 %v543, %v542
      %v619 = vpack.c.bf16 %v545, %v544
      %v620 = vpack.c.bf16 %v547, %v546
      %v621 = vpack.c.bf16 %v549, %v548
      %v622 = vpack.c.bf16 %v555, %v554
      %v623 = vpack.c.bf16 %v557, %v556
      %v624 = vpack.c.bf16 %v559, %v558
      %v625 = vpack.c.bf16 %v561, %v560
      %v626 = vpack.c.bf16 %v563, %v562
      %v627 = vpack.c.bf16 %v565, %v564
      %v628 = vpack.c.bf16 %v567, %v566
      %v629 = vpack.c.bf16 %v569, %v568
      %v630 = vpack.c.bf16 %v571, %v570
      %v631 = vpack.c.bf16 %v573, %v572
      %v632 = vpack.c.bf16 %v575, %v574
      %v633 = vpack.c.bf16 %v577, %v576
      %v634 = vpack.c.bf16 %v579, %v578
      %v635 = vpack.c.bf16 %v581, %v580
      %v636 = vpack.c.bf16 %v583, %v582
      %v637 = vpack.c.bf16 %v585, %v584
      %v638 = vpack.c.bf16 %v515, %v514
      %v639 = vpack.c.bf16 %v551, %v550
      %v640 = vpack.c.bf16 %v587, %v586
      %v641 = vpack.c.bf16 %v517, %v516
      %v642 = vpack.c.bf16 %v553, %v552
      %v643 = vpack.c.bf16 %v589, %v588
      %660 = vrot.lane.b32.xlu0 %v606, 9
      %v661 = vpop.permute.xlu0 %660
      %662 = vrot.lane.b32.xlu0 %v607, 9
      %v663 = vpop.permute.xlu0 %662
      %664 = vrot.lane.b32.xlu0 %v608, 9
      %v665 = vpop.permute.xlu0 %664
      %666 = vrot.lane.b32.xlu0 %v609, 9
      %v667 = vpop.permute.xlu0 %666
      %668 = vrot.lane.b32.xlu0 %v610, 9
      %v669 = vpop.permute.xlu0 %668
      %670 = vrot.lane.b32.xlu0 %v611, 9
      %v671 = vpop.permute.xlu0 %670
      %672 = vrot.lane.b32.xlu0 %v612, 9
      %v673 = vpop.permute.xlu0 %672
      %674 = vrot.lane.b32.xlu0 %v613, 9
      %v675 = vpop.permute.xlu0 %674
      %676 = vrot.lane.b32.xlu0 %v614, 9
      %v677 = vpop.permute.xlu0 %676
      %678 = vrot.lane.b32.xlu0 %v615, 9
      %v679 = vpop.permute.xlu0 %678
      %680 = vrot.lane.b32.xlu0 %v616, 9
      %v681 = vpop.permute.xlu0 %680
      %682 = vrot.lane.b32.xlu0 %v617, 9
      %v683 = vpop.permute.xlu0 %682
      %684 = vrot.lane.b32.xlu0 %v618, 9
      %v685 = vpop.permute.xlu0 %684
      %686 = vrot.lane.b32.xlu0 %v619, 9
      %v687 = vpop.permute.xlu0 %686
      %688 = vrot.lane.b32.xlu0 %v620, 9
      %v689 = vpop.permute.xlu0 %688
      %690 = vrot.lane.b32.xlu0 %v621, 9
      %v691 = vpop.permute.xlu0 %690
      %708 = vrot.lane.b32.xlu0 %v622, 18
      %v709 = vpop.permute.xlu0 %708
      %710 = vrot.lane.b32.xlu0 %v623, 18
      %v711 = vpop.permute.xlu0 %710
      %712 = vrot.lane.b32.xlu0 %v624, 18
      %v713 = vpop.permute.xlu0 %712
      %714 = vrot.lane.b32.xlu0 %v625, 18
      %v715 = vpop.permute.xlu0 %714
      %716 = vrot.lane.b32.xlu0 %v626, 18
      %v717 = vpop.permute.xlu0 %716
      %718 = vrot.lane.b32.xlu0 %v627, 18
      %v719 = vpop.permute.xlu0 %718
      %720 = vrot.lane.b32.xlu0 %v628, 18
      %v721 = vpop.permute.xlu0 %720
      %722 = vrot.lane.b32.xlu0 %v629, 18
      %v723 = vpop.permute.xlu0 %722
      %724 = vrot.lane.b32.xlu0 %v630, 18
      %v725 = vpop.permute.xlu0 %724
      %726 = vrot.lane.b32.xlu0 %v631, 18
      %v727 = vpop.permute.xlu0 %726
      %728 = vrot.lane.b32.xlu0 %v632, 18
      %v729 = vpop.permute.xlu0 %728
      %730 = vrot.lane.b32.xlu0 %v633, 18
      %v731 = vpop.permute.xlu0 %730
      %732 = vrot.lane.b32.xlu0 %v634, 18
      %v733 = vpop.permute.xlu0 %732
      %734 = vrot.lane.b32.xlu0 %v635, 18
      %v735 = vpop.permute.xlu0 %734
      %736 = vrot.lane.b32.xlu0 %v636, 18
      %v737 = vpop.permute.xlu0 %736
      %738 = vrot.lane.b32.xlu0 %v637, 18
      %v739 = vpop.permute.xlu0 %738
      %756 = vrot.lane.b32.xlu0 %v591, 27
      %v757 = vpop.permute.xlu0 %756
      %758 = vrot.lane.b32.xlu0 %v592, 27
      %v759 = vpop.permute.xlu0 %758
      %760 = vrot.lane.b32.xlu0 %v593, 27
      %v761 = vpop.permute.xlu0 %760
      %762 = vrot.lane.b32.xlu0 %v594, 27
      %v763 = vpop.permute.xlu0 %762
      %764 = vrot.lane.b32.xlu0 %v595, 27
      %v765 = vpop.permute.xlu0 %764
      %766 = vrot.lane.b32.xlu0 %v596, 27
      %v767 = vpop.permute.xlu0 %766
      %768 = vrot.lane.b32.xlu0 %v597, 27
      %v769 = vpop.permute.xlu0 %768
      %770 = vrot.lane.b32.xlu0 %v598, 27
      %v771 = vpop.permute.xlu0 %770
      %772 = vrot.lane.b32.xlu0 %v599, 27
      %v773 = vpop.permute.xlu0 %772
      %774 = vrot.lane.b32.xlu0 %v600, 27
      %v775 = vpop.permute.xlu0 %774
      %776 = vrot.lane.b32.xlu0 %v601, 27
      %v777 = vpop.permute.xlu0 %776
      %778 = vrot.lane.b32.xlu0 %v602, 27
      %v779 = vpop.permute.xlu0 %778
      %780 = vrot.lane.b32.xlu0 %v603, 27
      %v781 = vpop.permute.xlu0 %780
      %782 = vrot.lane.b32.xlu0 %v604, 27
      %v783 = vpop.permute.xlu0 %782
      %784 = vrot.lane.b32.xlu0 %v605, 27
      %v785 = vpop.permute.xlu0 %784
      %786 = vrot.lane.b32.xlu0 %v638, 27
      %v787 = vpop.permute.xlu0 %786
      %789 = vrot.lane.b32.xlu0 %v607, 36
      %v790 = vpop.permute.xlu0 %789
      %791 = vrot.lane.b32.xlu0 %v608, 36
      %v792 = vpop.permute.xlu0 %791
      %793 = vrot.lane.b32.xlu0 %v609, 36
      %v794 = vpop.permute.xlu0 %793
      %795 = vrot.lane.b32.xlu0 %v610, 36
      %v796 = vpop.permute.xlu0 %795
      %797 = vrot.lane.b32.xlu0 %v611, 36
      %v798 = vpop.permute.xlu0 %797
      %799 = vrot.lane.b32.xlu0 %v612, 36
      %v800 = vpop.permute.xlu0 %799
      %801 = vrot.lane.b32.xlu0 %v613, 36
      %v802 = vpop.permute.xlu0 %801
      %803 = vrot.lane.b32.xlu0 %v614, 36
      %v804 = vpop.permute.xlu0 %803
      %805 = vrot.lane.b32.xlu0 %v615, 36
      %v806 = vpop.permute.xlu0 %805
      %807 = vrot.lane.b32.xlu0 %v616, 36
      %v808 = vpop.permute.xlu0 %807
      %809 = vrot.lane.b32.xlu0 %v617, 36
      %v810 = vpop.permute.xlu0 %809
      %811 = vrot.lane.b32.xlu0 %v618, 36
      %v812 = vpop.permute.xlu0 %811
      %813 = vrot.lane.b32.xlu0 %v619, 36
      %v814 = vpop.permute.xlu0 %813
      %815 = vrot.lane.b32.xlu0 %v620, 36
      %v816 = vpop.permute.xlu0 %815
      %817 = vrot.lane.b32.xlu0 %v621, 36
      %v818 = vpop.permute.xlu0 %817
      %819 = vrot.lane.b32.xlu0 %v639, 36
      %v820 = vpop.permute.xlu0 %819
      %822 = vrot.lane.b32.xlu0 %v623, 45
      %v823 = vpop.permute.xlu0 %822
      %824 = vrot.lane.b32.xlu0 %v624, 45
      %v825 = vpop.permute.xlu0 %824
      %826 = vrot.lane.b32.xlu0 %v625, 45
      %v827 = vpop.permute.xlu0 %826
      %828 = vrot.lane.b32.xlu0 %v626, 45
      %v829 = vpop.permute.xlu0 %828
      %830 = vrot.lane.b32.xlu0 %v627, 45
      %v831 = vpop.permute.xlu0 %830
      %832 = vrot.lane.b32.xlu0 %v628, 45
      %v833 = vpop.permute.xlu0 %832
      %834 = vrot.lane.b32.xlu0 %v629, 45
      %v835 = vpop.permute.xlu0 %834
      %836 = vrot.lane.b32.xlu0 %v630, 45
      %v837 = vpop.permute.xlu0 %836
      %838 = vrot.lane.b32.xlu0 %v631, 45
      %v839 = vpop.permute.xlu0 %838
      %840 = vrot.lane.b32.xlu0 %v632, 45
      %v841 = vpop.permute.xlu0 %840
      %842 = vrot.lane.b32.xlu0 %v633, 45
      %v843 = vpop.permute.xlu0 %842
      %844 = vrot.lane.b32.xlu0 %v634, 45
      %v845 = vpop.permute.xlu0 %844
      %846 = vrot.lane.b32.xlu0 %v635, 45
      %v847 = vpop.permute.xlu0 %846
      %848 = vrot.lane.b32.xlu0 %v636, 45
      %v849 = vpop.permute.xlu0 %848
      %850 = vrot.lane.b32.xlu0 %v637, 45
      %v851 = vpop.permute.xlu0 %850
      %852 = vrot.lane.b32.xlu0 %v640, 45
      %v853 = vpop.permute.xlu0 %852
      %855 = vrot.lane.b32.xlu0 %v592, 54
      %v856 = vpop.permute.xlu0 %855
      %857 = vrot.lane.b32.xlu0 %v593, 54
      %v858 = vpop.permute.xlu0 %857
      %859 = vrot.lane.b32.xlu0 %v594, 54
      %v860 = vpop.permute.xlu0 %859
      %861 = vrot.lane.b32.xlu0 %v595, 54
      %v862 = vpop.permute.xlu0 %861
      %863 = vrot.lane.b32.xlu0 %v596, 54
      %v864 = vpop.permute.xlu0 %863
      %865 = vrot.lane.b32.xlu0 %v597, 54
      %v866 = vpop.permute.xlu0 %865
      %867 = vrot.lane.b32.xlu0 %v598, 54
      %v868 = vpop.permute.xlu0 %867
      %869 = vrot.lane.b32.xlu0 %v599, 54
      %v870 = vpop.permute.xlu0 %869
      %871 = vrot.lane.b32.xlu0 %v600, 54
      %v872 = vpop.permute.xlu0 %871
      %873 = vrot.lane.b32.xlu0 %v601, 54
      %v874 = vpop.permute.xlu0 %873
      %875 = vrot.lane.b32.xlu0 %v602, 54
      %v876 = vpop.permute.xlu0 %875
      %877 = vrot.lane.b32.xlu0 %v603, 54
      %v878 = vpop.permute.xlu0 %877
      %879 = vrot.lane.b32.xlu0 %v604, 54
      %v880 = vpop.permute.xlu0 %879
      %881 = vrot.lane.b32.xlu0 %v605, 54
      %v882 = vpop.permute.xlu0 %881
      %883 = vrot.lane.b32.xlu0 %v638, 54
      %v884 = vpop.permute.xlu0 %883
      %885 = vrot.lane.b32.xlu0 %v641, 54
      %v886 = vpop.permute.xlu0 %885
      %888 = vrot.lane.b32.xlu0 %v608, 63
      %v889 = vpop.permute.xlu0 %888
      %890 = vrot.lane.b32.xlu0 %v609, 63
      %v891 = vpop.permute.xlu0 %890
      %892 = vrot.lane.b32.xlu0 %v610, 63
      %v893 = vpop.permute.xlu0 %892
      %894 = vrot.lane.b32.xlu0 %v611, 63
      %v895 = vpop.permute.xlu0 %894
      %896 = vrot.lane.b32.xlu0 %v612, 63
      %v897 = vpop.permute.xlu0 %896
      %898 = vrot.lane.b32.xlu0 %v613, 63
      %v899 = vpop.permute.xlu0 %898
      %900 = vrot.lane.b32.xlu0 %v614, 63
      %v901 = vpop.permute.xlu0 %900
      %902 = vrot.lane.b32.xlu0 %v615, 63
      %v903 = vpop.permute.xlu0 %902
      %904 = vrot.lane.b32.xlu0 %v616, 63
      %v905 = vpop.permute.xlu0 %904
      %906 = vrot.lane.b32.xlu0 %v617, 63
      %v907 = vpop.permute.xlu0 %906
      %908 = vrot.lane.b32.xlu0 %v618, 63
      %v909 = vpop.permute.xlu0 %908
      %910 = vrot.lane.b32.xlu0 %v619, 63
      %v911 = vpop.permute.xlu0 %910
      %912 = vrot.lane.b32.xlu0 %v620, 63
      %v913 = vpop.permute.xlu0 %912
      %914 = vrot.lane.b32.xlu0 %v621, 63
      %v915 = vpop.permute.xlu0 %914
      %916 = vrot.lane.b32.xlu0 %v639, 63
      %v917 = vpop.permute.xlu0 %916
      %918 = vrot.lane.b32.xlu0 %v642, 63
      %v919 = vpop.permute.xlu0 %918
      %921 = vrot.lane.b32.xlu0 %v624, 72
      %v922 = vpop.permute.xlu0 %921
      %923 = vrot.lane.b32.xlu0 %v625, 72
      %v924 = vpop.permute.xlu0 %923
      %925 = vrot.lane.b32.xlu0 %v626, 72
      %v926 = vpop.permute.xlu0 %925
      %927 = vrot.lane.b32.xlu0 %v627, 72
      %v928 = vpop.permute.xlu0 %927
      %929 = vrot.lane.b32.xlu0 %v628, 72
      %v930 = vpop.permute.xlu0 %929
      %931 = vrot.lane.b32.xlu0 %v629, 72
      %v932 = vpop.permute.xlu0 %931
      %933 = vrot.lane.b32.xlu0 %v630, 72
      %v934 = vpop.permute.xlu0 %933
      %935 = vrot.lane.b32.xlu0 %v631, 72
      %v936 = vpop.permute.xlu0 %935
      %937 = vrot.lane.b32.xlu0 %v632, 72
      %v938 = vpop.permute.xlu0 %937
      %939 = vrot.lane.b32.xlu0 %v633, 72
      %v940 = vpop.permute.xlu0 %939
      %941 = vrot.lane.b32.xlu0 %v634, 72
      %v942 = vpop.permute.xlu0 %941
      %943 = vrot.lane.b32.xlu0 %v635, 72
      %v944 = vpop.permute.xlu0 %943
      %945 = vrot.lane.b32.xlu0 %v636, 72
      %v946 = vpop.permute.xlu0 %945
      %947 = vrot.lane.b32.xlu0 %v637, 72
      %v948 = vpop.permute.xlu0 %947
      %949 = vrot.lane.b32.xlu0 %v640, 72
      %v950 = vpop.permute.xlu0 %949
      %951 = vrot.lane.b32.xlu0 %v643, 72
      %v952 = vpop.permute.xlu0 %951
      %v955 = vsel %vm361, %v590, %v661
      %v958 = vsel %vm361, %v591, %v663
      %v961 = vsel %vm361, %v592, %v665
      %v964 = vsel %vm361, %v593, %v667
      %v967 = vsel %vm361, %v594, %v669
      %v970 = vsel %vm361, %v595, %v671
      %v973 = vsel %vm361, %v596, %v673
      %v976 = vsel %vm361, %v597, %v675
      %v979 = vsel %vm361, %v598, %v677
      %v982 = vsel %vm361, %v599, %v679
      %v985 = vsel %vm361, %v600, %v681
      %v988 = vsel %vm361, %v601, %v683
      %v991 = vsel %vm361, %v602, %v685
      %v994 = vsel %vm361, %v603, %v687
      %v997 = vsel %vm361, %v604, %v689
      %v1000 = vsel %vm361, %v605, %v691
      %vm1001 = vcmask 146432
      %v1003 = vsel %vm1001, %v955, %v709
      %v1005 = vsel %vm1001, %v958, %v711
      %v1007 = vsel %vm1001, %v961, %v713
      %v1009 = vsel %vm1001, %v964, %v715
      %v1011 = vsel %vm1001, %v967, %v717
      %v1013 = vsel %vm1001, %v970, %v719
      %v1015 = vsel %vm1001, %v973, %v721
      %v1017 = vsel %vm1001, %v976, %v723
      %v1019 = vsel %vm1001, %v979, %v725
      %v1021 = vsel %vm1001, %v982, %v727
      %v1023 = vsel %vm1001, %v985, %v729
      %v1025 = vsel %vm1001, %v988, %v731
      %v1027 = vsel %vm1001, %v991, %v733
      %v1029 = vsel %vm1001, %v994, %v735
      %v1031 = vsel %vm1001, %v997, %v737
      %v1033 = vsel %vm1001, %v1000, %v739
      %vm1034 = vcmask 220160
      %v1036 = vsel %vm1034, %v1003, %v757
      %v1038 = vsel %vm1034, %v1005, %v759
      %v1040 = vsel %vm1034, %v1007, %v761
      %v1042 = vsel %vm1034, %v1009, %v763
      %v1044 = vsel %vm1034, %v1011, %v765
      %v1046 = vsel %vm1034, %v1013, %v767
      %v1048 = vsel %vm1034, %v1015, %v769
      %v1050 = vsel %vm1034, %v1017, %v771
      %v1052 = vsel %vm1034, %v1019, %v773
      %v1054 = vsel %vm1034, %v1021, %v775
      %v1056 = vsel %vm1034, %v1023, %v777
      %v1058 = vsel %vm1034, %v1025, %v779
      %v1060 = vsel %vm1034, %v1027, %v781
      %v1062 = vsel %vm1034, %v1029, %v783
      %v1064 = vsel %vm1034, %v1031, %v785
      %v1066 = vsel %vm1034, %v1033, %v787
      %vm1067 = vcmask 293888
      %v1069 = vsel %vm1067, %v1036, %v790
      %v1071 = vsel %vm1067, %v1038, %v792
      %v1073 = vsel %vm1067, %v1040, %v794
      %v1075 = vsel %vm1067, %v1042, %v796
      %v1077 = vsel %vm1067, %v1044, %v798
      %v1079 = vsel %vm1067, %v1046, %v800
      %v1081 = vsel %vm1067, %v1048, %v802
      %v1083 = vsel %vm1067, %v1050, %v804
      %v1085 = vsel %vm1067, %v1052, %v806
      %v1087 = vsel %vm1067, %v1054, %v808
      %v1089 = vsel %vm1067, %v1056, %v810
      %v1091 = vsel %vm1067, %v1058, %v812
      %v1093 = vsel %vm1067, %v1060, %v814
      %v1095 = vsel %vm1067, %v1062, %v816
      %v1097 = vsel %vm1067, %v1064, %v818
      %v1099 = vsel %vm1067, %v1066, %v820
      %vm1100 = vcmask 367616
      %v1102 = vsel %vm1100, %v1069, %v823
      %v1104 = vsel %vm1100, %v1071, %v825
      %v1106 = vsel %vm1100, %v1073, %v827
      %v1108 = vsel %vm1100, %v1075, %v829
      %v1110 = vsel %vm1100, %v1077, %v831
      %v1112 = vsel %vm1100, %v1079, %v833
      %v1114 = vsel %vm1100, %v1081, %v835
      %v1116 = vsel %vm1100, %v1083, %v837
      %v1118 = vsel %vm1100, %v1085, %v839
      %v1120 = vsel %vm1100, %v1087, %v841
      %v1122 = vsel %vm1100, %v1089, %v843
      %v1124 = vsel %vm1100, %v1091, %v845
      %v1126 = vsel %vm1100, %v1093, %v847
      %v1128 = vsel %vm1100, %v1095, %v849
      %v1130 = vsel %vm1100, %v1097, %v851
      %v1132 = vsel %vm1100, %v1099, %v853
      %vm1133 = vcmask 441344
      %v1135 = vsel %vm1133, %v1102, %v856
      %v1137 = vsel %vm1133, %v1104, %v858
      %v1139 = vsel %vm1133, %v1106, %v860
      %v1141 = vsel %vm1133, %v1108, %v862
      %v1143 = vsel %vm1133, %v1110, %v864
      %v1145 = vsel %vm1133, %v1112, %v866
      %v1147 = vsel %vm1133, %v1114, %v868
      %v1149 = vsel %vm1133, %v1116, %v870
      %v1151 = vsel %vm1133, %v1118, %v872
      %v1153 = vsel %vm1133, %v1120, %v874
      %v1155 = vsel %vm1133, %v1122, %v876
      %v1157 = vsel %vm1133, %v1124, %v878
      %v1159 = vsel %vm1133, %v1126, %v880
      %v1161 = vsel %vm1133, %v1128, %v882
      %v1163 = vsel %vm1133, %v1130, %v884
      %v1165 = vsel %vm1133, %v1132, %v886
      %vm1166 = vcmask 515072
      %v1168 = vsel %vm1166, %v1135, %v889
      %v1170 = vsel %vm1166, %v1137, %v891
      %v1172 = vsel %vm1166, %v1139, %v893
      %v1174 = vsel %vm1166, %v1141, %v895
      %v1176 = vsel %vm1166, %v1143, %v897
      %v1178 = vsel %vm1166, %v1145, %v899
      %v1180 = vsel %vm1166, %v1147, %v901
      %v1182 = vsel %vm1166, %v1149, %v903
      %v1184 = vsel %vm1166, %v1151, %v905
      %v1186 = vsel %vm1166, %v1153, %v907
      %v1188 = vsel %vm1166, %v1155, %v909
      %v1190 = vsel %vm1166, %v1157, %v911
      %v1192 = vsel %vm1166, %v1159, %v913
      %v1194 = vsel %vm1166, %v1161, %v915
      %v1196 = vsel %vm1166, %v1163, %v917
      %v1198 = vsel %vm1166, %v1165, %v919
      %vm1199 = vcmask 588800
      %v1201 = vsel %vm1199, %v1168, %v922
      %v1203 = vsel %vm1199, %v1170, %v924
      %v1205 = vsel %vm1199, %v1172, %v926
      %v1207 = vsel %vm1199, %v1174, %v928
      %v1209 = vsel %vm1199, %v1176, %v930
      %v1211 = vsel %vm1199, %v1178, %v932
      %v1213 = vsel %vm1199, %v1180, %v934
      %v1215 = vsel %vm1199, %v1182, %v936
      %v1217 = vsel %vm1199, %v1184, %v938
      %v1219 = vsel %vm1199, %v1186, %v940
      %v1221 = vsel %vm1199, %v1188, %v942
      %v1223 = vsel %vm1199, %v1190, %v944
      %v1225 = vsel %vm1199, %v1192, %v946
      %v1227 = vsel %vm1199, %v1194, %v948
      %v1229 = vsel %vm1199, %v1196, %v950
      %v1231 = vsel %vm1199, %v1198, %v952
      %v1232 = vld [vmem:[%s1] sm:$0xf]
      %v1233 = vld [vmem:[%s1 + $0x4] sm:$0xf]
      %v1234 = vld [vmem:[%s1 + $0x8] sm:$0xf]
      %v1235 = vld [vmem:[%s1 + $0xc] sm:$0xf]
      %v1236 = vld [vmem:[%s1 + $0x10] sm:$0xf]
      %v1237 = vld [vmem:[%s1 + $0x14] sm:$0xf]
      %v1238 = vld [vmem:[%s1 + $0x18] sm:$0xf]
      %v1239 = vld [vmem:[%s1 + $0x1c] sm:$0xf]
      %v1240 = vld [vmem:[%s1 + $0x20] sm:$0xf]
      %v1241 = vld [vmem:[%s1 + $0x24] sm:$0xf]
      %v1242 = vld [vmem:[%s1 + $0x28] sm:$0x1]
      %v1243 = vld [vmem:[%s2] sm:$0x1]
      %v1245 = vlaneseq
      %v1246 = vshrl.u32 %v1245, 7
      %v1247 = vsub.s32 0, %v1246
      %v1248 = vrot.slane %v1243, %v1247
      %v1261 = vunpack.c.l.b16 %v1232
      %v1262 = vunpack.c.l.b16 %v1233
      %v1263 = vunpack.c.l.b16 %v1234
      %v1264 = vunpack.c.l.b16 %v1235
      %v1265 = vunpack.c.l.b16 %v1236
      %v1266 = vunpack.c.l.b16 %v1237
      %v1267 = vunpack.c.l.b16 %v1238
      %v1268 = vunpack.c.l.b16 %v1239
      %v1269 = vunpack.c.l.b16 %v1240
      %v1270 = vunpack.c.l.b16 %v1241
      %v1271 = vunpack.c.l.b16 %v1242
      %v1272 = vpack.c.b16 %v1262, %v1261
      %v1273 = vpack.c.b16 %v1264, %v1263
      %v1274 = vpack.c.b16 %v1266, %v1265
      %v1275 = vpack.c.b16 %v1268, %v1267
      %v1276 = vpack.c.b16 %v1270, %v1269
      %v1277 = vpack.c.b16 %v1271, %v1271
      %vm1283 = vcmask 662528
      %v1284 = vsel %vm1283, %v1201, 0
      %v1286 = vsel %vm1283, %v1203, 0
      %v1288 = vsel %vm1283, %v1205, 0
      %v1290 = vsel %vm1283, %v1207, 0
      %v1292 = vsel %vm1283, %v1209, 0
      %v1294 = vsel %vm1283, %v1211, 0
      %v1296 = vsel %vm1283, %v1213, 0
      %v1298 = vsel %vm1283, %v1215, 0
      %v1300 = vsel %vm1283, %v1217, 0
      %v1302 = vsel %vm1283, %v1219, 0
      %v1304 = vsel %vm1283, %v1221, 0
      %v1306 = vsel %vm1283, %v1223, 0
      %v1308 = vsel %vm1283, %v1225, 0
      %v1310 = vsel %vm1283, %v1227, 0
      %v1312 = vsel %vm1283, %v1229, 0
      %v1314 = vsel %vm1283, %v1231, 0
      %vm1316 = vcmask 1040384
      %v1317 = vsel 0, 4294967295, 65535
      %v1318 = vsel %vm1316, %v1317, 0
      %v1320 = vand.u32 %v1277, %v1318
      %1322 = vmatprep.subr.bf16.mxu0 0
      %1323 = vmatpush1.bf16.msra.mxu0 0
      %1324 = vmatprep.subr.bf16.mxu0 0
      %1325 = vmatpush1.bf16.msra.mxu0 0
      %1326 = vmatprep.subr.bf16.mxu0 0
      %1327 = vmatpush1.bf16.msra.mxu0 %v1320
      %1328 = vmatprep.subr.bf16.mxu0 0
      %1329 = vmatpush1.bf16.msra.mxu0 %v1276
      %1330 = vmatprep.subr.bf16.mxu0 0
      %1331 = vmatpush1.bf16.msra.mxu0 %v1275
      %1332 = vmatprep.subr.bf16.mxu0 0
      %1333 = vmatpush1.bf16.msra.mxu0 %v1274
      %1334 = vmatprep.subr.bf16.mxu0 0
      %1335 = vmatpush1.bf16.msra.mxu0 %v1273
      %1336 = vmatprep.subr.bf16.mxu0 0
      %1337 = vmatpush1.bf16.msra.mxu0 %v1272
      %1338 = vmatprep.subr.bf16.mxu0 0
      %1339 = vmatpush2.bf16.msra.mxu0 0
      %1340 = vmatprep.subr.bf16.mxu0 0
      %1341 = vmatpush2.bf16.msra.mxu0 0
      %1342 = vmatprep.subr.bf16.mxu0 0
      %1343 = vmatpush2.bf16.msra.mxu0 0
      %1344 = vmatprep.subr.bf16.mxu0 0
      %1345 = vmatpush2.bf16.msra.mxu0 0
      %1346 = vmatprep.subr.bf16.mxu0 0
      %1347 = vmatpush2.bf16.msra.mxu0 0
      %1348 = vmatprep.subr.bf16.mxu0 0
      %1349 = vmatpush2.bf16.msra.mxu0 0
      %1350 = vmatprep.subr.bf16.mxu0 0
      %1351 = vmatpush2.bf16.msra.mxu0 0
      %1352 = vmatprep.subr.bf16.mxu0 0
      %1353 = vmatpush2.bf16.msra.mxu0 0
      %1354 = vmatprep.mubr.bf16.mxu0 0
      %1355 = vmatmul.mubr.bf16.gmra.mxu0 %v1284
      %v1356 = vpop.f32.mrf.mxu0
      %v1357 = vadd.f32 %v1248, %v1356
      %v1358 = vpop.f32.mrf.mxu0
      %v1359 = vpop.f32.mrf.mxu0
      %v1360 = vadd.f32 %v1248, %v1359
      %v1361 = vpop.f32.mrf.mxu0
      %1362 = vmatprep.mubr.bf16.mxu0 0
      %1363 = vmatmul.mubr.bf16.gmra.mxu0 %v1286
      %v1364 = vpop.f32.mrf.mxu0
      %v1365 = vadd.f32 %v1248, %v1364
      %v1366 = vpop.f32.mrf.mxu0
      %v1367 = vpop.f32.mrf.mxu0
      %v1368 = vadd.f32 %v1248, %v1367
      %v1369 = vpop.f32.mrf.mxu0
      %1370 = vmatprep.mubr.bf16.mxu0 0
      %1371 = vmatmul.mubr.bf16.gmra.mxu0 %v1288
      %v1372 = vpop.f32.mrf.mxu0
      %v1373 = vadd.f32 %v1248, %v1372
      %v1374 = vpop.f32.mrf.mxu0
      %v1375 = vpop.f32.mrf.mxu0
      %v1376 = vadd.f32 %v1248, %v1375
      %v1377 = vpop.f32.mrf.mxu0
      %1378 = vmatprep.mubr.bf16.mxu0 0
      %1379 = vmatmul.mubr.bf16.gmra.mxu0 %v1290
      %v1380 = vpop.f32.mrf.mxu0
      %v1381 = vadd.f32 %v1248, %v1380
      %v1382 = vpop.f32.mrf.mxu0
      %v1383 = vpop.f32.mrf.mxu0
      %v1384 = vadd.f32 %v1248, %v1383
      %v1385 = vpop.f32.mrf.mxu0
      %1386 = vmatprep.mubr.bf16.mxu0 0
      %1387 = vmatmul.mubr.bf16.gmra.mxu0 %v1292
      %v1388 = vpop.f32.mrf.mxu0
      %v1389 = vadd.f32 %v1248, %v1388
      %v1390 = vpop.f32.mrf.mxu0
      %v1391 = vpop.f32.mrf.mxu0
      %v1392 = vadd.f32 %v1248, %v1391
      %v1393 = vpop.f32.mrf.mxu0
      %1394 = vmatprep.mubr.bf16.mxu0 0
      %1395 = vmatmul.mubr.bf16.gmra.mxu0 %v1294
      %v1396 = vpop.f32.mrf.mxu0
      %v1397 = vadd.f32 %v1248, %v1396
      %v1398 = vpop.f32.mrf.mxu0
      %v1399 = vpop.f32.mrf.mxu0
      %v1400 = vadd.f32 %v1248, %v1399
      %v1401 = vpop.f32.mrf.mxu0
      %1402 = vmatprep.mubr.bf16.mxu0 0
      %1403 = vmatmul.mubr.bf16.gmra.mxu0 %v1296
      %v1404 = vpop.f32.mrf.mxu0
      %v1405 = vadd.f32 %v1248, %v1404
      %v1406 = vpop.f32.mrf.mxu0
      %v1407 = vpop.f32.mrf.mxu0
      %v1408 = vadd.f32 %v1248, %v1407
      %v1409 = vpop.f32.mrf.mxu0
      %1410 = vmatprep.mubr.bf16.mxu0 0
      %1411 = vmatmul.mubr.bf16.gmra.mxu0 %v1298
      %v1412 = vpop.f32.mrf.mxu0
      %v1413 = vadd.f32 %v1248, %v1412
      %v1414 = vpop.f32.mrf.mxu0
      %v1415 = vpop.f32.mrf.mxu0
      %v1416 = vadd.f32 %v1248, %v1415
      %v1417 = vpop.f32.mrf.mxu0
      %1418 = vmatprep.mubr.bf16.mxu0 0
      %1419 = vmatmul.mubr.bf16.gmra.mxu0 %v1300
      %v1420 = vpop.f32.mrf.mxu0
      %v1421 = vadd.f32 %v1248, %v1420
      %v1422 = vpop.f32.mrf.mxu0
      %v1423 = vpop.f32.mrf.mxu0
      %v1424 = vadd.f32 %v1248, %v1423
      %v1425 = vpop.f32.mrf.mxu0
      %1426 = vmatprep.mubr.bf16.mxu0 0
      %1427 = vmatmul.mubr.bf16.gmra.mxu0 %v1302
      %v1428 = vpop.f32.mrf.mxu0
      %v1429 = vadd.f32 %v1248, %v1428
      %v1430 = vpop.f32.mrf.mxu0
      %v1431 = vpop.f32.mrf.mxu0
      %v1432 = vadd.f32 %v1248, %v1431
      %v1433 = vpop.f32.mrf.mxu0
      %1434 = vmatprep.mubr.bf16.mxu0 0
      %1435 = vmatmul.mubr.bf16.gmra.mxu0 %v1304
      %v1436 = vpop.f32.mrf.mxu0
      %v1437 = vadd.f32 %v1248, %v1436
      %v1438 = vpop.f32.mrf.mxu0
      %v1439 = vpop.f32.mrf.mxu0
      %v1440 = vadd.f32 %v1248, %v1439
      %v1441 = vpop.f32.mrf.mxu0
      %1442 = vmatprep.mubr.bf16.mxu0 0
      %1443 = vmatmul.mubr.bf16.gmra.mxu0 %v1306
      %v1444 = vpop.f32.mrf.mxu0
      %v1445 = vadd.f32 %v1248, %v1444
      %v1446 = vpop.f32.mrf.mxu0
      %v1447 = vpop.f32.mrf.mxu0
      %v1448 = vadd.f32 %v1248, %v1447
      %v1449 = vpop.f32.mrf.mxu0
      %1450 = vmatprep.mubr.bf16.mxu0 0
      %1451 = vmatmul.mubr.bf16.gmra.mxu0 %v1308
      %v1452 = vpop.f32.mrf.mxu0
      %v1453 = vadd.f32 %v1248, %v1452
      %v1454 = vpop.f32.mrf.mxu0
      %v1455 = vpop.f32.mrf.mxu0
      %v1456 = vadd.f32 %v1248, %v1455
      %v1457 = vpop.f32.mrf.mxu0
      %1458 = vmatprep.mubr.bf16.mxu0 0
      %1459 = vmatmul.mubr.bf16.gmra.mxu0 %v1310
      %v1460 = vpop.f32.mrf.mxu0
      %v1461 = vadd.f32 %v1248, %v1460
      %v1462 = vpop.f32.mrf.mxu0
      %v1463 = vpop.f32.mrf.mxu0
      %v1464 = vadd.f32 %v1248, %v1463
      %v1465 = vpop.f32.mrf.mxu0
      %1466 = vmatprep.mubr.bf16.mxu0 0
      %1467 = vmatmul.mubr.bf16.gmra.mxu0 %v1312
      %v1468 = vpop.f32.mrf.mxu0
      %v1469 = vadd.f32 %v1248, %v1468
      %v1470 = vpop.f32.mrf.mxu0
      %v1471 = vpop.f32.mrf.mxu0
      %v1472 = vadd.f32 %v1248, %v1471
      %v1473 = vpop.f32.mrf.mxu0
      %1474 = vmatprep.mubr.bf16.mxu0 0
      %1475 = vmatmul.mubr.bf16.gmra.mxu0 %v1314
      %v1476 = vpop.f32.mrf.mxu0
      %v1477 = vadd.f32 %v1248, %v1476
      %v1478 = vpop.f32.mrf.mxu0
      %v1479 = vpop.f32.mrf.mxu0
      %v1480 = vadd.f32 %v1248, %v1479
      %v1481 = vpop.f32.mrf.mxu0
      %1482 = vdwg.mxu0
      %vm1483 = vcmp.gt.f32.partialorder %v1357, 0.0
      %vm1484 = vcmp.gt.f32.partialorder %v1360, 0.0
      %vm1485 = vcmp.gt.f32.partialorder %v1365, 0.0
      %vm1486 = vcmp.gt.f32.partialorder %v1368, 0.0
      %vm1487 = vcmp.gt.f32.partialorder %v1373, 0.0
      %vm1488 = vcmp.gt.f32.partialorder %v1376, 0.0
      %vm1489 = vcmp.gt.f32.partialorder %v1381, 0.0
      %vm1490 = vcmp.gt.f32.partialorder %v1384, 0.0
      %vm1491 = vcmp.gt.f32.partialorder %v1389, 0.0
      %vm1492 = vcmp.gt.f32.partialorder %v1392, 0.0
      %vm1493 = vcmp.gt.f32.partialorder %v1397, 0.0
      %vm1494 = vcmp.gt.f32.partialorder %v1400, 0.0
      %vm1495 = vcmp.gt.f32.partialorder %v1405, 0.0
      %vm1496 = vcmp.gt.f32.partialorder %v1408, 0.0
      %vm1497 = vcmp.gt.f32.partialorder %v1413, 0.0
      %vm1498 = vcmp.gt.f32.partialorder %v1416, 0.0
      %vm1499 = vcmp.gt.f32.partialorder %v1421, 0.0
      %vm1500 = vcmp.gt.f32.partialorder %v1424, 0.0
      %vm1501 = vcmp.gt.f32.partialorder %v1429, 0.0
      %vm1502 = vcmp.gt.f32.partialorder %v1432, 0.0
      %vm1503 = vcmp.gt.f32.partialorder %v1437, 0.0
      %vm1504 = vcmp.gt.f32.partialorder %v1440, 0.0
      %vm1505 = vcmp.gt.f32.partialorder %v1445, 0.0
      %vm1506 = vcmp.gt.f32.partialorder %v1448, 0.0
      %vm1507 = vcmp.gt.f32.partialorder %v1453, 0.0
      %vm1508 = vcmp.gt.f32.partialorder %v1456, 0.0
      %vm1509 = vcmp.gt.f32.partialorder %v1461, 0.0
      %vm1510 = vcmp.gt.f32.partialorder %v1464, 0.0
      %vm1511 = vcmp.gt.f32.partialorder %v1469, 0.0
      %vm1512 = vcmp.gt.f32.partialorder %v1472, 0.0
      %vm1513 = vcmp.gt.f32.partialorder %v1477, 0.0
      %vm1514 = vcmp.gt.f32.partialorder %v1480, 0.0
      %v1515 = vld [vmem:[%s3] sm:$0x1]
      %v1517 = vlaneseq
      %v1518 = vshrl.u32 %v1517, 7
      %v1519 = vsub.s32 0, %v1518
      %v1520 = vrot.slane %v1515, %v1519
      %v1522 = vmul.f32 %v1520, %v1357
      %v1523 = vmul.f32 %v1520, %v1360
      %v1524 = vmul.f32 %v1520, %v1365
      %v1525 = vmul.f32 %v1520, %v1368
      %v1526 = vmul.f32 %v1520, %v1373
      %v1527 = vmul.f32 %v1520, %v1376
      %v1528 = vmul.f32 %v1520, %v1381
      %v1529 = vmul.f32 %v1520, %v1384
      %v1530 = vmul.f32 %v1520, %v1389
      %v1531 = vmul.f32 %v1520, %v1392
      %v1532 = vmul.f32 %v1520, %v1397
      %v1533 = vmul.f32 %v1520, %v1400
      %v1534 = vmul.f32 %v1520, %v1405
      %v1535 = vmul.f32 %v1520, %v1408
      %v1536 = vmul.f32 %v1520, %v1413
      %v1537 = vmul.f32 %v1520, %v1416
      %v1538 = vmul.f32 %v1520, %v1421
      %v1539 = vmul.f32 %v1520, %v1424
      %v1540 = vmul.f32 %v1520, %v1429
      %v1541 = vmul.f32 %v1520, %v1432
      %v1542 = vmul.f32 %v1520, %v1437
      %v1543 = vmul.f32 %v1520, %v1440
      %v1544 = vmul.f32 %v1520, %v1445
      %v1545 = vmul.f32 %v1520, %v1448
      %v1546 = vmul.f32 %v1520, %v1453
      %v1547 = vmul.f32 %v1520, %v1456
      %v1548 = vmul.f32 %v1520, %v1461
      %v1549 = vmul.f32 %v1520, %v1464
      %v1550 = vmul.f32 %v1520, %v1469
      %v1551 = vmul.f32 %v1520, %v1472
      %v1552 = vmul.f32 %v1520, %v1477
      %v1553 = vmul.f32 %v1520, %v1480
      %v1554 = vsel %vm1483, %v1357, %v1522
      %v1555 = vsel %vm1484, %v1360, %v1523
      %v1556 = vsel %vm1485, %v1365, %v1524
      %v1557 = vsel %vm1486, %v1368, %v1525
      %v1558 = vsel %vm1487, %v1373, %v1526
      %v1559 = vsel %vm1488, %v1376, %v1527
      %v1560 = vsel %vm1489, %v1381, %v1528
      %v1561 = vsel %vm1490, %v1384, %v1529
      %v1562 = vsel %vm1491, %v1389, %v1530
      %v1563 = vsel %vm1492, %v1392, %v1531
      %v1564 = vsel %vm1493, %v1397, %v1532
      %v1565 = vsel %vm1494, %v1400, %v1533
      %v1566 = vsel %vm1495, %v1405, %v1534
      %v1567 = vsel %vm1496, %v1408, %v1535
      %v1568 = vsel %vm1497, %v1413, %v1536
      %v1569 = vsel %vm1498, %v1416, %v1537
      %v1570 = vsel %vm1499, %v1421, %v1538
      %v1571 = vsel %vm1500, %v1424, %v1539
      %v1572 = vsel %vm1501, %v1429, %v1540
      %v1573 = vsel %vm1502, %v1432, %v1541
      %v1574 = vsel %vm1503, %v1437, %v1542
      %v1575 = vsel %vm1504, %v1440, %v1543
      %v1576 = vsel %vm1505, %v1445, %v1544
      %v1577 = vsel %vm1506, %v1448, %v1545
      %v1578 = vsel %vm1507, %v1453, %v1546
      %v1579 = vsel %vm1508, %v1456, %v1547
      %v1580 = vsel %vm1509, %v1461, %v1548
      %v1581 = vsel %vm1510, %v1464, %v1549
      %v1582 = vsel %vm1511, %v1469, %v1550
      %v1583 = vsel %vm1512, %v1472, %v1551
      %v1584 = vsel %vm1513, %v1477, %v1552
      %v1585 = vsel %vm1514, %v1480, %v1553
      %vm1586 = vcmask 261120
      %1587 = vst.msk [vmem:[#allocation3] sm:$0xff] %vm1586, 0.0
      %1588 = vst.msk [vmem:[#allocation3 + $0x8] sm:$0xff] %vm1586, 0.0
      %vm1589 = vcmask 254976
      %1590 = vst.msk [vmem:[#allocation3 + $0x10] sm:$0x3] %vm1589, 0.0
      %1591 = vst.msk [vmem:[#allocation3 + $0x18] sm:$0xff] %vm1586, 0.0
      %1592 = vst.msk [vmem:[#allocation3 + $0x20] sm:$0xff] %vm1586, 0.0
      %1593 = vst.msk [vmem:[#allocation3 + $0x28] sm:$0x3] %vm1589, 0.0
      %1594 = vst.msk [vmem:[#allocation3 + $0x30] sm:$0xff] %vm1586, 0.0
      %1595 = vst.msk [vmem:[#allocation3 + $0x38] sm:$0xff] %vm1586, 0.0
      %1596 = vst.msk [vmem:[#allocation3 + $0x40] sm:$0x3] %vm1589, 0.0
      %1597 = vst.msk [vmem:[#allocation3 + $0x48] sm:$0xff] %vm1586, 0.0
      %1598 = vst.msk [vmem:[#allocation3 + $0x50] sm:$0xff] %vm1586, 0.0
      %1599 = vst.msk [vmem:[#allocation3 + $0x58] sm:$0x3] %vm1589, 0.0
      %1600 = vst.msk [vmem:[#allocation3 + $0x60] sm:$0xff] %vm1586, 0.0
      %1601 = vst.msk [vmem:[#allocation3 + $0x68] sm:$0xff] %vm1586, 0.0
      %1602 = vst.msk [vmem:[#allocation3 + $0x70] sm:$0x3] %vm1589, 0.0
      %1603 = vst.msk [vmem:[#allocation3 + $0x78] sm:$0xff] %vm1586, 0.0
      %1604 = vst.msk [vmem:[#allocation3 + $0x80] sm:$0xff] %vm1586, 0.0
      %1605 = vst.msk [vmem:[#allocation3 + $0x88] sm:$0x3] %vm1589, 0.0
      %1606 = vst.msk [vmem:[#allocation3 + $0x90] sm:$0xff] %vm1586, 0.0
      %1607 = vst.msk [vmem:[#allocation3 + $0x98] sm:$0xff] %vm1586, 0.0
      %1608 = vst.msk [vmem:[#allocation3 + $0xa0] sm:$0x3] %vm1589, 0.0
      %1609 = vst.msk [vmem:[#allocation3 + $0xa8] sm:$0xff] %vm1586, 0.0
      %1610 = vst.msk [vmem:[#allocation3 + $0xb0] sm:$0xff] %vm1586, 0.0
      %1611 = vst.msk [vmem:[#allocation3 + $0xb8] sm:$0x3] %vm1589, 0.0
      %1612 = vst.msk [vmem:[#allocation3 + $0xc0] sm:$0xff] %vm1586, 0.0
      %1613 = vst.msk [vmem:[#allocation3 + $0xc8] sm:$0xff] %vm1586, 0.0
      %1614 = vst.msk [vmem:[#allocation3 + $0xd0] sm:$0x3] %vm1589, 0.0
      %1615 = vst.msk [vmem:[#allocation3 + $0xd8] sm:$0xff] %vm1586, 0.0
      %1616 = vst.msk [vmem:[#allocation3 + $0xe0] sm:$0xff] %vm1586, 0.0
      %1617 = vst.msk [vmem:[#allocation3 + $0xe8] sm:$0x3] %vm1589, 0.0
      %1618 = vst.msk [vmem:[#allocation3 + $0xf0] sm:$0xff] %vm1586, 0.0
      %1619 = vst.msk [vmem:[#allocation3 + $0xf8] sm:$0xff] %vm1586, 0.0
      %1620 = vst.msk [vmem:[#allocation3 + $0x100] sm:$0x3] %vm1589, 0.0
      %1621 = vst.msk [vmem:[#allocation3 + $0x108] sm:$0xff] %vm1586, 0.0
      %1622 = vst.msk [vmem:[#allocation3 + $0x110] sm:$0xff] %vm1586, 0.0
      %1623 = vst.msk [vmem:[#allocation3 + $0x118] sm:$0x3] %vm1589, 0.0
      %1624 = vst.msk [vmem:[#allocation3 + $0x120] sm:$0xff] %vm1586, 0.0
      %1625 = vst.msk [vmem:[#allocation3 + $0x128] sm:$0xff] %vm1586, 0.0
      %1626 = vst.msk [vmem:[#allocation3 + $0x130] sm:$0x3] %vm1589, 0.0
      %1627 = vst.msk [vmem:[#allocation3 + $0x138] sm:$0xff] %vm1586, 0.0
      %1628 = vst.msk [vmem:[#allocation3 + $0x140] sm:$0xff] %vm1586, 0.0
      %1629 = vst.msk [vmem:[#allocation3 + $0x148] sm:$0x3] %vm1589, 0.0
      %1630 = vst.msk [vmem:[#allocation3 + $0x150] sm:$0xff] %vm1586, 0.0
      %1631 = vst.msk [vmem:[#allocation3 + $0x158] sm:$0xff] %vm1586, 0.0
      %1632 = vst.msk [vmem:[#allocation3 + $0x160] sm:$0x3] %vm1589, 0.0
      %1633 = vst.msk [vmem:[#allocation3 + $0x168] sm:$0xff] %vm1586, 0.0
      %1634 = vst.msk [vmem:[#allocation3 + $0x170] sm:$0xff] %vm1586, 0.0
      %1635 = vst.msk [vmem:[#allocation3 + $0x178] sm:$0x3] %vm1589, 0.0
      %1636 = vst.msk [vmem:[#allocation3 + $0x180] sm:$0xff] %vm1586, 0.0
      %1637 = vst.msk [vmem:[#allocation3 + $0x188] sm:$0xff] %vm1586, 0.0
      %1638 = vst.msk [vmem:[#allocation3 + $0x190] sm:$0x3] %vm1589, 0.0
      %1639 = vst.msk [vmem:[#allocation3 + $0x198] sm:$0xff] %vm1586, 0.0
      %1640 = vst.msk [vmem:[#allocation3 + $0x1a0] sm:$0xff] %vm1586, 0.0
      %1641 = vst.msk [vmem:[#allocation3 + $0x1a8] sm:$0x3] %vm1589, 0.0
      %s1642 = scalar_lea.vmem [#allocation3], 24
      %1643 = vst.msk [vmem:[%s1642 + $0x1] sm:$0xff] %vm1586, %v1554
      %1644 = vst.msk [vmem:[%s1642 + $0x9] sm:$0xff] %vm1586, %v1555
      %1645 = vst.msk [vmem:[%s1642 + $0x19] sm:$0xff] %vm1586, %v1556
      %1646 = vst.msk [vmem:[%s1642 + $0x21] sm:$0xff] %vm1586, %v1557
      %1647 = vst.msk [vmem:[%s1642 + $0x31] sm:$0xff] %vm1586, %v1558
      %1648 = vst.msk [vmem:[%s1642 + $0x39] sm:$0xff] %vm1586, %v1559
      %1649 = vst.msk [vmem:[%s1642 + $0x49] sm:$0xff] %vm1586, %v1560
      %1650 = vst.msk [vmem:[%s1642 + $0x51] sm:$0xff] %vm1586, %v1561
      %1651 = vst.msk [vmem:[%s1642 + $0x61] sm:$0xff] %vm1586, %v1562
      %1652 = vst.msk [vmem:[%s1642 + $0x69] sm:$0xff] %vm1586, %v1563
      %1653 = vst.msk [vmem:[%s1642 + $0x79] sm:$0xff] %vm1586, %v1564
      %1654 = vst.msk [vmem:[%s1642 + $0x81] sm:$0xff] %vm1586, %v1565
      %1655 = vst.msk [vmem:[%s1642 + $0x91] sm:$0xff] %vm1586, %v1566
      %1656 = vst.msk [vmem:[%s1642 + $0x99] sm:$0xff] %vm1586, %v1567
      %1657 = vst.msk [vmem:[%s1642 + $0xa9] sm:$0xff] %vm1586, %v1568
      %1658 = vst.msk [vmem:[%s1642 + $0xb1] sm:$0xff] %vm1586, %v1569
      %1659 = vst.msk [vmem:[%s1642 + $0xc1] sm:$0xff] %vm1586, %v1570
      %1660 = vst.msk [vmem:[%s1642 + $0xc9] sm:$0xff] %vm1586, %v1571
      %1661 = vst.msk [vmem:[%s1642 + $0xd9] sm:$0xff] %vm1586, %v1572
      %1662 = vst.msk [vmem:[%s1642 + $0xe1] sm:$0xff] %vm1586, %v1573
      %1663 = vst.msk [vmem:[%s1642 + $0xf1] sm:$0xff] %vm1586, %v1574
      %1664 = vst.msk [vmem:[%s1642 + $0xf9] sm:$0xff] %vm1586, %v1575
      %1665 = vst.msk [vmem:[%s1642 + $0x109] sm:$0xff] %vm1586, %v1576
      %1666 = vst.msk [vmem:[%s1642 + $0x111] sm:$0xff] %vm1586, %v1577
      %1667 = vst.msk [vmem:[%s1642 + $0x121] sm:$0xff] %vm1586, %v1578
      %1668 = vst.msk [vmem:[%s1642 + $0x129] sm:$0xff] %vm1586, %v1579
      %1669 = vst.msk [vmem:[%s1642 + $0x139] sm:$0xff] %vm1586, %v1580
      %1670 = vst.msk [vmem:[%s1642 + $0x141] sm:$0xff] %vm1586, %v1581
      %1671 = vst.msk [vmem:[%s1642 + $0x151] sm:$0xff] %vm1586, %v1582
      %1672 = vst.msk [vmem:[%s1642 + $0x159] sm:$0xff] %vm1586, %v1583
      %1673 = vst.msk [vmem:[%s1642 + $0x169] sm:$0xff] %vm1586, %v1584
      %1674 = vst.msk [vmem:[%s1642 + $0x171] sm:$0xff] %vm1586, %v1585
      %v1675 = vld [vmem:[#allocation3] sm:$0xff]
      %v1676 = vld [vmem:[#allocation3 + $0x8] sm:$0xff]
      %v1677 = vld [vmem:[#allocation3 + $0x18] sm:$0xff]
      %v1678 = vld [vmem:[#allocation3 + $0x20] sm:$0xff]
      %v1679 = vld [vmem:[#allocation3 + $0x30] sm:$0xff]
      %v1680 = vld [vmem:[#allocation3 + $0x38] sm:$0xff]
      %v1681 = vld [vmem:[#allocation3 + $0x48] sm:$0xff]
      %v1682 = vld [vmem:[#allocation3 + $0x50] sm:$0xff]
      %v1683 = vld [vmem:[#allocation3 + $0x60] sm:$0xff]
      %v1684 = vld [vmem:[#allocation3 + $0x68] sm:$0xff]
      %v1685 = vld [vmem:[#allocation3 + $0x78] sm:$0xff]
      %v1686 = vld [vmem:[#allocation3 + $0x80] sm:$0xff]
      %v1687 = vld [vmem:[#allocation3 + $0x90] sm:$0xff]
      %v1688 = vld [vmem:[#allocation3 + $0x98] sm:$0xff]
      %v1689 = vld [vmem:[#allocation3 + $0xa8] sm:$0xff]
      %v1690 = vld [vmem:[#allocation3 + $0xb0] sm:$0xff]
      %v1691 = vld [vmem:[#allocation3 + $0xc0] sm:$0xff]
      %v1692 = vld [vmem:[#allocation3 + $0xc8] sm:$0xff]
      %v1693 = vld [vmem:[#allocation3 + $0xd8] sm:$0xff]
      %v1694 = vld [vmem:[#allocation3 + $0xe0] sm:$0xff]
      %v1695 = vld [vmem:[#allocation3 + $0xf0] sm:$0xff]
      %v1696 = vld [vmem:[#allocation3 + $0xf8] sm:$0xff]
      %v1697 = vld [vmem:[#allocation3 + $0x108] sm:$0xff]
      %v1698 = vld [vmem:[#allocation3 + $0x110] sm:$0xff]
      %v1699 = vld [vmem:[#allocation3 + $0x120] sm:$0xff]
      %v1700 = vld [vmem:[#allocation3 + $0x128] sm:$0xff]
      %v1701 = vld [vmem:[#allocation3 + $0x138] sm:$0xff]
      %v1702 = vld [vmem:[#allocation3 + $0x140] sm:$0xff]
      %v1703 = vld [vmem:[#allocation3 + $0x150] sm:$0xff]
      %v1704 = vld [vmem:[#allocation3 + $0x158] sm:$0xff]
      %v1705 = vld [vmem:[#allocation3 + $0x168] sm:$0xff]
      %v1706 = vld [vmem:[#allocation3 + $0x170] sm:$0xff]
      %v1707 = vld [vmem:[#allocation3 + $0x180] sm:$0xff]
      %v1708 = vld [vmem:[#allocation3 + $0x188] sm:$0xff]
      %v1709 = vld [vmem:[#allocation3 + $0x198] sm:$0xff]
      %v1710 = vld [vmem:[#allocation3 + $0x1a0] sm:$0xff]
      %v1711 = vld [vmem:[#allocation3 + $0x1] sm:$0xff]
      %v1712 = vld [vmem:[#allocation3 + $0x9] sm:$0xff]
      %v1713 = vld [vmem:[#allocation3 + $0x19] sm:$0xff]
      %v1714 = vld [vmem:[#allocation3 + $0x21] sm:$0xff]
      %v1715 = vld [vmem:[#allocation3 + $0x31] sm:$0xff]
      %v1716 = vld [vmem:[#allocation3 + $0x39] sm:$0xff]
      %v1717 = vld [vmem:[#allocation3 + $0x49] sm:$0xff]
      %v1718 = vld [vmem:[#allocation3 + $0x51] sm:$0xff]
      %v1719 = vld [vmem:[#allocation3 + $0x61] sm:$0xff]
      %v1720 = vld [vmem:[#allocation3 + $0x69] sm:$0xff]
      %v1721 = vld [vmem:[#allocation3 + $0x79] sm:$0xff]
      %v1722 = vld [vmem:[#allocation3 + $0x81] sm:$0xff]
      %v1723 = vld [vmem:[#allocation3 + $0x91] sm:$0xff]
      %v1724 = vld [vmem:[#allocation3 + $0x99] sm:$0xff]
      %v1725 = vld [vmem:[#allocation3 + $0xa9] sm:$0xff]
      %v1726 = vld [vmem:[#allocation3 + $0xb1] sm:$0xff]
      %v1727 = vld [vmem:[#allocation3 + $0xc1] sm:$0xff]
      %v1728 = vld [vmem:[#allocation3 + $0xc9] sm:$0xff]
      %v1729 = vld [vmem:[#allocation3 + $0xd9] sm:$0xff]
      %v1730 = vld [vmem:[#allocation3 + $0xe1] sm:$0xff]
      %v1731 = vld [vmem:[#allocation3 + $0xf1] sm:$0xff]
      %v1732 = vld [vmem:[#allocation3 + $0xf9] sm:$0xff]
      %v1733 = vld [vmem:[#allocation3 + $0x109] sm:$0xff]
      %v1734 = vld [vmem:[#allocation3 + $0x111] sm:$0xff]
      %v1735 = vld [vmem:[#allocation3 + $0x121] sm:$0xff]
      %v1736 = vld [vmem:[#allocation3 + $0x129] sm:$0xff]
      %v1737 = vld [vmem:[#allocation3 + $0x139] sm:$0xff]
      %v1738 = vld [vmem:[#allocation3 + $0x141] sm:$0xff]
      %v1739 = vld [vmem:[#allocation3 + $0x151] sm:$0xff]
      %v1740 = vld [vmem:[#allocation3 + $0x159] sm:$0xff]
      %v1741 = vld [vmem:[#allocation3 + $0x169] sm:$0xff]
      %v1742 = vld [vmem:[#allocation3 + $0x171] sm:$0xff]
      %v1743 = vld [vmem:[#allocation3 + $0x181] sm:$0xff]
      %v1744 = vld [vmem:[#allocation3 + $0x189] sm:$0xff]
      %v1745 = vld [vmem:[#allocation3 + $0x199] sm:$0xff]
      %v1746 = vld [vmem:[#allocation3 + $0x1a1] sm:$0xff]
      %v1747 = vld [vmem:[#allocation3 + $0x2] sm:$0xff]
      %v1748 = vld [vmem:[#allocation3 + $0xa] sm:$0xff]
      %v1749 = vld [vmem:[#allocation3 + $0x1a] sm:$0xff]
      %v1750 = vld [vmem:[#allocation3 + $0x22] sm:$0xff]
      %v1751 = vld [vmem:[#allocation3 + $0x32] sm:$0xff]
      %v1752 = vld [vmem:[#allocation3 + $0x3a] sm:$0xff]
      %v1753 = vld [vmem:[#allocation3 + $0x4a] sm:$0xff]
      %v1754 = vld [vmem:[#allocation3 + $0x52] sm:$0xff]
      %v1755 = vld [vmem:[#allocation3 + $0x62] sm:$0xff]
      %v1756 = vld [vmem:[#allocation3 + $0x6a] sm:$0xff]
      %v1757 = vld [vmem:[#allocation3 + $0x7a] sm:$0xff]
      %v1758 = vld [vmem:[#allocation3 + $0x82] sm:$0xff]
      %v1759 = vld [vmem:[#allocation3 + $0x92] sm:$0xff]
      %v1760 = vld [vmem:[#allocation3 + $0x9a] sm:$0xff]
      %v1761 = vld [vmem:[#allocation3 + $0xaa] sm:$0xff]
      %v1762 = vld [vmem:[#allocation3 + $0xb2] sm:$0xff]
      %v1763 = vld [vmem:[#allocation3 + $0xc2] sm:$0xff]
      %v1764 = vld [vmem:[#allocation3 + $0xca] sm:$0xff]
      %v1765 = vld [vmem:[#allocation3 + $0xda] sm:$0xff]
      %v1766 = vld [vmem:[#allocation3 + $0xe2] sm:$0xff]
      %v1767 = vld [vmem:[#allocation3 + $0xf2] sm:$0xff]
      %v1768 = vld [vmem:[#allocation3 + $0xfa] sm:$0xff]
      %v1769 = vld [vmem:[#allocation3 + $0x10a] sm:$0xff]
      %v1770 = vld [vmem:[#allocation3 + $0x112] sm:$0xff]
      %v1771 = vld [vmem:[#allocation3 + $0x122] sm:$0xff]
      %v1772 = vld [vmem:[#allocation3 + $0x12a] sm:$0xff]
      %v1773 = vld [vmem:[#allocation3 + $0x13a] sm:$0xff]
      %v1774 = vld [vmem:[#allocation3 + $0x142] sm:$0xff]
      %v1775 = vld [vmem:[#allocation3 + $0x152] sm:$0xff]
      %v1776 = vld [vmem:[#allocation3 + $0x15a] sm:$0xff]
      %v1777 = vld [vmem:[#allocation3 + $0x16a] sm:$0xff]
      %v1778 = vld [vmem:[#allocation3 + $0x172] sm:$0xff]
      %v1779 = vld [vmem:[#allocation3 + $0x182] sm:$0xff]
      %v1780 = vld [vmem:[#allocation3 + $0x18a] sm:$0xff]
      %v1781 = vld [vmem:[#allocation3 + $0x19a] sm:$0xff]
      %v1782 = vld [vmem:[#allocation3 + $0x1a2] sm:$0xff]
      %v1783 = vpack.c.bf16 %v1676, %v1675
      %v1784 = vpack.c.bf16 %v1678, %v1677
      %v1785 = vpack.c.bf16 %v1680, %v1679
      %v1786 = vpack.c.bf16 %v1682, %v1681
      %v1787 = vpack.c.bf16 %v1684, %v1683
      %v1788 = vpack.c.bf16 %v1686, %v1685
      %v1789 = vpack.c.bf16 %v1688, %v1687
      %v1790 = vpack.c.bf16 %v1690, %v1689
      %v1791 = vpack.c.bf16 %v1692, %v1691
      %v1792 = vpack.c.bf16 %v1694, %v1693
      %v1793 = vpack.c.bf16 %v1696, %v1695
      %v1794 = vpack.c.bf16 %v1698, %v1697
      %v1795 = vpack.c.bf16 %v1700, %v1699
      %v1796 = vpack.c.bf16 %v1702, %v1701
      %v1797 = vpack.c.bf16 %v1704, %v1703
      %v1798 = vpack.c.bf16 %v1706, %v1705
      %v1799 = vpack.c.bf16 %v1712, %v1711
      %v1800 = vpack.c.bf16 %v1714, %v1713
      %v1801 = vpack.c.bf16 %v1716, %v1715
      %v1802 = vpack.c.bf16 %v1718, %v1717
      %v1803 = vpack.c.bf16 %v1720, %v1719
      %v1804 = vpack.c.bf16 %v1722, %v1721
      %v1805 = vpack.c.bf16 %v1724, %v1723
      %v1806 = vpack.c.bf16 %v1726, %v1725
      %v1807 = vpack.c.bf16 %v1728, %v1727
      %v1808 = vpack.c.bf16 %v1730, %v1729
      %v1809 = vpack.c.bf16 %v1732, %v1731
      %v1810 = vpack.c.bf16 %v1734, %v1733
      %v1811 = vpack.c.bf16 %v1736, %v1735
      %v1812 = vpack.c.bf16 %v1738, %v1737
      %v1813 = vpack.c.bf16 %v1740, %v1739
      %v1814 = vpack.c.bf16 %v1742, %v1741
      %v1815 = vpack.c.bf16 %v1748, %v1747
      %v1816 = vpack.c.bf16 %v1750, %v1749
      %v1817 = vpack.c.bf16 %v1752, %v1751
      %v1818 = vpack.c.bf16 %v1754, %v1753
      %v1819 = vpack.c.bf16 %v1756, %v1755
      %v1820 = vpack.c.bf16 %v1758, %v1757
      %v1821 = vpack.c.bf16 %v1760, %v1759
      %v1822 = vpack.c.bf16 %v1762, %v1761
      %v1823 = vpack.c.bf16 %v1764, %v1763
      %v1824 = vpack.c.bf16 %v1766, %v1765
      %v1825 = vpack.c.bf16 %v1768, %v1767
      %v1826 = vpack.c.bf16 %v1770, %v1769
      %v1827 = vpack.c.bf16 %v1772, %v1771
      %v1828 = vpack.c.bf16 %v1774, %v1773
      %v1829 = vpack.c.bf16 %v1776, %v1775
      %v1830 = vpack.c.bf16 %v1778, %v1777
      %v1831 = vpack.c.bf16 %v1708, %v1707
      %v1832 = vpack.c.bf16 %v1744, %v1743
      %v1833 = vpack.c.bf16 %v1780, %v1779
      %v1834 = vpack.c.bf16 %v1710, %v1709
      %v1835 = vpack.c.bf16 %v1746, %v1745
      %v1836 = vpack.c.bf16 %v1782, %v1781
      %1853 = vrot.lane.b32.xlu0 %v1799, 32
      %v1854 = vpop.permute.xlu0 %1853
      %1855 = vrot.lane.b32.xlu0 %v1800, 32
      %v1856 = vpop.permute.xlu0 %1855
      %1857 = vrot.lane.b32.xlu0 %v1801, 32
      %v1858 = vpop.permute.xlu0 %1857
      %1859 = vrot.lane.b32.xlu0 %v1802, 32
      %v1860 = vpop.permute.xlu0 %1859
      %1861 = vrot.lane.b32.xlu0 %v1803, 32
      %v1862 = vpop.permute.xlu0 %1861
      %1863 = vrot.lane.b32.xlu0 %v1804, 32
      %v1864 = vpop.permute.xlu0 %1863
      %1865 = vrot.lane.b32.xlu0 %v1805, 32
      %v1866 = vpop.permute.xlu0 %1865
      %1867 = vrot.lane.b32.xlu0 %v1806, 32
      %v1868 = vpop.permute.xlu0 %1867
      %1869 = vrot.lane.b32.xlu0 %v1807, 32
      %v1870 = vpop.permute.xlu0 %1869
      %1871 = vrot.lane.b32.xlu0 %v1808, 32
      %v1872 = vpop.permute.xlu0 %1871
      %1873 = vrot.lane.b32.xlu0 %v1809, 32
      %v1874 = vpop.permute.xlu0 %1873
      %1875 = vrot.lane.b32.xlu0 %v1810, 32
      %v1876 = vpop.permute.xlu0 %1875
      %1877 = vrot.lane.b32.xlu0 %v1811, 32
      %v1878 = vpop.permute.xlu0 %1877
      %1879 = vrot.lane.b32.xlu0 %v1812, 32
      %v1880 = vpop.permute.xlu0 %1879
      %1881 = vrot.lane.b32.xlu0 %v1813, 32
      %v1882 = vpop.permute.xlu0 %1881
      %1883 = vrot.lane.b32.xlu0 %v1814, 32
      %v1884 = vpop.permute.xlu0 %1883
      %1901 = vrot.lane.b32.xlu0 %v1815, 64
      %v1902 = vpop.permute.xlu0 %1901
      %1903 = vrot.lane.b32.xlu0 %v1816, 64
      %v1904 = vpop.permute.xlu0 %1903
      %1905 = vrot.lane.b32.xlu0 %v1817, 64
      %v1906 = vpop.permute.xlu0 %1905
      %1907 = vrot.lane.b32.xlu0 %v1818, 64
      %v1908 = vpop.permute.xlu0 %1907
      %1909 = vrot.lane.b32.xlu0 %v1819, 64
      %v1910 = vpop.permute.xlu0 %1909
      %1911 = vrot.lane.b32.xlu0 %v1820, 64
      %v1912 = vpop.permute.xlu0 %1911
      %1913 = vrot.lane.b32.xlu0 %v1821, 64
      %v1914 = vpop.permute.xlu0 %1913
      %1915 = vrot.lane.b32.xlu0 %v1822, 64
      %v1916 = vpop.permute.xlu0 %1915
      %1917 = vrot.lane.b32.xlu0 %v1823, 64
      %v1918 = vpop.permute.xlu0 %1917
      %1919 = vrot.lane.b32.xlu0 %v1824, 64
      %v1920 = vpop.permute.xlu0 %1919
      %1921 = vrot.lane.b32.xlu0 %v1825, 64
      %v1922 = vpop.permute.xlu0 %1921
      %1923 = vrot.lane.b32.xlu0 %v1826, 64
      %v1924 = vpop.permute.xlu0 %1923
      %1925 = vrot.lane.b32.xlu0 %v1827, 64
      %v1926 = vpop.permute.xlu0 %1925
      %1927 = vrot.lane.b32.xlu0 %v1828, 64
      %v1928 = vpop.permute.xlu0 %1927
      %1929 = vrot.lane.b32.xlu0 %v1829, 64
      %v1930 = vpop.permute.xlu0 %1929
      %1931 = vrot.lane.b32.xlu0 %v1830, 64
      %v1932 = vpop.permute.xlu0 %1931
      %1949 = vrot.lane.b32.xlu0 %v1784, 96
      %v1950 = vpop.permute.xlu0 %1949
      %1951 = vrot.lane.b32.xlu0 %v1785, 96
      %v1952 = vpop.permute.xlu0 %1951
      %1953 = vrot.lane.b32.xlu0 %v1786, 96
      %v1954 = vpop.permute.xlu0 %1953
      %1955 = vrot.lane.b32.xlu0 %v1787, 96
      %v1956 = vpop.permute.xlu0 %1955
      %1957 = vrot.lane.b32.xlu0 %v1788, 96
      %v1958 = vpop.permute.xlu0 %1957
      %1959 = vrot.lane.b32.xlu0 %v1789, 96
      %v1960 = vpop.permute.xlu0 %1959
      %1961 = vrot.lane.b32.xlu0 %v1790, 96
      %v1962 = vpop.permute.xlu0 %1961
      %1963 = vrot.lane.b32.xlu0 %v1791, 96
      %v1964 = vpop.permute.xlu0 %1963
      %1965 = vrot.lane.b32.xlu0 %v1792, 96
      %v1966 = vpop.permute.xlu0 %1965
      %1967 = vrot.lane.b32.xlu0 %v1793, 96
      %v1968 = vpop.permute.xlu0 %1967
      %1969 = vrot.lane.b32.xlu0 %v1794, 96
      %v1970 = vpop.permute.xlu0 %1969
      %1971 = vrot.lane.b32.xlu0 %v1795, 96
      %v1972 = vpop.permute.xlu0 %1971
      %1973 = vrot.lane.b32.xlu0 %v1796, 96
      %v1974 = vpop.permute.xlu0 %1973
      %1975 = vrot.lane.b32.xlu0 %v1797, 96
      %v1976 = vpop.permute.xlu0 %1975
      %1977 = vrot.lane.b32.xlu0 %v1798, 96
      %v1978 = vpop.permute.xlu0 %1977
      %1979 = vrot.lane.b32.xlu0 %v1831, 96
      %v1980 = vpop.permute.xlu0 %1979
      %1982 = vrot.lane.b32.xlu0 %v1816, 32
      %v1983 = vpop.permute.xlu0 %1982
      %1984 = vrot.lane.b32.xlu0 %v1817, 32
      %v1985 = vpop.permute.xlu0 %1984
      %1986 = vrot.lane.b32.xlu0 %v1818, 32
      %v1987 = vpop.permute.xlu0 %1986
      %1988 = vrot.lane.b32.xlu0 %v1819, 32
      %v1989 = vpop.permute.xlu0 %1988
      %1990 = vrot.lane.b32.xlu0 %v1820, 32
      %v1991 = vpop.permute.xlu0 %1990
      %1992 = vrot.lane.b32.xlu0 %v1821, 32
      %v1993 = vpop.permute.xlu0 %1992
      %1994 = vrot.lane.b32.xlu0 %v1822, 32
      %v1995 = vpop.permute.xlu0 %1994
      %1996 = vrot.lane.b32.xlu0 %v1823, 32
      %v1997 = vpop.permute.xlu0 %1996
      %1998 = vrot.lane.b32.xlu0 %v1824, 32
      %v1999 = vpop.permute.xlu0 %1998
      %2000 = vrot.lane.b32.xlu0 %v1825, 32
      %v2001 = vpop.permute.xlu0 %2000
      %2002 = vrot.lane.b32.xlu0 %v1826, 32
      %v2003 = vpop.permute.xlu0 %2002
      %2004 = vrot.lane.b32.xlu0 %v1827, 32
      %v2005 = vpop.permute.xlu0 %2004
      %2006 = vrot.lane.b32.xlu0 %v1828, 32
      %v2007 = vpop.permute.xlu0 %2006
      %2008 = vrot.lane.b32.xlu0 %v1829, 32
      %v2009 = vpop.permute.xlu0 %2008
      %2010 = vrot.lane.b32.xlu0 %v1830, 32
      %v2011 = vpop.permute.xlu0 %2010
      %2012 = vrot.lane.b32.xlu0 %v1833, 32
      %v2013 = vpop.permute.xlu0 %2012
      %2015 = vrot.lane.b32.xlu0 %v1785, 64
      %v2016 = vpop.permute.xlu0 %2015
      %2017 = vrot.lane.b32.xlu0 %v1786, 64
      %v2018 = vpop.permute.xlu0 %2017
      %2019 = vrot.lane.b32.xlu0 %v1787, 64
      %v2020 = vpop.permute.xlu0 %2019
      %2021 = vrot.lane.b32.xlu0 %v1788, 64
      %v2022 = vpop.permute.xlu0 %2021
      %2023 = vrot.lane.b32.xlu0 %v1789, 64
      %v2024 = vpop.permute.xlu0 %2023
      %2025 = vrot.lane.b32.xlu0 %v1790, 64
      %v2026 = vpop.permute.xlu0 %2025
      %2027 = vrot.lane.b32.xlu0 %v1791, 64
      %v2028 = vpop.permute.xlu0 %2027
      %2029 = vrot.lane.b32.xlu0 %v1792, 64
      %v2030 = vpop.permute.xlu0 %2029
      %2031 = vrot.lane.b32.xlu0 %v1793, 64
      %v2032 = vpop.permute.xlu0 %2031
      %2033 = vrot.lane.b32.xlu0 %v1794, 64
      %v2034 = vpop.permute.xlu0 %2033
      %2035 = vrot.lane.b32.xlu0 %v1795, 64
      %v2036 = vpop.permute.xlu0 %2035
      %2037 = vrot.lane.b32.xlu0 %v1796, 64
      %v2038 = vpop.permute.xlu0 %2037
      %2039 = vrot.lane.b32.xlu0 %v1797, 64
      %v2040 = vpop.permute.xlu0 %2039
      %2041 = vrot.lane.b32.xlu0 %v1798, 64
      %v2042 = vpop.permute.xlu0 %2041
      %2043 = vrot.lane.b32.xlu0 %v1831, 64
      %v2044 = vpop.permute.xlu0 %2043
      %2045 = vrot.lane.b32.xlu0 %v1834, 64
      %v2046 = vpop.permute.xlu0 %2045
      %2049 = vrot.lane.b32.xlu0 %v1801, 96
      %v2050 = vpop.permute.xlu0 %2049
      %2051 = vrot.lane.b32.xlu0 %v1802, 96
      %v2052 = vpop.permute.xlu0 %2051
      %2053 = vrot.lane.b32.xlu0 %v1803, 96
      %v2054 = vpop.permute.xlu0 %2053
      %2055 = vrot.lane.b32.xlu0 %v1804, 96
      %v2056 = vpop.permute.xlu0 %2055
      %2057 = vrot.lane.b32.xlu0 %v1805, 96
      %v2058 = vpop.permute.xlu0 %2057
      %2059 = vrot.lane.b32.xlu0 %v1806, 96
      %v2060 = vpop.permute.xlu0 %2059
      %2061 = vrot.lane.b32.xlu0 %v1807, 96
      %v2062 = vpop.permute.xlu0 %2061
      %2063 = vrot.lane.b32.xlu0 %v1808, 96
      %v2064 = vpop.permute.xlu0 %2063
      %2065 = vrot.lane.b32.xlu0 %v1809, 96
      %v2066 = vpop.permute.xlu0 %2065
      %2067 = vrot.lane.b32.xlu0 %v1810, 96
      %v2068 = vpop.permute.xlu0 %2067
      %2069 = vrot.lane.b32.xlu0 %v1811, 96
      %v2070 = vpop.permute.xlu0 %2069
      %2071 = vrot.lane.b32.xlu0 %v1812, 96
      %v2072 = vpop.permute.xlu0 %2071
      %2073 = vrot.lane.b32.xlu0 %v1813, 96
      %v2074 = vpop.permute.xlu0 %2073
      %2075 = vrot.lane.b32.xlu0 %v1814, 96
      %v2076 = vpop.permute.xlu0 %2075
      %2077 = vrot.lane.b32.xlu0 %v1832, 96
      %v2078 = vpop.permute.xlu0 %2077
      %2079 = vrot.lane.b32.xlu0 %v1835, 96
      %v2080 = vpop.permute.xlu0 %2079
      %v2083 = vsel %vm1586, %v1783, %v1854
      %v2086 = vsel %vm1586, %v1784, %v1856
      %v2089 = vsel %vm1586, %v1785, %v1858
      %v2092 = vsel %vm1586, %v1786, %v1860
      %v2095 = vsel %vm1586, %v1787, %v1862
      %v2098 = vsel %vm1586, %v1788, %v1864
      %v2101 = vsel %vm1586, %v1789, %v1866
      %v2104 = vsel %vm1586, %v1790, %v1868
      %v2107 = vsel %vm1586, %v1791, %v1870
      %v2110 = vsel %vm1586, %v1792, %v1872
      %v2113 = vsel %vm1586, %v1793, %v1874
      %v2116 = vsel %vm1586, %v1794, %v1876
      %v2119 = vsel %vm1586, %v1795, %v1878
      %v2122 = vsel %vm1586, %v1796, %v1880
      %v2125 = vsel %vm1586, %v1797, %v1882
      %v2128 = vsel %vm1586, %v1798, %v1884
      %vm2129 = vcmask 523264
      %v2131 = vsel %vm2129, %v2083, %v1902
      %v2133 = vsel %vm2129, %v2086, %v1904
      %v2135 = vsel %vm2129, %v2089, %v1906
      %v2137 = vsel %vm2129, %v2092, %v1908
      %v2139 = vsel %vm2129, %v2095, %v1910
      %v2141 = vsel %vm2129, %v2098, %v1912
      %v2143 = vsel %vm2129, %v2101, %v1914
      %v2145 = vsel %vm2129, %v2104, %v1916
      %v2147 = vsel %vm2129, %v2107, %v1918
      %v2149 = vsel %vm2129, %v2110, %v1920
      %v2151 = vsel %vm2129, %v2113, %v1922
      %v2153 = vsel %vm2129, %v2116, %v1924
      %v2155 = vsel %vm2129, %v2119, %v1926
      %v2157 = vsel %vm2129, %v2122, %v1928
      %v2159 = vsel %vm2129, %v2125, %v1930
      %v2161 = vsel %vm2129, %v2128, %v1932
      %vm2162 = vcmask 785408
      %v2164 = vsel %vm2162, %v2131, %v1950
      %v2167 = vsel %vm2162, %v2133, %v1952
      %v2170 = vsel %vm2162, %v2135, %v1954
      %v2173 = vsel %vm2162, %v2137, %v1956
      %v2176 = vsel %vm2162, %v2139, %v1958
      %v2179 = vsel %vm2162, %v2141, %v1960
      %v2182 = vsel %vm2162, %v2143, %v1962
      %v2185 = vsel %vm2162, %v2145, %v1964
      %v2188 = vsel %vm2162, %v2147, %v1966
      %v2191 = vsel %vm2162, %v2149, %v1968
      %v2194 = vsel %vm2162, %v2151, %v1970
      %v2197 = vsel %vm2162, %v2153, %v1972
      %v2200 = vsel %vm2162, %v2155, %v1974
      %v2203 = vsel %vm2162, %v2157, %v1976
      %v2206 = vsel %vm2162, %v2159, %v1978
      %v2209 = vsel %vm2162, %v2161, %v1980
      %v2213 = vsel %vm1586, %v1800, %v1983
      %v2216 = vsel %vm1586, %v1801, %v1985
      %v2219 = vsel %vm1586, %v1802, %v1987
      %v2222 = vsel %vm1586, %v1803, %v1989
      %v2225 = vsel %vm1586, %v1804, %v1991
      %v2228 = vsel %vm1586, %v1805, %v1993
      %v2231 = vsel %vm1586, %v1806, %v1995
      %v2234 = vsel %vm1586, %v1807, %v1997
      %v2237 = vsel %vm1586, %v1808, %v1999
      %v2240 = vsel %vm1586, %v1809, %v2001
      %v2243 = vsel %vm1586, %v1810, %v2003
      %v2246 = vsel %vm1586, %v1811, %v2005
      %v2249 = vsel %vm1586, %v1812, %v2007
      %v2252 = vsel %vm1586, %v1813, %v2009
      %v2255 = vsel %vm1586, %v1814, %v2011
      %v2258 = vsel %vm1586, %v1832, %v2013
      %v2260 = vsel %vm2129, %v2213, %v2016
      %v2262 = vsel %vm2129, %v2216, %v2018
      %v2264 = vsel %vm2129, %v2219, %v2020
      %v2266 = vsel %vm2129, %v2222, %v2022
      %v2268 = vsel %vm2129, %v2225, %v2024
      %v2270 = vsel %vm2129, %v2228, %v2026
      %v2272 = vsel %vm2129, %v2231, %v2028
      %v2274 = vsel %vm2129, %v2234, %v2030
      %v2276 = vsel %vm2129, %v2237, %v2032
      %v2278 = vsel %vm2129, %v2240, %v2034
      %v2280 = vsel %vm2129, %v2243, %v2036
      %v2282 = vsel %vm2129, %v2246, %v2038
      %v2284 = vsel %vm2129, %v2249, %v2040
      %v2286 = vsel %vm2129, %v2252, %v2042
      %v2288 = vsel %vm2129, %v2255, %v2044
      %v2290 = vsel %vm2129, %v2258, %v2046
      %v2292 = vsel %vm2162, %v2260, %v2050
      %v2295 = vsel %vm2162, %v2262, %v2052
      %v2298 = vsel %vm2162, %v2264, %v2054
      %v2301 = vsel %vm2162, %v2266, %v2056
      %v2304 = vsel %vm2162, %v2268, %v2058
      %v2307 = vsel %vm2162, %v2270, %v2060
      %v2310 = vsel %vm2162, %v2272, %v2062
      %v2313 = vsel %vm2162, %v2274, %v2064
      %v2316 = vsel %vm2162, %v2276, %v2066
      %v2319 = vsel %vm2162, %v2278, %v2068
      %v2322 = vsel %vm2162, %v2280, %v2070
      %v2325 = vsel %vm2162, %v2282, %v2072
      %v2328 = vsel %vm2162, %v2284, %v2074
      %v2331 = vsel %vm2162, %v2286, %v2076
      %v2334 = vsel %vm2162, %v2288, %v2078
      %v2337 = vsel %vm2162, %v2290, %v2080
      %v2339 = vld [vmem:[%s4] sm:$0xf]
      %v2340 = vld [vmem:[%s4 + $0x4] sm:$0xf]
      %v2341 = vld [vmem:[%s4 + $0x8] sm:$0xf]
      %v2342 = vld [vmem:[%s4 + $0xc] sm:$0xf]
      %v2343 = vld [vmem:[%s4 + $0x10] sm:$0xf]
      %v2344 = vld [vmem:[%s4 + $0x14] sm:$0xf]
      %v2345 = vld [vmem:[%s4 + $0x18] sm:$0xf]
      %v2346 = vld [vmem:[%s4 + $0x1c] sm:$0xf]
      %v2347 = vld [vmem:[%s4 + $0x20] sm:$0xf]
      %v2348 = vld [vmem:[%s4 + $0x24] sm:$0xf]
      %v2349 = vld [vmem:[%s4 + $0x28] sm:$0xf]
      %v2350 = vld [vmem:[%s4 + $0x2c] sm:$0xf]
      %v2351 = vld [vmem:[%s4 + $0x30] sm:$0xf]
      %v2352 = vld [vmem:[%s4 + $0x34] sm:$0xf]
      %v2353 = vld [vmem:[%s4 + $0x38] sm:$0xf]
      %v2354 = vld [vmem:[%s4 + $0x3c] sm:$0xf]
      %v2355 = vld [vmem:[%s4 + $0x40] sm:$0xf]
      %v2356 = vld [vmem:[%s4 + $0x44] sm:$0xf]
      %v2357 = vld [vmem:[%s4 + $0x48] sm:$0xf]
      %v2358 = vld [vmem:[%s4 + $0x4c] sm:$0xf]
      %v2359 = vld [vmem:[%s4 + $0x50] sm:$0xf]
      %v2360 = vld [vmem:[%s4 + $0x54] sm:$0xf]
      %v2361 = vld [vmem:[%s4 + $0x58] sm:$0xf]
      %v2362 = vld [vmem:[%s4 + $0x5c] sm:$0xf]
      %v2363 = vld [vmem:[%s4 + $0x60] sm:$0xf]
      %v2364 = vld [vmem:[%s4 + $0x64] sm:$0xf]
      %v2365 = vld [vmem:[%s4 + $0x68] sm:$0xf]
      %v2366 = vld [vmem:[%s4 + $0x6c] sm:$0xf]
      %v2367 = vld [vmem:[%s4 + $0x70] sm:$0xf]
      %v2368 = vld [vmem:[%s4 + $0x74] sm:$0xf]
      %v2369 = vld [vmem:[%s4 + $0x78] sm:$0xf]
      %v2370 = vld [vmem:[%s4 + $0x7c] sm:$0xf]
      %v2371 = vld [vmem:[%s4 + $0x80] sm:$0xf]
      %v2372 = vld [vmem:[%s4 + $0x84] sm:$0xf]
      %v2373 = vld [vmem:[%s4 + $0x88] sm:$0xf]
      %v2374 = vld [vmem:[%s4 + $0x8c] sm:$0xf]
      %v2375 = vld [vmem:[%s5] sm:$0x1]
      %v2377 = vlaneseq
      %v2378 = vshrl.u32 %v2377, 7
      %v2379 = vsub.s32 0, %v2378
      %v2380 = vrot.slane %v2375, %v2379
      %v2418 = vunpack.c.l.b16 %v2339
      %v2419 = vunpack.c.l.b16 %v2340
      %v2420 = vunpack.c.l.b16 %v2341
      %v2421 = vunpack.c.l.b16 %v2342
      %v2422 = vunpack.c.l.b16 %v2343
      %v2423 = vunpack.c.l.b16 %v2344
      %v2424 = vunpack.c.l.b16 %v2345
      %v2425 = vunpack.c.l.b16 %v2346
      %v2426 = vunpack.c.l.b16 %v2347
      %v2427 = vunpack.c.l.b16 %v2348
      %v2428 = vunpack.c.l.b16 %v2349
      %v2429 = vunpack.c.l.b16 %v2350
      %v2430 = vunpack.c.l.b16 %v2351
      %v2431 = vunpack.c.l.b16 %v2352
      %v2432 = vunpack.c.l.b16 %v2353
      %v2433 = vunpack.c.l.b16 %v2354
      %v2434 = vunpack.c.l.b16 %v2355
      %v2435 = vunpack.c.l.b16 %v2356
      %v2436 = vunpack.c.l.b16 %v2357
      %v2437 = vunpack.c.l.b16 %v2358
      %v2438 = vunpack.c.l.b16 %v2359
      %v2439 = vunpack.c.l.b16 %v2360
      %v2440 = vunpack.c.l.b16 %v2361
      %v2441 = vunpack.c.l.b16 %v2362
      %v2442 = vunpack.c.l.b16 %v2363
      %v2443 = vunpack.c.l.b16 %v2364
      %v2444 = vunpack.c.l.b16 %v2365
      %v2445 = vunpack.c.l.b16 %v2366
      %v2446 = vunpack.c.l.b16 %v2367
      %v2447 = vunpack.c.l.b16 %v2368
      %v2448 = vunpack.c.l.b16 %v2369
      %v2449 = vunpack.c.l.b16 %v2370
      %v2450 = vunpack.c.l.b16 %v2371
      %v2451 = vunpack.c.l.b16 %v2372
      %v2452 = vunpack.c.l.b16 %v2373
      %v2453 = vunpack.c.l.b16 %v2374
      %v2454 = vpack.c.b16 %v2419, %v2418
      %v2455 = vpack.c.b16 %v2421, %v2420
      %v2456 = vpack.c.b16 %v2423, %v2422
      %v2457 = vpack.c.b16 %v2425, %v2424
      %v2458 = vpack.c.b16 %v2427, %v2426
      %v2459 = vpack.c.b16 %v2429, %v2428
      %v2460 = vpack.c.b16 %v2431, %v2430
      %v2461 = vpack.c.b16 %v2433, %v2432
      %v2462 = vpack.c.b16 %v2435, %v2434
      %v2463 = vpack.c.b16 %v2437, %v2436
      %v2464 = vpack.c.b16 %v2439, %v2438
      %v2465 = vpack.c.b16 %v2441, %v2440
      %v2466 = vpack.c.b16 %v2443, %v2442
      %v2467 = vpack.c.b16 %v2445, %v2444
      %v2468 = vpack.c.b16 %v2447, %v2446
      %v2469 = vpack.c.b16 %v2449, %v2448
      %v2470 = vpack.c.b16 %v2451, %v2450
      %v2471 = vpack.c.b16 %v2453, %v2452
      %v2491 = vsel %vm1586, %v1817, 0
      %v2494 = vsel %vm1586, %v1818, 0
      %v2497 = vsel %vm1586, %v1819, 0
      %v2500 = vsel %vm1586, %v1820, 0
      %v2503 = vsel %vm1586, %v1821, 0
      %v2506 = vsel %vm1586, %v1822, 0
      %v2509 = vsel %vm1586, %v1823, 0
      %v2512 = vsel %vm1586, %v1824, 0
      %v2515 = vsel %vm1586, %v1825, 0
      %v2518 = vsel %vm1586, %v1826, 0
      %v2521 = vsel %vm1586, %v1827, 0
      %v2524 = vsel %vm1586, %v1828, 0
      %v2527 = vsel %vm1586, %v1829, 0
      %v2530 = vsel %vm1586, %v1830, 0
      %v2533 = vsel %vm1586, %v1833, 0
      %v2536 = vsel %vm1586, %v1836, 0
      %2538 = vmatprep.subr.bf16.mxu0 0
      %2539 = vmatpush1.bf16.msra.mxu0 %v2461
      %2540 = vmatprep.subr.bf16.mxu0 0
      %2541 = vmatpush1.bf16.msra.mxu0 %v2460
      %2542 = vmatprep.subr.bf16.mxu0 0
      %2543 = vmatpush1.bf16.msra.mxu0 %v2459
      %2544 = vmatprep.subr.bf16.mxu0 0
      %2545 = vmatpush1.bf16.msra.mxu0 %v2458
      %2546 = vmatprep.subr.bf16.mxu0 0
      %2547 = vmatpush1.bf16.msra.mxu0 %v2457
      %2548 = vmatprep.subr.bf16.mxu0 0
      %2549 = vmatpush1.bf16.msra.mxu0 %v2456
      %2550 = vmatprep.subr.bf16.mxu0 0
      %2551 = vmatpush1.bf16.msra.mxu0 %v2455
      %2552 = vmatprep.subr.bf16.mxu0 0
      %2553 = vmatpush1.bf16.msra.mxu0 %v2454
      %2554 = vmatprep.subr.bf16.mxu0 0
      %2555 = vmatpush2.bf16.msra.mxu0 %v2469
      %2556 = vmatprep.subr.bf16.mxu0 0
      %2557 = vmatpush2.bf16.msra.mxu0 %v2468
      %2558 = vmatprep.subr.bf16.mxu0 0
      %2559 = vmatpush2.bf16.msra.mxu0 %v2467
      %2560 = vmatprep.subr.bf16.mxu0 0
      %2561 = vmatpush2.bf16.msra.mxu0 %v2466
      %2562 = vmatprep.subr.bf16.mxu0 0
      %2563 = vmatpush2.bf16.msra.mxu0 %v2465
      %2564 = vmatprep.subr.bf16.mxu0 0
      %2565 = vmatpush2.bf16.msra.mxu0 %v2464
      %2566 = vmatprep.subr.bf16.mxu0 0
      %2567 = vmatpush2.bf16.msra.mxu0 %v2463
      %2568 = vmatprep.subr.bf16.mxu0 0
      %2569 = vmatpush2.bf16.msra.mxu0 %v2462
      %2570 = vmatprep.mubr.bf16.mxu0 %v2292
      %2571 = vmatmul.mubr.bf16.gmra.mxu0 %v2164
      %v2572 = vpop.f32.mrf.mxu0
      %v2573 = vadd.f32 %v2380, %v2572
      %v2574 = vpop.f32.mrf.mxu0
      %v2575 = vpop.f32.mrf.mxu0
      %v2576 = vadd.f32 %v2380, %v2575
      %v2577 = vpop.f32.mrf.mxu0
      %2578 = vmatprep.mubr.bf16.mxu0 %v2295
      %2579 = vmatmul.mubr.bf16.gmra.mxu0 %v2167
      %v2580 = vpop.f32.mrf.mxu0
      %v2581 = vadd.f32 %v2380, %v2580
      %v2582 = vpop.f32.mrf.mxu0
      %v2583 = vpop.f32.mrf.mxu0
      %v2584 = vadd.f32 %v2380, %v2583
      %v2585 = vpop.f32.mrf.mxu0
      %2586 = vmatprep.mubr.bf16.mxu0 %v2298
      %2587 = vmatmul.mubr.bf16.gmra.mxu0 %v2170
      %v2588 = vpop.f32.mrf.mxu0
      %v2589 = vadd.f32 %v2380, %v2588
      %v2590 = vpop.f32.mrf.mxu0
      %v2591 = vpop.f32.mrf.mxu0
      %v2592 = vadd.f32 %v2380, %v2591
      %v2593 = vpop.f32.mrf.mxu0
      %2594 = vmatprep.mubr.bf16.mxu0 %v2301
      %2595 = vmatmul.mubr.bf16.gmra.mxu0 %v2173
      %v2596 = vpop.f32.mrf.mxu0
      %v2597 = vadd.f32 %v2380, %v2596
      %v2598 = vpop.f32.mrf.mxu0
      %v2599 = vpop.f32.mrf.mxu0
      %v2600 = vadd.f32 %v2380, %v2599
      %v2601 = vpop.f32.mrf.mxu0
      %2602 = vmatprep.mubr.bf16.mxu0 %v2304
      %2603 = vmatmul.mubr.bf16.gmra.mxu0 %v2176
      %v2604 = vpop.f32.mrf.mxu0
      %v2605 = vadd.f32 %v2380, %v2604
      %v2606 = vpop.f32.mrf.mxu0
      %v2607 = vpop.f32.mrf.mxu0
      %v2608 = vadd.f32 %v2380, %v2607
      %v2609 = vpop.f32.mrf.mxu0
      %2610 = vmatprep.mubr.bf16.mxu0 %v2307
      %2611 = vmatmul.mubr.bf16.gmra.mxu0 %v2179
      %v2612 = vpop.f32.mrf.mxu0
      %v2613 = vadd.f32 %v2380, %v2612
      %v2614 = vpop.f32.mrf.mxu0
      %v2615 = vpop.f32.mrf.mxu0
      %v2616 = vadd.f32 %v2380, %v2615
      %v2617 = vpop.f32.mrf.mxu0
      %2618 = vmatprep.mubr.bf16.mxu0 %v2310
      %2619 = vmatmul.mubr.bf16.gmra.mxu0 %v2182
      %v2620 = vpop.f32.mrf.mxu0
      %v2621 = vadd.f32 %v2380, %v2620
      %v2622 = vpop.f32.mrf.mxu0
      %v2623 = vpop.f32.mrf.mxu0
      %v2624 = vadd.f32 %v2380, %v2623
      %v2625 = vpop.f32.mrf.mxu0
      %2626 = vmatprep.mubr.bf16.mxu0 %v2313
      %2627 = vmatmul.mubr.bf16.gmra.mxu0 %v2185
      %v2628 = vpop.f32.mrf.mxu0
      %v2629 = vadd.f32 %v2380, %v2628
      %v2630 = vpop.f32.mrf.mxu0
      %v2631 = vpop.f32.mrf.mxu0
      %v2632 = vadd.f32 %v2380, %v2631
      %v2633 = vpop.f32.mrf.mxu0
      %2634 = vmatprep.mubr.bf16.mxu0 %v2316
      %2635 = vmatmul.mubr.bf16.gmra.mxu0 %v2188
      %v2636 = vpop.f32.mrf.mxu0
      %v2637 = vadd.f32 %v2380, %v2636
      %v2638 = vpop.f32.mrf.mxu0
      %v2639 = vpop.f32.mrf.mxu0
      %v2640 = vadd.f32 %v2380, %v2639
      %v2641 = vpop.f32.mrf.mxu0
      %2642 = vmatprep.mubr.bf16.mxu0 %v2319
      %2643 = vmatmul.mubr.bf16.gmra.mxu0 %v2191
      %v2644 = vpop.f32.mrf.mxu0
      %v2645 = vadd.f32 %v2380, %v2644
      %v2646 = vpop.f32.mrf.mxu0
      %v2647 = vpop.f32.mrf.mxu0
      %v2648 = vadd.f32 %v2380, %v2647
      %v2649 = vpop.f32.mrf.mxu0
      %2650 = vmatprep.mubr.bf16.mxu0 %v2322
      %2651 = vmatmul.mubr.bf16.gmra.mxu0 %v2194
      %v2652 = vpop.f32.mrf.mxu0
      %v2653 = vadd.f32 %v2380, %v2652
      %v2654 = vpop.f32.mrf.mxu0
      %v2655 = vpop.f32.mrf.mxu0
      %v2656 = vadd.f32 %v2380, %v2655
      %v2657 = vpop.f32.mrf.mxu0
      %2658 = vmatprep.mubr.bf16.mxu0 %v2325
      %2659 = vmatmul.mubr.bf16.gmra.mxu0 %v2197
      %v2660 = vpop.f32.mrf.mxu0
      %v2661 = vadd.f32 %v2380, %v2660
      %v2662 = vpop.f32.mrf.mxu0
      %v2663 = vpop.f32.mrf.mxu0
      %v2664 = vadd.f32 %v2380, %v2663
      %v2665 = vpop.f32.mrf.mxu0
      %2666 = vmatprep.mubr.bf16.mxu0 %v2328
      %2667 = vmatmul.mubr.bf16.gmra.mxu0 %v2200
      %v2668 = vpop.f32.mrf.mxu0
      %v2669 = vadd.f32 %v2380, %v2668
      %v2670 = vpop.f32.mrf.mxu0
      %v2671 = vpop.f32.mrf.mxu0
      %v2672 = vadd.f32 %v2380, %v2671
      %v2673 = vpop.f32.mrf.mxu0
      %2674 = vmatprep.mubr.bf16.mxu0 %v2331
      %2675 = vmatmul.mubr.bf16.gmra.mxu0 %v2203
      %v2676 = vpop.f32.mrf.mxu0
      %v2677 = vadd.f32 %v2380, %v2676
      %v2678 = vpop.f32.mrf.mxu0
      %v2679 = vpop.f32.mrf.mxu0
      %v2680 = vadd.f32 %v2380, %v2679
      %v2681 = vpop.f32.mrf.mxu0
      %2682 = vmatprep.mubr.bf16.mxu0 %v2334
      %2683 = vmatmul.mubr.bf16.gmra.mxu0 %v2206
      %v2684 = vpop.f32.mrf.mxu0
      %v2685 = vadd.f32 %v2380, %v2684
      %v2686 = vpop.f32.mrf.mxu0
      %v2687 = vpop.f32.mrf.mxu0
      %v2688 = vadd.f32 %v2380, %v2687
      %v2689 = vpop.f32.mrf.mxu0
      %2690 = vmatprep.mubr.bf16.mxu0 %v2337
      %2691 = vmatmul.mubr.bf16.gmra.mxu0 %v2209
      %v2692 = vpop.f32.mrf.mxu0
      %v2693 = vadd.f32 %v2380, %v2692
      %v2694 = vpop.f32.mrf.mxu0
      %v2695 = vpop.f32.mrf.mxu0
      %v2696 = vadd.f32 %v2380, %v2695
      %v2697 = vpop.f32.mrf.mxu0
      %2698 = vdwg.mxu0
      %2699 = vmatprep.subr.bf16.mxu0 0
      %2700 = vmatpush1.bf16.msra.mxu0 0
      %2701 = vmatprep.subr.bf16.mxu0 0
      %2702 = vmatpush1.bf16.msra.mxu0 0
      %2703 = vmatprep.subr.bf16.mxu0 0
      %2704 = vmatpush1.bf16.msra.mxu0 0
      %2705 = vmatprep.subr.bf16.mxu0 0
      %2706 = vmatpush1.bf16.msra.mxu0 0
      %2707 = vmatprep.subr.bf16.mxu0 0
      %2708 = vmatpush1.bf16.msra.mxu0 0
      %2709 = vmatprep.subr.bf16.mxu0 0
      %2710 = vmatpush1.bf16.msra.mxu0 0
      %2711 = vmatprep.subr.bf16.mxu0 0
      %2712 = vmatpush1.bf16.msra.mxu0 %v2471
      %2713 = vmatprep.subr.bf16.mxu0 0
      %2714 = vmatpush1.bf16.msra.mxu0 %v2470
      %2715 = vmatprep.subr.bf16.mxu0 0
      %2716 = vmatpush2.bf16.msra.mxu0 0
      %2717 = vmatprep.subr.bf16.mxu0 0
      %2718 = vmatpush2.bf16.msra.mxu0 0
      %2719 = vmatprep.subr.bf16.mxu0 0
      %2720 = vmatpush2.bf16.msra.mxu0 0
      %2721 = vmatprep.subr.bf16.mxu0 0
      %2722 = vmatpush2.bf16.msra.mxu0 0
      %2723 = vmatprep.subr.bf16.mxu0 0
      %2724 = vmatpush2.bf16.msra.mxu0 0
      %2725 = vmatprep.subr.bf16.mxu0 0
      %2726 = vmatpush2.bf16.msra.mxu0 0
      %2727 = vmatprep.subr.bf16.mxu0 0
      %2728 = vmatpush2.bf16.msra.mxu0 0
      %2729 = vmatprep.subr.bf16.mxu0 0
      %2730 = vmatpush2.bf16.msra.mxu0 0
      %2731 = vmatprep.mubr.bf16.mxu0 0
      %2732 = vmatmul.mubr.bf16.gmra.mxu0 %v2491
      %v2733 = vpop.f32.mrf.mxu0
      %v2734 = vadd.f32 %v2573, %v2733
      %v2735 = vpop.f32.mrf.mxu0
      %v2736 = vpop.f32.mrf.mxu0
      %v2737 = vadd.f32 %v2576, %v2736
      %v2738 = vpop.f32.mrf.mxu0
      %2739 = vmatprep.mubr.bf16.mxu0 0
      %2740 = vmatmul.mubr.bf16.gmra.mxu0 %v2494
      %v2741 = vpop.f32.mrf.mxu0
      %v2742 = vadd.f32 %v2581, %v2741
      %v2743 = vpop.f32.mrf.mxu0
      %v2744 = vpop.f32.mrf.mxu0
      %v2745 = vadd.f32 %v2584, %v2744
      %v2746 = vpop.f32.mrf.mxu0
      %2747 = vmatprep.mubr.bf16.mxu0 0
      %2748 = vmatmul.mubr.bf16.gmra.mxu0 %v2497
      %v2749 = vpop.f32.mrf.mxu0
      %v2750 = vadd.f32 %v2589, %v2749
      %v2751 = vpop.f32.mrf.mxu0
      %v2752 = vpop.f32.mrf.mxu0
      %v2753 = vadd.f32 %v2592, %v2752
      %v2754 = vpop.f32.mrf.mxu0
      %2755 = vmatprep.mubr.bf16.mxu0 0
      %2756 = vmatmul.mubr.bf16.gmra.mxu0 %v2500
      %v2757 = vpop.f32.mrf.mxu0
      %v2758 = vadd.f32 %v2597, %v2757
      %v2759 = vpop.f32.mrf.mxu0
      %v2760 = vpop.f32.mrf.mxu0
      %v2761 = vadd.f32 %v2600, %v2760
      %v2762 = vpop.f32.mrf.mxu0
      %2763 = vmatprep.mubr.bf16.mxu0 0
      %2764 = vmatmul.mubr.bf16.gmra.mxu0 %v2503
      %v2765 = vpop.f32.mrf.mxu0
      %v2766 = vadd.f32 %v2605, %v2765
      %v2767 = vpop.f32.mrf.mxu0
      %v2768 = vpop.f32.mrf.mxu0
      %v2769 = vadd.f32 %v2608, %v2768
      %v2770 = vpop.f32.mrf.mxu0
      %2771 = vmatprep.mubr.bf16.mxu0 0
      %2772 = vmatmul.mubr.bf16.gmra.mxu0 %v2506
      %v2773 = vpop.f32.mrf.mxu0
      %v2774 = vadd.f32 %v2613, %v2773
      %v2775 = vpop.f32.mrf.mxu0
      %v2776 = vpop.f32.mrf.mxu0
      %v2777 = vadd.f32 %v2616, %v2776
      %v2778 = vpop.f32.mrf.mxu0
      %2779 = vmatprep.mubr.bf16.mxu0 0
      %2780 = vmatmul.mubr.bf16.gmra.mxu0 %v2509
      %v2781 = vpop.f32.mrf.mxu0
      %v2782 = vadd.f32 %v2621, %v2781
      %v2783 = vpop.f32.mrf.mxu0
      %v2784 = vpop.f32.mrf.mxu0
      %v2785 = vadd.f32 %v2624, %v2784
      %v2786 = vpop.f32.mrf.mxu0
      %2787 = vmatprep.mubr.bf16.mxu0 0
      %2788 = vmatmul.mubr.bf16.gmra.mxu0 %v2512
      %v2789 = vpop.f32.mrf.mxu0
      %v2790 = vadd.f32 %v2629, %v2789
      %v2791 = vpop.f32.mrf.mxu0
      %v2792 = vpop.f32.mrf.mxu0
      %v2793 = vadd.f32 %v2632, %v2792
      %v2794 = vpop.f32.mrf.mxu0
      %2795 = vmatprep.mubr.bf16.mxu0 0
      %2796 = vmatmul.mubr.bf16.gmra.mxu0 %v2515
      %v2797 = vpop.f32.mrf.mxu0
      %v2798 = vadd.f32 %v2637, %v2797
      %v2799 = vpop.f32.mrf.mxu0
      %v2800 = vpop.f32.mrf.mxu0
      %v2801 = vadd.f32 %v2640, %v2800
      %v2802 = vpop.f32.mrf.mxu0
      %2803 = vmatprep.mubr.bf16.mxu0 0
      %2804 = vmatmul.mubr.bf16.gmra.mxu0 %v2518
      %v2805 = vpop.f32.mrf.mxu0
      %v2806 = vadd.f32 %v2645, %v2805
      %v2807 = vpop.f32.mrf.mxu0
      %v2808 = vpop.f32.mrf.mxu0
      %v2809 = vadd.f32 %v2648, %v2808
      %v2810 = vpop.f32.mrf.mxu0
      %2811 = vmatprep.mubr.bf16.mxu0 0
      %2812 = vmatmul.mubr.bf16.gmra.mxu0 %v2521
      %v2813 = vpop.f32.mrf.mxu0
      %v2814 = vadd.f32 %v2653, %v2813
      %v2815 = vpop.f32.mrf.mxu0
      %v2816 = vpop.f32.mrf.mxu0
      %v2817 = vadd.f32 %v2656, %v2816
      %v2818 = vpop.f32.mrf.mxu0
      %2819 = vmatprep.mubr.bf16.mxu0 0
      %2820 = vmatmul.mubr.bf16.gmra.mxu0 %v2524
      %v2821 = vpop.f32.mrf.mxu0
      %v2822 = vadd.f32 %v2661, %v2821
      %v2823 = vpop.f32.mrf.mxu0
      %v2824 = vpop.f32.mrf.mxu0
      %v2825 = vadd.f32 %v2664, %v2824
      %v2826 = vpop.f32.mrf.mxu0
      %2827 = vmatprep.mubr.bf16.mxu0 0
      %2828 = vmatmul.mubr.bf16.gmra.mxu0 %v2527
      %v2829 = vpop.f32.mrf.mxu0
      %v2830 = vadd.f32 %v2669, %v2829
      %v2831 = vpop.f32.mrf.mxu0
      %v2832 = vpop.f32.mrf.mxu0
      %v2833 = vadd.f32 %v2672, %v2832
      %v2834 = vpop.f32.mrf.mxu0
      %2835 = vmatprep.mubr.bf16.mxu0 0
      %2836 = vmatmul.mubr.bf16.gmra.mxu0 %v2530
      %v2837 = vpop.f32.mrf.mxu0
      %v2838 = vadd.f32 %v2677, %v2837
      %v2839 = vpop.f32.mrf.mxu0
      %v2840 = vpop.f32.mrf.mxu0
      %v2841 = vadd.f32 %v2680, %v2840
      %v2842 = vpop.f32.mrf.mxu0
      %2843 = vmatprep.mubr.bf16.mxu0 0
      %2844 = vmatmul.mubr.bf16.gmra.mxu0 %v2533
      %v2845 = vpop.f32.mrf.mxu0
      %v2846 = vadd.f32 %v2685, %v2845
      %v2847 = vpop.f32.mrf.mxu0
      %v2848 = vpop.f32.mrf.mxu0
      %v2849 = vadd.f32 %v2688, %v2848
      %v2850 = vpop.f32.mrf.mxu0
      %2851 = vmatprep.mubr.bf16.mxu0 0
      %2852 = vmatmul.mubr.bf16.gmra.mxu0 %v2536
      %v2853 = vpop.f32.mrf.mxu0
      %v2854 = vadd.f32 %v2693, %v2853
      %v2855 = vpop.f32.mrf.mxu0
      %v2856 = vpop.f32.mrf.mxu0
      %v2857 = vadd.f32 %v2696, %v2856
      %v2858 = vpop.f32.mrf.mxu0
      %2859 = vdwg.mxu0
      %vm2860 = vcmp.gt.f32.partialorder %v2734, 0.0
      %vm2861 = vcmp.gt.f32.partialorder %v2737, 0.0
      %vm2862 = vcmp.gt.f32.partialorder %v2742, 0.0
      %vm2863 = vcmp.gt.f32.partialorder %v2745, 0.0
      %vm2864 = vcmp.gt.f32.partialorder %v2750, 0.0
      %vm2865 = vcmp.gt.f32.partialorder %v2753, 0.0
      %vm2866 = vcmp.gt.f32.partialorder %v2758, 0.0
      %vm2867 = vcmp.gt.f32.partialorder %v2761, 0.0
      %vm2868 = vcmp.gt.f32.partialorder %v2766, 0.0
      %vm2869 = vcmp.gt.f32.partialorder %v2769, 0.0
      %vm2870 = vcmp.gt.f32.partialorder %v2774, 0.0
      %vm2871 = vcmp.gt.f32.partialorder %v2777, 0.0
      %vm2872 = vcmp.gt.f32.partialorder %v2782, 0.0
      %vm2873 = vcmp.gt.f32.partialorder %v2785, 0.0
      %vm2874 = vcmp.gt.f32.partialorder %v2790, 0.0
      %vm2875 = vcmp.gt.f32.partialorder %v2793, 0.0
      %vm2876 = vcmp.gt.f32.partialorder %v2798, 0.0
      %vm2877 = vcmp.gt.f32.partialorder %v2801, 0.0
      %vm2878 = vcmp.gt.f32.partialorder %v2806, 0.0
      %vm2879 = vcmp.gt.f32.partialorder %v2809, 0.0
      %vm2880 = vcmp.gt.f32.partialorder %v2814, 0.0
      %vm2881 = vcmp.gt.f32.partialorder %v2817, 0.0
      %vm2882 = vcmp.gt.f32.partialorder %v2822, 0.0
      %vm2883 = vcmp.gt.f32.partialorder %v2825, 0.0
      %vm2884 = vcmp.gt.f32.partialorder %v2830, 0.0
      %vm2885 = vcmp.gt.f32.partialorder %v2833, 0.0
      %vm2886 = vcmp.gt.f32.partialorder %v2838, 0.0
      %vm2887 = vcmp.gt.f32.partialorder %v2841, 0.0
      %vm2888 = vcmp.gt.f32.partialorder %v2846, 0.0
      %vm2889 = vcmp.gt.f32.partialorder %v2849, 0.0
      %vm2890 = vcmp.gt.f32.partialorder %v2854, 0.0
      %vm2891 = vcmp.gt.f32.partialorder %v2857, 0.0
      %v2892 = vld [vmem:[%s6] sm:$0x1]
      %v2894 = vlaneseq
      %v2895 = vshrl.u32 %v2894, 7
      %v2896 = vsub.s32 0, %v2895
      %v2897 = vrot.slane %v2892, %v2896
      %v2899 = vmul.f32 %v2897, %v2734
      %v2900 = vmul.f32 %v2897, %v2737
      %v2901 = vmul.f32 %v2897, %v2742
      %v2902 = vmul.f32 %v2897, %v2745
      %v2903 = vmul.f32 %v2897, %v2750
      %v2904 = vmul.f32 %v2897, %v2753
      %v2905 = vmul.f32 %v2897, %v2758
      %v2906 = vmul.f32 %v2897, %v2761
      %v2907 = vmul.f32 %v2897, %v2766
      %v2908 = vmul.f32 %v2897, %v2769
      %v2909 = vmul.f32 %v2897, %v2774
      %v2910 = vmul.f32 %v2897, %v2777
      %v2911 = vmul.f32 %v2897, %v2782
      %v2912 = vmul.f32 %v2897, %v2785
      %v2913 = vmul.f32 %v2897, %v2790
      %v2914 = vmul.f32 %v2897, %v2793
      %v2915 = vmul.f32 %v2897, %v2798
      %v2916 = vmul.f32 %v2897, %v2801
      %v2917 = vmul.f32 %v2897, %v2806
      %v2918 = vmul.f32 %v2897, %v2809
      %v2919 = vmul.f32 %v2897, %v2814
      %v2920 = vmul.f32 %v2897, %v2817
      %v2921 = vmul.f32 %v2897, %v2822
      %v2922 = vmul.f32 %v2897, %v2825
      %v2923 = vmul.f32 %v2897, %v2830
      %v2924 = vmul.f32 %v2897, %v2833
      %v2925 = vmul.f32 %v2897, %v2838
      %v2926 = vmul.f32 %v2897, %v2841
      %v2927 = vmul.f32 %v2897, %v2846
      %v2928 = vmul.f32 %v2897, %v2849
      %v2929 = vmul.f32 %v2897, %v2854
      %v2930 = vmul.f32 %v2897, %v2857
      %v2931 = vsel %vm2860, %v2734, %v2899
      %v2932 = vsel %vm2861, %v2737, %v2900
      %v2933 = vsel %vm2862, %v2742, %v2901
      %v2934 = vsel %vm2863, %v2745, %v2902
      %v2935 = vsel %vm2864, %v2750, %v2903
      %v2936 = vsel %vm2865, %v2753, %v2904
      %v2937 = vsel %vm2866, %v2758, %v2905
      %v2938 = vsel %vm2867, %v2761, %v2906
      %v2939 = vsel %vm2868, %v2766, %v2907
      %v2940 = vsel %vm2869, %v2769, %v2908
      %v2941 = vsel %vm2870, %v2774, %v2909
      %v2942 = vsel %vm2871, %v2777, %v2910
      %v2943 = vsel %vm2872, %v2782, %v2911
      %v2944 = vsel %vm2873, %v2785, %v2912
      %v2945 = vsel %vm2874, %v2790, %v2913
      %v2946 = vsel %vm2875, %v2793, %v2914
      %v2947 = vsel %vm2876, %v2798, %v2915
      %v2948 = vsel %vm2877, %v2801, %v2916
      %v2949 = vsel %vm2878, %v2806, %v2917
      %v2950 = vsel %vm2879, %v2809, %v2918
      %v2951 = vsel %vm2880, %v2814, %v2919
      %v2952 = vsel %vm2881, %v2817, %v2920
      %v2953 = vsel %vm2882, %v2822, %v2921
      %v2954 = vsel %vm2883, %v2825, %v2922
      %v2955 = vsel %vm2884, %v2830, %v2923
      %v2956 = vsel %vm2885, %v2833, %v2924
      %v2957 = vsel %vm2886, %v2838, %v2925
      %v2958 = vsel %vm2887, %v2841, %v2926
      %v2959 = vsel %vm2888, %v2846, %v2927
      %v2960 = vsel %vm2889, %v2849, %v2928
      %v2961 = vsel %vm2890, %v2854, %v2929
      %v2962 = vsel %vm2891, %v2857, %v2930
      %2963 = vst.msk [vmem:[%s1642 + $0x1] sm:$0xff] %vm1586, %v2931
      %2964 = vst.msk [vmem:[%s1642 + $0x9] sm:$0xff] %vm1586, %v2932
      %2965 = vst.msk [vmem:[%s1642 + $0x19] sm:$0xff] %vm1586, %v2933
      %2966 = vst.msk [vmem:[%s1642 + $0x21] sm:$0xff] %vm1586, %v2934
      %2967 = vst.msk [vmem:[%s1642 + $0x31] sm:$0xff] %vm1586, %v2935
      %2968 = vst.msk [vmem:[%s1642 + $0x39] sm:$0xff] %vm1586, %v2936
      %2969 = vst.msk [vmem:[%s1642 + $0x49] sm:$0xff] %vm1586, %v2937
      %2970 = vst.msk [vmem:[%s1642 + $0x51] sm:$0xff] %vm1586, %v2938
      %2971 = vst.msk [vmem:[%s1642 + $0x61] sm:$0xff] %vm1586, %v2939
      %2972 = vst.msk [vmem:[%s1642 + $0x69] sm:$0xff] %vm1586, %v2940
      %2973 = vst.msk [vmem:[%s1642 + $0x79] sm:$0xff] %vm1586, %v2941
      %2974 = vst.msk [vmem:[%s1642 + $0x81] sm:$0xff] %vm1586, %v2942
      %2975 = vst.msk [vmem:[%s1642 + $0x91] sm:$0xff] %vm1586, %v2943
      %2976 = vst.msk [vmem:[%s1642 + $0x99] sm:$0xff] %vm1586, %v2944
      %2977 = vst.msk [vmem:[%s1642 + $0xa9] sm:$0xff] %vm1586, %v2945
      %2978 = vst.msk [vmem:[%s1642 + $0xb1] sm:$0xff] %vm1586, %v2946
      %2979 = vst.msk [vmem:[%s1642 + $0xc1] sm:$0xff] %vm1586, %v2947
      %2980 = vst.msk [vmem:[%s1642 + $0xc9] sm:$0xff] %vm1586, %v2948
      %2981 = vst.msk [vmem:[%s1642 + $0xd9] sm:$0xff] %vm1586, %v2949
      %2982 = vst.msk [vmem:[%s1642 + $0xe1] sm:$0xff] %vm1586, %v2950
      %2983 = vst.msk [vmem:[%s1642 + $0xf1] sm:$0xff] %vm1586, %v2951
      %2984 = vst.msk [vmem:[%s1642 + $0xf9] sm:$0xff] %vm1586, %v2952
      %2985 = vst.msk [vmem:[%s1642 + $0x109] sm:$0xff] %vm1586, %v2953
      %2986 = vst.msk [vmem:[%s1642 + $0x111] sm:$0xff] %vm1586, %v2954
      %2987 = vst.msk [vmem:[%s1642 + $0x121] sm:$0xff] %vm1586, %v2955
      %2988 = vst.msk [vmem:[%s1642 + $0x129] sm:$0xff] %vm1586, %v2956
      %2989 = vst.msk [vmem:[%s1642 + $0x139] sm:$0xff] %vm1586, %v2957
      %2990 = vst.msk [vmem:[%s1642 + $0x141] sm:$0xff] %vm1586, %v2958
      %2991 = vst.msk [vmem:[%s1642 + $0x151] sm:$0xff] %vm1586, %v2959
      %2992 = vst.msk [vmem:[%s1642 + $0x159] sm:$0xff] %vm1586, %v2960
      %2993 = vst.msk [vmem:[%s1642 + $0x169] sm:$0xff] %vm1586, %v2961
      %2994 = vst.msk [vmem:[%s1642 + $0x171] sm:$0xff] %vm1586, %v2962
      %v2995 = vld [vmem:[#allocation3] sm:$0xff]
      %v2996 = vld [vmem:[#allocation3 + $0x8] sm:$0xff]
      %v2997 = vld [vmem:[#allocation3 + $0x18] sm:$0xff]
      %v2998 = vld [vmem:[#allocation3 + $0x20] sm:$0xff]
      %v2999 = vld [vmem:[#allocation3 + $0x30] sm:$0xff]
      %v3000 = vld [vmem:[#allocation3 + $0x38] sm:$0xff]
      %v3001 = vld [vmem:[#allocation3 + $0x48] sm:$0xff]
      %v3002 = vld [vmem:[#allocation3 + $0x50] sm:$0xff]
      %v3003 = vld [vmem:[#allocation3 + $0x60] sm:$0xff]
      %v3004 = vld [vmem:[#allocation3 + $0x68] sm:$0xff]
      %v3005 = vld [vmem:[#allocation3 + $0x78] sm:$0xff]
      %v3006 = vld [vmem:[#allocation3 + $0x80] sm:$0xff]
      %v3007 = vld [vmem:[#allocation3 + $0x90] sm:$0xff]
      %v3008 = vld [vmem:[#allocation3 + $0x98] sm:$0xff]
      %v3009 = vld [vmem:[#allocation3 + $0xa8] sm:$0xff]
      %v3010 = vld [vmem:[#allocation3 + $0xb0] sm:$0xff]
      %v3011 = vld [vmem:[#allocation3 + $0xc0] sm:$0xff]
      %v3012 = vld [vmem:[#allocation3 + $0xc8] sm:$0xff]
      %v3013 = vld [vmem:[#allocation3 + $0xd8] sm:$0xff]
      %v3014 = vld [vmem:[#allocation3 + $0xe0] sm:$0xff]
      %v3015 = vld [vmem:[#allocation3 + $0xf0] sm:$0xff]
      %v3016 = vld [vmem:[#allocation3 + $0xf8] sm:$0xff]
      %v3017 = vld [vmem:[#allocation3 + $0x108] sm:$0xff]
      %v3018 = vld [vmem:[#allocation3 + $0x110] sm:$0xff]
      %v3019 = vld [vmem:[#allocation3 + $0x120] sm:$0xff]
      %v3020 = vld [vmem:[#allocation3 + $0x128] sm:$0xff]
      %v3021 = vld [vmem:[#allocation3 + $0x138] sm:$0xff]
      %v3022 = vld [vmem:[#allocation3 + $0x140] sm:$0xff]
      %v3023 = vld [vmem:[#allocation3 + $0x150] sm:$0xff]
      %v3024 = vld [vmem:[#allocation3 + $0x158] sm:$0xff]
      %v3025 = vld [vmem:[#allocation3 + $0x168] sm:$0xff]
      %v3026 = vld [vmem:[#allocation3 + $0x170] sm:$0xff]
      %v3027 = vld [vmem:[#allocation3 + $0x180] sm:$0xff]
      %v3028 = vld [vmem:[#allocation3 + $0x188] sm:$0xff]
      %v3029 = vld [vmem:[#allocation3 + $0x198] sm:$0xff]
      %v3030 = vld [vmem:[#allocation3 + $0x1a0] sm:$0xff]
      %v3031 = vld [vmem:[#allocation3 + $0x1] sm:$0xff]
      %v3032 = vld [vmem:[#allocation3 + $0x9] sm:$0xff]
      %v3033 = vld [vmem:[#allocation3 + $0x19] sm:$0xff]
      %v3034 = vld [vmem:[#allocation3 + $0x21] sm:$0xff]
      %v3035 = vld [vmem:[#allocation3 + $0x31] sm:$0xff]
      %v3036 = vld [vmem:[#allocation3 + $0x39] sm:$0xff]
      %v3037 = vld [vmem:[#allocation3 + $0x49] sm:$0xff]
      %v3038 = vld [vmem:[#allocation3 + $0x51] sm:$0xff]
      %v3039 = vld [vmem:[#allocation3 + $0x61] sm:$0xff]
      %v3040 = vld [vmem:[#allocation3 + $0x69] sm:$0xff]
      %v3041 = vld [vmem:[#allocation3 + $0x79] sm:$0xff]
      %v3042 = vld [vmem:[#allocation3 + $0x81] sm:$0xff]
      %v3043 = vld [vmem:[#allocation3 + $0x91] sm:$0xff]
      %v3044 = vld [vmem:[#allocation3 + $0x99] sm:$0xff]
      %v3045 = vld [vmem:[#allocation3 + $0xa9] sm:$0xff]
      %v3046 = vld [vmem:[#allocation3 + $0xb1] sm:$0xff]
      %v3047 = vld [vmem:[#allocation3 + $0xc1] sm:$0xff]
      %v3048 = vld [vmem:[#allocation3 + $0xc9] sm:$0xff]
      %v3049 = vld [vmem:[#allocation3 + $0xd9] sm:$0xff]
      %v3050 = vld [vmem:[#allocation3 + $0xe1] sm:$0xff]
      %v3051 = vld [vmem:[#allocation3 + $0xf1] sm:$0xff]
      %v3052 = vld [vmem:[#allocation3 + $0xf9] sm:$0xff]
      %v3053 = vld [vmem:[#allocation3 + $0x109] sm:$0xff]
      %v3054 = vld [vmem:[#allocation3 + $0x111] sm:$0xff]
      %v3055 = vld [vmem:[#allocation3 + $0x121] sm:$0xff]
      %v3056 = vld [vmem:[#allocation3 + $0x129] sm:$0xff]
      %v3057 = vld [vmem:[#allocation3 + $0x139] sm:$0xff]
      %v3058 = vld [vmem:[#allocation3 + $0x141] sm:$0xff]
      %v3059 = vld [vmem:[#allocation3 + $0x151] sm:$0xff]
      %v3060 = vld [vmem:[#allocation3 + $0x159] sm:$0xff]
      %v3061 = vld [vmem:[#allocation3 + $0x169] sm:$0xff]
      %v3062 = vld [vmem:[#allocation3 + $0x171] sm:$0xff]
      %v3063 = vld [vmem:[#allocation3 + $0x181] sm:$0xff]
      %v3064 = vld [vmem:[#allocation3 + $0x189] sm:$0xff]
      %v3065 = vld [vmem:[#allocation3 + $0x199] sm:$0xff]
      %v3066 = vld [vmem:[#allocation3 + $0x1a1] sm:$0xff]
      %v3067 = vld [vmem:[#allocation3 + $0x2] sm:$0xff]
      %v3068 = vld [vmem:[#allocation3 + $0xa] sm:$0xff]
      %v3069 = vld [vmem:[#allocation3 + $0x1a] sm:$0xff]
      %v3070 = vld [vmem:[#allocation3 + $0x22] sm:$0xff]
      %v3071 = vld [vmem:[#allocation3 + $0x32] sm:$0xff]
      %v3072 = vld [vmem:[#allocation3 + $0x3a] sm:$0xff]
      %v3073 = vld [vmem:[#allocation3 + $0x4a] sm:$0xff]
      %v3074 = vld [vmem:[#allocation3 + $0x52] sm:$0xff]
      %v3075 = vld [vmem:[#allocation3 + $0x62] sm:$0xff]
      %v3076 = vld [vmem:[#allocation3 + $0x6a] sm:$0xff]
      %v3077 = vld [vmem:[#allocation3 + $0x7a] sm:$0xff]
      %v3078 = vld [vmem:[#allocation3 + $0x82] sm:$0xff]
      %v3079 = vld [vmem:[#allocation3 + $0x92] sm:$0xff]
      %v3080 = vld [vmem:[#allocation3 + $0x9a] sm:$0xff]
      %v3081 = vld [vmem:[#allocation3 + $0xaa] sm:$0xff]
      %v3082 = vld [vmem:[#allocation3 + $0xb2] sm:$0xff]
      %v3083 = vld [vmem:[#allocation3 + $0xc2] sm:$0xff]
      %v3084 = vld [vmem:[#allocation3 + $0xca] sm:$0xff]
      %v3085 = vld [vmem:[#allocation3 + $0xda] sm:$0xff]
      %v3086 = vld [vmem:[#allocation3 + $0xe2] sm:$0xff]
      %v3087 = vld [vmem:[#allocation3 + $0xf2] sm:$0xff]
      %v3088 = vld [vmem:[#allocation3 + $0xfa] sm:$0xff]
      %v3089 = vld [vmem:[#allocation3 + $0x10a] sm:$0xff]
      %v3090 = vld [vmem:[#allocation3 + $0x112] sm:$0xff]
      %v3091 = vld [vmem:[#allocation3 + $0x122] sm:$0xff]
      %v3092 = vld [vmem:[#allocation3 + $0x12a] sm:$0xff]
      %v3093 = vld [vmem:[#allocation3 + $0x13a] sm:$0xff]
      %v3094 = vld [vmem:[#allocation3 + $0x142] sm:$0xff]
      %v3095 = vld [vmem:[#allocation3 + $0x152] sm:$0xff]
      %v3096 = vld [vmem:[#allocation3 + $0x15a] sm:$0xff]
      %v3097 = vld [vmem:[#allocation3 + $0x16a] sm:$0xff]
      %v3098 = vld [vmem:[#allocation3 + $0x172] sm:$0xff]
      %v3099 = vld [vmem:[#allocation3 + $0x182] sm:$0xff]
      %v3100 = vld [vmem:[#allocation3 + $0x18a] sm:$0xff]
      %v3101 = vld [vmem:[#allocation3 + $0x19a] sm:$0xff]
      %v3102 = vld [vmem:[#allocation3 + $0x1a2] sm:$0xff]
      %v3103 = vpack.c.bf16 %v2996, %v2995
      %v3104 = vpack.c.bf16 %v2998, %v2997
      %v3105 = vpack.c.bf16 %v3000, %v2999
      %v3106 = vpack.c.bf16 %v3002, %v3001
      %v3107 = vpack.c.bf16 %v3004, %v3003
      %v3108 = vpack.c.bf16 %v3006, %v3005
      %v3109 = vpack.c.bf16 %v3008, %v3007
      %v3110 = vpack.c.bf16 %v3010, %v3009
      %v3111 = vpack.c.bf16 %v3012, %v3011
      %v3112 = vpack.c.bf16 %v3014, %v3013
      %v3113 = vpack.c.bf16 %v3016, %v3015
      %v3114 = vpack.c.bf16 %v3018, %v3017
      %v3115 = vpack.c.bf16 %v3020, %v3019
      %v3116 = vpack.c.bf16 %v3022, %v3021
      %v3117 = vpack.c.bf16 %v3024, %v3023
      %v3118 = vpack.c.bf16 %v3026, %v3025
      %v3119 = vpack.c.bf16 %v3032, %v3031
      %v3120 = vpack.c.bf16 %v3034, %v3033
      %v3121 = vpack.c.bf16 %v3036, %v3035
      %v3122 = vpack.c.bf16 %v3038, %v3037
      %v3123 = vpack.c.bf16 %v3040, %v3039
      %v3124 = vpack.c.bf16 %v3042, %v3041
      %v3125 = vpack.c.bf16 %v3044, %v3043
      %v3126 = vpack.c.bf16 %v3046, %v3045
      %v3127 = vpack.c.bf16 %v3048, %v3047
      %v3128 = vpack.c.bf16 %v3050, %v3049
      %v3129 = vpack.c.bf16 %v3052, %v3051
      %v3130 = vpack.c.bf16 %v3054, %v3053
      %v3131 = vpack.c.bf16 %v3056, %v3055
      %v3132 = vpack.c.bf16 %v3058, %v3057
      %v3133 = vpack.c.bf16 %v3060, %v3059
      %v3134 = vpack.c.bf16 %v3062, %v3061
      %v3135 = vpack.c.bf16 %v3068, %v3067
      %v3136 = vpack.c.bf16 %v3070, %v3069
      %v3137 = vpack.c.bf16 %v3072, %v3071
      %v3138 = vpack.c.bf16 %v3074, %v3073
      %v3139 = vpack.c.bf16 %v3076, %v3075
      %v3140 = vpack.c.bf16 %v3078, %v3077
      %v3141 = vpack.c.bf16 %v3080, %v3079
      %v3142 = vpack.c.bf16 %v3082, %v3081
      %v3143 = vpack.c.bf16 %v3084, %v3083
      %v3144 = vpack.c.bf16 %v3086, %v3085
      %v3145 = vpack.c.bf16 %v3088, %v3087
      %v3146 = vpack.c.bf16 %v3090, %v3089
      %v3147 = vpack.c.bf16 %v3092, %v3091
      %v3148 = vpack.c.bf16 %v3094, %v3093
      %v3149 = vpack.c.bf16 %v3096, %v3095
      %v3150 = vpack.c.bf16 %v3098, %v3097
      %v3151 = vpack.c.bf16 %v3028, %v3027
      %v3152 = vpack.c.bf16 %v3064, %v3063
      %v3153 = vpack.c.bf16 %v3100, %v3099
      %v3154 = vpack.c.bf16 %v3030, %v3029
      %v3155 = vpack.c.bf16 %v3066, %v3065
      %v3156 = vpack.c.bf16 %v3102, %v3101
      %3173 = vrot.lane.b32.xlu0 %v3119, 32
      %v3174 = vpop.permute.xlu0 %3173
      %3175 = vrot.lane.b32.xlu0 %v3120, 32
      %v3176 = vpop.permute.xlu0 %3175
      %3177 = vrot.lane.b32.xlu0 %v3121, 32
      %v3178 = vpop.permute.xlu0 %3177
      %3179 = vrot.lane.b32.xlu0 %v3122, 32
      %v3180 = vpop.permute.xlu0 %3179
      %3181 = vrot.lane.b32.xlu0 %v3123, 32
      %v3182 = vpop.permute.xlu0 %3181
      %3183 = vrot.lane.b32.xlu0 %v3124, 32
      %v3184 = vpop.permute.xlu0 %3183
      %3185 = vrot.lane.b32.xlu0 %v3125, 32
      %v3186 = vpop.permute.xlu0 %3185
      %3187 = vrot.lane.b32.xlu0 %v3126, 32
      %v3188 = vpop.permute.xlu0 %3187
      %3189 = vrot.lane.b32.xlu0 %v3127, 32
      %v3190 = vpop.permute.xlu0 %3189
      %3191 = vrot.lane.b32.xlu0 %v3128, 32
      %v3192 = vpop.permute.xlu0 %3191
      %3193 = vrot.lane.b32.xlu0 %v3129, 32
      %v3194 = vpop.permute.xlu0 %3193
      %3195 = vrot.lane.b32.xlu0 %v3130, 32
      %v3196 = vpop.permute.xlu0 %3195
      %3197 = vrot.lane.b32.xlu0 %v3131, 32
      %v3198 = vpop.permute.xlu0 %3197
      %3199 = vrot.lane.b32.xlu0 %v3132, 32
      %v3200 = vpop.permute.xlu0 %3199
      %3201 = vrot.lane.b32.xlu0 %v3133, 32
      %v3202 = vpop.permute.xlu0 %3201
      %3203 = vrot.lane.b32.xlu0 %v3134, 32
      %v3204 = vpop.permute.xlu0 %3203
      %3221 = vrot.lane.b32.xlu0 %v3135, 64
      %v3222 = vpop.permute.xlu0 %3221
      %3223 = vrot.lane.b32.xlu0 %v3136, 64
      %v3224 = vpop.permute.xlu0 %3223
      %3225 = vrot.lane.b32.xlu0 %v3137, 64
      %v3226 = vpop.permute.xlu0 %3225
      %3227 = vrot.lane.b32.xlu0 %v3138, 64
      %v3228 = vpop.permute.xlu0 %3227
      %3229 = vrot.lane.b32.xlu0 %v3139, 64
      %v3230 = vpop.permute.xlu0 %3229
      %3231 = vrot.lane.b32.xlu0 %v3140, 64
      %v3232 = vpop.permute.xlu0 %3231
      %3233 = vrot.lane.b32.xlu0 %v3141, 64
      %v3234 = vpop.permute.xlu0 %3233
      %3235 = vrot.lane.b32.xlu0 %v3142, 64
      %v3236 = vpop.permute.xlu0 %3235
      %3237 = vrot.lane.b32.xlu0 %v3143, 64
      %v3238 = vpop.permute.xlu0 %3237
      %3239 = vrot.lane.b32.xlu0 %v3144, 64
      %v3240 = vpop.permute.xlu0 %3239
      %3241 = vrot.lane.b32.xlu0 %v3145, 64
      %v3242 = vpop.permute.xlu0 %3241
      %3243 = vrot.lane.b32.xlu0 %v3146, 64
      %v3244 = vpop.permute.xlu0 %3243
      %3245 = vrot.lane.b32.xlu0 %v3147, 64
      %v3246 = vpop.permute.xlu0 %3245
      %3247 = vrot.lane.b32.xlu0 %v3148, 64
      %v3248 = vpop.permute.xlu0 %3247
      %3249 = vrot.lane.b32.xlu0 %v3149, 64
      %v3250 = vpop.permute.xlu0 %3249
      %3251 = vrot.lane.b32.xlu0 %v3150, 64
      %v3252 = vpop.permute.xlu0 %3251
      %3269 = vrot.lane.b32.xlu0 %v3104, 96
      %v3270 = vpop.permute.xlu0 %3269
      %3271 = vrot.lane.b32.xlu0 %v3105, 96
      %v3272 = vpop.permute.xlu0 %3271
      %3273 = vrot.lane.b32.xlu0 %v3106, 96
      %v3274 = vpop.permute.xlu0 %3273
      %3275 = vrot.lane.b32.xlu0 %v3107, 96
      %v3276 = vpop.permute.xlu0 %3275
      %3277 = vrot.lane.b32.xlu0 %v3108, 96
      %v3278 = vpop.permute.xlu0 %3277
      %3279 = vrot.lane.b32.xlu0 %v3109, 96
      %v3280 = vpop.permute.xlu0 %3279
      %3281 = vrot.lane.b32.xlu0 %v3110, 96
      %v3282 = vpop.permute.xlu0 %3281
      %3283 = vrot.lane.b32.xlu0 %v3111, 96
      %v3284 = vpop.permute.xlu0 %3283
      %3285 = vrot.lane.b32.xlu0 %v3112, 96
      %v3286 = vpop.permute.xlu0 %3285
      %3287 = vrot.lane.b32.xlu0 %v3113, 96
      %v3288 = vpop.permute.xlu0 %3287
      %3289 = vrot.lane.b32.xlu0 %v3114, 96
      %v3290 = vpop.permute.xlu0 %3289
      %3291 = vrot.lane.b32.xlu0 %v3115, 96
      %v3292 = vpop.permute.xlu0 %3291
      %3293 = vrot.lane.b32.xlu0 %v3116, 96
      %v3294 = vpop.permute.xlu0 %3293
      %3295 = vrot.lane.b32.xlu0 %v3117, 96
      %v3296 = vpop.permute.xlu0 %3295
      %3297 = vrot.lane.b32.xlu0 %v3118, 96
      %v3298 = vpop.permute.xlu0 %3297
      %3299 = vrot.lane.b32.xlu0 %v3151, 96
      %v3300 = vpop.permute.xlu0 %3299
      %3302 = vrot.lane.b32.xlu0 %v3136, 32
      %v3303 = vpop.permute.xlu0 %3302
      %3304 = vrot.lane.b32.xlu0 %v3137, 32
      %v3305 = vpop.permute.xlu0 %3304
      %3306 = vrot.lane.b32.xlu0 %v3138, 32
      %v3307 = vpop.permute.xlu0 %3306
      %3308 = vrot.lane.b32.xlu0 %v3139, 32
      %v3309 = vpop.permute.xlu0 %3308
      %3310 = vrot.lane.b32.xlu0 %v3140, 32
      %v3311 = vpop.permute.xlu0 %3310
      %3312 = vrot.lane.b32.xlu0 %v3141, 32
      %v3313 = vpop.permute.xlu0 %3312
      %3314 = vrot.lane.b32.xlu0 %v3142, 32
      %v3315 = vpop.permute.xlu0 %3314
      %3316 = vrot.lane.b32.xlu0 %v3143, 32
      %v3317 = vpop.permute.xlu0 %3316
      %3318 = vrot.lane.b32.xlu0 %v3144, 32
      %v3319 = vpop.permute.xlu0 %3318
      %3320 = vrot.lane.b32.xlu0 %v3145, 32
      %v3321 = vpop.permute.xlu0 %3320
      %3322 = vrot.lane.b32.xlu0 %v3146, 32
      %v3323 = vpop.permute.xlu0 %3322
      %3324 = vrot.lane.b32.xlu0 %v3147, 32
      %v3325 = vpop.permute.xlu0 %3324
      %3326 = vrot.lane.b32.xlu0 %v3148, 32
      %v3327 = vpop.permute.xlu0 %3326
      %3328 = vrot.lane.b32.xlu0 %v3149, 32
      %v3329 = vpop.permute.xlu0 %3328
      %3330 = vrot.lane.b32.xlu0 %v3150, 32
      %v3331 = vpop.permute.xlu0 %3330
      %3332 = vrot.lane.b32.xlu0 %v3153, 32
      %v3333 = vpop.permute.xlu0 %3332
      %3335 = vrot.lane.b32.xlu0 %v3105, 64
      %v3336 = vpop.permute.xlu0 %3335
      %3337 = vrot.lane.b32.xlu0 %v3106, 64
      %v3338 = vpop.permute.xlu0 %3337
      %3339 = vrot.lane.b32.xlu0 %v3107, 64
      %v3340 = vpop.permute.xlu0 %3339
      %3341 = vrot.lane.b32.xlu0 %v3108, 64
      %v3342 = vpop.permute.xlu0 %3341
      %3343 = vrot.lane.b32.xlu0 %v3109, 64
      %v3344 = vpop.permute.xlu0 %3343
      %3345 = vrot.lane.b32.xlu0 %v3110, 64
      %v3346 = vpop.permute.xlu0 %3345
      %3347 = vrot.lane.b32.xlu0 %v3111, 64
      %v3348 = vpop.permute.xlu0 %3347
      %3349 = vrot.lane.b32.xlu0 %v3112, 64
      %v3350 = vpop.permute.xlu0 %3349
      %3351 = vrot.lane.b32.xlu0 %v3113, 64
      %v3352 = vpop.permute.xlu0 %3351
      %3353 = vrot.lane.b32.xlu0 %v3114, 64
      %v3354 = vpop.permute.xlu0 %3353
      %3355 = vrot.lane.b32.xlu0 %v3115, 64
      %v3356 = vpop.permute.xlu0 %3355
      %3357 = vrot.lane.b32.xlu0 %v3116, 64
      %v3358 = vpop.permute.xlu0 %3357
      %3359 = vrot.lane.b32.xlu0 %v3117, 64
      %v3360 = vpop.permute.xlu0 %3359
      %3361 = vrot.lane.b32.xlu0 %v3118, 64
      %v3362 = vpop.permute.xlu0 %3361
      %3363 = vrot.lane.b32.xlu0 %v3151, 64
      %v3364 = vpop.permute.xlu0 %3363
      %3365 = vrot.lane.b32.xlu0 %v3154, 64
      %v3366 = vpop.permute.xlu0 %3365
      %3369 = vrot.lane.b32.xlu0 %v3121, 96
      %v3370 = vpop.permute.xlu0 %3369
      %3371 = vrot.lane.b32.xlu0 %v3122, 96
      %v3372 = vpop.permute.xlu0 %3371
      %3373 = vrot.lane.b32.xlu0 %v3123, 96
      %v3374 = vpop.permute.xlu0 %3373
      %3375 = vrot.lane.b32.xlu0 %v3124, 96
      %v3376 = vpop.permute.xlu0 %3375
      %3377 = vrot.lane.b32.xlu0 %v3125, 96
      %v3378 = vpop.permute.xlu0 %3377
      %3379 = vrot.lane.b32.xlu0 %v3126, 96
      %v3380 = vpop.permute.xlu0 %3379
      %3381 = vrot.lane.b32.xlu0 %v3127, 96
      %v3382 = vpop.permute.xlu0 %3381
      %3383 = vrot.lane.b32.xlu0 %v3128, 96
      %v3384 = vpop.permute.xlu0 %3383
      %3385 = vrot.lane.b32.xlu0 %v3129, 96
      %v3386 = vpop.permute.xlu0 %3385
      %3387 = vrot.lane.b32.xlu0 %v3130, 96
      %v3388 = vpop.permute.xlu0 %3387
      %3389 = vrot.lane.b32.xlu0 %v3131, 96
      %v3390 = vpop.permute.xlu0 %3389
      %3391 = vrot.lane.b32.xlu0 %v3132, 96
      %v3392 = vpop.permute.xlu0 %3391
      %3393 = vrot.lane.b32.xlu0 %v3133, 96
      %v3394 = vpop.permute.xlu0 %3393
      %3395 = vrot.lane.b32.xlu0 %v3134, 96
      %v3396 = vpop.permute.xlu0 %3395
      %3397 = vrot.lane.b32.xlu0 %v3152, 96
      %v3398 = vpop.permute.xlu0 %3397
      %3399 = vrot.lane.b32.xlu0 %v3155, 96
      %v3400 = vpop.permute.xlu0 %3399
      %v3403 = vsel %vm1586, %v3103, %v3174
      %v3406 = vsel %vm1586, %v3104, %v3176
      %v3409 = vsel %vm1586, %v3105, %v3178
      %v3412 = vsel %vm1586, %v3106, %v3180
      %v3415 = vsel %vm1586, %v3107, %v3182
      %v3418 = vsel %vm1586, %v3108, %v3184
      %v3421 = vsel %vm1586, %v3109, %v3186
      %v3424 = vsel %vm1586, %v3110, %v3188
      %v3427 = vsel %vm1586, %v3111, %v3190
      %v3430 = vsel %vm1586, %v3112, %v3192
      %v3433 = vsel %vm1586, %v3113, %v3194
      %v3436 = vsel %vm1586, %v3114, %v3196
      %v3439 = vsel %vm1586, %v3115, %v3198
      %v3442 = vsel %vm1586, %v3116, %v3200
      %v3445 = vsel %vm1586, %v3117, %v3202
      %v3448 = vsel %vm1586, %v3118, %v3204
      %v3450 = vsel %vm2129, %v3403, %v3222
      %v3452 = vsel %vm2129, %v3406, %v3224
      %v3454 = vsel %vm2129, %v3409, %v3226
      %v3456 = vsel %vm2129, %v3412, %v3228
      %v3458 = vsel %vm2129, %v3415, %v3230
      %v3460 = vsel %vm2129, %v3418, %v3232
      %v3462 = vsel %vm2129, %v3421, %v3234
      %v3464 = vsel %vm2129, %v3424, %v3236
      %v3466 = vsel %vm2129, %v3427, %v3238
      %v3468 = vsel %vm2129, %v3430, %v3240
      %v3470 = vsel %vm2129, %v3433, %v3242
      %v3472 = vsel %vm2129, %v3436, %v3244
      %v3474 = vsel %vm2129, %v3439, %v3246
      %v3476 = vsel %vm2129, %v3442, %v3248
      %v3478 = vsel %vm2129, %v3445, %v3250
      %v3480 = vsel %vm2129, %v3448, %v3252
      %v3482 = vsel %vm2162, %v3450, %v3270
      %v3485 = vsel %vm2162, %v3452, %v3272
      %v3488 = vsel %vm2162, %v3454, %v3274
      %v3491 = vsel %vm2162, %v3456, %v3276
      %v3494 = vsel %vm2162, %v3458, %v3278
      %v3497 = vsel %vm2162, %v3460, %v3280
      %v3500 = vsel %vm2162, %v3462, %v3282
      %v3503 = vsel %vm2162, %v3464, %v3284
      %v3506 = vsel %vm2162, %v3466, %v3286
      %v3509 = vsel %vm2162, %v3468, %v3288
      %v3512 = vsel %vm2162, %v3470, %v3290
      %v3515 = vsel %vm2162, %v3472, %v3292
      %v3518 = vsel %vm2162, %v3474, %v3294
      %v3521 = vsel %vm2162, %v3476, %v3296
      %v3524 = vsel %vm2162, %v3478, %v3298
      %v3527 = vsel %vm2162, %v3480, %v3300
      %v3531 = vsel %vm1586, %v3120, %v3303
      %v3534 = vsel %vm1586, %v3121, %v3305
      %v3537 = vsel %vm1586, %v3122, %v3307
      %v3540 = vsel %vm1586, %v3123, %v3309
      %v3543 = vsel %vm1586, %v3124, %v3311
      %v3546 = vsel %vm1586, %v3125, %v3313
      %v3549 = vsel %vm1586, %v3126, %v3315
      %v3552 = vsel %vm1586, %v3127, %v3317
      %v3555 = vsel %vm1586, %v3128, %v3319
      %v3558 = vsel %vm1586, %v3129, %v3321
      %v3561 = vsel %vm1586, %v3130, %v3323
      %v3564 = vsel %vm1586, %v3131, %v3325
      %v3567 = vsel %vm1586, %v3132, %v3327
      %v3570 = vsel %vm1586, %v3133, %v3329
      %v3573 = vsel %vm1586, %v3134, %v3331
      %v3576 = vsel %vm1586, %v3152, %v3333
      %v3578 = vsel %vm2129, %v3531, %v3336
      %v3580 = vsel %vm2129, %v3534, %v3338
      %v3582 = vsel %vm2129, %v3537, %v3340
      %v3584 = vsel %vm2129, %v3540, %v3342
      %v3586 = vsel %vm2129, %v3543, %v3344
      %v3588 = vsel %vm2129, %v3546, %v3346
      %v3590 = vsel %vm2129, %v3549, %v3348
      %v3592 = vsel %vm2129, %v3552, %v3350
      %v3594 = vsel %vm2129, %v3555, %v3352
      %v3596 = vsel %vm2129, %v3558, %v3354
      %v3598 = vsel %vm2129, %v3561, %v3356
      %v3600 = vsel %vm2129, %v3564, %v3358
      %v3602 = vsel %vm2129, %v3567, %v3360
      %v3604 = vsel %vm2129, %v3570, %v3362
      %v3606 = vsel %vm2129, %v3573, %v3364
      %v3608 = vsel %vm2129, %v3576, %v3366
      %v3610 = vsel %vm2162, %v3578, %v3370
      %v3613 = vsel %vm2162, %v3580, %v3372
      %v3616 = vsel %vm2162, %v3582, %v3374
      %v3619 = vsel %vm2162, %v3584, %v3376
      %v3622 = vsel %vm2162, %v3586, %v3378
      %v3625 = vsel %vm2162, %v3588, %v3380
      %v3628 = vsel %vm2162, %v3590, %v3382
      %v3631 = vsel %vm2162, %v3592, %v3384
      %v3634 = vsel %vm2162, %v3594, %v3386
      %v3637 = vsel %vm2162, %v3596, %v3388
      %v3640 = vsel %vm2162, %v3598, %v3390
      %v3643 = vsel %vm2162, %v3600, %v3392
      %v3646 = vsel %vm2162, %v3602, %v3394
      %v3649 = vsel %vm2162, %v3604, %v3396
      %v3652 = vsel %vm2162, %v3606, %v3398
      %v3655 = vsel %vm2162, %v3608, %v3400
      %v3657 = vld [vmem:[%s7] sm:$0xf]
      %v3658 = vld [vmem:[%s7 + $0x4] sm:$0xf]
      %v3659 = vld [vmem:[%s7 + $0x8] sm:$0xf]
      %v3660 = vld [vmem:[%s7 + $0xc] sm:$0xf]
      %v3661 = vld [vmem:[%s7 + $0x10] sm:$0xf]
      %v3662 = vld [vmem:[%s7 + $0x14] sm:$0xf]
      %v3663 = vld [vmem:[%s7 + $0x18] sm:$0xf]
      %v3664 = vld [vmem:[%s7 + $0x1c] sm:$0xf]
      %v3665 = vld [vmem:[%s7 + $0x20] sm:$0xf]
      %v3666 = vld [vmem:[%s7 + $0x24] sm:$0xf]
      %v3667 = vld [vmem:[%s7 + $0x28] sm:$0xf]
      %v3668 = vld [vmem:[%s7 + $0x2c] sm:$0xf]
      %v3669 = vld [vmem:[%s7 + $0x30] sm:$0xf]
      %v3670 = vld [vmem:[%s7 + $0x34] sm:$0xf]
      %v3671 = vld [vmem:[%s7 + $0x38] sm:$0xf]
      %v3672 = vld [vmem:[%s7 + $0x3c] sm:$0xf]
      %v3673 = vld [vmem:[%s7 + $0x40] sm:$0xf]
      %v3674 = vld [vmem:[%s7 + $0x44] sm:$0xf]
      %v3675 = vld [vmem:[%s7 + $0x48] sm:$0xf]
      %v3676 = vld [vmem:[%s7 + $0x4c] sm:$0xf]
      %v3677 = vld [vmem:[%s7 + $0x50] sm:$0xf]
      %v3678 = vld [vmem:[%s7 + $0x54] sm:$0xf]
      %v3679 = vld [vmem:[%s7 + $0x58] sm:$0xf]
      %v3680 = vld [vmem:[%s7 + $0x5c] sm:$0xf]
      %v3681 = vld [vmem:[%s7 + $0x60] sm:$0xf]
      %v3682 = vld [vmem:[%s7 + $0x64] sm:$0xf]
      %v3683 = vld [vmem:[%s7 + $0x68] sm:$0xf]
      %v3684 = vld [vmem:[%s7 + $0x6c] sm:$0xf]
      %v3685 = vld [vmem:[%s7 + $0x70] sm:$0xf]
      %v3686 = vld [vmem:[%s7 + $0x74] sm:$0xf]
      %v3687 = vld [vmem:[%s7 + $0x78] sm:$0xf]
      %v3688 = vld [vmem:[%s7 + $0x7c] sm:$0xf]
      %v3689 = vld [vmem:[%s7 + $0x80] sm:$0xf]
      %v3690 = vld [vmem:[%s7 + $0x84] sm:$0xf]
      %v3691 = vld [vmem:[%s7 + $0x88] sm:$0xf]
      %v3692 = vld [vmem:[%s7 + $0x8c] sm:$0xf]
      %v3693 = vld [vmem:[%s8] sm:$0x1]
      %v3695 = vlaneseq
      %v3696 = vshrl.u32 %v3695, 7
      %v3697 = vsub.s32 0, %v3696
      %v3698 = vrot.slane %v3693, %v3697
      %v3736 = vunpack.c.l.b16 %v3657
      %v3737 = vunpack.c.l.b16 %v3658
      %v3738 = vunpack.c.l.b16 %v3659
      %v3739 = vunpack.c.l.b16 %v3660
      %v3740 = vunpack.c.l.b16 %v3661
      %v3741 = vunpack.c.l.b16 %v3662
      %v3742 = vunpack.c.l.b16 %v3663
      %v3743 = vunpack.c.l.b16 %v3664
      %v3744 = vunpack.c.l.b16 %v3665
      %v3745 = vunpack.c.l.b16 %v3666
      %v3746 = vunpack.c.l.b16 %v3667
      %v3747 = vunpack.c.l.b16 %v3668
      %v3748 = vunpack.c.l.b16 %v3669
      %v3749 = vunpack.c.l.b16 %v3670
      %v3750 = vunpack.c.l.b16 %v3671
      %v3751 = vunpack.c.l.b16 %v3672
      %v3752 = vunpack.c.l.b16 %v3673
      %v3753 = vunpack.c.l.b16 %v3674
      %v3754 = vunpack.c.l.b16 %v3675
      %v3755 = vunpack.c.l.b16 %v3676
      %v3756 = vunpack.c.l.b16 %v3677
      %v3757 = vunpack.c.l.b16 %v3678
      %v3758 = vunpack.c.l.b16 %v3679
      %v3759 = vunpack.c.l.b16 %v3680
      %v3760 = vunpack.c.l.b16 %v3681
      %v3761 = vunpack.c.l.b16 %v3682
      %v3762 = vunpack.c.l.b16 %v3683
      %v3763 = vunpack.c.l.b16 %v3684
      %v3764 = vunpack.c.l.b16 %v3685
      %v3765 = vunpack.c.l.b16 %v3686
      %v3766 = vunpack.c.l.b16 %v3687
      %v3767 = vunpack.c.l.b16 %v3688
      %v3768 = vunpack.c.l.b16 %v3689
      %v3769 = vunpack.c.l.b16 %v3690
      %v3770 = vunpack.c.l.b16 %v3691
      %v3771 = vunpack.c.l.b16 %v3692
      %v3772 = vpack.c.b16 %v3737, %v3736
      %v3773 = vpack.c.b16 %v3739, %v3738
      %v3774 = vpack.c.b16 %v3741, %v3740
      %v3775 = vpack.c.b16 %v3743, %v3742
      %v3776 = vpack.c.b16 %v3745, %v3744
      %v3777 = vpack.c.b16 %v3747, %v3746
      %v3778 = vpack.c.b16 %v3749, %v3748
      %v3779 = vpack.c.b16 %v3751, %v3750
      %v3780 = vpack.c.b16 %v3753, %v3752
      %v3781 = vpack.c.b16 %v3755, %v3754
      %v3782 = vpack.c.b16 %v3757, %v3756
      %v3783 = vpack.c.b16 %v3759, %v3758
      %v3784 = vpack.c.b16 %v3761, %v3760
      %v3785 = vpack.c.b16 %v3763, %v3762
      %v3786 = vpack.c.b16 %v3765, %v3764
      %v3787 = vpack.c.b16 %v3767, %v3766
      %v3788 = vpack.c.b16 %v3769, %v3768
      %v3789 = vpack.c.b16 %v3771, %v3770
      %v3809 = vsel %vm1586, %v3137, 0
      %v3812 = vsel %vm1586, %v3138, 0
      %v3815 = vsel %vm1586, %v3139, 0
      %v3818 = vsel %vm1586, %v3140, 0
      %v3821 = vsel %vm1586, %v3141, 0
      %v3824 = vsel %vm1586, %v3142, 0
      %v3827 = vsel %vm1586, %v3143, 0
      %v3830 = vsel %vm1586, %v3144, 0
      %v3833 = vsel %vm1586, %v3145, 0
      %v3836 = vsel %vm1586, %v3146, 0
      %v3839 = vsel %vm1586, %v3147, 0
      %v3842 = vsel %vm1586, %v3148, 0
      %v3845 = vsel %vm1586, %v3149, 0
      %v3848 = vsel %vm1586, %v3150, 0
      %v3851 = vsel %vm1586, %v3153, 0
      %v3854 = vsel %vm1586, %v3156, 0
      %3856 = vmatprep.subr.bf16.mxu0 0
      %3857 = vmatpush1.bf16.msra.mxu0 %v3779
      %3858 = vmatprep.subr.bf16.mxu0 0
      %3859 = vmatpush1.bf16.msra.mxu0 %v3778
      %3860 = vmatprep.subr.bf16.mxu0 0
      %3861 = vmatpush1.bf16.msra.mxu0 %v3777
      %3862 = vmatprep.subr.bf16.mxu0 0
      %3863 = vmatpush1.bf16.msra.mxu0 %v3776
      %3864 = vmatprep.subr.bf16.mxu0 0
      %3865 = vmatpush1.bf16.msra.mxu0 %v3775
      %3866 = vmatprep.subr.bf16.mxu0 0
      %3867 = vmatpush1.bf16.msra.mxu0 %v3774
      %3868 = vmatprep.subr.bf16.mxu0 0
      %3869 = vmatpush1.bf16.msra.mxu0 %v3773
      %3870 = vmatprep.subr.bf16.mxu0 0
      %3871 = vmatpush1.bf16.msra.mxu0 %v3772
      %3872 = vmatprep.subr.bf16.mxu0 0
      %3873 = vmatpush2.bf16.msra.mxu0 %v3787
      %3874 = vmatprep.subr.bf16.mxu0 0
      %3875 = vmatpush2.bf16.msra.mxu0 %v3786
      %3876 = vmatprep.subr.bf16.mxu0 0
      %3877 = vmatpush2.bf16.msra.mxu0 %v3785
      %3878 = vmatprep.subr.bf16.mxu0 0
      %3879 = vmatpush2.bf16.msra.mxu0 %v3784
      %3880 = vmatprep.subr.bf16.mxu0 0
      %3881 = vmatpush2.bf16.msra.mxu0 %v3783
      %3882 = vmatprep.subr.bf16.mxu0 0
      %3883 = vmatpush2.bf16.msra.mxu0 %v3782
      %3884 = vmatprep.subr.bf16.mxu0 0
      %3885 = vmatpush2.bf16.msra.mxu0 %v3781
      %3886 = vmatprep.subr.bf16.mxu0 0
      %3887 = vmatpush2.bf16.msra.mxu0 %v3780
      %3888 = vmatprep.mubr.bf16.mxu0 %v3610
      %3889 = vmatmul.mubr.bf16.gmra.mxu0 %v3482
      %v3890 = vpop.f32.mrf.mxu0
      %v3891 = vadd.f32 %v3698, %v3890
      %v3892 = vpop.f32.mrf.mxu0
      %v3893 = vpop.f32.mrf.mxu0
      %v3894 = vadd.f32 %v3698, %v3893
      %v3895 = vpop.f32.mrf.mxu0
      %3896 = vmatprep.mubr.bf16.mxu0 %v3613
      %3897 = vmatmul.mubr.bf16.gmra.mxu0 %v3485
      %v3898 = vpop.f32.mrf.mxu0
      %v3899 = vadd.f32 %v3698, %v3898
      %v3900 = vpop.f32.mrf.mxu0
      %v3901 = vpop.f32.mrf.mxu0
      %v3902 = vadd.f32 %v3698, %v3901
      %v3903 = vpop.f32.mrf.mxu0
      %3904 = vmatprep.mubr.bf16.mxu0 %v3616
      %3905 = vmatmul.mubr.bf16.gmra.mxu0 %v3488
      %v3906 = vpop.f32.mrf.mxu0
      %v3907 = vadd.f32 %v3698, %v3906
      %v3908 = vpop.f32.mrf.mxu0
      %v3909 = vpop.f32.mrf.mxu0
      %v3910 = vadd.f32 %v3698, %v3909
      %v3911 = vpop.f32.mrf.mxu0
      %3912 = vmatprep.mubr.bf16.mxu0 %v3619
      %3913 = vmatmul.mubr.bf16.gmra.mxu0 %v3491
      %v3914 = vpop.f32.mrf.mxu0
      %v3915 = vadd.f32 %v3698, %v3914
      %v3916 = vpop.f32.mrf.mxu0
      %v3917 = vpop.f32.mrf.mxu0
      %v3918 = vadd.f32 %v3698, %v3917
      %v3919 = vpop.f32.mrf.mxu0
      %3920 = vmatprep.mubr.bf16.mxu0 %v3622
      %3921 = vmatmul.mubr.bf16.gmra.mxu0 %v3494
      %v3922 = vpop.f32.mrf.mxu0
      %v3923 = vadd.f32 %v3698, %v3922
      %v3924 = vpop.f32.mrf.mxu0
      %v3925 = vpop.f32.mrf.mxu0
      %v3926 = vadd.f32 %v3698, %v3925
      %v3927 = vpop.f32.mrf.mxu0
      %3928 = vmatprep.mubr.bf16.mxu0 %v3625
      %3929 = vmatmul.mubr.bf16.gmra.mxu0 %v3497
      %v3930 = vpop.f32.mrf.mxu0
      %v3931 = vadd.f32 %v3698, %v3930
      %v3932 = vpop.f32.mrf.mxu0
      %v3933 = vpop.f32.mrf.mxu0
      %v3934 = vadd.f32 %v3698, %v3933
      %v3935 = vpop.f32.mrf.mxu0
      %3936 = vmatprep.mubr.bf16.mxu0 %v3628
      %3937 = vmatmul.mubr.bf16.gmra.mxu0 %v3500
      %v3938 = vpop.f32.mrf.mxu0
      %v3939 = vadd.f32 %v3698, %v3938
      %v3940 = vpop.f32.mrf.mxu0
      %v3941 = vpop.f32.mrf.mxu0
      %v3942 = vadd.f32 %v3698, %v3941
      %v3943 = vpop.f32.mrf.mxu0
      %3944 = vmatprep.mubr.bf16.mxu0 %v3631
      %3945 = vmatmul.mubr.bf16.gmra.mxu0 %v3503
      %v3946 = vpop.f32.mrf.mxu0
      %v3947 = vadd.f32 %v3698, %v3946
      %v3948 = vpop.f32.mrf.mxu0
      %v3949 = vpop.f32.mrf.mxu0
      %v3950 = vadd.f32 %v3698, %v3949
      %v3951 = vpop.f32.mrf.mxu0
      %3952 = vmatprep.mubr.bf16.mxu0 %v3634
      %3953 = vmatmul.mubr.bf16.gmra.mxu0 %v3506
      %v3954 = vpop.f32.mrf.mxu0
      %v3955 = vadd.f32 %v3698, %v3954
      %v3956 = vpop.f32.mrf.mxu0
      %v3957 = vpop.f32.mrf.mxu0
      %v3958 = vadd.f32 %v3698, %v3957
      %v3959 = vpop.f32.mrf.mxu0
      %3960 = vmatprep.mubr.bf16.mxu0 %v3637
      %3961 = vmatmul.mubr.bf16.gmra.mxu0 %v3509
      %v3962 = vpop.f32.mrf.mxu0
      %v3963 = vadd.f32 %v3698, %v3962
      %v3964 = vpop.f32.mrf.mxu0
      %v3965 = vpop.f32.mrf.mxu0
      %v3966 = vadd.f32 %v3698, %v3965
      %v3967 = vpop.f32.mrf.mxu0
      %3968 = vmatprep.mubr.bf16.mxu0 %v3640
      %3969 = vmatmul.mubr.bf16.gmra.mxu0 %v3512
      %v3970 = vpop.f32.mrf.mxu0
      %v3971 = vadd.f32 %v3698, %v3970
      %v3972 = vpop.f32.mrf.mxu0
      %v3973 = vpop.f32.mrf.mxu0
      %v3974 = vadd.f32 %v3698, %v3973
      %v3975 = vpop.f32.mrf.mxu0
      %3976 = vmatprep.mubr.bf16.mxu0 %v3643
      %3977 = vmatmul.mubr.bf16.gmra.mxu0 %v3515
      %v3978 = vpop.f32.mrf.mxu0
      %v3979 = vadd.f32 %v3698, %v3978
      %v3980 = vpop.f32.mrf.mxu0
      %v3981 = vpop.f32.mrf.mxu0
      %v3982 = vadd.f32 %v3698, %v3981
      %v3983 = vpop.f32.mrf.mxu0
      %3984 = vmatprep.mubr.bf16.mxu0 %v3646
      %3985 = vmatmul.mubr.bf16.gmra.mxu0 %v3518
      %v3986 = vpop.f32.mrf.mxu0
      %v3987 = vadd.f32 %v3698, %v3986
      %v3988 = vpop.f32.mrf.mxu0
      %v3989 = vpop.f32.mrf.mxu0
      %v3990 = vadd.f32 %v3698, %v3989
      %v3991 = vpop.f32.mrf.mxu0
      %3992 = vmatprep.mubr.bf16.mxu0 %v3649
      %3993 = vmatmul.mubr.bf16.gmra.mxu0 %v3521
      %v3994 = vpop.f32.mrf.mxu0
      %v3995 = vadd.f32 %v3698, %v3994
      %v3996 = vpop.f32.mrf.mxu0
      %v3997 = vpop.f32.mrf.mxu0
      %v3998 = vadd.f32 %v3698, %v3997
      %v3999 = vpop.f32.mrf.mxu0
      %4000 = vmatprep.mubr.bf16.mxu0 %v3652
      %4001 = vmatmul.mubr.bf16.gmra.mxu0 %v3524
      %v4002 = vpop.f32.mrf.mxu0
      %v4003 = vadd.f32 %v3698, %v4002
      %v4004 = vpop.f32.mrf.mxu0
      %v4005 = vpop.f32.mrf.mxu0
      %v4006 = vadd.f32 %v3698, %v4005
      %v4007 = vpop.f32.mrf.mxu0
      %4008 = vmatprep.mubr.bf16.mxu0 %v3655
      %4009 = vmatmul.mubr.bf16.gmra.mxu0 %v3527
      %v4010 = vpop.f32.mrf.mxu0
      %v4011 = vadd.f32 %v3698, %v4010
      %v4012 = vpop.f32.mrf.mxu0
      %v4013 = vpop.f32.mrf.mxu0
      %v4014 = vadd.f32 %v3698, %v4013
      %v4015 = vpop.f32.mrf.mxu0
      %4016 = vdwg.mxu0
      %4017 = vmatprep.subr.bf16.mxu0 0
      %4018 = vmatpush1.bf16.msra.mxu0 0
      %4019 = vmatprep.subr.bf16.mxu0 0
      %4020 = vmatpush1.bf16.msra.mxu0 0
      %4021 = vmatprep.subr.bf16.mxu0 0
      %4022 = vmatpush1.bf16.msra.mxu0 0
      %4023 = vmatprep.subr.bf16.mxu0 0
      %4024 = vmatpush1.bf16.msra.mxu0 0
      %4025 = vmatprep.subr.bf16.mxu0 0
      %4026 = vmatpush1.bf16.msra.mxu0 0
      %4027 = vmatprep.subr.bf16.mxu0 0
      %4028 = vmatpush1.bf16.msra.mxu0 0
      %4029 = vmatprep.subr.bf16.mxu0 0
      %4030 = vmatpush1.bf16.msra.mxu0 %v3789
      %4031 = vmatprep.subr.bf16.mxu0 0
      %4032 = vmatpush1.bf16.msra.mxu0 %v3788
      %4033 = vmatprep.subr.bf16.mxu0 0
      %4034 = vmatpush2.bf16.msra.mxu0 0
      %4035 = vmatprep.subr.bf16.mxu0 0
      %4036 = vmatpush2.bf16.msra.mxu0 0
      %4037 = vmatprep.subr.bf16.mxu0 0
      %4038 = vmatpush2.bf16.msra.mxu0 0
      %4039 = vmatprep.subr.bf16.mxu0 0
      %4040 = vmatpush2.bf16.msra.mxu0 0
      %4041 = vmatprep.subr.bf16.mxu0 0
      %4042 = vmatpush2.bf16.msra.mxu0 0
      %4043 = vmatprep.subr.bf16.mxu0 0
      %4044 = vmatpush2.bf16.msra.mxu0 0
      %4045 = vmatprep.subr.bf16.mxu0 0
      %4046 = vmatpush2.bf16.msra.mxu0 0
      %4047 = vmatprep.subr.bf16.mxu0 0
      %4048 = vmatpush2.bf16.msra.mxu0 0
      %4049 = vmatprep.mubr.bf16.mxu0 0
      %4050 = vmatmul.mubr.bf16.gmra.mxu0 %v3809
      %v4051 = vpop.f32.mrf.mxu0
      %v4052 = vadd.f32 %v3891, %v4051
      %v4053 = vpop.f32.mrf.mxu0
      %v4054 = vpop.f32.mrf.mxu0
      %v4055 = vadd.f32 %v3894, %v4054
      %v4056 = vpop.f32.mrf.mxu0
      %4057 = vmatprep.mubr.bf16.mxu0 0
      %4058 = vmatmul.mubr.bf16.gmra.mxu0 %v3812
      %v4059 = vpop.f32.mrf.mxu0
      %v4060 = vadd.f32 %v3899, %v4059
      %v4061 = vpop.f32.mrf.mxu0
      %v4062 = vpop.f32.mrf.mxu0
      %v4063 = vadd.f32 %v3902, %v4062
      %v4064 = vpop.f32.mrf.mxu0
      %4065 = vmatprep.mubr.bf16.mxu0 0
      %4066 = vmatmul.mubr.bf16.gmra.mxu0 %v3815
      %v4067 = vpop.f32.mrf.mxu0
      %v4068 = vadd.f32 %v3907, %v4067
      %v4069 = vpop.f32.mrf.mxu0
      %v4070 = vpop.f32.mrf.mxu0
      %v4071 = vadd.f32 %v3910, %v4070
      %v4072 = vpop.f32.mrf.mxu0
      %4073 = vmatprep.mubr.bf16.mxu0 0
      %4074 = vmatmul.mubr.bf16.gmra.mxu0 %v3818
      %v4075 = vpop.f32.mrf.mxu0
      %v4076 = vadd.f32 %v3915, %v4075
      %v4077 = vpop.f32.mrf.mxu0
      %v4078 = vpop.f32.mrf.mxu0
      %v4079 = vadd.f32 %v3918, %v4078
      %v4080 = vpop.f32.mrf.mxu0
      %4081 = vmatprep.mubr.bf16.mxu0 0
      %4082 = vmatmul.mubr.bf16.gmra.mxu0 %v3821
      %v4083 = vpop.f32.mrf.mxu0
      %v4084 = vadd.f32 %v3923, %v4083
      %v4085 = vpop.f32.mrf.mxu0
      %v4086 = vpop.f32.mrf.mxu0
      %v4087 = vadd.f32 %v3926, %v4086
      %v4088 = vpop.f32.mrf.mxu0
      %4089 = vmatprep.mubr.bf16.mxu0 0
      %4090 = vmatmul.mubr.bf16.gmra.mxu0 %v3824
      %v4091 = vpop.f32.mrf.mxu0
      %v4092 = vadd.f32 %v3931, %v4091
      %v4093 = vpop.f32.mrf.mxu0
      %v4094 = vpop.f32.mrf.mxu0
      %v4095 = vadd.f32 %v3934, %v4094
      %v4096 = vpop.f32.mrf.mxu0
      %4097 = vmatprep.mubr.bf16.mxu0 0
      %4098 = vmatmul.mubr.bf16.gmra.mxu0 %v3827
      %v4099 = vpop.f32.mrf.mxu0
      %v4100 = vadd.f32 %v3939, %v4099
      %v4101 = vpop.f32.mrf.mxu0
      %v4102 = vpop.f32.mrf.mxu0
      %v4103 = vadd.f32 %v3942, %v4102
      %v4104 = vpop.f32.mrf.mxu0
      %4105 = vmatprep.mubr.bf16.mxu0 0
      %4106 = vmatmul.mubr.bf16.gmra.mxu0 %v3830
      %v4107 = vpop.f32.mrf.mxu0
      %v4108 = vadd.f32 %v3947, %v4107
      %v4109 = vpop.f32.mrf.mxu0
      %v4110 = vpop.f32.mrf.mxu0
      %v4111 = vadd.f32 %v3950, %v4110
      %v4112 = vpop.f32.mrf.mxu0
      %4113 = vmatprep.mubr.bf16.mxu0 0
      %4114 = vmatmul.mubr.bf16.gmra.mxu0 %v3833
      %v4115 = vpop.f32.mrf.mxu0
      %v4116 = vadd.f32 %v3955, %v4115
      %v4117 = vpop.f32.mrf.mxu0
      %v4118 = vpop.f32.mrf.mxu0
      %v4119 = vadd.f32 %v3958, %v4118
      %v4120 = vpop.f32.mrf.mxu0
      %4121 = vmatprep.mubr.bf16.mxu0 0
      %4122 = vmatmul.mubr.bf16.gmra.mxu0 %v3836
      %v4123 = vpop.f32.mrf.mxu0
      %v4124 = vadd.f32 %v3963, %v4123
      %v4125 = vpop.f32.mrf.mxu0
      %v4126 = vpop.f32.mrf.mxu0
      %v4127 = vadd.f32 %v3966, %v4126
      %v4128 = vpop.f32.mrf.mxu0
      %4129 = vmatprep.mubr.bf16.mxu0 0
      %4130 = vmatmul.mubr.bf16.gmra.mxu0 %v3839
      %v4131 = vpop.f32.mrf.mxu0
      %v4132 = vadd.f32 %v3971, %v4131
      %v4133 = vpop.f32.mrf.mxu0
      %v4134 = vpop.f32.mrf.mxu0
      %v4135 = vadd.f32 %v3974, %v4134
      %v4136 = vpop.f32.mrf.mxu0
      %4137 = vmatprep.mubr.bf16.mxu0 0
      %4138 = vmatmul.mubr.bf16.gmra.mxu0 %v3842
      %v4139 = vpop.f32.mrf.mxu0
      %v4140 = vadd.f32 %v3979, %v4139
      %v4141 = vpop.f32.mrf.mxu0
      %v4142 = vpop.f32.mrf.mxu0
      %v4143 = vadd.f32 %v3982, %v4142
      %v4144 = vpop.f32.mrf.mxu0
      %4145 = vmatprep.mubr.bf16.mxu0 0
      %4146 = vmatmul.mubr.bf16.gmra.mxu0 %v3845
      %v4147 = vpop.f32.mrf.mxu0
      %v4148 = vadd.f32 %v3987, %v4147
      %v4149 = vpop.f32.mrf.mxu0
      %v4150 = vpop.f32.mrf.mxu0
      %v4151 = vadd.f32 %v3990, %v4150
      %v4152 = vpop.f32.mrf.mxu0
      %4153 = vmatprep.mubr.bf16.mxu0 0
      %4154 = vmatmul.mubr.bf16.gmra.mxu0 %v3848
      %v4155 = vpop.f32.mrf.mxu0
      %v4156 = vadd.f32 %v3995, %v4155
      %v4157 = vpop.f32.mrf.mxu0
      %v4158 = vpop.f32.mrf.mxu0
      %v4159 = vadd.f32 %v3998, %v4158
      %v4160 = vpop.f32.mrf.mxu0
      %4161 = vmatprep.mubr.bf16.mxu0 0
      %4162 = vmatmul.mubr.bf16.gmra.mxu0 %v3851
      %v4163 = vpop.f32.mrf.mxu0
      %v4164 = vadd.f32 %v4003, %v4163
      %v4165 = vpop.f32.mrf.mxu0
      %v4166 = vpop.f32.mrf.mxu0
      %v4167 = vadd.f32 %v4006, %v4166
      %v4168 = vpop.f32.mrf.mxu0
      %4169 = vmatprep.mubr.bf16.mxu0 0
      %4170 = vmatmul.mubr.bf16.gmra.mxu0 %v3854
      %v4171 = vpop.f32.mrf.mxu0
      %v4172 = vadd.f32 %v4011, %v4171
      %v4173 = vpop.f32.mrf.mxu0
      %v4174 = vpop.f32.mrf.mxu0
      %v4175 = vadd.f32 %v4014, %v4174
      %v4176 = vpop.f32.mrf.mxu0
      %4177 = vdwg.mxu0
      %vm4178 = vcmp.gt.f32.partialorder %v4052, 0.0
      %vm4179 = vcmp.gt.f32.partialorder %v4055, 0.0
      %vm4180 = vcmp.gt.f32.partialorder %v4060, 0.0
      %vm4181 = vcmp.gt.f32.partialorder %v4063, 0.0
      %vm4182 = vcmp.gt.f32.partialorder %v4068, 0.0
      %vm4183 = vcmp.gt.f32.partialorder %v4071, 0.0
      %vm4184 = vcmp.gt.f32.partialorder %v4076, 0.0
      %vm4185 = vcmp.gt.f32.partialorder %v4079, 0.0
      %vm4186 = vcmp.gt.f32.partialorder %v4084, 0.0
      %vm4187 = vcmp.gt.f32.partialorder %v4087, 0.0
      %vm4188 = vcmp.gt.f32.partialorder %v4092, 0.0
      %vm4189 = vcmp.gt.f32.partialorder %v4095, 0.0
      %vm4190 = vcmp.gt.f32.partialorder %v4100, 0.0
      %vm4191 = vcmp.gt.f32.partialorder %v4103, 0.0
      %vm4192 = vcmp.gt.f32.partialorder %v4108, 0.0
      %vm4193 = vcmp.gt.f32.partialorder %v4111, 0.0
      %vm4194 = vcmp.gt.f32.partialorder %v4116, 0.0
      %vm4195 = vcmp.gt.f32.partialorder %v4119, 0.0
      %vm4196 = vcmp.gt.f32.partialorder %v4124, 0.0
      %vm4197 = vcmp.gt.f32.partialorder %v4127, 0.0
      %vm4198 = vcmp.gt.f32.partialorder %v4132, 0.0
      %vm4199 = vcmp.gt.f32.partialorder %v4135, 0.0
      %vm4200 = vcmp.gt.f32.partialorder %v4140, 0.0
      %vm4201 = vcmp.gt.f32.partialorder %v4143, 0.0
      %vm4202 = vcmp.gt.f32.partialorder %v4148, 0.0
      %vm4203 = vcmp.gt.f32.partialorder %v4151, 0.0
      %vm4204 = vcmp.gt.f32.partialorder %v4156, 0.0
      %vm4205 = vcmp.gt.f32.partialorder %v4159, 0.0
      %vm4206 = vcmp.gt.f32.partialorder %v4164, 0.0
      %vm4207 = vcmp.gt.f32.partialorder %v4167, 0.0
      %vm4208 = vcmp.gt.f32.partialorder %v4172, 0.0
      %vm4209 = vcmp.gt.f32.partialorder %v4175, 0.0
      %v4210 = vld [vmem:[%s9] sm:$0x1]
      %v4212 = vlaneseq
      %v4213 = vshrl.u32 %v4212, 7
      %v4214 = vsub.s32 0, %v4213
      %v4215 = vrot.slane %v4210, %v4214
      %v4217 = vmul.f32 %v4215, %v4052
      %v4218 = vmul.f32 %v4215, %v4055
      %v4219 = vmul.f32 %v4215, %v4060
      %v4220 = vmul.f32 %v4215, %v4063
      %v4221 = vmul.f32 %v4215, %v4068
      %v4222 = vmul.f32 %v4215, %v4071
      %v4223 = vmul.f32 %v4215, %v4076
      %v4224 = vmul.f32 %v4215, %v4079
      %v4225 = vmul.f32 %v4215, %v4084
      %v4226 = vmul.f32 %v4215, %v4087
      %v4227 = vmul.f32 %v4215, %v4092
      %v4228 = vmul.f32 %v4215, %v4095
      %v4229 = vmul.f32 %v4215, %v4100
      %v4230 = vmul.f32 %v4215, %v4103
      %v4231 = vmul.f32 %v4215, %v4108
      %v4232 = vmul.f32 %v4215, %v4111
      %v4233 = vmul.f32 %v4215, %v4116
      %v4234 = vmul.f32 %v4215, %v4119
      %v4235 = vmul.f32 %v4215, %v4124
      %v4236 = vmul.f32 %v4215, %v4127
      %v4237 = vmul.f32 %v4215, %v4132
      %v4238 = vmul.f32 %v4215, %v4135
      %v4239 = vmul.f32 %v4215, %v4140
      %v4240 = vmul.f32 %v4215, %v4143
      %v4241 = vmul.f32 %v4215, %v4148
      %v4242 = vmul.f32 %v4215, %v4151
      %v4243 = vmul.f32 %v4215, %v4156
      %v4244 = vmul.f32 %v4215, %v4159
      %v4245 = vmul.f32 %v4215, %v4164
      %v4246 = vmul.f32 %v4215, %v4167
      %v4247 = vmul.f32 %v4215, %v4172
      %v4248 = vmul.f32 %v4215, %v4175
      %v4249 = vsel %vm4178, %v4052, %v4217
      %v4250 = vsel %vm4179, %v4055, %v4218
      %v4251 = vsel %vm4180, %v4060, %v4219
      %v4252 = vsel %vm4181, %v4063, %v4220
      %v4253 = vsel %vm4182, %v4068, %v4221
      %v4254 = vsel %vm4183, %v4071, %v4222
      %v4255 = vsel %vm4184, %v4076, %v4223
      %v4256 = vsel %vm4185, %v4079, %v4224
      %v4257 = vsel %vm4186, %v4084, %v4225
      %v4258 = vsel %vm4187, %v4087, %v4226
      %v4259 = vsel %vm4188, %v4092, %v4227
      %v4260 = vsel %vm4189, %v4095, %v4228
      %v4261 = vsel %vm4190, %v4100, %v4229
      %v4262 = vsel %vm4191, %v4103, %v4230
      %v4263 = vsel %vm4192, %v4108, %v4231
      %v4264 = vsel %vm4193, %v4111, %v4232
      %v4265 = vsel %vm4194, %v4116, %v4233
      %v4266 = vsel %vm4195, %v4119, %v4234
      %v4267 = vsel %vm4196, %v4124, %v4235
      %v4268 = vsel %vm4197, %v4127, %v4236
      %v4269 = vsel %vm4198, %v4132, %v4237
      %v4270 = vsel %vm4199, %v4135, %v4238
      %v4271 = vsel %vm4200, %v4140, %v4239
      %v4272 = vsel %vm4201, %v4143, %v4240
      %v4273 = vsel %vm4202, %v4148, %v4241
      %v4274 = vsel %vm4203, %v4151, %v4242
      %v4275 = vsel %vm4204, %v4156, %v4243
      %v4276 = vsel %vm4205, %v4159, %v4244
      %v4277 = vsel %vm4206, %v4164, %v4245
      %v4278 = vsel %vm4207, %v4167, %v4246
      %v4279 = vsel %vm4208, %v4172, %v4247
      %v4280 = vsel %vm4209, %v4175, %v4248
      %vm4281 = vcmask 97280
      %4282 = vst.msk [vmem:[%s359] sm:$0xff] %vm4281, %v4249
      %4283 = vst.msk [vmem:[%s359 + $0x8] sm:$0xff] %vm4281, %v4250
      %4284 = vst.msk [vmem:[%s359 + $0x10] sm:$0xff] %vm4281, %v4251
      %4285 = vst.msk [vmem:[%s359 + $0x18] sm:$0xff] %vm4281, %v4252
      %4286 = vst.msk [vmem:[%s359 + $0x20] sm:$0xff] %vm4281, %v4253
      %4287 = vst.msk [vmem:[%s359 + $0x28] sm:$0xff] %vm4281, %v4254
      %4288 = vst.msk [vmem:[%s359 + $0x30] sm:$0xff] %vm4281, %v4255
      %4289 = vst.msk [vmem:[%s359 + $0x38] sm:$0xff] %vm4281, %v4256
      %4290 = vst.msk [vmem:[%s359 + $0x40] sm:$0xff] %vm4281, %v4257
      %4291 = vst.msk [vmem:[%s359 + $0x48] sm:$0xff] %vm4281, %v4258
      %4292 = vst.msk [vmem:[%s359 + $0x50] sm:$0xff] %vm4281, %v4259
      %4293 = vst.msk [vmem:[%s359 + $0x58] sm:$0xff] %vm4281, %v4260
      %4294 = vst.msk [vmem:[%s359 + $0x60] sm:$0xff] %vm4281, %v4261
      %4295 = vst.msk [vmem:[%s359 + $0x68] sm:$0xff] %vm4281, %v4262
      %4296 = vst.msk [vmem:[%s359 + $0x70] sm:$0xff] %vm4281, %v4263
      %4297 = vst.msk [vmem:[%s359 + $0x78] sm:$0xff] %vm4281, %v4264
      %4298 = vst.msk [vmem:[%s359 + $0x80] sm:$0xff] %vm4281, %v4265
      %4299 = vst.msk [vmem:[%s359 + $0x88] sm:$0xff] %vm4281, %v4266
      %4300 = vst.msk [vmem:[%s359 + $0x90] sm:$0xff] %vm4281, %v4267
      %4301 = vst.msk [vmem:[%s359 + $0x98] sm:$0xff] %vm4281, %v4268
      %4302 = vst.msk [vmem:[%s359 + $0xa0] sm:$0xff] %vm4281, %v4269
      %4303 = vst.msk [vmem:[%s359 + $0xa8] sm:$0xff] %vm4281, %v4270
      %4304 = vst.msk [vmem:[%s359 + $0xb0] sm:$0xff] %vm4281, %v4271
      %4305 = vst.msk [vmem:[%s359 + $0xb8] sm:$0xff] %vm4281, %v4272
      %4306 = vst.msk [vmem:[%s359 + $0xc0] sm:$0xff] %vm4281, %v4273
      %4307 = vst.msk [vmem:[%s359 + $0xc8] sm:$0xff] %vm4281, %v4274
      %4308 = vst.msk [vmem:[%s359 + $0xd0] sm:$0xff] %vm4281, %v4275
      %4309 = vst.msk [vmem:[%s359 + $0xd8] sm:$0xff] %vm4281, %v4276
      %4310 = vst.msk [vmem:[%s359 + $0xe0] sm:$0xff] %vm4281, %v4277
      %4311 = vst.msk [vmem:[%s359 + $0xe8] sm:$0xff] %vm4281, %v4278
      %4312 = vst.msk [vmem:[%s359 + $0xf0] sm:$0xff] %vm4281, %v4279
      %4313 = vst.msk [vmem:[%s359 + $0xf8] sm:$0xff] %vm4281, %v4280
      %p4314 = scmp.lt.s32.totalorder %s21, 1
      %s4315 = scalar_select %p4314, %s21, 1
      %s4316 = smul.addr %s4315, 32
      %s4317 = smul.addr %s4316, 8
      %s4318 = scalar_lea.vmem %s10, %s4317
      // Predicated region
      $region61: #{ema_backbone_forward.2} parent=59 // pred_check
        %p4319 = pneg %p254
      $region62: #{ema_backbone_forward.2} parent=59 // pred_check_branch
        %4321 = sbr.rel (%p4319) target = $region64
      $region63: #{ema_backbone_forward.2} parent=59 // pred_region
        _
      $region64: #{ema_backbone_forward.2} parent=59 // pred_fallthru
        _
    $region60: #{ema_backbone_forward.2} parent=5 // pred_fallthru
      _
    %p4322 = scmp.le.s32.totalorder 2, %s16
    // Predicated region
    $region65: #{ema_backbone_forward.2} parent=5 // pred_check
      %p4323 = pneg %p4322
    $region66: #{ema_backbone_forward.2} parent=5 // pred_check_branch
      %4325 = sbr.rel (%p4323) target = $region68
    $region67: #{ema_backbone_forward.2} parent=5 // pred_region
      %s4326 = ssub.s32 %s16, 2
      // Predicated region
      $region69: #{ema_backbone_forward.2} parent=67 // pred_check
        %p4327 = pneg %p260
      $region70: #{ema_backbone_forward.2} parent=67 // pred_check_branch
        %4329 = sbr.rel (%p4327) target = $region72
      $region71: #{ema_backbone_forward.2} parent=67 // pred_region
        %p4330 = scmp.lt.s32.totalorder %s22, 1
        %s4331 = scalar_select %p4330, %s22, 1
        %s4332 = smul.addr %s4331, 32
        %s4333 = smul.addr %s4332, 8
        %s4334 = scalar_lea.vmem %s10, %s4333
      $region72: #{ema_backbone_forward.2} parent=67 // pred_fallthru
        _
    $region68: #{ema_backbone_forward.2} parent=5 // pred_fallthru
      _
  $region6: #{ema_backbone_forward.2} parent=0 // loop_footer
    %s20 = sadd.s32 1, %s16
  $region7: #{ema_backbone_forward.2} parent=0 // loop_footer_branch
    %15 = sbr.rel target = $region3
  $region8: #{ema_backbone_forward.2} parent=0 // loop_exit
    _

// kernel: ema_backbone_forward.3
$region0: #{ema_backbone_forward.3}
  #allocation0 [shape = 'u32[]', space=smem, size = 0x4, offset = 0x4, fixed_abs, tag = 'smem constant byte address 0x4 - core index']
  #allocation1 [shape = 'u32[144,128]{1,0:T(1,128)}', space=vmem, size = 0x12000, scoped, tag = 'internal scratch']
  #allocation2 [shape = 'f32[1,18,18,27]{3,2,1,0:T(8,128)}', space=vmem, size = 0x36000, scoped, tag = 'scratch operand']
  #allocation3 [shape = 'f32[1,18,18,32]{3,2,1,0:T(8,128)}', space=vmem, size = 0x36000, scoped, tag = 'scratch operand']
  %s0 = inlined_call_operand.vmem [shape: f32[2,16,16,27], index: 0, kind: input, shape index: {}]
  %s1 = inlined_call_operand.vmem [shape: bf16[243,32], index: 1, kind: input, shape index: {}]
  %s2 = inlined_call_operand.vmem [shape: f32[1,32], index: 2, kind: input, shape index: {}]
  %s3 = inlined_call_operand.vmem [shape: f32[1,32], index: 3, kind: input, shape index: {}, may-alias: {3,6}]
  %s4 = inlined_call_operand.vmem [shape: bf16[288,32], index: 4, kind: input, shape index: {}]
  %s5 = inlined_call_operand.vmem [shape: f32[1,32], index: 5, kind: input, shape index: {}]
  %s6 = inlined_call_operand.vmem [shape: f32[1,32], index: 6, kind: input, shape index: {}, may-alias: {3,6}]
  %s7 = inlined_call_operand.vmem [shape: bf16[288,12], index: 7, kind: input, shape index: {}]
  %s8 = inlined_call_operand.vmem [shape: f32[1,12], index: 8, kind: input, shape index: {}]
  %s9 = inlined_call_operand.vmem [shape: f32[1,12], index: 9, kind: input, shape index: {}]
  %s10 = inlined_call_operand.vmem [shape: f32[2,256,12], index: 10, kind: output, shape index: {}]
  %s11 = sld [smem:[#allocation0]]
  $region73: #{ema_backbone_forward.3} parent=0
    _
  %s13 = ssub.s32 1, %s11
  %s14 = scalar_select 0, %s13, %s11
  loop: start=0, step=1, limit=4
  $region2: #{ema_backbone_forward.3} parent=0 // loop_pre_header
    _
  $region3: #{ema_backbone_forward.3} parent=0 // loop_header
    %s16 = sphi 0, %s20
    %p17 = scmp.ge.s32.totalorder %s16, 4
    %s26 = sphi 0, %s28
    %s29 = sphi 0, %s26
    %s30 = sphi 0, %s29
    %s46 = sphi 0, %s30
    %s50 = sphi 0, %s50
    %s52 = sphi 0, %s50
    %s53 = sphi 0, %s52
    %s67 = sphi 0, %s53
    %s71 = sphi 0, %s71
    %s73 = sphi 0, %s71
    %s74 = sphi 0, %s73
    %s88 = sphi 0, %s74
    %s92 = sphi 0, %s92
    %s94 = sphi 0, %s92
    %s95 = sphi 0, %s94
    %s109 = sphi 0, %s95
    %s113 = sphi 0, %s113
    %s115 = sphi 0, %s113
    %s116 = sphi 0, %s115
    %s130 = sphi 0, %s116
    %s134 = sphi 0, %s134
    %s136 = sphi 0, %s134
    %s137 = sphi 0, %s136
    %s151 = sphi 0, %s137
    %s155 = sphi 0, %s155
    %s157 = sphi 0, %s155
    %s158 = sphi 0, %s157
    %s172 = sphi 0, %s158
    %s176 = sphi 0, %s176
    %s178 = sphi 0, %s176
    %s179 = sphi 0, %s178
    %s193 = sphi 0, %s179
    %s197 = sphi 0, %s197
    %s199 = sphi 0, %s197
    %s200 = sphi 0, %s199
    %s214 = sphi 0, %s200
    %s218 = sphi 0, %s218
    %s220 = sphi 0, %s218
    %s221 = sphi 0, %s220
    %s235 = sphi 0, %s221
    %s241 = sphi 0, %s243
    %s244 = sphi 0, %s241
    %s245 = sphi 0, %s244
    %s261 = sphi 0, %s245
  $region4: #{ema_backbone_forward.3} parent=0 // loop_header_branch
    %19 = sbr.rel (%p17) target = $region8
  $region5: #{ema_backbone_forward.3} parent=0 // loop_body
    %s21 = ssub.s32 %s16, 1
    %s22 = ssub.s32 %s16, 2
    %s23 = sadd.s32 %s16, 1
    %s24 = ssub.s32 %s16, %s23
    %p25 = scmp.eq.s32.totalorder %s24, 0
    %s27 = sadd.s32 %s26, 1
    %s28 = scalar_select %p25, %s26, %s27
    %p31 = pneg %p25
    %p32 = scmp.eq.s32.totalorder %s16, 1
    %p33 = por %p31, %p32
    %p34 = scmp.ne.s32.totalorder %s26, %s29
    %p35 = scmp.eq.s32.totalorder %s16, 0
    %p36 = por %p34, %p35
    %p37 = scmp.ne.s32.totalorder %s26, %s29
    %p38 = scmp.eq.s32.totalorder %s21, 1
    %p39 = por %p37, %p38
    %p40 = scmp.ne.s32.totalorder %s29, %s30
    %p41 = scmp.eq.s32.totalorder %s21, 0
    %p42 = por %p40, %p41
    %p43 = scmp.ne.s32.totalorder %s29, %s30
    %p44 = scmp.eq.s32.totalorder %s22, 1
    %p45 = por %p43, %p44
    %p47 = scmp.ne.s32.totalorder %s30, %s46
    %p48 = scmp.eq.s32.totalorder %s22, 0
    %p49 = por %p47, %p48
    %s51 = sadd.s32 %s50, 1
    %p54 = scmp.eq.s32.totalorder %s16, 1
    %p55 = scmp.ne.s32.totalorder %s50, %s52
    %p56 = scmp.eq.s32.totalorder %s16, 0
    %p57 = por %p55, %p56
    %p58 = scmp.ne.s32.totalorder %s50, %s52
    %p59 = scmp.eq.s32.totalorder %s21, 1
    %p60 = por %p58, %p59
    %p61 = scmp.ne.s32.totalorder %s52, %s53
    %p62 = scmp.eq.s32.totalorder %s21, 0
    %p63 = por %p61, %p62
    %p64 = scmp.ne.s32.totalorder %s52, %s53
    %p65 = scmp.eq.s32.totalorder %s22, 1
    %p66 = por %p64, %p65
    %p68 = scmp.ne.s32.totalorder %s53, %s67
    %p69 = scmp.eq.s32.totalorder %s22, 0
    %p70 = por %p68, %p69
    %s72 = sadd.s32 %s71, 1
    %p75 = scmp.eq.s32.totalorder %s16, 1
    %p76 = scmp.ne.s32.totalorder %s71, %s73
    %p77 = scmp.eq.s32.totalorder %s16, 0
    %p78 = por %p76, %p77
    %p79 = scmp.ne.s32.totalorder %s71, %s73
    %p80 = scmp.eq.s32.totalorder %s21, 1
    %p81 = por %p79, %p80
    %p82 = scmp.ne.s32.totalorder %s73, %s74
    %p83 = scmp.eq.s32.totalorder %s21, 0
    %p84 = por %p82, %p83
    %p85 = scmp.ne.s32.totalorder %s73, %s74
    %p86 = scmp.eq.s32.totalorder %s22, 1
    %p87 = por %p85, %p86
    %p89 = scmp.ne.s32.totalorder %s74, %s88
    %p90 = scmp.eq.s32.totalorder %s22, 0
    %p91 = por %p89, %p90
    %s93 = sadd.s32 %s92, 1
    %p96 = scmp.eq.s32.totalorder %s16, 1
    %p97 = scmp.ne.s32.totalorder %s92, %s94
    %p98 = scmp.eq.s32.totalorder %s16, 0
    %p99 = por %p97, %p98
    %p100 = scmp.ne.s32.totalorder %s92, %s94
    %p101 = scmp.eq.s32.totalorder %s21, 1
    %p102 = por %p100, %p101
    %p103 = scmp.ne.s32.totalorder %s94, %s95
    %p104 = scmp.eq.s32.totalorder %s21, 0
    %p105 = por %p103, %p104
    %p106 = scmp.ne.s32.totalorder %s94, %s95
    %p107 = scmp.eq.s32.totalorder %s22, 1
    %p108 = por %p106, %p107
    %p110 = scmp.ne.s32.totalorder %s95, %s109
    %p111 = scmp.eq.s32.totalorder %s22, 0
    %p112 = por %p110, %p111
    %s114 = sadd.s32 %s113, 1
    %p117 = scmp.eq.s32.totalorder %s16, 1
    %p118 = scmp.ne.s32.totalorder %s113, %s115
    %p119 = scmp.eq.s32.totalorder %s16, 0
    %p120 = por %p118, %p119
    %p121 = scmp.ne.s32.totalorder %s113, %s115
    %p122 = scmp.eq.s32.totalorder %s21, 1
    %p123 = por %p121, %p122
    %p124 = scmp.ne.s32.totalorder %s115, %s116
    %p125 = scmp.eq.s32.totalorder %s21, 0
    %p126 = por %p124, %p125
    %p127 = scmp.ne.s32.totalorder %s115, %s116
    %p128 = scmp.eq.s32.totalorder %s22, 1
    %p129 = por %p127, %p128
    %p131 = scmp.ne.s32.totalorder %s116, %s130
    %p132 = scmp.eq.s32.totalorder %s22, 0
    %p133 = por %p131, %p132
    %s135 = sadd.s32 %s134, 1
    %p138 = scmp.eq.s32.totalorder %s16, 1
    %p139 = scmp.ne.s32.totalorder %s134, %s136
    %p140 = scmp.eq.s32.totalorder %s16, 0
    %p141 = por %p139, %p140
    %p142 = scmp.ne.s32.totalorder %s134, %s136
    %p143 = scmp.eq.s32.totalorder %s21, 1
    %p144 = por %p142, %p143
    %p145 = scmp.ne.s32.totalorder %s136, %s137
    %p146 = scmp.eq.s32.totalorder %s21, 0
    %p147 = por %p145, %p146
    %p148 = scmp.ne.s32.totalorder %s136, %s137
    %p149 = scmp.eq.s32.totalorder %s22, 1
    %p150 = por %p148, %p149
    %p152 = scmp.ne.s32.totalorder %s137, %s151
    %p153 = scmp.eq.s32.totalorder %s22, 0
    %p154 = por %p152, %p153
    %s156 = sadd.s32 %s155, 1
    %p159 = scmp.eq.s32.totalorder %s16, 1
    %p160 = scmp.ne.s32.totalorder %s155, %s157
    %p161 = scmp.eq.s32.totalorder %s16, 0
    %p162 = por %p160, %p161
    %p163 = scmp.ne.s32.totalorder %s155, %s157
    %p164 = scmp.eq.s32.totalorder %s21, 1
    %p165 = por %p163, %p164
    %p166 = scmp.ne.s32.totalorder %s157, %s158
    %p167 = scmp.eq.s32.totalorder %s21, 0
    %p168 = por %p166, %p167
    %p169 = scmp.ne.s32.totalorder %s157, %s158
    %p170 = scmp.eq.s32.totalorder %s22, 1
    %p171 = por %p169, %p170
    %p173 = scmp.ne.s32.totalorder %s158, %s172
    %p174 = scmp.eq.s32.totalorder %s22, 0
    %p175 = por %p173, %p174
    %s177 = sadd.s32 %s176, 1
    %p180 = scmp.eq.s32.totalorder %s16, 1
    %p181 = scmp.ne.s32.totalorder %s176, %s178
    %p182 = scmp.eq.s32.totalorder %s16, 0
    %p183 = por %p181, %p182
    %p184 = scmp.ne.s32.totalorder %s176, %s178
    %p185 = scmp.eq.s32.totalorder %s21, 1
    %p186 = por %p184, %p185
    %p187 = scmp.ne.s32.totalorder %s178, %s179
    %p188 = scmp.eq.s32.totalorder %s21, 0
    %p189 = por %p187, %p188
    %p190 = scmp.ne.s32.totalorder %s178, %s179
    %p191 = scmp.eq.s32.totalorder %s22, 1
    %p192 = por %p190, %p191
    %p194 = scmp.ne.s32.totalorder %s179, %s193
    %p195 = scmp.eq.s32.totalorder %s22, 0
    %p196 = por %p194, %p195
    %s198 = sadd.s32 %s197, 1
    %p201 = scmp.eq.s32.totalorder %s16, 1
    %p202 = scmp.ne.s32.totalorder %s197, %s199
    %p203 = scmp.eq.s32.totalorder %s16, 0
    %p204 = por %p202, %p203
    %p205 = scmp.ne.s32.totalorder %s197, %s199
    %p206 = scmp.eq.s32.totalorder %s21, 1
    %p207 = por %p205, %p206
    %p208 = scmp.ne.s32.totalorder %s199, %s200
    %p209 = scmp.eq.s32.totalorder %s21, 0
    %p210 = por %p208, %p209
    %p211 = scmp.ne.s32.totalorder %s199, %s200
    %p212 = scmp.eq.s32.totalorder %s22, 1
    %p213 = por %p211, %p212
    %p215 = scmp.ne.s32.totalorder %s200, %s214
    %p216 = scmp.eq.s32.totalorder %s22, 0
    %p217 = por %p215, %p216
    %s219 = sadd.s32 %s218, 1
    %p222 = scmp.eq.s32.totalorder %s16, 1
    %p223 = scmp.ne.s32.totalorder %s218, %s220
    %p224 = scmp.eq.s32.totalorder %s16, 0
    %p225 = por %p223, %p224
    %p226 = scmp.ne.s32.totalorder %s218, %s220
    %p227 = scmp.eq.s32.totalorder %s21, 1
    %p228 = por %p226, %p227
    %p229 = scmp.ne.s32.totalorder %s220, %s221
    %p230 = scmp.eq.s32.totalorder %s21, 0
    %p231 = por %p229, %p230
    %p232 = scmp.ne.s32.totalorder %s220, %s221
    %p233 = scmp.eq.s32.totalorder %s22, 1
    %p234 = por %p232, %p233
    %p236 = scmp.ne.s32.totalorder %s221, %s235
    %p237 = scmp.eq.s32.totalorder %s22, 0
    %p238 = por %p236, %p237
    %s239 = ssub.s32 %s16, %s23
    %p240 = scmp.eq.s32.totalorder %s239, 0
    %s242 = sadd.s32 %s241, 1
    %s243 = scalar_select %p240, %s241, %s242
    %p246 = pneg %p240
    %p247 = scmp.eq.s32.totalorder %s16, 1
    %p248 = por %p246, %p247
    %p249 = scmp.ne.s32.totalorder %s241, %s244
    %p250 = scmp.eq.s32.totalorder %s16, 0
    %p251 = por %p249, %p250
    %p252 = scmp.ne.s32.totalorder %s241, %s244
    %p253 = scmp.eq.s32.totalorder %s21, 1
    %p254 = por %p252, %p253
    %p255 = scmp.ne.s32.totalorder %s244, %s245
    %p256 = scmp.eq.s32.totalorder %s21, 0
    %p257 = por %p255, %p256
    %p258 = scmp.ne.s32.totalorder %s244, %s245
    %p259 = scmp.eq.s32.totalorder %s22, 1
    %p260 = por %p258, %p259
    %p262 = scmp.ne.s32.totalorder %s245, %s261
    %p263 = scmp.eq.s32.totalorder %s22, 0
    %p264 = por %p262, %p263
    %p265 = scmp.le.s32.totalorder 1, %s16
    %p266 = scmp.lt.s32.totalorder %s16, 3
    %p267 = pnand %p265, %p266
    %p268 = pneg %p267
    // Predicated region
    $region9: #{ema_backbone_forward.3} parent=5 // pred_check
      _
    $region10: #{ema_backbone_forward.3} parent=5 // pred_check_branch
      %270 = sbr.rel (%p267) target = $region12
    $region11: #{ema_backbone_forward.3} parent=5 // pred_region
      %s271 = ssub.s32 %s16, 1
      // Predicated region
      $region13: #{ema_backbone_forward.3} parent=11 // pred_check
        %p272 = pneg %p63
      $region14: #{ema_backbone_forward.3} parent=11 // pred_check_branch
        %274 = sbr.rel (%p272) target = $region16
      $region15: #{ema_backbone_forward.3} parent=11 // pred_region
        _
      $region16: #{ema_backbone_forward.3} parent=11 // pred_fallthru
        _
      // Predicated region
      $region17: #{ema_backbone_forward.3} parent=11 // pred_check
        %p275 = pneg %p84
      $region18: #{ema_backbone_forward.3} parent=11 // pred_check_branch
        %277 = sbr.rel (%p275) target = $region20
      $region19: #{ema_backbone_forward.3} parent=11 // pred_region
        _
      $region20: #{ema_backbone_forward.3} parent=11 // pred_fallthru
        _
      // Predicated region
      $region21: #{ema_backbone_forward.3} parent=11 // pred_check
        %p278 = pneg %p105
      $region22: #{ema_backbone_forward.3} parent=11 // pred_check_branch
        %280 = sbr.rel (%p278) target = $region24
      $region23: #{ema_backbone_forward.3} parent=11 // pred_region
        _
      $region24: #{ema_backbone_forward.3} parent=11 // pred_fallthru
        _
      // Predicated region
      $region25: #{ema_backbone_forward.3} parent=11 // pred_check
        %p281 = pneg %p126
      $region26: #{ema_backbone_forward.3} parent=11 // pred_check_branch
        %283 = sbr.rel (%p281) target = $region28
      $region27: #{ema_backbone_forward.3} parent=11 // pred_region
        _
      $region28: #{ema_backbone_forward.3} parent=11 // pred_fallthru
        _
      // Predicated region
      $region29: #{ema_backbone_forward.3} parent=11 // pred_check
        %p284 = pneg %p147
      $region30: #{ema_backbone_forward.3} parent=11 // pred_check_branch
        %286 = sbr.rel (%p284) target = $region32
      $region31: #{ema_backbone_forward.3} parent=11 // pred_region
        _
      $region32: #{ema_backbone_forward.3} parent=11 // pred_fallthru
        _
      // Predicated region
      $region33: #{ema_backbone_forward.3} parent=11 // pred_check
        %p287 = pneg %p168
      $region34: #{ema_backbone_forward.3} parent=11 // pred_check_branch
        %289 = sbr.rel (%p287) target = $region36
      $region35: #{ema_backbone_forward.3} parent=11 // pred_region
        _
      $region36: #{ema_backbone_forward.3} parent=11 // pred_fallthru
        _
      // Predicated region
      $region37: #{ema_backbone_forward.3} parent=11 // pred_check
        %p290 = pneg %p189
      $region38: #{ema_backbone_forward.3} parent=11 // pred_check_branch
        %292 = sbr.rel (%p290) target = $region40
      $region39: #{ema_backbone_forward.3} parent=11 // pred_region
        _
      $region40: #{ema_backbone_forward.3} parent=11 // pred_fallthru
        _
      // Predicated region
      $region41: #{ema_backbone_forward.3} parent=11 // pred_check
        %p293 = pneg %p210
      $region42: #{ema_backbone_forward.3} parent=11 // pred_check_branch
        %295 = sbr.rel (%p293) target = $region44
      $region43: #{ema_backbone_forward.3} parent=11 // pred_region
        _
      $region44: #{ema_backbone_forward.3} parent=11 // pred_fallthru
        _
      // Predicated region
      $region45: #{ema_backbone_forward.3} parent=11 // pred_check
        %p296 = pneg %p231
      $region46: #{ema_backbone_forward.3} parent=11 // pred_check_branch
        %298 = sbr.rel (%p296) target = $region48
      $region47: #{ema_backbone_forward.3} parent=11 // pred_region
        _
      $region48: #{ema_backbone_forward.3} parent=11 // pred_fallthru
        _
    $region12: #{ema_backbone_forward.3} parent=5 // pred_fallthru
      _
    %p299 = scmp.lt.s32.totalorder %s16, 2
    // Predicated region
    $region49: #{ema_backbone_forward.3} parent=5 // pred_check
      %p300 = pneg %p299
    $region50: #{ema_backbone_forward.3} parent=5 // pred_check_branch
      %302 = sbr.rel (%p300) target = $region52
    $region51: #{ema_backbone_forward.3} parent=5 // pred_region
      // Predicated region
      $region53: #{ema_backbone_forward.3} parent=51 // pred_check
        %p303 = pneg %p36
      $region54: #{ema_backbone_forward.3} parent=51 // pred_check_branch
        %305 = sbr.rel (%p303) target = $region56
      $region55: #{ema_backbone_forward.3} parent=51 // pred_region
        %p306 = scmp.lt.s32.totalorder %s16, 1
        %s307 = scalar_select %p306, %s16, 1
        %s308 = smul.addr %s307, 32
        %s309 = smul.addr %s308, 8
        %s310 = scalar_lea.vmem %s0, %s309
      $region56: #{ema_backbone_forward.3} parent=51 // pred_fallthru
        _
    $region52: #{ema_backbone_forward.3} parent=5 // pred_fallthru
      _
    %p311 = scmp.le.s32.totalorder 1, %s16
    %p312 = scmp.lt.s32.totalorder %s16, 3
    %p313 = pnand %p311, %p312
    %p314 = pneg %p313
    // Predicated region
    $region57: #{ema_backbone_forward.3} parent=5 // pred_check
      _
    $region58: #{ema_backbone_forward.3} parent=5 // pred_check_branch
      %316 = sbr.rel (%p313) target = $region60
    $region59: #{ema_backbone_forward.3} parent=5 // pred_region
      %s317 = ssub.s32 %s16, 1
      %p318 = scmp.lt.s32.totalorder %s21, 1
      %s319 = scalar_select %p318, %s21, 1
      %s320 = smul.addr %s319, 32
      %s321 = smul.addr %s320, 8
      %s322 = scalar_lea.vmem %s0, %s321
      %p323 = pneg %p42
      %p324 = pneg %p39
      %p325 = pneg %p63
      %p326 = pneg %p60
      %p327 = pneg %p84
      %p328 = pneg %p81
      %p329 = pneg %p105
      %p330 = pneg %p102
      %p331 = pneg %p126
      %p332 = pneg %p123
      %p333 = pneg %p147
      %p334 = pneg %p144
      %p335 = pneg %p168
      %p336 = pneg %p165
      %p337 = pneg %p189
      %p338 = pneg %p186
      %p339 = pneg %p210
      %p340 = pneg %p207
      %p341 = pneg %p231
      %p342 = pneg %p228
      %p343 = pneg %p257
      %p344 = pneg %p254
      %p345 = scmp.lt.s32.totalorder %s21, 1
      %s346 = scalar_select %p345, %s21, 1
      %s347 = smul.addr %s346, 32
      %s348 = smul.addr %s347, 8
      %s349 = scalar_lea.vmem %s10, %s348
      %p350 = scmp.lt.s32.totalorder %s21, 1
      %s351 = scalar_select %p350, %s21, 1
      %s352 = smul.addr %s351, 32
      %s353 = smul.addr %s352, 8
      %s354 = scalar_lea.vmem %s0, %s353
      %p355 = scmp.lt.s32.totalorder %s21, 1
      %s356 = scalar_select %p355, %s21, 1
      %s357 = smul.addr %s356, 32
      %s358 = smul.addr %s357, 8
      %s359 = scalar_lea.vmem %s10, %s358
      %vm361 = vcmask 220160
      %362 = vst.msk [vmem:[#allocation2] sm:$0xff] %vm361, 0.0
      %363 = vst.msk [vmem:[#allocation2 + $0x8] sm:$0xff] %vm361, 0.0
      %vm364 = vcmask 214016
      %365 = vst.msk [vmem:[#allocation2 + $0x10] sm:$0x3] %vm364, 0.0
      %366 = vst.msk [vmem:[#allocation2 + $0x18] sm:$0xff] %vm361, 0.0
      %367 = vst.msk [vmem:[#allocation2 + $0x20] sm:$0xff] %vm361, 0.0
      %368 = vst.msk [vmem:[#allocation2 + $0x28] sm:$0x3] %vm364, 0.0
      %369 = vst.msk [vmem:[#allocation2 + $0x30] sm:$0xff] %vm361, 0.0
      %370 = vst.msk [vmem:[#allocation2 + $0x38] sm:$0xff] %vm361, 0.0
      %371 = vst.msk [vmem:[#allocation2 + $0x40] sm:$0x3] %vm364, 0.0
      %372 = vst.msk [vmem:[#allocation2 + $0x48] sm:$0xff] %vm361, 0.0
      %373 = vst.msk [vmem:[#allocation2 + $0x50] sm:$0xff] %vm361, 0.0
      %374 = vst.msk [vmem:[#allocation2 + $0x58] sm:$0x3] %vm364, 0.0
      %375 = vst.msk [vmem:[#allocation2 + $0x60] sm:$0xff] %vm361, 0.0
      %376 = vst.msk [vmem:[#allocation2 + $0x68] sm:$0xff] %vm361, 0.0
      %377 = vst.msk [vmem:[#allocation2 + $0x70] sm:$0x3] %vm364, 0.0
      %378 = vst.msk [vmem:[#allocation2 + $0x78] sm:$0xff] %vm361, 0.0
      %379 = vst.msk [vmem:[#allocation2 + $0x80] sm:$0xff] %vm361, 0.0
      %380 = vst.msk [vmem:[#allocation2 + $0x88] sm:$0x3] %vm364, 0.0
      %381 = vst.msk [vmem:[#allocation2 + $0x90] sm:$0xff] %vm361, 0.0
      %382 = vst.msk [vmem:[#allocation2 + $0x98] sm:$0xff] %vm361, 0.0
      %383 = vst.msk [vmem:[#allocation2 + $0xa0] sm:$0x3] %vm364, 0.0
      %384 = vst.msk [vmem:[#allocation2 + $0xa8] sm:$0xff] %vm361, 0.0
      %385 = vst.msk [vmem:[#allocation2 + $0xb0] sm:$0xff] %vm361, 0.0
      %386 = vst.msk [vmem:[#allocation2 + $0xb8] sm:$0x3] %vm364, 0.0
      %387 = vst.msk [vmem:[#allocation2 + $0xc0] sm:$0xff] %vm361, 0.0
      %388 = vst.msk [vmem:[#allocation2 + $0xc8] sm:$0xff] %vm361, 0.0
      %389 = vst.msk [vmem:[#allocation2 + $0xd0] sm:$0x3] %vm364, 0.0
      %390 = vst.msk [vmem:[#allocation2 + $0xd8] sm:$0xff] %vm361, 0.0
      %391 = vst.msk [vmem:[#allocation2 + $0xe0] sm:$0xff] %vm361, 0.0
      %392 = vst.msk [vmem:[#allocation2 + $0xe8] sm:$0x3] %vm364, 0.0
      %393 = vst.msk [vmem:[#allocation2 + $0xf0] sm:$0xff] %vm361, 0.0
      %394 = vst.msk [vmem:[#allocation2 + $0xf8] sm:$0xff] %vm361, 0.0
      %395 = vst.msk [vmem:[#allocation2 + $0x100] sm:$0x3] %vm364, 0.0
      %396 = vst.msk [vmem:[#allocation2 + $0x108] sm:$0xff] %vm361, 0.0
      %397 = vst.msk [vmem:[#allocation2 + $0x110] sm:$0xff] %vm361, 0.0
      %398 = vst.msk [vmem:[#allocation2 + $0x118] sm:$0x3] %vm364, 0.0
      %399 = vst.msk [vmem:[#allocation2 + $0x120] sm:$0xff] %vm361, 0.0
      %400 = vst.msk [vmem:[#allocation2 + $0x128] sm:$0xff] %vm361, 0.0
      %401 = vst.msk [vmem:[#allocation2 + $0x130] sm:$0x3] %vm364, 0.0
      %402 = vst.msk [vmem:[#allocation2 + $0x138] sm:$0xff] %vm361, 0.0
      %403 = vst.msk [vmem:[#allocation2 + $0x140] sm:$0xff] %vm361, 0.0
      %404 = vst.msk [vmem:[#allocation2 + $0x148] sm:$0x3] %vm364, 0.0
      %405 = vst.msk [vmem:[#allocation2 + $0x150] sm:$0xff] %vm361, 0.0
      %406 = vst.msk [vmem:[#allocation2 + $0x158] sm:$0xff] %vm361, 0.0
      %407 = vst.msk [vmem:[#allocation2 + $0x160] sm:$0x3] %vm364, 0.0
      %408 = vst.msk [vmem:[#allocation2 + $0x168] sm:$0xff] %vm361, 0.0
      %409 = vst.msk [vmem:[#allocation2 + $0x170] sm:$0xff] %vm361, 0.0
      %410 = vst.msk [vmem:[#allocation2 + $0x178] sm:$0x3] %vm364, 0.0
      %411 = vst.msk [vmem:[#allocation2 + $0x180] sm:$0xff] %vm361, 0.0
      %412 = vst.msk [vmem:[#allocation2 + $0x188] sm:$0xff] %vm361, 0.0
      %413 = vst.msk [vmem:[#allocation2 + $0x190] sm:$0x3] %vm364, 0.0
      %414 = vst.msk [vmem:[#allocation2 + $0x198] sm:$0xff] %vm361, 0.0
      %415 = vst.msk [vmem:[#allocation2 + $0x1a0] sm:$0xff] %vm361, 0.0
      %416 = vst.msk [vmem:[#allocation2 + $0x1a8] sm:$0x3] %vm364, 0.0
      %v417 = vld [vmem:[%s354] sm:$0xff]
      %v418 = vld [vmem:[%s354 + $0x8] sm:$0xff]
      %v419 = vld [vmem:[%s354 + $0x10] sm:$0xff]
      %v420 = vld [vmem:[%s354 + $0x18] sm:$0xff]
      %v421 = vld [vmem:[%s354 + $0x20] sm:$0xff]
      %v422 = vld [vmem:[%s354 + $0x28] sm:$0xff]
      %v423 = vld [vmem:[%s354 + $0x30] sm:$0xff]
      %v424 = vld [vmem:[%s354 + $0x38] sm:$0xff]
      %v425 = vld [vmem:[%s354 + $0x40] sm:$0xff]
      %v426 = vld [vmem:[%s354 + $0x48] sm:$0xff]
      %v427 = vld [vmem:[%s354 + $0x50] sm:$0xff]
      %v428 = vld [vmem:[%s354 + $0x58] sm:$0xff]
      %v429 = vld [vmem:[%s354 + $0x60] sm:$0xff]
      %v430 = vld [vmem:[%s354 + $0x68] sm:$0xff]
      %v431 = vld [vmem:[%s354 + $0x70] sm:$0xff]
      %v432 = vld [vmem:[%s354 + $0x78] sm:$0xff]
      %v433 = vld [vmem:[%s354 + $0x80] sm:$0xff]
      %v434 = vld [vmem:[%s354 + $0x88] sm:$0xff]
      %v435 = vld [vmem:[%s354 + $0x90] sm:$0xff]
      %v436 = vld [vmem:[%s354 + $0x98] sm:$0xff]
      %v437 = vld [vmem:[%s354 + $0xa0] sm:$0xff]
      %v438 = vld [vmem:[%s354 + $0xa8] sm:$0xff]
      %v439 = vld [vmem:[%s354 + $0xb0] sm:$0xff]
      %v440 = vld [vmem:[%s354 + $0xb8] sm:$0xff]
      %v441 = vld [vmem:[%s354 + $0xc0] sm:$0xff]
      %v442 = vld [vmem:[%s354 + $0xc8] sm:$0xff]
      %v443 = vld [vmem:[%s354 + $0xd0] sm:$0xff]
      %v444 = vld [vmem:[%s354 + $0xd8] sm:$0xff]
      %v445 = vld [vmem:[%s354 + $0xe0] sm:$0xff]
      %v446 = vld [vmem:[%s354 + $0xe8] sm:$0xff]
      %v447 = vld [vmem:[%s354 + $0xf0] sm:$0xff]
      %v448 = vld [vmem:[%s354 + $0xf8] sm:$0xff]
      %s449 = scalar_lea.vmem [#allocation2], 24
      %450 = vst.msk [vmem:[%s449 + $0x1] sm:$0xff] %vm361, %v417
      %451 = vst.msk [vmem:[%s449 + $0x9] sm:$0xff] %vm361, %v418
      %452 = vst.msk [vmem:[%s449 + $0x19] sm:$0xff] %vm361, %v419
      %453 = vst.msk [vmem:[%s449 + $0x21] sm:$0xff] %vm361, %v420
      %454 = vst.msk [vmem:[%s449 + $0x31] sm:$0xff] %vm361, %v421
      %455 = vst.msk [vmem:[%s449 + $0x39] sm:$0xff] %vm361, %v422
      %456 = vst.msk [vmem:[%s449 + $0x49] sm:$0xff] %vm361, %v423
      %457 = vst.msk [vmem:[%s449 + $0x51] sm:$0xff] %vm361, %v424
      %458 = vst.msk [vmem:[%s449 + $0x61] sm:$0xff] %vm361, %v425
      %459 = vst.msk [vmem:[%s449 + $0x69] sm:$0xff] %vm361, %v426
      %460 = vst.msk [vmem:[%s449 + $0x79] sm:$0xff] %vm361, %v427
      %461 = vst.msk [vmem:[%s449 + $0x81] sm:$0xff] %vm361, %v428
      %462 = vst.msk [vmem:[%s449 + $0x91] sm:$0xff] %vm361, %v429
      %463 = vst.msk [vmem:[%s449 + $0x99] sm:$0xff] %vm361, %v430
      %464 = vst.msk [vmem:[%s449 + $0xa9] sm:$0xff] %vm361, %v431
      %465 = vst.msk [vmem:[%s449 + $0xb1] sm:$0xff] %vm361, %v432
      %466 = vst.msk [vmem:[%s449 + $0xc1] sm:$0xff] %vm361, %v433
      %467 = vst.msk [vmem:[%s449 + $0xc9] sm:$0xff] %vm361, %v434
      %468 = vst.msk [vmem:[%s449 + $0xd9] sm:$0xff] %vm361, %v435
      %469 = vst.msk [vmem:[%s449 + $0xe1] sm:$0xff] %vm361, %v436
      %470 = vst.msk [vmem:[%s449 + $0xf1] sm:$0xff] %vm361, %v437
      %471 = vst.msk [vmem:[%s449 + $0xf9] sm:$0xff] %vm361, %v438
      %472 = vst.msk [vmem:[%s449 + $0x109] sm:$0xff] %vm361, %v439
      %473 = vst.msk [vmem:[%s449 + $0x111] sm:$0xff] %vm361, %v440
      %474 = vst.msk [vmem:[%s449 + $0x121] sm:$0xff] %vm361, %v441
      %475 = vst.msk [vmem:[%s449 + $0x129] sm:$0xff] %vm361, %v442
      %476 = vst.msk [vmem:[%s449 + $0x139] sm:$0xff] %vm361, %v443
      %477 = vst.msk [vmem:[%s449 + $0x141] sm:$0xff] %vm361, %v444
      %478 = vst.msk [vmem:[%s449 + $0x151] sm:$0xff] %vm361, %v445
      %479 = vst.msk [vmem:[%s449 + $0x159] sm:$0xff] %vm361, %v446
      %480 = vst.msk [vmem:[%s449 + $0x169] sm:$0xff] %vm361, %v447
      %481 = vst.msk [vmem:[%s449 + $0x171] sm:$0xff] %vm361, %v448
      %v482 = vld [vmem:[#allocation2] sm:$0xff]
      %v483 = vld [vmem:[#allocation2 + $0x8] sm:$0xff]
      %v484 = vld [vmem:[#allocation2 + $0x18] sm:$0xff]
      %v485 = vld [vmem:[#allocation2 + $0x20] sm:$0xff]
      %v486 = vld [vmem:[#allocation2 + $0x30] sm:$0xff]
      %v487 = vld [vmem:[#allocation2 + $0x38] sm:$0xff]
      %v488 = vld [vmem:[#allocation2 + $0x48] sm:$0xff]
      %v489 = vld [vmem:[#allocation2 + $0x50] sm:$0xff]
      %v490 = vld [vmem:[#allocation2 + $0x60] sm:$0xff]
      %v491 = vld [vmem:[#allocation2 + $0x68] sm:$0xff]
      %v492 = vld [vmem:[#allocation2 + $0x78] sm:$0xff]
      %v493 = vld [vmem:[#allocation2 + $0x80] sm:$0xff]
      %v494 = vld [vmem:[#allocation2 + $0x90] sm:$0xff]
      %v495 = vld [vmem:[#allocation2 + $0x98] sm:$0xff]
      %v496 = vld [vmem:[#allocation2 + $0xa8] sm:$0xff]
      %v497 = vld [vmem:[#allocation2 + $0xb0] sm:$0xff]
      %v498 = vld [vmem:[#allocation2 + $0xc0] sm:$0xff]
      %v499 = vld [vmem:[#allocation2 + $0xc8] sm:$0xff]
      %v500 = vld [vmem:[#allocation2 + $0xd8] sm:$0xff]
      %v501 = vld [vmem:[#allocation2 + $0xe0] sm:$0xff]
      %v502 = vld [vmem:[#allocation2 + $0xf0] sm:$0xff]
      %v503 = vld [vmem:[#allocation2 + $0xf8] sm:$0xff]
      %v504 = vld [vmem:[#allocation2 + $0x108] sm:$0xff]
      %v505 = vld [vmem:[#allocation2 + $0x110] sm:$0xff]
      %v506 = vld [vmem:[#allocation2 + $0x120] sm:$0xff]
      %v507 = vld [vmem:[#allocation2 + $0x128] sm:$0xff]
      %v508 = vld [vmem:[#allocation2 + $0x138] sm:$0xff]
      %v509 = vld [vmem:[#allocation2 + $0x140] sm:$0xff]
      %v510 = vld [vmem:[#allocation2 + $0x150] sm:$0xff]
      %v511 = vld [vmem:[#allocation2 + $0x158] sm:$0xff]
      %v512 = vld [vmem:[#allocation2 + $0x168] sm:$0xff]
      %v513 = vld [vmem:[#allocation2 + $0x170] sm:$0xff]
      %v514 = vld [vmem:[#allocation2 + $0x180] sm:$0xff]
      %v515 = vld [vmem:[#allocation2 + $0x188] sm:$0xff]
      %v516 = vld [vmem:[#allocation2 + $0x198] sm:$0xff]
      %v517 = vld [vmem:[#allocation2 + $0x1a0] sm:$0xff]
      %v518 = vld [vmem:[#allocation2 + $0x1] sm:$0xff]
      %v519 = vld [vmem:[#allocation2 + $0x9] sm:$0xff]
      %v520 = vld [vmem:[#allocation2 + $0x19] sm:$0xff]
      %v521 = vld [vmem:[#allocation2 + $0x21] sm:$0xff]
      %v522 = vld [vmem:[#allocation2 + $0x31] sm:$0xff]
      %v523 = vld [vmem:[#allocation2 + $0x39] sm:$0xff]
      %v524 = vld [vmem:[#allocation2 + $0x49] sm:$0xff]
      %v525 = vld [vmem:[#allocation2 + $0x51] sm:$0xff]
      %v526 = vld [vmem:[#allocation2 + $0x61] sm:$0xff]
      %v527 = vld [vmem:[#allocation2 + $0x69] sm:$0xff]
      %v528 = vld [vmem:[#allocation2 + $0x79] sm:$0xff]
      %v529 = vld [vmem:[#allocation2 + $0x81] sm:$0xff]
      %v530 = vld [vmem:[#allocation2 + $0x91] sm:$0xff]
      %v531 = vld [vmem:[#allocation2 + $0x99] sm:$0xff]
      %v532 = vld [vmem:[#allocation2 + $0xa9] sm:$0xff]
      %v533 = vld [vmem:[#allocation2 + $0xb1] sm:$0xff]
      %v534 = vld [vmem:[#allocation2 + $0xc1] sm:$0xff]
      %v535 = vld [vmem:[#allocation2 + $0xc9] sm:$0xff]
      %v536 = vld [vmem:[#allocation2 + $0xd9] sm:$0xff]
      %v537 = vld [vmem:[#allocation2 + $0xe1] sm:$0xff]
      %v538 = vld [vmem:[#allocation2 + $0xf1] sm:$0xff]
      %v539 = vld [vmem:[#allocation2 + $0xf9] sm:$0xff]
      %v540 = vld [vmem:[#allocation2 + $0x109] sm:$0xff]
      %v541 = vld [vmem:[#allocation2 + $0x111] sm:$0xff]
      %v542 = vld [vmem:[#allocation2 + $0x121] sm:$0xff]
      %v543 = vld [vmem:[#allocation2 + $0x129] sm:$0xff]
      %v544 = vld [vmem:[#allocation2 + $0x139] sm:$0xff]
      %v545 = vld [vmem:[#allocation2 + $0x141] sm:$0xff]
      %v546 = vld [vmem:[#allocation2 + $0x151] sm:$0xff]
      %v547 = vld [vmem:[#allocation2 + $0x159] sm:$0xff]
      %v548 = vld [vmem:[#allocation2 + $0x169] sm:$0xff]
      %v549 = vld [vmem:[#allocation2 + $0x171] sm:$0xff]
      %v550 = vld [vmem:[#allocation2 + $0x181] sm:$0xff]
      %v551 = vld [vmem:[#allocation2 + $0x189] sm:$0xff]
      %v552 = vld [vmem:[#allocation2 + $0x199] sm:$0xff]
      %v553 = vld [vmem:[#allocation2 + $0x1a1] sm:$0xff]
      %v554 = vld [vmem:[#allocation2 + $0x2] sm:$0xff]
      %v555 = vld [vmem:[#allocation2 + $0xa] sm:$0xff]
      %v556 = vld [vmem:[#allocation2 + $0x1a] sm:$0xff]
      %v557 = vld [vmem:[#allocation2 + $0x22] sm:$0xff]
      %v558 = vld [vmem:[#allocation2 + $0x32] sm:$0xff]
      %v559 = vld [vmem:[#allocation2 + $0x3a] sm:$0xff]
      %v560 = vld [vmem:[#allocation2 + $0x4a] sm:$0xff]
      %v561 = vld [vmem:[#allocation2 + $0x52] sm:$0xff]
      %v562 = vld [vmem:[#allocation2 + $0x62] sm:$0xff]
      %v563 = vld [vmem:[#allocation2 + $0x6a] sm:$0xff]
      %v564 = vld [vmem:[#allocation2 + $0x7a] sm:$0xff]
      %v565 = vld [vmem:[#allocation2 + $0x82] sm:$0xff]
      %v566 = vld [vmem:[#allocation2 + $0x92] sm:$0xff]
      %v567 = vld [vmem:[#allocation2 + $0x9a] sm:$0xff]
      %v568 = vld [vmem:[#allocation2 + $0xaa] sm:$0xff]
      %v569 = vld [vmem:[#allocation2 + $0xb2] sm:$0xff]
      %v570 = vld [vmem:[#allocation2 + $0xc2] sm:$0xff]
      %v571 = vld [vmem:[#allocation2 + $0xca] sm:$0xff]
      %v572 = vld [vmem:[#allocation2 + $0xda] sm:$0xff]
      %v573 = vld [vmem:[#allocation2 + $0xe2] sm:$0xff]
      %v574 = vld [vmem:[#allocation2 + $0xf2] sm:$0xff]
      %v575 = vld [vmem:[#allocation2 + $0xfa] sm:$0xff]
      %v576 = vld [vmem:[#allocation2 + $0x10a] sm:$0xff]
      %v577 = vld [vmem:[#allocation2 + $0x112] sm:$0xff]
      %v578 = vld [vmem:[#allocation2 + $0x122] sm:$0xff]
      %v579 = vld [vmem:[#allocation2 + $0x12a] sm:$0xff]
      %v580 = vld [vmem:[#allocation2 + $0x13a] sm:$0xff]
      %v581 = vld [vmem:[#allocation2 + $0x142] sm:$0xff]
      %v582 = vld [vmem:[#allocation2 + $0x152] sm:$0xff]
      %v583 = vld [vmem:[#allocation2 + $0x15a] sm:$0xff]
      %v584 = vld [vmem:[#allocation2 + $0x16a] sm:$0xff]
      %v585 = vld [vmem:[#allocation2 + $0x172] sm:$0xff]
      %v586 = vld [vmem:[#allocation2 + $0x182] sm:$0xff]
      %v587 = vld [vmem:[#allocation2 + $0x18a] sm:$0xff]
      %v588 = vld [vmem:[#allocation2 + $0x19a] sm:$0xff]
      %v589 = vld [vmem:[#allocation2 + $0x1a2] sm:$0xff]
      %v590 = vpack.c.bf16 %v483, %v482
      %v591 = vpack.c.bf16 %v485, %v484
      %v592 = vpack.c.bf16 %v487, %v486
      %v593 = vpack.c.bf16 %v489, %v488
      %v594 = vpack.c.bf16 %v491, %v490
      %v595 = vpack.c.bf16 %v493, %v492
      %v596 = vpack.c.bf16 %v495, %v494
      %v597 = vpack.c.bf16 %v497, %v496
      %v598 = vpack.c.bf16 %v499, %v498
      %v599 = vpack.c.bf16 %v501, %v500
      %v600 = vpack.c.bf16 %v503, %v502
      %v601 = vpack.c.bf16 %v505, %v504
      %v602 = vpack.c.bf16 %v507, %v506
      %v603 = vpack.c.bf16 %v509, %v508
      %v604 = vpack.c.bf16 %v511, %v510
      %v605 = vpack.c.bf16 %v513, %v512
      %v606 = vpack.c.bf16 %v519, %v518
      %v607 = vpack.c.bf16 %v521, %v520
      %v608 = vpack.c.bf16 %v523, %v522
      %v609 = vpack.c.bf16 %v525, %v524
      %v610 = vpack.c.bf16 %v527, %v526
      %v611 = vpack.c.bf16 %v529, %v528
      %v612 = vpack.c.bf16 %v531, %v530
      %v613 = vpack.c.bf16 %v533, %v532
      %v614 = vpack.c.bf16 %v535, %v534
      %v615 = vpack.c.bf16 %v537, %v536
      %v616 = vpack.c.bf16 %v539, %v538
      %v617 = vpack.c.bf16 %v541, %v540
      %v618 = vpack.c.bf16 %v543, %v542
      %v619 = vpack.c.bf16 %v545, %v544
      %v620 = vpack.c.bf16 %v547, %v546
      %v621 = vpack.c.bf16 %v549, %v548
      %v622 = vpack.c.bf16 %v555, %v554
      %v623 = vpack.c.bf16 %v557, %v556
      %v624 = vpack.c.bf16 %v559, %v558
      %v625 = vpack.c.bf16 %v561, %v560
      %v626 = vpack.c.bf16 %v563, %v562
      %v627 = vpack.c.bf16 %v565, %v564
      %v628 = vpack.c.bf16 %v567, %v566
      %v629 = vpack.c.bf16 %v569, %v568
      %v630 = vpack.c.bf16 %v571, %v570
      %v631 = vpack.c.bf16 %v573, %v572
      %v632 = vpack.c.bf16 %v575, %v574
      %v633 = vpack.c.bf16 %v577, %v576
      %v634 = vpack.c.bf16 %v579, %v578
      %v635 = vpack.c.bf16 %v581, %v580
      %v636 = vpack.c.bf16 %v583, %v582
      %v637 = vpack.c.bf16 %v585, %v584
      %v638 = vpack.c.bf16 %v515, %v514
      %v639 = vpack.c.bf16 %v551, %v550
      %v640 = vpack.c.bf16 %v587, %v586
      %v641 = vpack.c.bf16 %v517, %v516
      %v642 = vpack.c.bf16 %v553, %v552
      %v643 = vpack.c.bf16 %v589, %v588
      %660 = vrot.lane.b32.xlu0 %v606, 27
      %v661 = vpop.permute.xlu0 %660
      %662 = vrot.lane.b32.xlu0 %v607, 27
      %v663 = vpop.permute.xlu0 %662
      %664 = vrot.lane.b32.xlu0 %v608, 27
      %v665 = vpop.permute.xlu0 %664
      %666 = vrot.lane.b32.xlu0 %v609, 27
      %v667 = vpop.permute.xlu0 %666
      %668 = vrot.lane.b32.xlu0 %v610, 27
      %v669 = vpop.permute.xlu0 %668
      %670 = vrot.lane.b32.xlu0 %v611, 27
      %v671 = vpop.permute.xlu0 %670
      %672 = vrot.lane.b32.xlu0 %v612, 27
      %v673 = vpop.permute.xlu0 %672
      %674 = vrot.lane.b32.xlu0 %v613, 27
      %v675 = vpop.permute.xlu0 %674
      %676 = vrot.lane.b32.xlu0 %v614, 27
      %v677 = vpop.permute.xlu0 %676
      %678 = vrot.lane.b32.xlu0 %v615, 27
      %v679 = vpop.permute.xlu0 %678
      %680 = vrot.lane.b32.xlu0 %v616, 27
      %v681 = vpop.permute.xlu0 %680
      %682 = vrot.lane.b32.xlu0 %v617, 27
      %v683 = vpop.permute.xlu0 %682
      %684 = vrot.lane.b32.xlu0 %v618, 27
      %v685 = vpop.permute.xlu0 %684
      %686 = vrot.lane.b32.xlu0 %v619, 27
      %v687 = vpop.permute.xlu0 %686
      %688 = vrot.lane.b32.xlu0 %v620, 27
      %v689 = vpop.permute.xlu0 %688
      %690 = vrot.lane.b32.xlu0 %v621, 27
      %v691 = vpop.permute.xlu0 %690
      %708 = vrot.lane.b32.xlu0 %v622, 54
      %v709 = vpop.permute.xlu0 %708
      %710 = vrot.lane.b32.xlu0 %v623, 54
      %v711 = vpop.permute.xlu0 %710
      %712 = vrot.lane.b32.xlu0 %v624, 54
      %v713 = vpop.permute.xlu0 %712
      %714 = vrot.lane.b32.xlu0 %v625, 54
      %v715 = vpop.permute.xlu0 %714
      %716 = vrot.lane.b32.xlu0 %v626, 54
      %v717 = vpop.permute.xlu0 %716
      %718 = vrot.lane.b32.xlu0 %v627, 54
      %v719 = vpop.permute.xlu0 %718
      %720 = vrot.lane.b32.xlu0 %v628, 54
      %v721 = vpop.permute.xlu0 %720
      %722 = vrot.lane.b32.xlu0 %v629, 54
      %v723 = vpop.permute.xlu0 %722
      %724 = vrot.lane.b32.xlu0 %v630, 54
      %v725 = vpop.permute.xlu0 %724
      %726 = vrot.lane.b32.xlu0 %v631, 54
      %v727 = vpop.permute.xlu0 %726
      %728 = vrot.lane.b32.xlu0 %v632, 54
      %v729 = vpop.permute.xlu0 %728
      %730 = vrot.lane.b32.xlu0 %v633, 54
      %v731 = vpop.permute.xlu0 %730
      %732 = vrot.lane.b32.xlu0 %v634, 54
      %v733 = vpop.permute.xlu0 %732
      %734 = vrot.lane.b32.xlu0 %v635, 54
      %v735 = vpop.permute.xlu0 %734
      %736 = vrot.lane.b32.xlu0 %v636, 54
      %v737 = vpop.permute.xlu0 %736
      %738 = vrot.lane.b32.xlu0 %v637, 54
      %v739 = vpop.permute.xlu0 %738
      %756 = vrot.lane.b32.xlu0 %v591, 81
      %v757 = vpop.permute.xlu0 %756
      %758 = vrot.lane.b32.xlu0 %v592, 81
      %v759 = vpop.permute.xlu0 %758
      %760 = vrot.lane.b32.xlu0 %v593, 81
      %v761 = vpop.permute.xlu0 %760
      %762 = vrot.lane.b32.xlu0 %v594, 81
      %v763 = vpop.permute.xlu0 %762
      %764 = vrot.lane.b32.xlu0 %v595, 81
      %v765 = vpop.permute.xlu0 %764
      %766 = vrot.lane.b32.xlu0 %v596, 81
      %v767 = vpop.permute.xlu0 %766
      %768 = vrot.lane.b32.xlu0 %v597, 81
      %v769 = vpop.permute.xlu0 %768
      %770 = vrot.lane.b32.xlu0 %v598, 81
      %v771 = vpop.permute.xlu0 %770
      %772 = vrot.lane.b32.xlu0 %v599, 81
      %v773 = vpop.permute.xlu0 %772
      %774 = vrot.lane.b32.xlu0 %v600, 81
      %v775 = vpop.permute.xlu0 %774
      %776 = vrot.lane.b32.xlu0 %v601, 81
      %v777 = vpop.permute.xlu0 %776
      %778 = vrot.lane.b32.xlu0 %v602, 81
      %v779 = vpop.permute.xlu0 %778
      %780 = vrot.lane.b32.xlu0 %v603, 81
      %v781 = vpop.permute.xlu0 %780
      %782 = vrot.lane.b32.xlu0 %v604, 81
      %v783 = vpop.permute.xlu0 %782
      %784 = vrot.lane.b32.xlu0 %v605, 81
      %v785 = vpop.permute.xlu0 %784
      %786 = vrot.lane.b32.xlu0 %v638, 81
      %v787 = vpop.permute.xlu0 %786
      %789 = vrot.lane.b32.xlu0 %v607, 108
      %v790 = vpop.permute.xlu0 %789
      %791 = vrot.lane.b32.xlu0 %v608, 108
      %v792 = vpop.permute.xlu0 %791
      %793 = vrot.lane.b32.xlu0 %v609, 108
      %v794 = vpop.permute.xlu0 %793
      %795 = vrot.lane.b32.xlu0 %v610, 108
      %v796 = vpop.permute.xlu0 %795
      %797 = vrot.lane.b32.xlu0 %v611, 108
      %v798 = vpop.permute.xlu0 %797
      %799 = vrot.lane.b32.xlu0 %v612, 108
      %v800 = vpop.permute.xlu0 %799
      %801 = vrot.lane.b32.xlu0 %v613, 108
      %v802 = vpop.permute.xlu0 %801
      %803 = vrot.lane.b32.xlu0 %v614, 108
      %v804 = vpop.permute.xlu0 %803
      %805 = vrot.lane.b32.xlu0 %v615, 108
      %v806 = vpop.permute.xlu0 %805
      %807 = vrot.lane.b32.xlu0 %v616, 108
      %v808 = vpop.permute.xlu0 %807
      %809 = vrot.lane.b32.xlu0 %v617, 108
      %v810 = vpop.permute.xlu0 %809
      %811 = vrot.lane.b32.xlu0 %v618, 108
      %v812 = vpop.permute.xlu0 %811
      %813 = vrot.lane.b32.xlu0 %v619, 108
      %v814 = vpop.permute.xlu0 %813
      %815 = vrot.lane.b32.xlu0 %v620, 108
      %v816 = vpop.permute.xlu0 %815
      %817 = vrot.lane.b32.xlu0 %v621, 108
      %v818 = vpop.permute.xlu0 %817
      %819 = vrot.lane.b32.xlu0 %v639, 108
      %v820 = vpop.permute.xlu0 %819
      %822 = vrot.lane.b32.xlu0 %v623, 7
      %v823 = vpop.permute.xlu0 %822
      %824 = vrot.lane.b32.xlu0 %v624, 7
      %v825 = vpop.permute.xlu0 %824
      %826 = vrot.lane.b32.xlu0 %v625, 7
      %v827 = vpop.permute.xlu0 %826
      %828 = vrot.lane.b32.xlu0 %v626, 7
      %v829 = vpop.permute.xlu0 %828
      %830 = vrot.lane.b32.xlu0 %v627, 7
      %v831 = vpop.permute.xlu0 %830
      %832 = vrot.lane.b32.xlu0 %v628, 7
      %v833 = vpop.permute.xlu0 %832
      %834 = vrot.lane.b32.xlu0 %v629, 7
      %v835 = vpop.permute.xlu0 %834
      %836 = vrot.lane.b32.xlu0 %v630, 7
      %v837 = vpop.permute.xlu0 %836
      %838 = vrot.lane.b32.xlu0 %v631, 7
      %v839 = vpop.permute.xlu0 %838
      %840 = vrot.lane.b32.xlu0 %v632, 7
      %v841 = vpop.permute.xlu0 %840
      %842 = vrot.lane.b32.xlu0 %v633, 7
      %v843 = vpop.permute.xlu0 %842
      %844 = vrot.lane.b32.xlu0 %v634, 7
      %v845 = vpop.permute.xlu0 %844
      %846 = vrot.lane.b32.xlu0 %v635, 7
      %v847 = vpop.permute.xlu0 %846
      %848 = vrot.lane.b32.xlu0 %v636, 7
      %v849 = vpop.permute.xlu0 %848
      %850 = vrot.lane.b32.xlu0 %v637, 7
      %v851 = vpop.permute.xlu0 %850
      %852 = vrot.lane.b32.xlu0 %v640, 7
      %v853 = vpop.permute.xlu0 %852
      %855 = vrot.lane.b32.xlu0 %v592, 34
      %v856 = vpop.permute.xlu0 %855
      %857 = vrot.lane.b32.xlu0 %v593, 34
      %v858 = vpop.permute.xlu0 %857
      %859 = vrot.lane.b32.xlu0 %v594, 34
      %v860 = vpop.permute.xlu0 %859
      %861 = vrot.lane.b32.xlu0 %v595, 34
      %v862 = vpop.permute.xlu0 %861
      %863 = vrot.lane.b32.xlu0 %v596, 34
      %v864 = vpop.permute.xlu0 %863
      %865 = vrot.lane.b32.xlu0 %v597, 34
      %v866 = vpop.permute.xlu0 %865
      %867 = vrot.lane.b32.xlu0 %v598, 34
      %v868 = vpop.permute.xlu0 %867
      %869 = vrot.lane.b32.xlu0 %v599, 34
      %v870 = vpop.permute.xlu0 %869
      %871 = vrot.lane.b32.xlu0 %v600, 34
      %v872 = vpop.permute.xlu0 %871
      %873 = vrot.lane.b32.xlu0 %v601, 34
      %v874 = vpop.permute.xlu0 %873
      %875 = vrot.lane.b32.xlu0 %v602, 34
      %v876 = vpop.permute.xlu0 %875
      %877 = vrot.lane.b32.xlu0 %v603, 34
      %v878 = vpop.permute.xlu0 %877
      %879 = vrot.lane.b32.xlu0 %v604, 34
      %v880 = vpop.permute.xlu0 %879
      %881 = vrot.lane.b32.xlu0 %v605, 34
      %v882 = vpop.permute.xlu0 %881
      %883 = vrot.lane.b32.xlu0 %v638, 34
      %v884 = vpop.permute.xlu0 %883
      %885 = vrot.lane.b32.xlu0 %v641, 34
      %v886 = vpop.permute.xlu0 %885
      %888 = vrot.lane.b32.xlu0 %v608, 61
      %v889 = vpop.permute.xlu0 %888
      %890 = vrot.lane.b32.xlu0 %v609, 61
      %v891 = vpop.permute.xlu0 %890
      %892 = vrot.lane.b32.xlu0 %v610, 61
      %v893 = vpop.permute.xlu0 %892
      %894 = vrot.lane.b32.xlu0 %v611, 61
      %v895 = vpop.permute.xlu0 %894
      %896 = vrot.lane.b32.xlu0 %v612, 61
      %v897 = vpop.permute.xlu0 %896
      %898 = vrot.lane.b32.xlu0 %v613, 61
      %v899 = vpop.permute.xlu0 %898
      %900 = vrot.lane.b32.xlu0 %v614, 61
      %v901 = vpop.permute.xlu0 %900
      %902 = vrot.lane.b32.xlu0 %v615, 61
      %v903 = vpop.permute.xlu0 %902
      %904 = vrot.lane.b32.xlu0 %v616, 61
      %v905 = vpop.permute.xlu0 %904
      %906 = vrot.lane.b32.xlu0 %v617, 61
      %v907 = vpop.permute.xlu0 %906
      %908 = vrot.lane.b32.xlu0 %v618, 61
      %v909 = vpop.permute.xlu0 %908
      %910 = vrot.lane.b32.xlu0 %v619, 61
      %v911 = vpop.permute.xlu0 %910
      %912 = vrot.lane.b32.xlu0 %v620, 61
      %v913 = vpop.permute.xlu0 %912
      %914 = vrot.lane.b32.xlu0 %v621, 61
      %v915 = vpop.permute.xlu0 %914
      %916 = vrot.lane.b32.xlu0 %v639, 61
      %v917 = vpop.permute.xlu0 %916
      %918 = vrot.lane.b32.xlu0 %v642, 61
      %v919 = vpop.permute.xlu0 %918
      %921 = vrot.lane.b32.xlu0 %v624, 88
      %v922 = vpop.permute.xlu0 %921
      %923 = vrot.lane.b32.xlu0 %v625, 88
      %v924 = vpop.permute.xlu0 %923
      %925 = vrot.lane.b32.xlu0 %v626, 88
      %v926 = vpop.permute.xlu0 %925
      %927 = vrot.lane.b32.xlu0 %v627, 88
      %v928 = vpop.permute.xlu0 %927
      %929 = vrot.lane.b32.xlu0 %v628, 88
      %v930 = vpop.permute.xlu0 %929
      %931 = vrot.lane.b32.xlu0 %v629, 88
      %v932 = vpop.permute.xlu0 %931
      %933 = vrot.lane.b32.xlu0 %v630, 88
      %v934 = vpop.permute.xlu0 %933
      %935 = vrot.lane.b32.xlu0 %v631, 88
      %v936 = vpop.permute.xlu0 %935
      %937 = vrot.lane.b32.xlu0 %v632, 88
      %v938 = vpop.permute.xlu0 %937
      %939 = vrot.lane.b32.xlu0 %v633, 88
      %v940 = vpop.permute.xlu0 %939
      %941 = vrot.lane.b32.xlu0 %v634, 88
      %v942 = vpop.permute.xlu0 %941
      %943 = vrot.lane.b32.xlu0 %v635, 88
      %v944 = vpop.permute.xlu0 %943
      %945 = vrot.lane.b32.xlu0 %v636, 88
      %v946 = vpop.permute.xlu0 %945
      %947 = vrot.lane.b32.xlu0 %v637, 88
      %v948 = vpop.permute.xlu0 %947
      %949 = vrot.lane.b32.xlu0 %v640, 88
      %v950 = vpop.permute.xlu0 %949
      %951 = vrot.lane.b32.xlu0 %v643, 88
      %v952 = vpop.permute.xlu0 %951
      %v955 = vsel %vm361, %v590, %v661
      %v958 = vsel %vm361, %v591, %v663
      %v961 = vsel %vm361, %v592, %v665
      %v964 = vsel %vm361, %v593, %v667
      %v967 = vsel %vm361, %v594, %v669
      %v970 = vsel %vm361, %v595, %v671
      %v973 = vsel %vm361, %v596, %v673
      %v976 = vsel %vm361, %v597, %v675
      %v979 = vsel %vm361, %v598, %v677
      %v982 = vsel %vm361, %v599, %v679
      %v985 = vsel %vm361, %v600, %v681
      %v988 = vsel %vm361, %v601, %v683
      %v991 = vsel %vm361, %v602, %v685
      %v994 = vsel %vm361, %v603, %v687
      %v997 = vsel %vm361, %v604, %v689
      %v1000 = vsel %vm361, %v605, %v691
      %vm1001 = vcmask 441344
      %v1003 = vsel %vm1001, %v955, %v709
      %v1005 = vsel %vm1001, %v958, %v711
      %v1007 = vsel %vm1001, %v961, %v713
      %v1009 = vsel %vm1001, %v964, %v715
      %v1011 = vsel %vm1001, %v967, %v717
      %v1013 = vsel %vm1001, %v970, %v719
      %v1015 = vsel %vm1001, %v973, %v721
      %v1017 = vsel %vm1001, %v976, %v723
      %v1019 = vsel %vm1001, %v979, %v725
      %v1021 = vsel %vm1001, %v982, %v727
      %v1023 = vsel %vm1001, %v985, %v729
      %v1025 = vsel %vm1001, %v988, %v731
      %v1027 = vsel %vm1001, %v991, %v733
      %v1029 = vsel %vm1001, %v994, %v735
      %v1031 = vsel %vm1001, %v997, %v737
      %v1033 = vsel %vm1001, %v1000, %v739
      %vm1034 = vcmask 662528
      %v1036 = vsel %vm1034, %v1003, %v757
      %v1038 = vsel %vm1034, %v1005, %v759
      %v1040 = vsel %vm1034, %v1007, %v761
      %v1042 = vsel %vm1034, %v1009, %v763
      %v1044 = vsel %vm1034, %v1011, %v765
      %v1046 = vsel %vm1034, %v1013, %v767
      %v1048 = vsel %vm1034, %v1015, %v769
      %v1050 = vsel %vm1034, %v1017, %v771
      %v1052 = vsel %vm1034, %v1019, %v773
      %v1054 = vsel %vm1034, %v1021, %v775
      %v1056 = vsel %vm1034, %v1023, %v777
      %v1058 = vsel %vm1034, %v1025, %v779
      %v1060 = vsel %vm1034, %v1027, %v781
      %v1062 = vsel %vm1034, %v1029, %v783
      %v1064 = vsel %vm1034, %v1031, %v785
      %v1066 = vsel %vm1034, %v1033, %v787
      %vm1067 = vcmask 883712
      %v1069 = vsel %vm1067, %v1036, %v790
      %v1072 = vsel %vm1067, %v1038, %v792
      %v1075 = vsel %vm1067, %v1040, %v794
      %v1078 = vsel %vm1067, %v1042, %v796
      %v1081 = vsel %vm1067, %v1044, %v798
      %v1084 = vsel %vm1067, %v1046, %v800
      %v1087 = vsel %vm1067, %v1048, %v802
      %v1090 = vsel %vm1067, %v1050, %v804
      %v1093 = vsel %vm1067, %v1052, %v806
      %v1096 = vsel %vm1067, %v1054, %v808
      %v1099 = vsel %vm1067, %v1056, %v810
      %v1102 = vsel %vm1067, %v1058, %v812
      %v1105 = vsel %vm1067, %v1060, %v814
      %v1108 = vsel %vm1067, %v1062, %v816
      %v1111 = vsel %vm1067, %v1064, %v818
      %v1114 = vsel %vm1067, %v1066, %v820
      %vm1116 = vcmask 56320
      %v1118 = vsel %vm1116, %v790, %v823
      %v1120 = vsel %vm1116, %v792, %v825
      %v1122 = vsel %vm1116, %v794, %v827
      %v1124 = vsel %vm1116, %v796, %v829
      %v1126 = vsel %vm1116, %v798, %v831
      %v1128 = vsel %vm1116, %v800, %v833
      %v1130 = vsel %vm1116, %v802, %v835
      %v1132 = vsel %vm1116, %v804, %v837
      %v1134 = vsel %vm1116, %v806, %v839
      %v1136 = vsel %vm1116, %v808, %v841
      %v1138 = vsel %vm1116, %v810, %v843
      %v1140 = vsel %vm1116, %v812, %v845
      %v1142 = vsel %vm1116, %v814, %v847
      %v1144 = vsel %vm1116, %v816, %v849
      %v1146 = vsel %vm1116, %v818, %v851
      %v1148 = vsel %vm1116, %v820, %v853
      %vm1149 = vcmask 277504
      %v1151 = vsel %vm1149, %v1118, %v856
      %v1153 = vsel %vm1149, %v1120, %v858
      %v1155 = vsel %vm1149, %v1122, %v860
      %v1157 = vsel %vm1149, %v1124, %v862
      %v1159 = vsel %vm1149, %v1126, %v864
      %v1161 = vsel %vm1149, %v1128, %v866
      %v1163 = vsel %vm1149, %v1130, %v868
      %v1165 = vsel %vm1149, %v1132, %v870
      %v1167 = vsel %vm1149, %v1134, %v872
      %v1169 = vsel %vm1149, %v1136, %v874
      %v1171 = vsel %vm1149, %v1138, %v876
      %v1173 = vsel %vm1149, %v1140, %v878
      %v1175 = vsel %vm1149, %v1142, %v880
      %v1177 = vsel %vm1149, %v1144, %v882
      %v1179 = vsel %vm1149, %v1146, %v884
      %v1181 = vsel %vm1149, %v1148, %v886
      %vm1182 = vcmask 498688
      %v1184 = vsel %vm1182, %v1151, %v889
      %v1186 = vsel %vm1182, %v1153, %v891
      %v1188 = vsel %vm1182, %v1155, %v893
      %v1190 = vsel %vm1182, %v1157, %v895
      %v1192 = vsel %vm1182, %v1159, %v897
      %v1194 = vsel %vm1182, %v1161, %v899
      %v1196 = vsel %vm1182, %v1163, %v901
      %v1198 = vsel %vm1182, %v1165, %v903
      %v1200 = vsel %vm1182, %v1167, %v905
      %v1202 = vsel %vm1182, %v1169, %v907
      %v1204 = vsel %vm1182, %v1171, %v909
      %v1206 = vsel %vm1182, %v1173, %v911
      %v1208 = vsel %vm1182, %v1175, %v913
      %v1210 = vsel %vm1182, %v1177, %v915
      %v1212 = vsel %vm1182, %v1179, %v917
      %v1214 = vsel %vm1182, %v1181, %v919
      %vm1215 = vcmask 719872
      %v1217 = vsel %vm1215, %v1184, %v922
      %v1219 = vsel %vm1215, %v1186, %v924
      %v1221 = vsel %vm1215, %v1188, %v926
      %v1223 = vsel %vm1215, %v1190, %v928
      %v1225 = vsel %vm1215, %v1192, %v930
      %v1227 = vsel %vm1215, %v1194, %v932
      %v1229 = vsel %vm1215, %v1196, %v934
      %v1231 = vsel %vm1215, %v1198, %v936
      %v1233 = vsel %vm1215, %v1200, %v938
      %v1235 = vsel %vm1215, %v1202, %v940
      %v1237 = vsel %vm1215, %v1204, %v942
      %v1239 = vsel %vm1215, %v1206, %v944
      %v1241 = vsel %vm1215, %v1208, %v946
      %v1243 = vsel %vm1215, %v1210, %v948
      %v1245 = vsel %vm1215, %v1212, %v950
      %v1247 = vsel %vm1215, %v1214, %v952
      %v1248 = vld [vmem:[%s1] sm:$0xf]
      %v1249 = vld [vmem:[%s1 + $0x4] sm:$0xf]
      %v1250 = vld [vmem:[%s1 + $0x8] sm:$0xf]
      %v1251 = vld [vmem:[%s1 + $0xc] sm:$0xf]
      %v1252 = vld [vmem:[%s1 + $0x10] sm:$0xf]
      %v1253 = vld [vmem:[%s1 + $0x14] sm:$0xf]
      %v1254 = vld [vmem:[%s1 + $0x18] sm:$0xf]
      %v1255 = vld [vmem:[%s1 + $0x1c] sm:$0xf]
      %v1256 = vld [vmem:[%s1 + $0x20] sm:$0xf]
      %v1257 = vld [vmem:[%s1 + $0x24] sm:$0xf]
      %v1258 = vld [vmem:[%s1 + $0x28] sm:$0xf]
      %v1259 = vld [vmem:[%s1 + $0x2c] sm:$0xf]
      %v1260 = vld [vmem:[%s1 + $0x30] sm:$0xf]
      %v1261 = vld [vmem:[%s1 + $0x34] sm:$0xf]
      %v1262 = vld [vmem:[%s1 + $0x38] sm:$0xf]
      %v1263 = vld [vmem:[%s1 + $0x3c] sm:$0xf]
      %v1264 = vld [vmem:[%s1 + $0x40] sm:$0xf]
      %v1265 = vld [vmem:[%s1 + $0x44] sm:$0xf]
      %v1266 = vld [vmem:[%s1 + $0x48] sm:$0xf]
      %v1267 = vld [vmem:[%s1 + $0x4c] sm:$0xf]
      %v1268 = vld [vmem:[%s1 + $0x50] sm:$0xf]
      %v1269 = vld [vmem:[%s1 + $0x54] sm:$0xf]
      %v1270 = vld [vmem:[%s1 + $0x58] sm:$0xf]
      %v1271 = vld [vmem:[%s1 + $0x5c] sm:$0xf]
      %v1272 = vld [vmem:[%s1 + $0x60] sm:$0xf]
      %v1273 = vld [vmem:[%s1 + $0x64] sm:$0xf]
      %v1274 = vld [vmem:[%s1 + $0x68] sm:$0xf]
      %v1275 = vld [vmem:[%s1 + $0x6c] sm:$0xf]
      %v1276 = vld [vmem:[%s1 + $0x70] sm:$0xf]
      %v1277 = vld [vmem:[%s1 + $0x74] sm:$0xf]
      %v1278 = vld [vmem:[%s1 + $0x78] sm:$0x3]
      %v1279 = vld [vmem:[%s2] sm:$0x1]
      %v1281 = vlaneseq
      %v1282 = vshrl.u32 %v1281, 7
      %v1283 = vsub.s32 0, %v1282
      %v1284 = vrot.slane %v1279, %v1283
      %v1317 = vunpack.c.l.b16 %v1248
      %v1318 = vunpack.c.l.b16 %v1249
      %v1319 = vunpack.c.l.b16 %v1250
      %v1320 = vunpack.c.l.b16 %v1251
      %v1321 = vunpack.c.l.b16 %v1252
      %v1322 = vunpack.c.l.b16 %v1253
      %v1323 = vunpack.c.l.b16 %v1254
      %v1324 = vunpack.c.l.b16 %v1255
      %v1325 = vunpack.c.l.b16 %v1256
      %v1326 = vunpack.c.l.b16 %v1257
      %v1327 = vunpack.c.l.b16 %v1258
      %v1328 = vunpack.c.l.b16 %v1259
      %v1329 = vunpack.c.l.b16 %v1260
      %v1330 = vunpack.c.l.b16 %v1261
      %v1331 = vunpack.c.l.b16 %v1262
      %v1332 = vunpack.c.l.b16 %v1263
      %v1333 = vunpack.c.l.b16 %v1264
      %v1334 = vunpack.c.l.b16 %v1265
      %v1335 = vunpack.c.l.b16 %v1266
      %v1336 = vunpack.c.l.b16 %v1267
      %v1337 = vunpack.c.l.b16 %v1268
      %v1338 = vunpack.c.l.b16 %v1269
      %v1339 = vunpack.c.l.b16 %v1270
      %v1340 = vunpack.c.l.b16 %v1271
      %v1341 = vunpack.c.l.b16 %v1272
      %v1342 = vunpack.c.l.b16 %v1273
      %v1343 = vunpack.c.l.b16 %v1274
      %v1344 = vunpack.c.l.b16 %v1275
      %v1345 = vunpack.c.l.b16 %v1276
      %v1346 = vunpack.c.l.b16 %v1277
      %v1347 = vunpack.c.l.b16 %v1278
      %v1348 = vpack.c.b16 %v1318, %v1317
      %v1349 = vpack.c.b16 %v1320, %v1319
      %v1350 = vpack.c.b16 %v1322, %v1321
      %v1351 = vpack.c.b16 %v1324, %v1323
      %v1352 = vpack.c.b16 %v1326, %v1325
      %v1353 = vpack.c.b16 %v1328, %v1327
      %v1354 = vpack.c.b16 %v1330, %v1329
      %v1355 = vpack.c.b16 %v1332, %v1331
      %v1356 = vpack.c.b16 %v1334, %v1333
      %v1357 = vpack.c.b16 %v1336, %v1335
      %v1358 = vpack.c.b16 %v1338, %v1337
      %v1359 = vpack.c.b16 %v1340, %v1339
      %v1360 = vpack.c.b16 %v1342, %v1341
      %v1361 = vpack.c.b16 %v1344, %v1343
      %v1362 = vpack.c.b16 %v1346, %v1345
      %v1363 = vpack.c.b16 %v1347, %v1347
      %vm1379 = vcmask 941056
      %v1380 = vsel %vm1379, %v1217, 0
      %v1382 = vsel %vm1379, %v1219, 0
      %v1384 = vsel %vm1379, %v1221, 0
      %v1386 = vsel %vm1379, %v1223, 0
      %v1388 = vsel %vm1379, %v1225, 0
      %v1390 = vsel %vm1379, %v1227, 0
      %v1392 = vsel %vm1379, %v1229, 0
      %v1394 = vsel %vm1379, %v1231, 0
      %v1396 = vsel %vm1379, %v1233, 0
      %v1398 = vsel %vm1379, %v1235, 0
      %v1400 = vsel %vm1379, %v1237, 0
      %v1402 = vsel %vm1379, %v1239, 0
      %v1404 = vsel %vm1379, %v1241, 0
      %v1406 = vsel %vm1379, %v1243, 0
      %v1408 = vsel %vm1379, %v1245, 0
      %v1410 = vsel %vm1379, %v1247, 0
      %vm1412 = vcmask 1040384
      %vm1413 = vcmask 1041408
      %v1414 = vsel %vm1412, 4294967295, 65535
      %v1415 = vsel %vm1413, %v1414, 0
      %v1417 = vand.u32 %v1363, %v1415
      %1419 = vmatprep.subr.bf16.mxu0 0
      %1420 = vmatpush1.bf16.msra.mxu0 %v1355
      %1421 = vmatprep.subr.bf16.mxu0 0
      %1422 = vmatpush1.bf16.msra.mxu0 %v1354
      %1423 = vmatprep.subr.bf16.mxu0 0
      %1424 = vmatpush1.bf16.msra.mxu0 %v1353
      %1425 = vmatprep.subr.bf16.mxu0 0
      %1426 = vmatpush1.bf16.msra.mxu0 %v1352
      %1427 = vmatprep.subr.bf16.mxu0 0
      %1428 = vmatpush1.bf16.msra.mxu0 %v1351
      %1429 = vmatprep.subr.bf16.mxu0 0
      %1430 = vmatpush1.bf16.msra.mxu0 %v1350
      %1431 = vmatprep.subr.bf16.mxu0 0
      %1432 = vmatpush1.bf16.msra.mxu0 %v1349
      %1433 = vmatprep.subr.bf16.mxu0 0
      %1434 = vmatpush1.bf16.msra.mxu0 %v1348
      %1435 = vmatprep.subr.bf16.mxu0 0
      %1436 = vmatpush2.bf16.msra.mxu0 %v1417
      %1437 = vmatprep.subr.bf16.mxu0 0
      %1438 = vmatpush2.bf16.msra.mxu0 %v1362
      %1439 = vmatprep.subr.bf16.mxu0 0
      %1440 = vmatpush2.bf16.msra.mxu0 %v1361
      %1441 = vmatprep.subr.bf16.mxu0 0
      %1442 = vmatpush2.bf16.msra.mxu0 %v1360
      %1443 = vmatprep.subr.bf16.mxu0 0
      %1444 = vmatpush2.bf16.msra.mxu0 %v1359
      %1445 = vmatprep.subr.bf16.mxu0 0
      %1446 = vmatpush2.bf16.msra.mxu0 %v1358
      %1447 = vmatprep.subr.bf16.mxu0 0
      %1448 = vmatpush2.bf16.msra.mxu0 %v1357
      %1449 = vmatprep.subr.bf16.mxu0 0
      %1450 = vmatpush2.bf16.msra.mxu0 %v1356
      %1451 = vmatprep.mubr.bf16.mxu0 %v1380
      %1452 = vmatmul.mubr.bf16.gmra.mxu0 %v1069
      %v1453 = vpop.f32.mrf.mxu0
      %v1454 = vadd.f32 %v1284, %v1453
      %v1455 = vpop.f32.mrf.mxu0
      %v1456 = vpop.f32.mrf.mxu0
      %v1457 = vadd.f32 %v1284, %v1456
      %v1458 = vpop.f32.mrf.mxu0
      %1459 = vmatprep.mubr.bf16.mxu0 %v1382
      %1460 = vmatmul.mubr.bf16.gmra.mxu0 %v1072
      %v1461 = vpop.f32.mrf.mxu0
      %v1462 = vadd.f32 %v1284, %v1461
      %v1463 = vpop.f32.mrf.mxu0
      %v1464 = vpop.f32.mrf.mxu0
      %v1465 = vadd.f32 %v1284, %v1464
      %v1466 = vpop.f32.mrf.mxu0
      %1467 = vmatprep.mubr.bf16.mxu0 %v1384
      %1468 = vmatmul.mubr.bf16.gmra.mxu0 %v1075
      %v1469 = vpop.f32.mrf.mxu0
      %v1470 = vadd.f32 %v1284, %v1469
      %v1471 = vpop.f32.mrf.mxu0
      %v1472 = vpop.f32.mrf.mxu0
      %v1473 = vadd.f32 %v1284, %v1472
      %v1474 = vpop.f32.mrf.mxu0
      %1475 = vmatprep.mubr.bf16.mxu0 %v1386
      %1476 = vmatmul.mubr.bf16.gmra.mxu0 %v1078
      %v1477 = vpop.f32.mrf.mxu0
      %v1478 = vadd.f32 %v1284, %v1477
      %v1479 = vpop.f32.mrf.mxu0
      %v1480 = vpop.f32.mrf.mxu0
      %v1481 = vadd.f32 %v1284, %v1480
      %v1482 = vpop.f32.mrf.mxu0
      %1483 = vmatprep.mubr.bf16.mxu0 %v1388
      %1484 = vmatmul.mubr.bf16.gmra.mxu0 %v1081
      %v1485 = vpop.f32.mrf.mxu0
      %v1486 = vadd.f32 %v1284, %v1485
      %v1487 = vpop.f32.mrf.mxu0
      %v1488 = vpop.f32.mrf.mxu0
      %v1489 = vadd.f32 %v1284, %v1488
      %v1490 = vpop.f32.mrf.mxu0
      %1491 = vmatprep.mubr.bf16.mxu0 %v1390
      %1492 = vmatmul.mubr.bf16.gmra.mxu0 %v1084
      %v1493 = vpop.f32.mrf.mxu0
      %v1494 = vadd.f32 %v1284, %v1493
      %v1495 = vpop.f32.mrf.mxu0
      %v1496 = vpop.f32.mrf.mxu0
      %v1497 = vadd.f32 %v1284, %v1496
      %v1498 = vpop.f32.mrf.mxu0
      %1499 = vmatprep.mubr.bf16.mxu0 %v1392
      %1500 = vmatmul.mubr.bf16.gmra.mxu0 %v1087
      %v1501 = vpop.f32.mrf.mxu0
      %v1502 = vadd.f32 %v1284, %v1501
      %v1503 = vpop.f32.mrf.mxu0
      %v1504 = vpop.f32.mrf.mxu0
      %v1505 = vadd.f32 %v1284, %v1504
      %v1506 = vpop.f32.mrf.mxu0
      %1507 = vmatprep.mubr.bf16.mxu0 %v1394
      %1508 = vmatmul.mubr.bf16.gmra.mxu0 %v1090
      %v1509 = vpop.f32.mrf.mxu0
      %v1510 = vadd.f32 %v1284, %v1509
      %v1511 = vpop.f32.mrf.mxu0
      %v1512 = vpop.f32.mrf.mxu0
      %v1513 = vadd.f32 %v1284, %v1512
      %v1514 = vpop.f32.mrf.mxu0
      %1515 = vmatprep.mubr.bf16.mxu0 %v1396
      %1516 = vmatmul.mubr.bf16.gmra.mxu0 %v1093
      %v1517 = vpop.f32.mrf.mxu0
      %v1518 = vadd.f32 %v1284, %v1517
      %v1519 = vpop.f32.mrf.mxu0
      %v1520 = vpop.f32.mrf.mxu0
      %v1521 = vadd.f32 %v1284, %v1520
      %v1522 = vpop.f32.mrf.mxu0
      %1523 = vmatprep.mubr.bf16.mxu0 %v1398
      %1524 = vmatmul.mubr.bf16.gmra.mxu0 %v1096
      %v1525 = vpop.f32.mrf.mxu0
      %v1526 = vadd.f32 %v1284, %v1525
      %v1527 = vpop.f32.mrf.mxu0
      %v1528 = vpop.f32.mrf.mxu0
      %v1529 = vadd.f32 %v1284, %v1528
      %v1530 = vpop.f32.mrf.mxu0
      %1531 = vmatprep.mubr.bf16.mxu0 %v1400
      %1532 = vmatmul.mubr.bf16.gmra.mxu0 %v1099
      %v1533 = vpop.f32.mrf.mxu0
      %v1534 = vadd.f32 %v1284, %v1533
      %v1535 = vpop.f32.mrf.mxu0
      %v1536 = vpop.f32.mrf.mxu0
      %v1537 = vadd.f32 %v1284, %v1536
      %v1538 = vpop.f32.mrf.mxu0
      %1539 = vmatprep.mubr.bf16.mxu0 %v1402
      %1540 = vmatmul.mubr.bf16.gmra.mxu0 %v1102
      %v1541 = vpop.f32.mrf.mxu0
      %v1542 = vadd.f32 %v1284, %v1541
      %v1543 = vpop.f32.mrf.mxu0
      %v1544 = vpop.f32.mrf.mxu0
      %v1545 = vadd.f32 %v1284, %v1544
      %v1546 = vpop.f32.mrf.mxu0
      %1547 = vmatprep.mubr.bf16.mxu0 %v1404
      %1548 = vmatmul.mubr.bf16.gmra.mxu0 %v1105
      %v1549 = vpop.f32.mrf.mxu0
      %v1550 = vadd.f32 %v1284, %v1549
      %v1551 = vpop.f32.mrf.mxu0
      %v1552 = vpop.f32.mrf.mxu0
      %v1553 = vadd.f32 %v1284, %v1552
      %v1554 = vpop.f32.mrf.mxu0
      %1555 = vmatprep.mubr.bf16.mxu0 %v1406
      %1556 = vmatmul.mubr.bf16.gmra.mxu0 %v1108
      %v1557 = vpop.f32.mrf.mxu0
      %v1558 = vadd.f32 %v1284, %v1557
      %v1559 = vpop.f32.mrf.mxu0
      %v1560 = vpop.f32.mrf.mxu0
      %v1561 = vadd.f32 %v1284, %v1560
      %v1562 = vpop.f32.mrf.mxu0
      %1563 = vmatprep.mubr.bf16.mxu0 %v1408
      %1564 = vmatmul.mubr.bf16.gmra.mxu0 %v1111
      %v1565 = vpop.f32.mrf.mxu0
      %v1566 = vadd.f32 %v1284, %v1565
      %v1567 = vpop.f32.mrf.mxu0
      %v1568 = vpop.f32.mrf.mxu0
      %v1569 = vadd.f32 %v1284, %v1568
      %v1570 = vpop.f32.mrf.mxu0
      %1571 = vmatprep.mubr.bf16.mxu0 %v1410
      %1572 = vmatmul.mubr.bf16.gmra.mxu0 %v1114
      %v1573 = vpop.f32.mrf.mxu0
      %v1574 = vadd.f32 %v1284, %v1573
      %v1575 = vpop.f32.mrf.mxu0
      %v1576 = vpop.f32.mrf.mxu0
      %v1577 = vadd.f32 %v1284, %v1576
      %v1578 = vpop.f32.mrf.mxu0
      %1579 = vdwg.mxu0
      %vm1580 = vcmp.gt.f32.partialorder %v1454, 0.0
      %vm1581 = vcmp.gt.f32.partialorder %v1457, 0.0
      %vm1582 = vcmp.gt.f32.partialorder %v1462, 0.0
      %vm1583 = vcmp.gt.f32.partialorder %v1465, 0.0
      %vm1584 = vcmp.gt.f32.partialorder %v1470, 0.0
      %vm1585 = vcmp.gt.f32.partialorder %v1473, 0.0
      %vm1586 = vcmp.gt.f32.partialorder %v1478, 0.0
      %vm1587 = vcmp.gt.f32.partialorder %v1481, 0.0
      %vm1588 = vcmp.gt.f32.partialorder %v1486, 0.0
      %vm1589 = vcmp.gt.f32.partialorder %v1489, 0.0
      %vm1590 = vcmp.gt.f32.partialorder %v1494, 0.0
      %vm1591 = vcmp.gt.f32.partialorder %v1497, 0.0
      %vm1592 = vcmp.gt.f32.partialorder %v1502, 0.0
      %vm1593 = vcmp.gt.f32.partialorder %v1505, 0.0
      %vm1594 = vcmp.gt.f32.partialorder %v1510, 0.0
      %vm1595 = vcmp.gt.f32.partialorder %v1513, 0.0
      %vm1596 = vcmp.gt.f32.partialorder %v1518, 0.0
      %vm1597 = vcmp.gt.f32.partialorder %v1521, 0.0
      %vm1598 = vcmp.gt.f32.partialorder %v1526, 0.0
      %vm1599 = vcmp.gt.f32.partialorder %v1529, 0.0
      %vm1600 = vcmp.gt.f32.partialorder %v1534, 0.0
      %vm1601 = vcmp.gt.f32.partialorder %v1537, 0.0
      %vm1602 = vcmp.gt.f32.partialorder %v1542, 0.0
      %vm1603 = vcmp.gt.f32.partialorder %v1545, 0.0
      %vm1604 = vcmp.gt.f32.partialorder %v1550, 0.0
      %vm1605 = vcmp.gt.f32.partialorder %v1553, 0.0
      %vm1606 = vcmp.gt.f32.partialorder %v1558, 0.0
      %vm1607 = vcmp.gt.f32.partialorder %v1561, 0.0
      %vm1608 = vcmp.gt.f32.partialorder %v1566, 0.0
      %vm1609 = vcmp.gt.f32.partialorder %v1569, 0.0
      %vm1610 = vcmp.gt.f32.partialorder %v1574, 0.0
      %vm1611 = vcmp.gt.f32.partialorder %v1577, 0.0
      %v1612 = vld [vmem:[%s3] sm:$0x1]
      %v1614 = vlaneseq
      %v1615 = vshrl.u32 %v1614, 7
      %v1616 = vsub.s32 0, %v1615
      %v1617 = vrot.slane %v1612, %v1616
      %v1619 = vmul.f32 %v1617, %v1454
      %v1620 = vmul.f32 %v1617, %v1457
      %v1621 = vmul.f32 %v1617, %v1462
      %v1622 = vmul.f32 %v1617, %v1465
      %v1623 = vmul.f32 %v1617, %v1470
      %v1624 = vmul.f32 %v1617, %v1473
      %v1625 = vmul.f32 %v1617, %v1478
      %v1626 = vmul.f32 %v1617, %v1481
      %v1627 = vmul.f32 %v1617, %v1486
      %v1628 = vmul.f32 %v1617, %v1489
      %v1629 = vmul.f32 %v1617, %v1494
      %v1630 = vmul.f32 %v1617, %v1497
      %v1631 = vmul.f32 %v1617, %v1502
      %v1632 = vmul.f32 %v1617, %v1505
      %v1633 = vmul.f32 %v1617, %v1510
      %v1634 = vmul.f32 %v1617, %v1513
      %v1635 = vmul.f32 %v1617, %v1518
      %v1636 = vmul.f32 %v1617, %v1521
      %v1637 = vmul.f32 %v1617, %v1526
      %v1638 = vmul.f32 %v1617, %v1529
      %v1639 = vmul.f32 %v1617, %v1534
      %v1640 = vmul.f32 %v1617, %v1537
      %v1641 = vmul.f32 %v1617, %v1542
      %v1642 = vmul.f32 %v1617, %v1545
      %v1643 = vmul.f32 %v1617, %v1550
      %v1644 = vmul.f32 %v1617, %v1553
      %v1645 = vmul.f32 %v1617, %v1558
      %v1646 = vmul.f32 %v1617, %v1561
      %v1647 = vmul.f32 %v1617, %v1566
      %v1648 = vmul.f32 %v1617, %v1569
      %v1649 = vmul.f32 %v1617, %v1574
      %v1650 = vmul.f32 %v1617, %v1577
      %v1651 = vsel %vm1580, %v1454, %v1619
      %v1652 = vsel %vm1581, %v1457, %v1620
      %v1653 = vsel %vm1582, %v1462, %v1621
      %v1654 = vsel %vm1583, %v1465, %v1622
      %v1655 = vsel %vm1584, %v1470, %v1623
      %v1656 = vsel %vm1585, %v1473, %v1624
      %v1657 = vsel %vm1586, %v1478, %v1625
      %v1658 = vsel %vm1587, %v1481, %v1626
      %v1659 = vsel %vm1588, %v1486, %v1627
      %v1660 = vsel %vm1589, %v1489, %v1628
      %v1661 = vsel %vm1590, %v1494, %v1629
      %v1662 = vsel %vm1591, %v1497, %v1630
      %v1663 = vsel %vm1592, %v1502, %v1631
      %v1664 = vsel %vm1593, %v1505, %v1632
      %v1665 = vsel %vm1594, %v1510, %v1633
      %v1666 = vsel %vm1595, %v1513, %v1634
      %v1667 = vsel %vm1596, %v1518, %v1635
      %v1668 = vsel %vm1597, %v1521, %v1636
      %v1669 = vsel %vm1598, %v1526, %v1637
      %v1670 = vsel %vm1599, %v1529, %v1638
      %v1671 = vsel %vm1600, %v1534, %v1639
      %v1672 = vsel %vm1601, %v1537, %v1640
      %v1673 = vsel %vm1602, %v1542, %v1641
      %v1674 = vsel %vm1603, %v1545, %v1642
      %v1675 = vsel %vm1604, %v1550, %v1643
      %v1676 = vsel %vm1605, %v1553, %v1644
      %v1677 = vsel %vm1606, %v1558, %v1645
      %v1678 = vsel %vm1607, %v1561, %v1646
      %v1679 = vsel %vm1608, %v1566, %v1647
      %v1680 = vsel %vm1609, %v1569, %v1648
      %v1681 = vsel %vm1610, %v1574, %v1649
      %v1682 = vsel %vm1611, %v1577, %v1650
      %vm1683 = vcmask 261120
      %1684 = vst.msk [vmem:[#allocation3] sm:$0xff] %vm1683, 0.0
      %1685 = vst.msk [vmem:[#allocation3 + $0x8] sm:$0xff] %vm1683, 0.0
      %vm1686 = vcmask 254976
      %1687 = vst.msk [vmem:[#allocation3 + $0x10] sm:$0x3] %vm1686, 0.0
      %1688 = vst.msk [vmem:[#allocation3 + $0x18] sm:$0xff] %vm1683, 0.0
      %1689 = vst.msk [vmem:[#allocation3 + $0x20] sm:$0xff] %vm1683, 0.0
      %1690 = vst.msk [vmem:[#allocation3 + $0x28] sm:$0x3] %vm1686, 0.0
      %1691 = vst.msk [vmem:[#allocation3 + $0x30] sm:$0xff] %vm1683, 0.0
      %1692 = vst.msk [vmem:[#allocation3 + $0x38] sm:$0xff] %vm1683, 0.0
      %1693 = vst.msk [vmem:[#allocation3 + $0x40] sm:$0x3] %vm1686, 0.0
      %1694 = vst.msk [vmem:[#allocation3 + $0x48] sm:$0xff] %vm1683, 0.0
      %1695 = vst.msk [vmem:[#allocation3 + $0x50] sm:$0xff] %vm1683, 0.0
      %1696 = vst.msk [vmem:[#allocation3 + $0x58] sm:$0x3] %vm1686, 0.0
      %1697 = vst.msk [vmem:[#allocation3 + $0x60] sm:$0xff] %vm1683, 0.0
      %1698 = vst.msk [vmem:[#allocation3 + $0x68] sm:$0xff] %vm1683, 0.0
      %1699 = vst.msk [vmem:[#allocation3 + $0x70] sm:$0x3] %vm1686, 0.0
      %1700 = vst.msk [vmem:[#allocation3 + $0x78] sm:$0xff] %vm1683, 0.0
      %1701 = vst.msk [vmem:[#allocation3 + $0x80] sm:$0xff] %vm1683, 0.0
      %1702 = vst.msk [vmem:[#allocation3 + $0x88] sm:$0x3] %vm1686, 0.0
      %1703 = vst.msk [vmem:[#allocation3 + $0x90] sm:$0xff] %vm1683, 0.0
      %1704 = vst.msk [vmem:[#allocation3 + $0x98] sm:$0xff] %vm1683, 0.0
      %1705 = vst.msk [vmem:[#allocation3 + $0xa0] sm:$0x3] %vm1686, 0.0
      %1706 = vst.msk [vmem:[#allocation3 + $0xa8] sm:$0xff] %vm1683, 0.0
      %1707 = vst.msk [vmem:[#allocation3 + $0xb0] sm:$0xff] %vm1683, 0.0
      %1708 = vst.msk [vmem:[#allocation3 + $0xb8] sm:$0x3] %vm1686, 0.0
      %1709 = vst.msk [vmem:[#allocation3 + $0xc0] sm:$0xff] %vm1683, 0.0
      %1710 = vst.msk [vmem:[#allocation3 + $0xc8] sm:$0xff] %vm1683, 0.0
      %1711 = vst.msk [vmem:[#allocation3 + $0xd0] sm:$0x3] %vm1686, 0.0
      %1712 = vst.msk [vmem:[#allocation3 + $0xd8] sm:$0xff] %vm1683, 0.0
      %1713 = vst.msk [vmem:[#allocation3 + $0xe0] sm:$0xff] %vm1683, 0.0
      %1714 = vst.msk [vmem:[#allocation3 + $0xe8] sm:$0x3] %vm1686, 0.0
      %1715 = vst.msk [vmem:[#allocation3 + $0xf0] sm:$0xff] %vm1683, 0.0
      %1716 = vst.msk [vmem:[#allocation3 + $0xf8] sm:$0xff] %vm1683, 0.0
      %1717 = vst.msk [vmem:[#allocation3 + $0x100] sm:$0x3] %vm1686, 0.0
      %1718 = vst.msk [vmem:[#allocation3 + $0x108] sm:$0xff] %vm1683, 0.0
      %1719 = vst.msk [vmem:[#allocation3 + $0x110] sm:$0xff] %vm1683, 0.0
      %1720 = vst.msk [vmem:[#allocation3 + $0x118] sm:$0x3] %vm1686, 0.0
      %1721 = vst.msk [vmem:[#allocation3 + $0x120] sm:$0xff] %vm1683, 0.0
      %1722 = vst.msk [vmem:[#allocation3 + $0x128] sm:$0xff] %vm1683, 0.0
      %1723 = vst.msk [vmem:[#allocation3 + $0x130] sm:$0x3] %vm1686, 0.0
      %1724 = vst.msk [vmem:[#allocation3 + $0x138] sm:$0xff] %vm1683, 0.0
      %1725 = vst.msk [vmem:[#allocation3 + $0x140] sm:$0xff] %vm1683, 0.0
      %1726 = vst.msk [vmem:[#allocation3 + $0x148] sm:$0x3] %vm1686, 0.0
      %1727 = vst.msk [vmem:[#allocation3 + $0x150] sm:$0xff] %vm1683, 0.0
      %1728 = vst.msk [vmem:[#allocation3 + $0x158] sm:$0xff] %vm1683, 0.0
      %1729 = vst.msk [vmem:[#allocation3 + $0x160] sm:$0x3] %vm1686, 0.0
      %1730 = vst.msk [vmem:[#allocation3 + $0x168] sm:$0xff] %vm1683, 0.0
      %1731 = vst.msk [vmem:[#allocation3 + $0x170] sm:$0xff] %vm1683, 0.0
      %1732 = vst.msk [vmem:[#allocation3 + $0x178] sm:$0x3] %vm1686, 0.0
      %1733 = vst.msk [vmem:[#allocation3 + $0x180] sm:$0xff] %vm1683, 0.0
      %1734 = vst.msk [vmem:[#allocation3 + $0x188] sm:$0xff] %vm1683, 0.0
      %1735 = vst.msk [vmem:[#allocation3 + $0x190] sm:$0x3] %vm1686, 0.0
      %1736 = vst.msk [vmem:[#allocation3 + $0x198] sm:$0xff] %vm1683, 0.0
      %1737 = vst.msk [vmem:[#allocation3 + $0x1a0] sm:$0xff] %vm1683, 0.0
      %1738 = vst.msk [vmem:[#allocation3 + $0x1a8] sm:$0x3] %vm1686, 0.0
      %s1739 = scalar_lea.vmem [#allocation3], 24
      %1740 = vst.msk [vmem:[%s1739 + $0x1] sm:$0xff] %vm1683, %v1651
      %1741 = vst.msk [vmem:[%s1739 + $0x9] sm:$0xff] %vm1683, %v1652
      %1742 = vst.msk [vmem:[%s1739 + $0x19] sm:$0xff] %vm1683, %v1653
      %1743 = vst.msk [vmem:[%s1739 + $0x21] sm:$0xff] %vm1683, %v1654
      %1744 = vst.msk [vmem:[%s1739 + $0x31] sm:$0xff] %vm1683, %v1655
      %1745 = vst.msk [vmem:[%s1739 + $0x39] sm:$0xff] %vm1683, %v1656
      %1746 = vst.msk [vmem:[%s1739 + $0x49] sm:$0xff] %vm1683, %v1657
      %1747 = vst.msk [vmem:[%s1739 + $0x51] sm:$0xff] %vm1683, %v1658
      %1748 = vst.msk [vmem:[%s1739 + $0x61] sm:$0xff] %vm1683, %v1659
      %1749 = vst.msk [vmem:[%s1739 + $0x69] sm:$0xff] %vm1683, %v1660
      %1750 = vst.msk [vmem:[%s1739 + $0x79] sm:$0xff] %vm1683, %v1661
      %1751 = vst.msk [vmem:[%s1739 + $0x81] sm:$0xff] %vm1683, %v1662
      %1752 = vst.msk [vmem:[%s1739 + $0x91] sm:$0xff] %vm1683, %v1663
      %1753 = vst.msk [vmem:[%s1739 + $0x99] sm:$0xff] %vm1683, %v1664
      %1754 = vst.msk [vmem:[%s1739 + $0xa9] sm:$0xff] %vm1683, %v1665
      %1755 = vst.msk [vmem:[%s1739 + $0xb1] sm:$0xff] %vm1683, %v1666
      %1756 = vst.msk [vmem:[%s1739 + $0xc1] sm:$0xff] %vm1683, %v1667
      %1757 = vst.msk [vmem:[%s1739 + $0xc9] sm:$0xff] %vm1683, %v1668
      %1758 = vst.msk [vmem:[%s1739 + $0xd9] sm:$0xff] %vm1683, %v1669
      %1759 = vst.msk [vmem:[%s1739 + $0xe1] sm:$0xff] %vm1683, %v1670
      %1760 = vst.msk [vmem:[%s1739 + $0xf1] sm:$0xff] %vm1683, %v1671
      %1761 = vst.msk [vmem:[%s1739 + $0xf9] sm:$0xff] %vm1683, %v1672
      %1762 = vst.msk [vmem:[%s1739 + $0x109] sm:$0xff] %vm1683, %v1673
      %1763 = vst.msk [vmem:[%s1739 + $0x111] sm:$0xff] %vm1683, %v1674
      %1764 = vst.msk [vmem:[%s1739 + $0x121] sm:$0xff] %vm1683, %v1675
      %1765 = vst.msk [vmem:[%s1739 + $0x129] sm:$0xff] %vm1683, %v1676
      %1766 = vst.msk [vmem:[%s1739 + $0x139] sm:$0xff] %vm1683, %v1677
      %1767 = vst.msk [vmem:[%s1739 + $0x141] sm:$0xff] %vm1683, %v1678
      %1768 = vst.msk [vmem:[%s1739 + $0x151] sm:$0xff] %vm1683, %v1679
      %1769 = vst.msk [vmem:[%s1739 + $0x159] sm:$0xff] %vm1683, %v1680
      %1770 = vst.msk [vmem:[%s1739 + $0x169] sm:$0xff] %vm1683, %v1681
      %1771 = vst.msk [vmem:[%s1739 + $0x171] sm:$0xff] %vm1683, %v1682
      %v1772 = vld [vmem:[#allocation3] sm:$0xff]
      %v1773 = vld [vmem:[#allocation3 + $0x8] sm:$0xff]
      %v1774 = vld [vmem:[#allocation3 + $0x18] sm:$0xff]
      %v1775 = vld [vmem:[#allocation3 + $0x20] sm:$0xff]
      %v1776 = vld [vmem:[#allocation3 + $0x30] sm:$0xff]
      %v1777 = vld [vmem:[#allocation3 + $0x38] sm:$0xff]
      %v1778 = vld [vmem:[#allocation3 + $0x48] sm:$0xff]
      %v1779 = vld [vmem:[#allocation3 + $0x50] sm:$0xff]
      %v1780 = vld [vmem:[#allocation3 + $0x60] sm:$0xff]
      %v1781 = vld [vmem:[#allocation3 + $0x68] sm:$0xff]
      %v1782 = vld [vmem:[#allocation3 + $0x78] sm:$0xff]
      %v1783 = vld [vmem:[#allocation3 + $0x80] sm:$0xff]
      %v1784 = vld [vmem:[#allocation3 + $0x90] sm:$0xff]
      %v1785 = vld [vmem:[#allocation3 + $0x98] sm:$0xff]
      %v1786 = vld [vmem:[#allocation3 + $0xa8] sm:$0xff]
      %v1787 = vld [vmem:[#allocation3 + $0xb0] sm:$0xff]
      %v1788 = vld [vmem:[#allocation3 + $0xc0] sm:$0xff]
      %v1789 = vld [vmem:[#allocation3 + $0xc8] sm:$0xff]
      %v1790 = vld [vmem:[#allocation3 + $0xd8] sm:$0xff]
      %v1791 = vld [vmem:[#allocation3 + $0xe0] sm:$0xff]
      %v1792 = vld [vmem:[#allocation3 + $0xf0] sm:$0xff]
      %v1793 = vld [vmem:[#allocation3 + $0xf8] sm:$0xff]
      %v1794 = vld [vmem:[#allocation3 + $0x108] sm:$0xff]
      %v1795 = vld [vmem:[#allocation3 + $0x110] sm:$0xff]
      %v1796 = vld [vmem:[#allocation3 + $0x120] sm:$0xff]
      %v1797 = vld [vmem:[#allocation3 + $0x128] sm:$0xff]
      %v1798 = vld [vmem:[#allocation3 + $0x138] sm:$0xff]
      %v1799 = vld [vmem:[#allocation3 + $0x140] sm:$0xff]
      %v1800 = vld [vmem:[#allocation3 + $0x150] sm:$0xff]
      %v1801 = vld [vmem:[#allocation3 + $0x158] sm:$0xff]
      %v1802 = vld [vmem:[#allocation3 + $0x168] sm:$0xff]
      %v1803 = vld [vmem:[#allocation3 + $0x170] sm:$0xff]
      %v1804 = vld [vmem:[#allocation3 + $0x180] sm:$0xff]
      %v1805 = vld [vmem:[#allocation3 + $0x188] sm:$0xff]
      %v1806 = vld [vmem:[#allocation3 + $0x198] sm:$0xff]
      %v1807 = vld [vmem:[#allocation3 + $0x1a0] sm:$0xff]
      %v1808 = vld [vmem:[#allocation3 + $0x1] sm:$0xff]
      %v1809 = vld [vmem:[#allocation3 + $0x9] sm:$0xff]
      %v1810 = vld [vmem:[#allocation3 + $0x19] sm:$0xff]
      %v1811 = vld [vmem:[#allocation3 + $0x21] sm:$0xff]
      %v1812 = vld [vmem:[#allocation3 + $0x31] sm:$0xff]
      %v1813 = vld [vmem:[#allocation3 + $0x39] sm:$0xff]
      %v1814 = vld [vmem:[#allocation3 + $0x49] sm:$0xff]
      %v1815 = vld [vmem:[#allocation3 + $0x51] sm:$0xff]
      %v1816 = vld [vmem:[#allocation3 + $0x61] sm:$0xff]
      %v1817 = vld [vmem:[#allocation3 + $0x69] sm:$0xff]
      %v1818 = vld [vmem:[#allocation3 + $0x79] sm:$0xff]
      %v1819 = vld [vmem:[#allocation3 + $0x81] sm:$0xff]
      %v1820 = vld [vmem:[#allocation3 + $0x91] sm:$0xff]
      %v1821 = vld [vmem:[#allocation3 + $0x99] sm:$0xff]
      %v1822 = vld [vmem:[#allocation3 + $0xa9] sm:$0xff]
      %v1823 = vld [vmem:[#allocation3 + $0xb1] sm:$0xff]
      %v1824 = vld [vmem:[#allocation3 + $0xc1] sm:$0xff]
      %v1825 = vld [vmem:[#allocation3 + $0xc9] sm:$0xff]
      %v1826 = vld [vmem:[#allocation3 + $0xd9] sm:$0xff]
      %v1827 = vld [vmem:[#allocation3 + $0xe1] sm:$0xff]
      %v1828 = vld [vmem:[#allocation3 + $0xf1] sm:$0xff]
      %v1829 = vld [vmem:[#allocation3 + $0xf9] sm:$0xff]
      %v1830 = vld [vmem:[#allocation3 + $0x109] sm:$0xff]
      %v1831 = vld [vmem:[#allocation3 + $0x111] sm:$0xff]
      %v1832 = vld [vmem:[#allocation3 + $0x121] sm:$0xff]
      %v1833 = vld [vmem:[#allocation3 + $0x129] sm:$0xff]
      %v1834 = vld [vmem:[#allocation3 + $0x139] sm:$0xff]
      %v1835 = vld [vmem:[#allocation3 + $0x141] sm:$0xff]
      %v1836 = vld [vmem:[#allocation3 + $0x151] sm:$0xff]
      %v1837 = vld [vmem:[#allocation3 + $0x159] sm:$0xff]
      %v1838 = vld [vmem:[#allocation3 + $0x169] sm:$0xff]
      %v1839 = vld [vmem:[#allocation3 + $0x171] sm:$0xff]
      %v1840 = vld [vmem:[#allocation3 + $0x181] sm:$0xff]
      %v1841 = vld [vmem:[#allocation3 + $0x189] sm:$0xff]
      %v1842 = vld [vmem:[#allocation3 + $0x199] sm:$0xff]
      %v1843 = vld [vmem:[#allocation3 + $0x1a1] sm:$0xff]
      %v1844 = vld [vmem:[#allocation3 + $0x2] sm:$0xff]
      %v1845 = vld [vmem:[#allocation3 + $0xa] sm:$0xff]
      %v1846 = vld [vmem:[#allocation3 + $0x1a] sm:$0xff]
      %v1847 = vld [vmem:[#allocation3 + $0x22] sm:$0xff]
      %v1848 = vld [vmem:[#allocation3 + $0x32] sm:$0xff]
      %v1849 = vld [vmem:[#allocation3 + $0x3a] sm:$0xff]
      %v1850 = vld [vmem:[#allocation3 + $0x4a] sm:$0xff]
      %v1851 = vld [vmem:[#allocation3 + $0x52] sm:$0xff]
      %v1852 = vld [vmem:[#allocation3 + $0x62] sm:$0xff]
      %v1853 = vld [vmem:[#allocation3 + $0x6a] sm:$0xff]
      %v1854 = vld [vmem:[#allocation3 + $0x7a] sm:$0xff]
      %v1855 = vld [vmem:[#allocation3 + $0x82] sm:$0xff]
      %v1856 = vld [vmem:[#allocation3 + $0x92] sm:$0xff]
      %v1857 = vld [vmem:[#allocation3 + $0x9a] sm:$0xff]
      %v1858 = vld [vmem:[#allocation3 + $0xaa] sm:$0xff]
      %v1859 = vld [vmem:[#allocation3 + $0xb2] sm:$0xff]
      %v1860 = vld [vmem:[#allocation3 + $0xc2] sm:$0xff]
      %v1861 = vld [vmem:[#allocation3 + $0xca] sm:$0xff]
      %v1862 = vld [vmem:[#allocation3 + $0xda] sm:$0xff]
      %v1863 = vld [vmem:[#allocation3 + $0xe2] sm:$0xff]
      %v1864 = vld [vmem:[#allocation3 + $0xf2] sm:$0xff]
      %v1865 = vld [vmem:[#allocation3 + $0xfa] sm:$0xff]
      %v1866 = vld [vmem:[#allocation3 + $0x10a] sm:$0xff]
      %v1867 = vld [vmem:[#allocation3 + $0x112] sm:$0xff]
      %v1868 = vld [vmem:[#allocation3 + $0x122] sm:$0xff]
      %v1869 = vld [vmem:[#allocation3 + $0x12a] sm:$0xff]
      %v1870 = vld [vmem:[#allocation3 + $0x13a] sm:$0xff]
      %v1871 = vld [vmem:[#allocation3 + $0x142] sm:$0xff]
      %v1872 = vld [vmem:[#allocation3 + $0x152] sm:$0xff]
      %v1873 = vld [vmem:[#allocation3 + $0x15a] sm:$0xff]
      %v1874 = vld [vmem:[#allocation3 + $0x16a] sm:$0xff]
      %v1875 = vld [vmem:[#allocation3 + $0x172] sm:$0xff]
      %v1876 = vld [vmem:[#allocation3 + $0x182] sm:$0xff]
      %v1877 = vld [vmem:[#allocation3 + $0x18a] sm:$0xff]
      %v1878 = vld [vmem:[#allocation3 + $0x19a] sm:$0xff]
      %v1879 = vld [vmem:[#allocation3 + $0x1a2] sm:$0xff]
      %v1880 = vpack.c.bf16 %v1773, %v1772
      %v1881 = vpack.c.bf16 %v1775, %v1774
      %v1882 = vpack.c.bf16 %v1777, %v1776
      %v1883 = vpack.c.bf16 %v1779, %v1778
      %v1884 = vpack.c.bf16 %v1781, %v1780
      %v1885 = vpack.c.bf16 %v1783, %v1782
      %v1886 = vpack.c.bf16 %v1785, %v1784
      %v1887 = vpack.c.bf16 %v1787, %v1786
      %v1888 = vpack.c.bf16 %v1789, %v1788
      %v1889 = vpack.c.bf16 %v1791, %v1790
      %v1890 = vpack.c.bf16 %v1793, %v1792
      %v1891 = vpack.c.bf16 %v1795, %v1794
      %v1892 = vpack.c.bf16 %v1797, %v1796
      %v1893 = vpack.c.bf16 %v1799, %v1798
      %v1894 = vpack.c.bf16 %v1801, %v1800
      %v1895 = vpack.c.bf16 %v1803, %v1802
      %v1896 = vpack.c.bf16 %v1809, %v1808
      %v1897 = vpack.c.bf16 %v1811, %v1810
      %v1898 = vpack.c.bf16 %v1813, %v1812
      %v1899 = vpack.c.bf16 %v1815, %v1814
      %v1900 = vpack.c.bf16 %v1817, %v1816
      %v1901 = vpack.c.bf16 %v1819, %v1818
      %v1902 = vpack.c.bf16 %v1821, %v1820
      %v1903 = vpack.c.bf16 %v1823, %v1822
      %v1904 = vpack.c.bf16 %v1825, %v1824
      %v1905 = vpack.c.bf16 %v1827, %v1826
      %v1906 = vpack.c.bf16 %v1829, %v1828
      %v1907 = vpack.c.bf16 %v1831, %v1830
      %v1908 = vpack.c.bf16 %v1833, %v1832
      %v1909 = vpack.c.bf16 %v1835, %v1834
      %v1910 = vpack.c.bf16 %v1837, %v1836
      %v1911 = vpack.c.bf16 %v1839, %v1838
      %v1912 = vpack.c.bf16 %v1845, %v1844
      %v1913 = vpack.c.bf16 %v1847, %v1846
      %v1914 = vpack.c.bf16 %v1849, %v1848
      %v1915 = vpack.c.bf16 %v1851, %v1850
      %v1916 = vpack.c.bf16 %v1853, %v1852
      %v1917 = vpack.c.bf16 %v1855, %v1854
      %v1918 = vpack.c.bf16 %v1857, %v1856
      %v1919 = vpack.c.bf16 %v1859, %v1858
      %v1920 = vpack.c.bf16 %v1861, %v1860
      %v1921 = vpack.c.bf16 %v1863, %v1862
      %v1922 = vpack.c.bf16 %v1865, %v1864
      %v1923 = vpack.c.bf16 %v1867, %v1866
      %v1924 = vpack.c.bf16 %v1869, %v1868
      %v1925 = vpack.c.bf16 %v1871, %v1870
      %v1926 = vpack.c.bf16 %v1873, %v1872
      %v1927 = vpack.c.bf16 %v1875, %v1874
      %v1928 = vpack.c.bf16 %v1805, %v1804
      %v1929 = vpack.c.bf16 %v1841, %v1840
      %v1930 = vpack.c.bf16 %v1877, %v1876
      %v1931 = vpack.c.bf16 %v1807, %v1806
      %v1932 = vpack.c.bf16 %v1843, %v1842
      %v1933 = vpack.c.bf16 %v1879, %v1878
      %1950 = vrot.lane.b32.xlu0 %v1896, 32
      %v1951 = vpop.permute.xlu0 %1950
      %1952 = vrot.lane.b32.xlu0 %v1897, 32
      %v1953 = vpop.permute.xlu0 %1952
      %1954 = vrot.lane.b32.xlu0 %v1898, 32
      %v1955 = vpop.permute.xlu0 %1954
      %1956 = vrot.lane.b32.xlu0 %v1899, 32
      %v1957 = vpop.permute.xlu0 %1956
      %1958 = vrot.lane.b32.xlu0 %v1900, 32
      %v1959 = vpop.permute.xlu0 %1958
      %1960 = vrot.lane.b32.xlu0 %v1901, 32
      %v1961 = vpop.permute.xlu0 %1960
      %1962 = vrot.lane.b32.xlu0 %v1902, 32
      %v1963 = vpop.permute.xlu0 %1962
      %1964 = vrot.lane.b32.xlu0 %v1903, 32
      %v1965 = vpop.permute.xlu0 %1964
      %1966 = vrot.lane.b32.xlu0 %v1904, 32
      %v1967 = vpop.permute.xlu0 %1966
      %1968 = vrot.lane.b32.xlu0 %v1905, 32
      %v1969 = vpop.permute.xlu0 %1968
      %1970 = vrot.lane.b32.xlu0 %v1906, 32
      %v1971 = vpop.permute.xlu0 %1970
      %1972 = vrot.lane.b32.xlu0 %v1907, 32
      %v1973 = vpop.permute.xlu0 %1972
      %1974 = vrot.lane.b32.xlu0 %v1908, 32
      %v1975 = vpop.permute.xlu0 %1974
      %1976 = vrot.lane.b32.xlu0 %v1909, 32
      %v1977 = vpop.permute.xlu0 %1976
      %1978 = vrot.lane.b32.xlu0 %v1910, 32
      %v1979 = vpop.permute.xlu0 %1978
      %1980 = vrot.lane.b32.xlu0 %v1911, 32
      %v1981 = vpop.permute.xlu0 %1980
      %1998 = vrot.lane.b32.xlu0 %v1912, 64
      %v1999 = vpop.permute.xlu0 %1998
      %2000 = vrot.lane.b32.xlu0 %v1913, 64
      %v2001 = vpop.permute.xlu0 %2000
      %2002 = vrot.lane.b32.xlu0 %v1914, 64
      %v2003 = vpop.permute.xlu0 %2002
      %2004 = vrot.lane.b32.xlu0 %v1915, 64
      %v2005 = vpop.permute.xlu0 %2004
      %2006 = vrot.lane.b32.xlu0 %v1916, 64
      %v2007 = vpop.permute.xlu0 %2006
      %2008 = vrot.lane.b32.xlu0 %v1917, 64
      %v2009 = vpop.permute.xlu0 %2008
      %2010 = vrot.lane.b32.xlu0 %v1918, 64
      %v2011 = vpop.permute.xlu0 %2010
      %2012 = vrot.lane.b32.xlu0 %v1919, 64
      %v2013 = vpop.permute.xlu0 %2012
      %2014 = vrot.lane.b32.xlu0 %v1920, 64
      %v2015 = vpop.permute.xlu0 %2014
      %2016 = vrot.lane.b32.xlu0 %v1921, 64
      %v2017 = vpop.permute.xlu0 %2016
      %2018 = vrot.lane.b32.xlu0 %v1922, 64
      %v2019 = vpop.permute.xlu0 %2018
      %2020 = vrot.lane.b32.xlu0 %v1923, 64
      %v2021 = vpop.permute.xlu0 %2020
      %2022 = vrot.lane.b32.xlu0 %v1924, 64
      %v2023 = vpop.permute.xlu0 %2022
      %2024 = vrot.lane.b32.xlu0 %v1925, 64
      %v2025 = vpop.permute.xlu0 %2024
      %2026 = vrot.lane.b32.xlu0 %v1926, 64
      %v2027 = vpop.permute.xlu0 %2026
      %2028 = vrot.lane.b32.xlu0 %v1927, 64
      %v2029 = vpop.permute.xlu0 %2028
      %2046 = vrot.lane.b32.xlu0 %v1881, 96
      %v2047 = vpop.permute.xlu0 %2046
      %2048 = vrot.lane.b32.xlu0 %v1882, 96
      %v2049 = vpop.permute.xlu0 %2048
      %2050 = vrot.lane.b32.xlu0 %v1883, 96
      %v2051 = vpop.permute.xlu0 %2050
      %2052 = vrot.lane.b32.xlu0 %v1884, 96
      %v2053 = vpop.permute.xlu0 %2052
      %2054 = vrot.lane.b32.xlu0 %v1885, 96
      %v2055 = vpop.permute.xlu0 %2054
      %2056 = vrot.lane.b32.xlu0 %v1886, 96
      %v2057 = vpop.permute.xlu0 %2056
      %2058 = vrot.lane.b32.xlu0 %v1887, 96
      %v2059 = vpop.permute.xlu0 %2058
      %2060 = vrot.lane.b32.xlu0 %v1888, 96
      %v2061 = vpop.permute.xlu0 %2060
      %2062 = vrot.lane.b32.xlu0 %v1889, 96
      %v2063 = vpop.permute.xlu0 %2062
      %2064 = vrot.lane.b32.xlu0 %v1890, 96
      %v2065 = vpop.permute.xlu0 %2064
      %2066 = vrot.lane.b32.xlu0 %v1891, 96
      %v2067 = vpop.permute.xlu0 %2066
      %2068 = vrot.lane.b32.xlu0 %v1892, 96
      %v2069 = vpop.permute.xlu0 %2068
      %2070 = vrot.lane.b32.xlu0 %v1893, 96
      %v2071 = vpop.permute.xlu0 %2070
      %2072 = vrot.lane.b32.xlu0 %v1894, 96
      %v2073 = vpop.permute.xlu0 %2072
      %2074 = vrot.lane.b32.xlu0 %v1895, 96
      %v2075 = vpop.permute.xlu0 %2074
      %2076 = vrot.lane.b32.xlu0 %v1928, 96
      %v2077 = vpop.permute.xlu0 %2076
      %2079 = vrot.lane.b32.xlu0 %v1913, 32
      %v2080 = vpop.permute.xlu0 %2079
      %2081 = vrot.lane.b32.xlu0 %v1914, 32
      %v2082 = vpop.permute.xlu0 %2081
      %2083 = vrot.lane.b32.xlu0 %v1915, 32
      %v2084 = vpop.permute.xlu0 %2083
      %2085 = vrot.lane.b32.xlu0 %v1916, 32
      %v2086 = vpop.permute.xlu0 %2085
      %2087 = vrot.lane.b32.xlu0 %v1917, 32
      %v2088 = vpop.permute.xlu0 %2087
      %2089 = vrot.lane.b32.xlu0 %v1918, 32
      %v2090 = vpop.permute.xlu0 %2089
      %2091 = vrot.lane.b32.xlu0 %v1919, 32
      %v2092 = vpop.permute.xlu0 %2091
      %2093 = vrot.lane.b32.xlu0 %v1920, 32
      %v2094 = vpop.permute.xlu0 %2093
      %2095 = vrot.lane.b32.xlu0 %v1921, 32
      %v2096 = vpop.permute.xlu0 %2095
      %2097 = vrot.lane.b32.xlu0 %v1922, 32
      %v2098 = vpop.permute.xlu0 %2097
      %2099 = vrot.lane.b32.xlu0 %v1923, 32
      %v2100 = vpop.permute.xlu0 %2099
      %2101 = vrot.lane.b32.xlu0 %v1924, 32
      %v2102 = vpop.permute.xlu0 %2101
      %2103 = vrot.lane.b32.xlu0 %v1925, 32
      %v2104 = vpop.permute.xlu0 %2103
      %2105 = vrot.lane.b32.xlu0 %v1926, 32
      %v2106 = vpop.permute.xlu0 %2105
      %2107 = vrot.lane.b32.xlu0 %v1927, 32
      %v2108 = vpop.permute.xlu0 %2107
      %2109 = vrot.lane.b32.xlu0 %v1930, 32
      %v2110 = vpop.permute.xlu0 %2109
      %2112 = vrot.lane.b32.xlu0 %v1882, 64
      %v2113 = vpop.permute.xlu0 %2112
      %2114 = vrot.lane.b32.xlu0 %v1883, 64
      %v2115 = vpop.permute.xlu0 %2114
      %2116 = vrot.lane.b32.xlu0 %v1884, 64
      %v2117 = vpop.permute.xlu0 %2116
      %2118 = vrot.lane.b32.xlu0 %v1885, 64
      %v2119 = vpop.permute.xlu0 %2118
      %2120 = vrot.lane.b32.xlu0 %v1886, 64
      %v2121 = vpop.permute.xlu0 %2120
      %2122 = vrot.lane.b32.xlu0 %v1887, 64
      %v2123 = vpop.permute.xlu0 %2122
      %2124 = vrot.lane.b32.xlu0 %v1888, 64
      %v2125 = vpop.permute.xlu0 %2124
      %2126 = vrot.lane.b32.xlu0 %v1889, 64
      %v2127 = vpop.permute.xlu0 %2126
      %2128 = vrot.lane.b32.xlu0 %v1890, 64
      %v2129 = vpop.permute.xlu0 %2128
      %2130 = vrot.lane.b32.xlu0 %v1891, 64
      %v2131 = vpop.permute.xlu0 %2130
      %2132 = vrot.lane.b32.xlu0 %v1892, 64
      %v2133 = vpop.permute.xlu0 %2132
      %2134 = vrot.lane.b32.xlu0 %v1893, 64
      %v2135 = vpop.permute.xlu0 %2134
      %2136 = vrot.lane.b32.xlu0 %v1894, 64
      %v2137 = vpop.permute.xlu0 %2136
      %2138 = vrot.lane.b32.xlu0 %v1895, 64
      %v2139 = vpop.permute.xlu0 %2138
      %2140 = vrot.lane.b32.xlu0 %v1928, 64
      %v2141 = vpop.permute.xlu0 %2140
      %2142 = vrot.lane.b32.xlu0 %v1931, 64
      %v2143 = vpop.permute.xlu0 %2142
      %2146 = vrot.lane.b32.xlu0 %v1898, 96
      %v2147 = vpop.permute.xlu0 %2146
      %2148 = vrot.lane.b32.xlu0 %v1899, 96
      %v2149 = vpop.permute.xlu0 %2148
      %2150 = vrot.lane.b32.xlu0 %v1900, 96
      %v2151 = vpop.permute.xlu0 %2150
      %2152 = vrot.lane.b32.xlu0 %v1901, 96
      %v2153 = vpop.permute.xlu0 %2152
      %2154 = vrot.lane.b32.xlu0 %v1902, 96
      %v2155 = vpop.permute.xlu0 %2154
      %2156 = vrot.lane.b32.xlu0 %v1903, 96
      %v2157 = vpop.permute.xlu0 %2156
      %2158 = vrot.lane.b32.xlu0 %v1904, 96
      %v2159 = vpop.permute.xlu0 %2158
      %2160 = vrot.lane.b32.xlu0 %v1905, 96
      %v2161 = vpop.permute.xlu0 %2160
      %2162 = vrot.lane.b32.xlu0 %v1906, 96
      %v2163 = vpop.permute.xlu0 %2162
      %2164 = vrot.lane.b32.xlu0 %v1907, 96
      %v2165 = vpop.permute.xlu0 %2164
      %2166 = vrot.lane.b32.xlu0 %v1908, 96
      %v2167 = vpop.permute.xlu0 %2166
      %2168 = vrot.lane.b32.xlu0 %v1909, 96
      %v2169 = vpop.permute.xlu0 %2168
      %2170 = vrot.lane.b32.xlu0 %v1910, 96
      %v2171 = vpop.permute.xlu0 %2170
      %2172 = vrot.lane.b32.xlu0 %v1911, 96
      %v2173 = vpop.permute.xlu0 %2172
      %2174 = vrot.lane.b32.xlu0 %v1929, 96
      %v2175 = vpop.permute.xlu0 %2174
      %2176 = vrot.lane.b32.xlu0 %v1932, 96
      %v2177 = vpop.permute.xlu0 %2176
      %v2180 = vsel %vm1683, %v1880, %v1951
      %v2183 = vsel %vm1683, %v1881, %v1953
      %v2186 = vsel %vm1683, %v1882, %v1955
      %v2189 = vsel %vm1683, %v1883, %v1957
      %v2192 = vsel %vm1683, %v1884, %v1959
      %v2195 = vsel %vm1683, %v1885, %v1961
      %v2198 = vsel %vm1683, %v1886, %v1963
      %v2201 = vsel %vm1683, %v1887, %v1965
      %v2204 = vsel %vm1683, %v1888, %v1967
      %v2207 = vsel %vm1683, %v1889, %v1969
      %v2210 = vsel %vm1683, %v1890, %v1971
      %v2213 = vsel %vm1683, %v1891, %v1973
      %v2216 = vsel %vm1683, %v1892, %v1975
      %v2219 = vsel %vm1683, %v1893, %v1977
      %v2222 = vsel %vm1683, %v1894, %v1979
      %v2225 = vsel %vm1683, %v1895, %v1981
      %vm2226 = vcmask 523264
      %v2228 = vsel %vm2226, %v2180, %v1999
      %v2230 = vsel %vm2226, %v2183, %v2001
      %v2232 = vsel %vm2226, %v2186, %v2003
      %v2234 = vsel %vm2226, %v2189, %v2005
      %v2236 = vsel %vm2226, %v2192, %v2007
      %v2238 = vsel %vm2226, %v2195, %v2009
      %v2240 = vsel %vm2226, %v2198, %v2011
      %v2242 = vsel %vm2226, %v2201, %v2013
      %v2244 = vsel %vm2226, %v2204, %v2015
      %v2246 = vsel %vm2226, %v2207, %v2017
      %v2248 = vsel %vm2226, %v2210, %v2019
      %v2250 = vsel %vm2226, %v2213, %v2021
      %v2252 = vsel %vm2226, %v2216, %v2023
      %v2254 = vsel %vm2226, %v2219, %v2025
      %v2256 = vsel %vm2226, %v2222, %v2027
      %v2258 = vsel %vm2226, %v2225, %v2029
      %vm2259 = vcmask 785408
      %v2261 = vsel %vm2259, %v2228, %v2047
      %v2264 = vsel %vm2259, %v2230, %v2049
      %v2267 = vsel %vm2259, %v2232, %v2051
      %v2270 = vsel %vm2259, %v2234, %v2053
      %v2273 = vsel %vm2259, %v2236, %v2055
      %v2276 = vsel %vm2259, %v2238, %v2057
      %v2279 = vsel %vm2259, %v2240, %v2059
      %v2282 = vsel %vm2259, %v2242, %v2061
      %v2285 = vsel %vm2259, %v2244, %v2063
      %v2288 = vsel %vm2259, %v2246, %v2065
      %v2291 = vsel %vm2259, %v2248, %v2067
      %v2294 = vsel %vm2259, %v2250, %v2069
      %v2297 = vsel %vm2259, %v2252, %v2071
      %v2300 = vsel %vm2259, %v2254, %v2073
      %v2303 = vsel %vm2259, %v2256, %v2075
      %v2306 = vsel %vm2259, %v2258, %v2077
      %v2310 = vsel %vm1683, %v1897, %v2080
      %v2313 = vsel %vm1683, %v1898, %v2082
      %v2316 = vsel %vm1683, %v1899, %v2084
      %v2319 = vsel %vm1683, %v1900, %v2086
      %v2322 = vsel %vm1683, %v1901, %v2088
      %v2325 = vsel %vm1683, %v1902, %v2090
      %v2328 = vsel %vm1683, %v1903, %v2092
      %v2331 = vsel %vm1683, %v1904, %v2094
      %v2334 = vsel %vm1683, %v1905, %v2096
      %v2337 = vsel %vm1683, %v1906, %v2098
      %v2340 = vsel %vm1683, %v1907, %v2100
      %v2343 = vsel %vm1683, %v1908, %v2102
      %v2346 = vsel %vm1683, %v1909, %v2104
      %v2349 = vsel %vm1683, %v1910, %v2106
      %v2352 = vsel %vm1683, %v1911, %v2108
      %v2355 = vsel %vm1683, %v1929, %v2110
      %v2357 = vsel %vm2226, %v2310, %v2113
      %v2359 = vsel %vm2226, %v2313, %v2115
      %v2361 = vsel %vm2226, %v2316, %v2117
      %v2363 = vsel %vm2226, %v2319, %v2119
      %v2365 = vsel %vm2226, %v2322, %v2121
      %v2367 = vsel %vm2226, %v2325, %v2123
      %v2369 = vsel %vm2226, %v2328, %v2125
      %v2371 = vsel %vm2226, %v2331, %v2127
      %v2373 = vsel %vm2226, %v2334, %v2129
      %v2375 = vsel %vm2226, %v2337, %v2131
      %v2377 = vsel %vm2226, %v2340, %v2133
      %v2379 = vsel %vm2226, %v2343, %v2135
      %v2381 = vsel %vm2226, %v2346, %v2137
      %v2383 = vsel %vm2226, %v2349, %v2139
      %v2385 = vsel %vm2226, %v2352, %v2141
      %v2387 = vsel %vm2226, %v2355, %v2143
      %v2389 = vsel %vm2259, %v2357, %v2147
      %v2392 = vsel %vm2259, %v2359, %v2149
      %v2395 = vsel %vm2259, %v2361, %v2151
      %v2398 = vsel %vm2259, %v2363, %v2153
      %v2401 = vsel %vm2259, %v2365, %v2155
      %v2404 = vsel %vm2259, %v2367, %v2157
      %v2407 = vsel %vm2259, %v2369, %v2159
      %v2410 = vsel %vm2259, %v2371, %v2161
      %v2413 = vsel %vm2259, %v2373, %v2163
      %v2416 = vsel %vm2259, %v2375, %v2165
      %v2419 = vsel %vm2259, %v2377, %v2167
      %v2422 = vsel %vm2259, %v2379, %v2169
      %v2425 = vsel %vm2259, %v2381, %v2171
      %v2428 = vsel %vm2259, %v2383, %v2173
      %v2431 = vsel %vm2259, %v2385, %v2175
      %v2434 = vsel %vm2259, %v2387, %v2177
      %v2436 = vld [vmem:[%s4] sm:$0xf]
      %v2437 = vld [vmem:[%s4 + $0x4] sm:$0xf]
      %v2438 = vld [vmem:[%s4 + $0x8] sm:$0xf]
      %v2439 = vld [vmem:[%s4 + $0xc] sm:$0xf]
      %v2440 = vld [vmem:[%s4 + $0x10] sm:$0xf]
      %v2441 = vld [vmem:[%s4 + $0x14] sm:$0xf]
      %v2442 = vld [vmem:[%s4 + $0x18] sm:$0xf]
      %v2443 = vld [vmem:[%s4 + $0x1c] sm:$0xf]
      %v2444 = vld [vmem:[%s4 + $0x20] sm:$0xf]
      %v2445 = vld [vmem:[%s4 + $0x24] sm:$0xf]
      %v2446 = vld [vmem:[%s4 + $0x28] sm:$0xf]
      %v2447 = vld [vmem:[%s4 + $0x2c] sm:$0xf]
      %v2448 = vld [vmem:[%s4 + $0x30] sm:$0xf]
      %v2449 = vld [vmem:[%s4 + $0x34] sm:$0xf]
      %v2450 = vld [vmem:[%s4 + $0x38] sm:$0xf]
      %v2451 = vld [vmem:[%s4 + $0x3c] sm:$0xf]
      %v2452 = vld [vmem:[%s4 + $0x40] sm:$0xf]
      %v2453 = vld [vmem:[%s4 + $0x44] sm:$0xf]
      %v2454 = vld [vmem:[%s4 + $0x48] sm:$0xf]
      %v2455 = vld [vmem:[%s4 + $0x4c] sm:$0xf]
      %v2456 = vld [vmem:[%s4 + $0x50] sm:$0xf]
      %v2457 = vld [vmem:[%s4 + $0x54] sm:$0xf]
      %v2458 = vld [vmem:[%s4 + $0x58] sm:$0xf]
      %v2459 = vld [vmem:[%s4 + $0x5c] sm:$0xf]
      %v2460 = vld [vmem:[%s4 + $0x60] sm:$0xf]
      %v2461 = vld [vmem:[%s4 + $0x64] sm:$0xf]
      %v2462 = vld [vmem:[%s4 + $0x68] sm:$0xf]
      %v2463 = vld [vmem:[%s4 + $0x6c] sm:$0xf]
      %v2464 = vld [vmem:[%s4 + $0x70] sm:$0xf]
      %v2465 = vld [vmem:[%s4 + $0x74] sm:$0xf]
      %v2466 = vld [vmem:[%s4 + $0x78] sm:$0xf]
      %v2467 = vld [vmem:[%s4 + $0x7c] sm:$0xf]
      %v2468 = vld [vmem:[%s4 + $0x80] sm:$0xf]
      %v2469 = vld [vmem:[%s4 + $0x84] sm:$0xf]
      %v2470 = vld [vmem:[%s4 + $0x88] sm:$0xf]
      %v2471 = vld [vmem:[%s4 + $0x8c] sm:$0xf]
      %v2472 = vld [vmem:[%s5] sm:$0x1]
      %v2474 = vlaneseq
      %v2475 = vshrl.u32 %v2474, 7
      %v2476 = vsub.s32 0, %v2475
      %v2477 = vrot.slane %v2472, %v2476
      %v2515 = vunpack.c.l.b16 %v2436
      %v2516 = vunpack.c.l.b16 %v2437
      %v2517 = vunpack.c.l.b16 %v2438
      %v2518 = vunpack.c.l.b16 %v2439
      %v2519 = vunpack.c.l.b16 %v2440
      %v2520 = vunpack.c.l.b16 %v2441
      %v2521 = vunpack.c.l.b16 %v2442
      %v2522 = vunpack.c.l.b16 %v2443
      %v2523 = vunpack.c.l.b16 %v2444
      %v2524 = vunpack.c.l.b16 %v2445
      %v2525 = vunpack.c.l.b16 %v2446
      %v2526 = vunpack.c.l.b16 %v2447
      %v2527 = vunpack.c.l.b16 %v2448
      %v2528 = vunpack.c.l.b16 %v2449
      %v2529 = vunpack.c.l.b16 %v2450
      %v2530 = vunpack.c.l.b16 %v2451
      %v2531 = vunpack.c.l.b16 %v2452
      %v2532 = vunpack.c.l.b16 %v2453
      %v2533 = vunpack.c.l.b16 %v2454
      %v2534 = vunpack.c.l.b16 %v2455
      %v2535 = vunpack.c.l.b16 %v2456
      %v2536 = vunpack.c.l.b16 %v2457
      %v2537 = vunpack.c.l.b16 %v2458
      %v2538 = vunpack.c.l.b16 %v2459
      %v2539 = vunpack.c.l.b16 %v2460
      %v2540 = vunpack.c.l.b16 %v2461
      %v2541 = vunpack.c.l.b16 %v2462
      %v2542 = vunpack.c.l.b16 %v2463
      %v2543 = vunpack.c.l.b16 %v2464
      %v2544 = vunpack.c.l.b16 %v2465
      %v2545 = vunpack.c.l.b16 %v2466
      %v2546 = vunpack.c.l.b16 %v2467
      %v2547 = vunpack.c.l.b16 %v2468
      %v2548 = vunpack.c.l.b16 %v2469
      %v2549 = vunpack.c.l.b16 %v2470
      %v2550 = vunpack.c.l.b16 %v2471
      %v2551 = vpack.c.b16 %v2516, %v2515
      %v2552 = vpack.c.b16 %v2518, %v2517
      %v2553 = vpack.c.b16 %v2520, %v2519
      %v2554 = vpack.c.b16 %v2522, %v2521
      %v2555 = vpack.c.b16 %v2524, %v2523
      %v2556 = vpack.c.b16 %v2526, %v2525
      %v2557 = vpack.c.b16 %v2528, %v2527
      %v2558 = vpack.c.b16 %v2530, %v2529
      %v2559 = vpack.c.b16 %v2532, %v2531
      %v2560 = vpack.c.b16 %v2534, %v2533
      %v2561 = vpack.c.b16 %v2536, %v2535
      %v2562 = vpack.c.b16 %v2538, %v2537
      %v2563 = vpack.c.b16 %v2540, %v2539
      %v2564 = vpack.c.b16 %v2542, %v2541
      %v2565 = vpack.c.b16 %v2544, %v2543
      %v2566 = vpack.c.b16 %v2546, %v2545
      %v2567 = vpack.c.b16 %v2548, %v2547
      %v2568 = vpack.c.b16 %v2550, %v2549
      %v2588 = vsel %vm1683, %v1914, 0
      %v2591 = vsel %vm1683, %v1915, 0
      %v2594 = vsel %vm1683, %v1916, 0
      %v2597 = vsel %vm1683, %v1917, 0
      %v2600 = vsel %vm1683, %v1918, 0
      %v2603 = vsel %vm1683, %v1919, 0
      %v2606 = vsel %vm1683, %v1920, 0
      %v2609 = vsel %vm1683, %v1921, 0
      %v2612 = vsel %vm1683, %v1922, 0
      %v2615 = vsel %vm1683, %v1923, 0
      %v2618 = vsel %vm1683, %v1924, 0
      %v2621 = vsel %vm1683, %v1925, 0
      %v2624 = vsel %vm1683, %v1926, 0
      %v2627 = vsel %vm1683, %v1927, 0
      %v2630 = vsel %vm1683, %v1930, 0
      %v2633 = vsel %vm1683, %v1933, 0
      %2635 = vmatprep.subr.bf16.mxu0 0
      %2636 = vmatpush1.bf16.msra.mxu0 %v2558
      %2637 = vmatprep.subr.bf16.mxu0 0
      %2638 = vmatpush1.bf16.msra.mxu0 %v2557
      %2639 = vmatprep.subr.bf16.mxu0 0
      %2640 = vmatpush1.bf16.msra.mxu0 %v2556
      %2641 = vmatprep.subr.bf16.mxu0 0
      %2642 = vmatpush1.bf16.msra.mxu0 %v2555
      %2643 = vmatprep.subr.bf16.mxu0 0
      %2644 = vmatpush1.bf16.msra.mxu0 %v2554
      %2645 = vmatprep.subr.bf16.mxu0 0
      %2646 = vmatpush1.bf16.msra.mxu0 %v2553
      %2647 = vmatprep.subr.bf16.mxu0 0
      %2648 = vmatpush1.bf16.msra.mxu0 %v2552
      %2649 = vmatprep.subr.bf16.mxu0 0
      %2650 = vmatpush1.bf16.msra.mxu0 %v2551
      %2651 = vmatprep.subr.bf16.mxu0 0
      %2652 = vmatpush2.bf16.msra.mxu0 %v2566
      %2653 = vmatprep.subr.bf16.mxu0 0
      %2654 = vmatpush2.bf16.msra.mxu0 %v2565
      %2655 = vmatprep.subr.bf16.mxu0 0
      %2656 = vmatpush2.bf16.msra.mxu0 %v2564
      %2657 = vmatprep.subr.bf16.mxu0 0
      %2658 = vmatpush2.bf16.msra.mxu0 %v2563
      %2659 = vmatprep.subr.bf16.mxu0 0
      %2660 = vmatpush2.bf16.msra.mxu0 %v2562
      %2661 = vmatprep.subr.bf16.mxu0 0
      %2662 = vmatpush2.bf16.msra.mxu0 %v2561
      %2663 = vmatprep.subr.bf16.mxu0 0
      %2664 = vmatpush2.bf16.msra.mxu0 %v2560
      %2665 = vmatprep.subr.bf16.mxu0 0
      %2666 = vmatpush2.bf16.msra.mxu0 %v2559
      %2667 = vmatprep.mubr.bf16.mxu0 %v2389
      %2668 = vmatmul.mubr.bf16.gmra.mxu0 %v2261
      %v2669 = vpop.f32.mrf.mxu0
      %v2670 = vadd.f32 %v2477, %v2669
      %v2671 = vpop.f32.mrf.mxu0
      %v2672 = vpop.f32.mrf.mxu0
      %v2673 = vadd.f32 %v2477, %v2672
      %v2674 = vpop.f32.mrf.mxu0
      %2675 = vmatprep.mubr.bf16.mxu0 %v2392
      %2676 = vmatmul.mubr.bf16.gmra.mxu0 %v2264
      %v2677 = vpop.f32.mrf.mxu0
      %v2678 = vadd.f32 %v2477, %v2677
      %v2679 = vpop.f32.mrf.mxu0
      %v2680 = vpop.f32.mrf.mxu0
      %v2681 = vadd.f32 %v2477, %v2680
      %v2682 = vpop.f32.mrf.mxu0
      %2683 = vmatprep.mubr.bf16.mxu0 %v2395
      %2684 = vmatmul.mubr.bf16.gmra.mxu0 %v2267
      %v2685 = vpop.f32.mrf.mxu0
      %v2686 = vadd.f32 %v2477, %v2685
      %v2687 = vpop.f32.mrf.mxu0
      %v2688 = vpop.f32.mrf.mxu0
      %v2689 = vadd.f32 %v2477, %v2688
      %v2690 = vpop.f32.mrf.mxu0
      %2691 = vmatprep.mubr.bf16.mxu0 %v2398
      %2692 = vmatmul.mubr.bf16.gmra.mxu0 %v2270
      %v2693 = vpop.f32.mrf.mxu0
      %v2694 = vadd.f32 %v2477, %v2693
      %v2695 = vpop.f32.mrf.mxu0
      %v2696 = vpop.f32.mrf.mxu0
      %v2697 = vadd.f32 %v2477, %v2696
      %v2698 = vpop.f32.mrf.mxu0
      %2699 = vmatprep.mubr.bf16.mxu0 %v2401
      %2700 = vmatmul.mubr.bf16.gmra.mxu0 %v2273
      %v2701 = vpop.f32.mrf.mxu0
      %v2702 = vadd.f32 %v2477, %v2701
      %v2703 = vpop.f32.mrf.mxu0
      %v2704 = vpop.f32.mrf.mxu0
      %v2705 = vadd.f32 %v2477, %v2704
      %v2706 = vpop.f32.mrf.mxu0
      %2707 = vmatprep.mubr.bf16.mxu0 %v2404
      %2708 = vmatmul.mubr.bf16.gmra.mxu0 %v2276
      %v2709 = vpop.f32.mrf.mxu0
      %v2710 = vadd.f32 %v2477, %v2709
      %v2711 = vpop.f32.mrf.mxu0
      %v2712 = vpop.f32.mrf.mxu0
      %v2713 = vadd.f32 %v2477, %v2712
      %v2714 = vpop.f32.mrf.mxu0
      %2715 = vmatprep.mubr.bf16.mxu0 %v2407
      %2716 = vmatmul.mubr.bf16.gmra.mxu0 %v2279
      %v2717 = vpop.f32.mrf.mxu0
      %v2718 = vadd.f32 %v2477, %v2717
      %v2719 = vpop.f32.mrf.mxu0
      %v2720 = vpop.f32.mrf.mxu0
      %v2721 = vadd.f32 %v2477, %v2720
      %v2722 = vpop.f32.mrf.mxu0
      %2723 = vmatprep.mubr.bf16.mxu0 %v2410
      %2724 = vmatmul.mubr.bf16.gmra.mxu0 %v2282
      %v2725 = vpop.f32.mrf.mxu0
      %v2726 = vadd.f32 %v2477, %v2725
      %v2727 = vpop.f32.mrf.mxu0
      %v2728 = vpop.f32.mrf.mxu0
      %v2729 = vadd.f32 %v2477, %v2728
      %v2730 = vpop.f32.mrf.mxu0
      %2731 = vmatprep.mubr.bf16.mxu0 %v2413
      %2732 = vmatmul.mubr.bf16.gmra.mxu0 %v2285
      %v2733 = vpop.f32.mrf.mxu0
      %v2734 = vadd.f32 %v2477, %v2733
      %v2735 = vpop.f32.mrf.mxu0
      %v2736 = vpop.f32.mrf.mxu0
      %v2737 = vadd.f32 %v2477, %v2736
      %v2738 = vpop.f32.mrf.mxu0
      %2739 = vmatprep.mubr.bf16.mxu0 %v2416
      %2740 = vmatmul.mubr.bf16.gmra.mxu0 %v2288
      %v2741 = vpop.f32.mrf.mxu0
      %v2742 = vadd.f32 %v2477, %v2741
      %v2743 = vpop.f32.mrf.mxu0
      %v2744 = vpop.f32.mrf.mxu0
      %v2745 = vadd.f32 %v2477, %v2744
      %v2746 = vpop.f32.mrf.mxu0
      %2747 = vmatprep.mubr.bf16.mxu0 %v2419
      %2748 = vmatmul.mubr.bf16.gmra.mxu0 %v2291
      %v2749 = vpop.f32.mrf.mxu0
      %v2750 = vadd.f32 %v2477, %v2749
      %v2751 = vpop.f32.mrf.mxu0
      %v2752 = vpop.f32.mrf.mxu0
      %v2753 = vadd.f32 %v2477, %v2752
      %v2754 = vpop.f32.mrf.mxu0
      %2755 = vmatprep.mubr.bf16.mxu0 %v2422
      %2756 = vmatmul.mubr.bf16.gmra.mxu0 %v2294
      %v2757 = vpop.f32.mrf.mxu0
      %v2758 = vadd.f32 %v2477, %v2757
      %v2759 = vpop.f32.mrf.mxu0
      %v2760 = vpop.f32.mrf.mxu0
      %v2761 = vadd.f32 %v2477, %v2760
      %v2762 = vpop.f32.mrf.mxu0
      %2763 = vmatprep.mubr.bf16.mxu0 %v2425
      %2764 = vmatmul.mubr.bf16.gmra.mxu0 %v2297
      %v2765 = vpop.f32.mrf.mxu0
      %v2766 = vadd.f32 %v2477, %v2765
      %v2767 = vpop.f32.mrf.mxu0
      %v2768 = vpop.f32.mrf.mxu0
      %v2769 = vadd.f32 %v2477, %v2768
      %v2770 = vpop.f32.mrf.mxu0
      %2771 = vmatprep.mubr.bf16.mxu0 %v2428
      %2772 = vmatmul.mubr.bf16.gmra.mxu0 %v2300
      %v2773 = vpop.f32.mrf.mxu0
      %v2774 = vadd.f32 %v2477, %v2773
      %v2775 = vpop.f32.mrf.mxu0
      %v2776 = vpop.f32.mrf.mxu0
      %v2777 = vadd.f32 %v2477, %v2776
      %v2778 = vpop.f32.mrf.mxu0
      %2779 = vmatprep.mubr.bf16.mxu0 %v2431
      %2780 = vmatmul.mubr.bf16.gmra.mxu0 %v2303
      %v2781 = vpop.f32.mrf.mxu0
      %v2782 = vadd.f32 %v2477, %v2781
      %v2783 = vpop.f32.mrf.mxu0
      %v2784 = vpop.f32.mrf.mxu0
      %v2785 = vadd.f32 %v2477, %v2784
      %v2786 = vpop.f32.mrf.mxu0
      %2787 = vmatprep.mubr.bf16.mxu0 %v2434
      %2788 = vmatmul.mubr.bf16.gmra.mxu0 %v2306
      %v2789 = vpop.f32.mrf.mxu0
      %v2790 = vadd.f32 %v2477, %v2789
      %v2791 = vpop.f32.mrf.mxu0
      %v2792 = vpop.f32.mrf.mxu0
      %v2793 = vadd.f32 %v2477, %v2792
      %v2794 = vpop.f32.mrf.mxu0
      %2795 = vdwg.mxu0
      %2796 = vmatprep.subr.bf16.mxu0 0
      %2797 = vmatpush1.bf16.msra.mxu0 0
      %2798 = vmatprep.subr.bf16.mxu0 0
      %2799 = vmatpush1.bf16.msra.mxu0 0
      %2800 = vmatprep.subr.bf16.mxu0 0
      %2801 = vmatpush1.bf16.msra.mxu0 0
      %2802 = vmatprep.subr.bf16.mxu0 0
      %2803 = vmatpush1.bf16.msra.mxu0 0
      %2804 = vmatprep.subr.bf16.mxu0 0
      %2805 = vmatpush1.bf16.msra.mxu0 0
      %2806 = vmatprep.subr.bf16.mxu0 0
      %2807 = vmatpush1.bf16.msra.mxu0 0
      %2808 = vmatprep.subr.bf16.mxu0 0
      %2809 = vmatpush1.bf16.msra.mxu0 %v2568
      %2810 = vmatprep.subr.bf16.mxu0 0
      %2811 = vmatpush1.bf16.msra.mxu0 %v2567
      %2812 = vmatprep.subr.bf16.mxu0 0
      %2813 = vmatpush2.bf16.msra.mxu0 0
      %2814 = vmatprep.subr.bf16.mxu0 0
      %2815 = vmatpush2.bf16.msra.mxu0 0
      %2816 = vmatprep.subr.bf16.mxu0 0
      %2817 = vmatpush2.bf16.msra.mxu0 0
      %2818 = vmatprep.subr.bf16.mxu0 0
      %2819 = vmatpush2.bf16.msra.mxu0 0
      %2820 = vmatprep.subr.bf16.mxu0 0
      %2821 = vmatpush2.bf16.msra.mxu0 0
      %2822 = vmatprep.subr.bf16.mxu0 0
      %2823 = vmatpush2.bf16.msra.mxu0 0
      %2824 = vmatprep.subr.bf16.mxu0 0
      %2825 = vmatpush2.bf16.msra.mxu0 0
      %2826 = vmatprep.subr.bf16.mxu0 0
      %2827 = vmatpush2.bf16.msra.mxu0 0
      %2828 = vmatprep.mubr.bf16.mxu0 0
      %2829 = vmatmul.mubr.bf16.gmra.mxu0 %v2588
      %v2830 = vpop.f32.mrf.mxu0
      %v2831 = vadd.f32 %v2670, %v2830
      %v2832 = vpop.f32.mrf.mxu0
      %v2833 = vpop.f32.mrf.mxu0
      %v2834 = vadd.f32 %v2673, %v2833
      %v2835 = vpop.f32.mrf.mxu0
      %2836 = vmatprep.mubr.bf16.mxu0 0
      %2837 = vmatmul.mubr.bf16.gmra.mxu0 %v2591
      %v2838 = vpop.f32.mrf.mxu0
      %v2839 = vadd.f32 %v2678, %v2838
      %v2840 = vpop.f32.mrf.mxu0
      %v2841 = vpop.f32.mrf.mxu0
      %v2842 = vadd.f32 %v2681, %v2841
      %v2843 = vpop.f32.mrf.mxu0
      %2844 = vmatprep.mubr.bf16.mxu0 0
      %2845 = vmatmul.mubr.bf16.gmra.mxu0 %v2594
      %v2846 = vpop.f32.mrf.mxu0
      %v2847 = vadd.f32 %v2686, %v2846
      %v2848 = vpop.f32.mrf.mxu0
      %v2849 = vpop.f32.mrf.mxu0
      %v2850 = vadd.f32 %v2689, %v2849
      %v2851 = vpop.f32.mrf.mxu0
      %2852 = vmatprep.mubr.bf16.mxu0 0
      %2853 = vmatmul.mubr.bf16.gmra.mxu0 %v2597
      %v2854 = vpop.f32.mrf.mxu0
      %v2855 = vadd.f32 %v2694, %v2854
      %v2856 = vpop.f32.mrf.mxu0
      %v2857 = vpop.f32.mrf.mxu0
      %v2858 = vadd.f32 %v2697, %v2857
      %v2859 = vpop.f32.mrf.mxu0
      %2860 = vmatprep.mubr.bf16.mxu0 0
      %2861 = vmatmul.mubr.bf16.gmra.mxu0 %v2600
      %v2862 = vpop.f32.mrf.mxu0
      %v2863 = vadd.f32 %v2702, %v2862
      %v2864 = vpop.f32.mrf.mxu0
      %v2865 = vpop.f32.mrf.mxu0
      %v2866 = vadd.f32 %v2705, %v2865
      %v2867 = vpop.f32.mrf.mxu0
      %2868 = vmatprep.mubr.bf16.mxu0 0
      %2869 = vmatmul.mubr.bf16.gmra.mxu0 %v2603
      %v2870 = vpop.f32.mrf.mxu0
      %v2871 = vadd.f32 %v2710, %v2870
      %v2872 = vpop.f32.mrf.mxu0
      %v2873 = vpop.f32.mrf.mxu0
      %v2874 = vadd.f32 %v2713, %v2873
      %v2875 = vpop.f32.mrf.mxu0
      %2876 = vmatprep.mubr.bf16.mxu0 0
      %2877 = vmatmul.mubr.bf16.gmra.mxu0 %v2606
      %v2878 = vpop.f32.mrf.mxu0
      %v2879 = vadd.f32 %v2718, %v2878
      %v2880 = vpop.f32.mrf.mxu0
      %v2881 = vpop.f32.mrf.mxu0
      %v2882 = vadd.f32 %v2721, %v2881
      %v2883 = vpop.f32.mrf.mxu0
      %2884 = vmatprep.mubr.bf16.mxu0 0
      %2885 = vmatmul.mubr.bf16.gmra.mxu0 %v2609
      %v2886 = vpop.f32.mrf.mxu0
      %v2887 = vadd.f32 %v2726, %v2886
      %v2888 = vpop.f32.mrf.mxu0
      %v2889 = vpop.f32.mrf.mxu0
      %v2890 = vadd.f32 %v2729, %v2889
      %v2891 = vpop.f32.mrf.mxu0
      %2892 = vmatprep.mubr.bf16.mxu0 0
      %2893 = vmatmul.mubr.bf16.gmra.mxu0 %v2612
      %v2894 = vpop.f32.mrf.mxu0
      %v2895 = vadd.f32 %v2734, %v2894
      %v2896 = vpop.f32.mrf.mxu0
      %v2897 = vpop.f32.mrf.mxu0
      %v2898 = vadd.f32 %v2737, %v2897
      %v2899 = vpop.f32.mrf.mxu0
      %2900 = vmatprep.mubr.bf16.mxu0 0
      %2901 = vmatmul.mubr.bf16.gmra.mxu0 %v2615
      %v2902 = vpop.f32.mrf.mxu0
      %v2903 = vadd.f32 %v2742, %v2902
      %v2904 = vpop.f32.mrf.mxu0
      %v2905 = vpop.f32.mrf.mxu0
      %v2906 = vadd.f32 %v2745, %v2905
      %v2907 = vpop.f32.mrf.mxu0
      %2908 = vmatprep.mubr.bf16.mxu0 0
      %2909 = vmatmul.mubr.bf16.gmra.mxu0 %v2618
      %v2910 = vpop.f32.mrf.mxu0
      %v2911 = vadd.f32 %v2750, %v2910
      %v2912 = vpop.f32.mrf.mxu0
      %v2913 = vpop.f32.mrf.mxu0
      %v2914 = vadd.f32 %v2753, %v2913
      %v2915 = vpop.f32.mrf.mxu0
      %2916 = vmatprep.mubr.bf16.mxu0 0
      %2917 = vmatmul.mubr.bf16.gmra.mxu0 %v2621
      %v2918 = vpop.f32.mrf.mxu0
      %v2919 = vadd.f32 %v2758, %v2918
      %v2920 = vpop.f32.mrf.mxu0
      %v2921 = vpop.f32.mrf.mxu0
      %v2922 = vadd.f32 %v2761, %v2921
      %v2923 = vpop.f32.mrf.mxu0
      %2924 = vmatprep.mubr.bf16.mxu0 0
      %2925 = vmatmul.mubr.bf16.gmra.mxu0 %v2624
      %v2926 = vpop.f32.mrf.mxu0
      %v2927 = vadd.f32 %v2766, %v2926
      %v2928 = vpop.f32.mrf.mxu0
      %v2929 = vpop.f32.mrf.mxu0
      %v2930 = vadd.f32 %v2769, %v2929
      %v2931 = vpop.f32.mrf.mxu0
      %2932 = vmatprep.mubr.bf16.mxu0 0
      %2933 = vmatmul.mubr.bf16.gmra.mxu0 %v2627
      %v2934 = vpop.f32.mrf.mxu0
      %v2935 = vadd.f32 %v2774, %v2934
      %v2936 = vpop.f32.mrf.mxu0
      %v2937 = vpop.f32.mrf.mxu0
      %v2938 = vadd.f32 %v2777, %v2937
      %v2939 = vpop.f32.mrf.mxu0
      %2940 = vmatprep.mubr.bf16.mxu0 0
      %2941 = vmatmul.mubr.bf16.gmra.mxu0 %v2630
      %v2942 = vpop.f32.mrf.mxu0
      %v2943 = vadd.f32 %v2782, %v2942
      %v2944 = vpop.f32.mrf.mxu0
      %v2945 = vpop.f32.mrf.mxu0
      %v2946 = vadd.f32 %v2785, %v2945
      %v2947 = vpop.f32.mrf.mxu0
      %2948 = vmatprep.mubr.bf16.mxu0 0
      %2949 = vmatmul.mubr.bf16.gmra.mxu0 %v2633
      %v2950 = vpop.f32.mrf.mxu0
      %v2951 = vadd.f32 %v2790, %v2950
      %v2952 = vpop.f32.mrf.mxu0
      %v2953 = vpop.f32.mrf.mxu0
      %v2954 = vadd.f32 %v2793, %v2953
      %v2955 = vpop.f32.mrf.mxu0
      %2956 = vdwg.mxu0
      %vm2957 = vcmp.gt.f32.partialorder %v2831, 0.0
      %vm2958 = vcmp.gt.f32.partialorder %v2834, 0.0
      %vm2959 = vcmp.gt.f32.partialorder %v2839, 0.0
      %vm2960 = vcmp.gt.f32.partialorder %v2842, 0.0
      %vm2961 = vcmp.gt.f32.partialorder %v2847, 0.0
      %vm2962 = vcmp.gt.f32.partialorder %v2850, 0.0
      %vm2963 = vcmp.gt.f32.partialorder %v2855, 0.0
      %vm2964 = vcmp.gt.f32.partialorder %v2858, 0.0
      %vm2965 = vcmp.gt.f32.partialorder %v2863, 0.0
      %vm2966 = vcmp.gt.f32.partialorder %v2866, 0.0
      %vm2967 = vcmp.gt.f32.partialorder %v2871, 0.0
      %vm2968 = vcmp.gt.f32.partialorder %v2874, 0.0
      %vm2969 = vcmp.gt.f32.partialorder %v2879, 0.0
      %vm2970 = vcmp.gt.f32.partialorder %v2882, 0.0
      %vm2971 = vcmp.gt.f32.partialorder %v2887, 0.0
      %vm2972 = vcmp.gt.f32.partialorder %v2890, 0.0
      %vm2973 = vcmp.gt.f32.partialorder %v2895, 0.0
      %vm2974 = vcmp.gt.f32.partialorder %v2898, 0.0
      %vm2975 = vcmp.gt.f32.partialorder %v2903, 0.0
      %vm2976 = vcmp.gt.f32.partialorder %v2906, 0.0
      %vm2977 = vcmp.gt.f32.partialorder %v2911, 0.0
      %vm2978 = vcmp.gt.f32.partialorder %v2914, 0.0
      %vm2979 = vcmp.gt.f32.partialorder %v2919, 0.0
      %vm2980 = vcmp.gt.f32.partialorder %v2922, 0.0
      %vm2981 = vcmp.gt.f32.partialorder %v2927, 0.0
      %vm2982 = vcmp.gt.f32.partialorder %v2930, 0.0
      %vm2983 = vcmp.gt.f32.partialorder %v2935, 0.0
      %vm2984 = vcmp.gt.f32.partialorder %v2938, 0.0
      %vm2985 = vcmp.gt.f32.partialorder %v2943, 0.0
      %vm2986 = vcmp.gt.f32.partialorder %v2946, 0.0
      %vm2987 = vcmp.gt.f32.partialorder %v2951, 0.0
      %vm2988 = vcmp.gt.f32.partialorder %v2954, 0.0
      %v2989 = vld [vmem:[%s6] sm:$0x1]
      %v2991 = vlaneseq
      %v2992 = vshrl.u32 %v2991, 7
      %v2993 = vsub.s32 0, %v2992
      %v2994 = vrot.slane %v2989, %v2993
      %v2996 = vmul.f32 %v2994, %v2831
      %v2997 = vmul.f32 %v2994, %v2834
      %v2998 = vmul.f32 %v2994, %v2839
      %v2999 = vmul.f32 %v2994, %v2842
      %v3000 = vmul.f32 %v2994, %v2847
      %v3001 = vmul.f32 %v2994, %v2850
      %v3002 = vmul.f32 %v2994, %v2855
      %v3003 = vmul.f32 %v2994, %v2858
      %v3004 = vmul.f32 %v2994, %v2863
      %v3005 = vmul.f32 %v2994, %v2866
      %v3006 = vmul.f32 %v2994, %v2871
      %v3007 = vmul.f32 %v2994, %v2874
      %v3008 = vmul.f32 %v2994, %v2879
      %v3009 = vmul.f32 %v2994, %v2882
      %v3010 = vmul.f32 %v2994, %v2887
      %v3011 = vmul.f32 %v2994, %v2890
      %v3012 = vmul.f32 %v2994, %v2895
      %v3013 = vmul.f32 %v2994, %v2898
      %v3014 = vmul.f32 %v2994, %v2903
      %v3015 = vmul.f32 %v2994, %v2906
      %v3016 = vmul.f32 %v2994, %v2911
      %v3017 = vmul.f32 %v2994, %v2914
      %v3018 = vmul.f32 %v2994, %v2919
      %v3019 = vmul.f32 %v2994, %v2922
      %v3020 = vmul.f32 %v2994, %v2927
      %v3021 = vmul.f32 %v2994, %v2930
      %v3022 = vmul.f32 %v2994, %v2935
      %v3023 = vmul.f32 %v2994, %v2938
      %v3024 = vmul.f32 %v2994, %v2943
      %v3025 = vmul.f32 %v2994, %v2946
      %v3026 = vmul.f32 %v2994, %v2951
      %v3027 = vmul.f32 %v2994, %v2954
      %v3028 = vsel %vm2957, %v2831, %v2996
      %v3029 = vsel %vm2958, %v2834, %v2997
      %v3030 = vsel %vm2959, %v2839, %v2998
      %v3031 = vsel %vm2960, %v2842, %v2999
      %v3032 = vsel %vm2961, %v2847, %v3000
      %v3033 = vsel %vm2962, %v2850, %v3001
      %v3034 = vsel %vm2963, %v2855, %v3002
      %v3035 = vsel %vm2964, %v2858, %v3003
      %v3036 = vsel %vm2965, %v2863, %v3004
      %v3037 = vsel %vm2966, %v2866, %v3005
      %v3038 = vsel %vm2967, %v2871, %v3006
      %v3039 = vsel %vm2968, %v2874, %v3007
      %v3040 = vsel %vm2969, %v2879, %v3008
      %v3041 = vsel %vm2970, %v2882, %v3009
      %v3042 = vsel %vm2971, %v2887, %v3010
      %v3043 = vsel %vm2972, %v2890, %v3011
      %v3044 = vsel %vm2973, %v2895, %v3012
      %v3045 = vsel %vm2974, %v2898, %v3013
      %v3046 = vsel %vm2975, %v2903, %v3014
      %v3047 = vsel %vm2976, %v2906, %v3015
      %v3048 = vsel %vm2977, %v2911, %v3016
      %v3049 = vsel %vm2978, %v2914, %v3017
      %v3050 = vsel %vm2979, %v2919, %v3018
      %v3051 = vsel %vm2980, %v2922, %v3019
      %v3052 = vsel %vm2981, %v2927, %v3020
      %v3053 = vsel %vm2982, %v2930, %v3021
      %v3054 = vsel %vm2983, %v2935, %v3022
      %v3055 = vsel %vm2984, %v2938, %v3023
      %v3056 = vsel %vm2985, %v2943, %v3024
      %v3057 = vsel %vm2986, %v2946, %v3025
      %v3058 = vsel %vm2987, %v2951, %v3026
      %v3059 = vsel %vm2988, %v2954, %v3027
      %3060 = vst.msk [vmem:[%s1739 + $0x1] sm:$0xff] %vm1683, %v3028
      %3061 = vst.msk [vmem:[%s1739 + $0x9] sm:$0xff] %vm1683, %v3029
      %3062 = vst.msk [vmem:[%s1739 + $0x19] sm:$0xff] %vm1683, %v3030
      %3063 = vst.msk [vmem:[%s1739 + $0x21] sm:$0xff] %vm1683, %v3031
      %3064 = vst.msk [vmem:[%s1739 + $0x31] sm:$0xff] %vm1683, %v3032
      %3065 = vst.msk [vmem:[%s1739 + $0x39] sm:$0xff] %vm1683, %v3033
      %3066 = vst.msk [vmem:[%s1739 + $0x49] sm:$0xff] %vm1683, %v3034
      %3067 = vst.msk [vmem:[%s1739 + $0x51] sm:$0xff] %vm1683, %v3035
      %3068 = vst.msk [vmem:[%s1739 + $0x61] sm:$0xff] %vm1683, %v3036
      %3069 = vst.msk [vmem:[%s1739 + $0x69] sm:$0xff] %vm1683, %v3037
      %3070 = vst.msk [vmem:[%s1739 + $0x79] sm:$0xff] %vm1683, %v3038
      %3071 = vst.msk [vmem:[%s1739 + $0x81] sm:$0xff] %vm1683, %v3039
      %3072 = vst.msk [vmem:[%s1739 + $0x91] sm:$0xff] %vm1683, %v3040
      %3073 = vst.msk [vmem:[%s1739 + $0x99] sm:$0xff] %vm1683, %v3041
      %3074 = vst.msk [vmem:[%s1739 + $0xa9] sm:$0xff] %vm1683, %v3042
      %3075 = vst.msk [vmem:[%s1739 + $0xb1] sm:$0xff] %vm1683, %v3043
      %3076 = vst.msk [vmem:[%s1739 + $0xc1] sm:$0xff] %vm1683, %v3044
      %3077 = vst.msk [vmem:[%s1739 + $0xc9] sm:$0xff] %vm1683, %v3045
      %3078 = vst.msk [vmem:[%s1739 + $0xd9] sm:$0xff] %vm1683, %v3046
      %3079 = vst.msk [vmem:[%s1739 + $0xe1] sm:$0xff] %vm1683, %v3047
      %3080 = vst.msk [vmem:[%s1739 + $0xf1] sm:$0xff] %vm1683, %v3048
      %3081 = vst.msk [vmem:[%s1739 + $0xf9] sm:$0xff] %vm1683, %v3049
      %3082 = vst.msk [vmem:[%s1739 + $0x109] sm:$0xff] %vm1683, %v3050
      %3083 = vst.msk [vmem:[%s1739 + $0x111] sm:$0xff] %vm1683, %v3051
      %3084 = vst.msk [vmem:[%s1739 + $0x121] sm:$0xff] %vm1683, %v3052
      %3085 = vst.msk [vmem:[%s1739 + $0x129] sm:$0xff] %vm1683, %v3053
      %3086 = vst.msk [vmem:[%s1739 + $0x139] sm:$0xff] %vm1683, %v3054
      %3087 = vst.msk [vmem:[%s1739 + $0x141] sm:$0xff] %vm1683, %v3055
      %3088 = vst.msk [vmem:[%s1739 + $0x151] sm:$0xff] %vm1683, %v3056
      %3089 = vst.msk [vmem:[%s1739 + $0x159] sm:$0xff] %vm1683, %v3057
      %3090 = vst.msk [vmem:[%s1739 + $0x169] sm:$0xff] %vm1683, %v3058
      %3091 = vst.msk [vmem:[%s1739 + $0x171] sm:$0xff] %vm1683, %v3059
      %v3092 = vld [vmem:[#allocation3] sm:$0xff]
      %v3093 = vld [vmem:[#allocation3 + $0x8] sm:$0xff]
      %v3094 = vld [vmem:[#allocation3 + $0x18] sm:$0xff]
      %v3095 = vld [vmem:[#allocation3 + $0x20] sm:$0xff]
      %v3096 = vld [vmem:[#allocation3 + $0x30] sm:$0xff]
      %v3097 = vld [vmem:[#allocation3 + $0x38] sm:$0xff]
      %v3098 = vld [vmem:[#allocation3 + $0x48] sm:$0xff]
      %v3099 = vld [vmem:[#allocation3 + $0x50] sm:$0xff]
      %v3100 = vld [vmem:[#allocation3 + $0x60] sm:$0xff]
      %v3101 = vld [vmem:[#allocation3 + $0x68] sm:$0xff]
      %v3102 = vld [vmem:[#allocation3 + $0x78] sm:$0xff]
      %v3103 = vld [vmem:[#allocation3 + $0x80] sm:$0xff]
      %v3104 = vld [vmem:[#allocation3 + $0x90] sm:$0xff]
      %v3105 = vld [vmem:[#allocation3 + $0x98] sm:$0xff]
      %v3106 = vld [vmem:[#allocation3 + $0xa8] sm:$0xff]
      %v3107 = vld [vmem:[#allocation3 + $0xb0] sm:$0xff]
      %v3108 = vld [vmem:[#allocation3 + $0xc0] sm:$0xff]
      %v3109 = vld [vmem:[#allocation3 + $0xc8] sm:$0xff]
      %v3110 = vld [vmem:[#allocation3 + $0xd8] sm:$0xff]
      %v3111 = vld [vmem:[#allocation3 + $0xe0] sm:$0xff]
      %v3112 = vld [vmem:[#allocation3 + $0xf0] sm:$0xff]
      %v3113 = vld [vmem:[#allocation3 + $0xf8] sm:$0xff]
      %v3114 = vld [vmem:[#allocation3 + $0x108] sm:$0xff]
      %v3115 = vld [vmem:[#allocation3 + $0x110] sm:$0xff]
      %v3116 = vld [vmem:[#allocation3 + $0x120] sm:$0xff]
      %v3117 = vld [vmem:[#allocation3 + $0x128] sm:$0xff]
      %v3118 = vld [vmem:[#allocation3 + $0x138] sm:$0xff]
      %v3119 = vld [vmem:[#allocation3 + $0x140] sm:$0xff]
      %v3120 = vld [vmem:[#allocation3 + $0x150] sm:$0xff]
      %v3121 = vld [vmem:[#allocation3 + $0x158] sm:$0xff]
      %v3122 = vld [vmem:[#allocation3 + $0x168] sm:$0xff]
      %v3123 = vld [vmem:[#allocation3 + $0x170] sm:$0xff]
      %v3124 = vld [vmem:[#allocation3 + $0x180] sm:$0xff]
      %v3125 = vld [vmem:[#allocation3 + $0x188] sm:$0xff]
      %v3126 = vld [vmem:[#allocation3 + $0x198] sm:$0xff]
      %v3127 = vld [vmem:[#allocation3 + $0x1a0] sm:$0xff]
      %v3128 = vld [vmem:[#allocation3 + $0x1] sm:$0xff]
      %v3129 = vld [vmem:[#allocation3 + $0x9] sm:$0xff]
      %v3130 = vld [vmem:[#allocation3 + $0x19] sm:$0xff]
      %v3131 = vld [vmem:[#allocation3 + $0x21] sm:$0xff]
      %v3132 = vld [vmem:[#allocation3 + $0x31] sm:$0xff]
      %v3133 = vld [vmem:[#allocation3 + $0x39] sm:$0xff]
      %v3134 = vld [vmem:[#allocation3 + $0x49] sm:$0xff]
      %v3135 = vld [vmem:[#allocation3 + $0x51] sm:$0xff]
      %v3136 = vld [vmem:[#allocation3 + $0x61] sm:$0xff]
      %v3137 = vld [vmem:[#allocation3 + $0x69] sm:$0xff]
      %v3138 = vld [vmem:[#allocation3 + $0x79] sm:$0xff]
      %v3139 = vld [vmem:[#allocation3 + $0x81] sm:$0xff]
      %v3140 = vld [vmem:[#allocation3 + $0x91] sm:$0xff]
      %v3141 = vld [vmem:[#allocation3 + $0x99] sm:$0xff]
      %v3142 = vld [vmem:[#allocation3 + $0xa9] sm:$0xff]
      %v3143 = vld [vmem:[#allocation3 + $0xb1] sm:$0xff]
      %v3144 = vld [vmem:[#allocation3 + $0xc1] sm:$0xff]
      %v3145 = vld [vmem:[#allocation3 + $0xc9] sm:$0xff]
      %v3146 = vld [vmem:[#allocation3 + $0xd9] sm:$0xff]
      %v3147 = vld [vmem:[#allocation3 + $0xe1] sm:$0xff]
      %v3148 = vld [vmem:[#allocation3 + $0xf1] sm:$0xff]
      %v3149 = vld [vmem:[#allocation3 + $0xf9] sm:$0xff]
      %v3150 = vld [vmem:[#allocation3 + $0x109] sm:$0xff]
      %v3151 = vld [vmem:[#allocation3 + $0x111] sm:$0xff]
      %v3152 = vld [vmem:[#allocation3 + $0x121] sm:$0xff]
      %v3153 = vld [vmem:[#allocation3 + $0x129] sm:$0xff]
      %v3154 = vld [vmem:[#allocation3 + $0x139] sm:$0xff]
      %v3155 = vld [vmem:[#allocation3 + $0x141] sm:$0xff]
      %v3156 = vld [vmem:[#allocation3 + $0x151] sm:$0xff]
      %v3157 = vld [vmem:[#allocation3 + $0x159] sm:$0xff]
      %v3158 = vld [vmem:[#allocation3 + $0x169] sm:$0xff]
      %v3159 = vld [vmem:[#allocation3 + $0x171] sm:$0xff]
      %v3160 = vld [vmem:[#allocation3 + $0x181] sm:$0xff]
      %v3161 = vld [vmem:[#allocation3 + $0x189] sm:$0xff]
      %v3162 = vld [vmem:[#allocation3 + $0x199] sm:$0xff]
      %v3163 = vld [vmem:[#allocation3 + $0x1a1] sm:$0xff]
      %v3164 = vld [vmem:[#allocation3 + $0x2] sm:$0xff]
      %v3165 = vld [vmem:[#allocation3 + $0xa] sm:$0xff]
      %v3166 = vld [vmem:[#allocation3 + $0x1a] sm:$0xff]
      %v3167 = vld [vmem:[#allocation3 + $0x22] sm:$0xff]
      %v3168 = vld [vmem:[#allocation3 + $0x32] sm:$0xff]
      %v3169 = vld [vmem:[#allocation3 + $0x3a] sm:$0xff]
      %v3170 = vld [vmem:[#allocation3 + $0x4a] sm:$0xff]
      %v3171 = vld [vmem:[#allocation3 + $0x52] sm:$0xff]
      %v3172 = vld [vmem:[#allocation3 + $0x62] sm:$0xff]
      %v3173 = vld [vmem:[#allocation3 + $0x6a] sm:$0xff]
      %v3174 = vld [vmem:[#allocation3 + $0x7a] sm:$0xff]
      %v3175 = vld [vmem:[#allocation3 + $0x82] sm:$0xff]
      %v3176 = vld [vmem:[#allocation3 + $0x92] sm:$0xff]
      %v3177 = vld [vmem:[#allocation3 + $0x9a] sm:$0xff]
      %v3178 = vld [vmem:[#allocation3 + $0xaa] sm:$0xff]
      %v3179 = vld [vmem:[#allocation3 + $0xb2] sm:$0xff]
      %v3180 = vld [vmem:[#allocation3 + $0xc2] sm:$0xff]
      %v3181 = vld [vmem:[#allocation3 + $0xca] sm:$0xff]
      %v3182 = vld [vmem:[#allocation3 + $0xda] sm:$0xff]
      %v3183 = vld [vmem:[#allocation3 + $0xe2] sm:$0xff]
      %v3184 = vld [vmem:[#allocation3 + $0xf2] sm:$0xff]
      %v3185 = vld [vmem:[#allocation3 + $0xfa] sm:$0xff]
      %v3186 = vld [vmem:[#allocation3 + $0x10a] sm:$0xff]
      %v3187 = vld [vmem:[#allocation3 + $0x112] sm:$0xff]
      %v3188 = vld [vmem:[#allocation3 + $0x122] sm:$0xff]
      %v3189 = vld [vmem:[#allocation3 + $0x12a] sm:$0xff]
      %v3190 = vld [vmem:[#allocation3 + $0x13a] sm:$0xff]
      %v3191 = vld [vmem:[#allocation3 + $0x142] sm:$0xff]
      %v3192 = vld [vmem:[#allocation3 + $0x152] sm:$0xff]
      %v3193 = vld [vmem:[#allocation3 + $0x15a] sm:$0xff]
      %v3194 = vld [vmem:[#allocation3 + $0x16a] sm:$0xff]
      %v3195 = vld [vmem:[#allocation3 + $0x172] sm:$0xff]
      %v3196 = vld [vmem:[#allocation3 + $0x182] sm:$0xff]
      %v3197 = vld [vmem:[#allocation3 + $0x18a] sm:$0xff]
      %v3198 = vld [vmem:[#allocation3 + $0x19a] sm:$0xff]
      %v3199 = vld [vmem:[#allocation3 + $0x1a2] sm:$0xff]
      %v3200 = vpack.c.bf16 %v3093, %v3092
      %v3201 = vpack.c.bf16 %v3095, %v3094
      %v3202 = vpack.c.bf16 %v3097, %v3096
      %v3203 = vpack.c.bf16 %v3099, %v3098
      %v3204 = vpack.c.bf16 %v3101, %v3100
      %v3205 = vpack.c.bf16 %v3103, %v3102
      %v3206 = vpack.c.bf16 %v3105, %v3104
      %v3207 = vpack.c.bf16 %v3107, %v3106
      %v3208 = vpack.c.bf16 %v3109, %v3108
      %v3209 = vpack.c.bf16 %v3111, %v3110
      %v3210 = vpack.c.bf16 %v3113, %v3112
      %v3211 = vpack.c.bf16 %v3115, %v3114
      %v3212 = vpack.c.bf16 %v3117, %v3116
      %v3213 = vpack.c.bf16 %v3119, %v3118
      %v3214 = vpack.c.bf16 %v3121, %v3120
      %v3215 = vpack.c.bf16 %v3123, %v3122
      %v3216 = vpack.c.bf16 %v3129, %v3128
      %v3217 = vpack.c.bf16 %v3131, %v3130
      %v3218 = vpack.c.bf16 %v3133, %v3132
      %v3219 = vpack.c.bf16 %v3135, %v3134
      %v3220 = vpack.c.bf16 %v3137, %v3136
      %v3221 = vpack.c.bf16 %v3139, %v3138
      %v3222 = vpack.c.bf16 %v3141, %v3140
      %v3223 = vpack.c.bf16 %v3143, %v3142
      %v3224 = vpack.c.bf16 %v3145, %v3144
      %v3225 = vpack.c.bf16 %v3147, %v3146
      %v3226 = vpack.c.bf16 %v3149, %v3148
      %v3227 = vpack.c.bf16 %v3151, %v3150
      %v3228 = vpack.c.bf16 %v3153, %v3152
      %v3229 = vpack.c.bf16 %v3155, %v3154
      %v3230 = vpack.c.bf16 %v3157, %v3156
      %v3231 = vpack.c.bf16 %v3159, %v3158
      %v3232 = vpack.c.bf16 %v3165, %v3164
      %v3233 = vpack.c.bf16 %v3167, %v3166
      %v3234 = vpack.c.bf16 %v3169, %v3168
      %v3235 = vpack.c.bf16 %v3171, %v3170
      %v3236 = vpack.c.bf16 %v3173, %v3172
      %v3237 = vpack.c.bf16 %v3175, %v3174
      %v3238 = vpack.c.bf16 %v3177, %v3176
      %v3239 = vpack.c.bf16 %v3179, %v3178
      %v3240 = vpack.c.bf16 %v3181, %v3180
      %v3241 = vpack.c.bf16 %v3183, %v3182
      %v3242 = vpack.c.bf16 %v3185, %v3184
      %v3243 = vpack.c.bf16 %v3187, %v3186
      %v3244 = vpack.c.bf16 %v3189, %v3188
      %v3245 = vpack.c.bf16 %v3191, %v3190
      %v3246 = vpack.c.bf16 %v3193, %v3192
      %v3247 = vpack.c.bf16 %v3195, %v3194
      %v3248 = vpack.c.bf16 %v3125, %v3124
      %v3249 = vpack.c.bf16 %v3161, %v3160
      %v3250 = vpack.c.bf16 %v3197, %v3196
      %v3251 = vpack.c.bf16 %v3127, %v3126
      %v3252 = vpack.c.bf16 %v3163, %v3162
      %v3253 = vpack.c.bf16 %v3199, %v3198
      %3270 = vrot.lane.b32.xlu0 %v3216, 32
      %v3271 = vpop.permute.xlu0 %3270
      %3272 = vrot.lane.b32.xlu0 %v3217, 32
      %v3273 = vpop.permute.xlu0 %3272
      %3274 = vrot.lane.b32.xlu0 %v3218, 32
      %v3275 = vpop.permute.xlu0 %3274
      %3276 = vrot.lane.b32.xlu0 %v3219, 32
      %v3277 = vpop.permute.xlu0 %3276
      %3278 = vrot.lane.b32.xlu0 %v3220, 32
      %v3279 = vpop.permute.xlu0 %3278
      %3280 = vrot.lane.b32.xlu0 %v3221, 32
      %v3281 = vpop.permute.xlu0 %3280
      %3282 = vrot.lane.b32.xlu0 %v3222, 32
      %v3283 = vpop.permute.xlu0 %3282
      %3284 = vrot.lane.b32.xlu0 %v3223, 32
      %v3285 = vpop.permute.xlu0 %3284
      %3286 = vrot.lane.b32.xlu0 %v3224, 32
      %v3287 = vpop.permute.xlu0 %3286
      %3288 = vrot.lane.b32.xlu0 %v3225, 32
      %v3289 = vpop.permute.xlu0 %3288
      %3290 = vrot.lane.b32.xlu0 %v3226, 32
      %v3291 = vpop.permute.xlu0 %3290
      %3292 = vrot.lane.b32.xlu0 %v3227, 32
      %v3293 = vpop.permute.xlu0 %3292
      %3294 = vrot.lane.b32.xlu0 %v3228, 32
      %v3295 = vpop.permute.xlu0 %3294
      %3296 = vrot.lane.b32.xlu0 %v3229, 32
      %v3297 = vpop.permute.xlu0 %3296
      %3298 = vrot.lane.b32.xlu0 %v3230, 32
      %v3299 = vpop.permute.xlu0 %3298
      %3300 = vrot.lane.b32.xlu0 %v3231, 32
      %v3301 = vpop.permute.xlu0 %3300
      %3318 = vrot.lane.b32.xlu0 %v3232, 64
      %v3319 = vpop.permute.xlu0 %3318
      %3320 = vrot.lane.b32.xlu0 %v3233, 64
      %v3321 = vpop.permute.xlu0 %3320
      %3322 = vrot.lane.b32.xlu0 %v3234, 64
      %v3323 = vpop.permute.xlu0 %3322
      %3324 = vrot.lane.b32.xlu0 %v3235, 64
      %v3325 = vpop.permute.xlu0 %3324
      %3326 = vrot.lane.b32.xlu0 %v3236, 64
      %v3327 = vpop.permute.xlu0 %3326
      %3328 = vrot.lane.b32.xlu0 %v3237, 64
      %v3329 = vpop.permute.xlu0 %3328
      %3330 = vrot.lane.b32.xlu0 %v3238, 64
      %v3331 = vpop.permute.xlu0 %3330
      %3332 = vrot.lane.b32.xlu0 %v3239, 64
      %v3333 = vpop.permute.xlu0 %3332
      %3334 = vrot.lane.b32.xlu0 %v3240, 64
      %v3335 = vpop.permute.xlu0 %3334
      %3336 = vrot.lane.b32.xlu0 %v3241, 64
      %v3337 = vpop.permute.xlu0 %3336
      %3338 = vrot.lane.b32.xlu0 %v3242, 64
      %v3339 = vpop.permute.xlu0 %3338
      %3340 = vrot.lane.b32.xlu0 %v3243, 64
      %v3341 = vpop.permute.xlu0 %3340
      %3342 = vrot.lane.b32.xlu0 %v3244, 64
      %v3343 = vpop.permute.xlu0 %3342
      %3344 = vrot.lane.b32.xlu0 %v3245, 64
      %v3345 = vpop.permute.xlu0 %3344
      %3346 = vrot.lane.b32.xlu0 %v3246, 64
      %v3347 = vpop.permute.xlu0 %3346
      %3348 = vrot.lane.b32.xlu0 %v3247, 64
      %v3349 = vpop.permute.xlu0 %3348
      %3366 = vrot.lane.b32.xlu0 %v3201, 96
      %v3367 = vpop.permute.xlu0 %3366
      %3368 = vrot.lane.b32.xlu0 %v3202, 96
      %v3369 = vpop.permute.xlu0 %3368
      %3370 = vrot.lane.b32.xlu0 %v3203, 96
      %v3371 = vpop.permute.xlu0 %3370
      %3372 = vrot.lane.b32.xlu0 %v3204, 96
      %v3373 = vpop.permute.xlu0 %3372
      %3374 = vrot.lane.b32.xlu0 %v3205, 96
      %v3375 = vpop.permute.xlu0 %3374
      %3376 = vrot.lane.b32.xlu0 %v3206, 96
      %v3377 = vpop.permute.xlu0 %3376
      %3378 = vrot.lane.b32.xlu0 %v3207, 96
      %v3379 = vpop.permute.xlu0 %3378
      %3380 = vrot.lane.b32.xlu0 %v3208, 96
      %v3381 = vpop.permute.xlu0 %3380
      %3382 = vrot.lane.b32.xlu0 %v3209, 96
      %v3383 = vpop.permute.xlu0 %3382
      %3384 = vrot.lane.b32.xlu0 %v3210, 96
      %v3385 = vpop.permute.xlu0 %3384
      %3386 = vrot.lane.b32.xlu0 %v3211, 96
      %v3387 = vpop.permute.xlu0 %3386
      %3388 = vrot.lane.b32.xlu0 %v3212, 96
      %v3389 = vpop.permute.xlu0 %3388
      %3390 = vrot.lane.b32.xlu0 %v3213, 96
      %v3391 = vpop.permute.xlu0 %3390
      %3392 = vrot.lane.b32.xlu0 %v3214, 96
      %v3393 = vpop.permute.xlu0 %3392
      %3394 = vrot.lane.b32.xlu0 %v3215, 96
      %v3395 = vpop.permute.xlu0 %3394
      %3396 = vrot.lane.b32.xlu0 %v3248, 96
      %v3397 = vpop.permute.xlu0 %3396
      %3399 = vrot.lane.b32.xlu0 %v3233, 32
      %v3400 = vpop.permute.xlu0 %3399
      %3401 = vrot.lane.b32.xlu0 %v3234, 32
      %v3402 = vpop.permute.xlu0 %3401
      %3403 = vrot.lane.b32.xlu0 %v3235, 32
      %v3404 = vpop.permute.xlu0 %3403
      %3405 = vrot.lane.b32.xlu0 %v3236, 32
      %v3406 = vpop.permute.xlu0 %3405
      %3407 = vrot.lane.b32.xlu0 %v3237, 32
      %v3408 = vpop.permute.xlu0 %3407
      %3409 = vrot.lane.b32.xlu0 %v3238, 32
      %v3410 = vpop.permute.xlu0 %3409
      %3411 = vrot.lane.b32.xlu0 %v3239, 32
      %v3412 = vpop.permute.xlu0 %3411
      %3413 = vrot.lane.b32.xlu0 %v3240, 32
      %v3414 = vpop.permute.xlu0 %3413
      %3415 = vrot.lane.b32.xlu0 %v3241, 32
      %v3416 = vpop.permute.xlu0 %3415
      %3417 = vrot.lane.b32.xlu0 %v3242, 32
      %v3418 = vpop.permute.xlu0 %3417
      %3419 = vrot.lane.b32.xlu0 %v3243, 32
      %v3420 = vpop.permute.xlu0 %3419
      %3421 = vrot.lane.b32.xlu0 %v3244, 32
      %v3422 = vpop.permute.xlu0 %3421
      %3423 = vrot.lane.b32.xlu0 %v3245, 32
      %v3424 = vpop.permute.xlu0 %3423
      %3425 = vrot.lane.b32.xlu0 %v3246, 32
      %v3426 = vpop.permute.xlu0 %3425
      %3427 = vrot.lane.b32.xlu0 %v3247, 32
      %v3428 = vpop.permute.xlu0 %3427
      %3429 = vrot.lane.b32.xlu0 %v3250, 32
      %v3430 = vpop.permute.xlu0 %3429
      %3432 = vrot.lane.b32.xlu0 %v3202, 64
      %v3433 = vpop.permute.xlu0 %3432
      %3434 = vrot.lane.b32.xlu0 %v3203, 64
      %v3435 = vpop.permute.xlu0 %3434
      %3436 = vrot.lane.b32.xlu0 %v3204, 64
      %v3437 = vpop.permute.xlu0 %3436
      %3438 = vrot.lane.b32.xlu0 %v3205, 64
      %v3439 = vpop.permute.xlu0 %3438
      %3440 = vrot.lane.b32.xlu0 %v3206, 64
      %v3441 = vpop.permute.xlu0 %3440
      %3442 = vrot.lane.b32.xlu0 %v3207, 64
      %v3443 = vpop.permute.xlu0 %3442
      %3444 = vrot.lane.b32.xlu0 %v3208, 64
      %v3445 = vpop.permute.xlu0 %3444
      %3446 = vrot.lane.b32.xlu0 %v3209, 64
      %v3447 = vpop.permute.xlu0 %3446
      %3448 = vrot.lane.b32.xlu0 %v3210, 64
      %v3449 = vpop.permute.xlu0 %3448
      %3450 = vrot.lane.b32.xlu0 %v3211, 64
      %v3451 = vpop.permute.xlu0 %3450
      %3452 = vrot.lane.b32.xlu0 %v3212, 64
      %v3453 = vpop.permute.xlu0 %3452
      %3454 = vrot.lane.b32.xlu0 %v3213, 64
      %v3455 = vpop.permute.xlu0 %3454
      %3456 = vrot.lane.b32.xlu0 %v3214, 64
      %v3457 = vpop.permute.xlu0 %3456
      %3458 = vrot.lane.b32.xlu0 %v3215, 64
      %v3459 = vpop.permute.xlu0 %3458
      %3460 = vrot.lane.b32.xlu0 %v3248, 64
      %v3461 = vpop.permute.xlu0 %3460
      %3462 = vrot.lane.b32.xlu0 %v3251, 64
      %v3463 = vpop.permute.xlu0 %3462
      %3466 = vrot.lane.b32.xlu0 %v3218, 96
      %v3467 = vpop.permute.xlu0 %3466
      %3468 = vrot.lane.b32.xlu0 %v3219, 96
      %v3469 = vpop.permute.xlu0 %3468
      %3470 = vrot.lane.b32.xlu0 %v3220, 96
      %v3471 = vpop.permute.xlu0 %3470
      %3472 = vrot.lane.b32.xlu0 %v3221, 96
      %v3473 = vpop.permute.xlu0 %3472
      %3474 = vrot.lane.b32.xlu0 %v3222, 96
      %v3475 = vpop.permute.xlu0 %3474
      %3476 = vrot.lane.b32.xlu0 %v3223, 96
      %v3477 = vpop.permute.xlu0 %3476
      %3478 = vrot.lane.b32.xlu0 %v3224, 96
      %v3479 = vpop.permute.xlu0 %3478
      %3480 = vrot.lane.b32.xlu0 %v3225, 96
      %v3481 = vpop.permute.xlu0 %3480
      %3482 = vrot.lane.b32.xlu0 %v3226, 96
      %v3483 = vpop.permute.xlu0 %3482
      %3484 = vrot.lane.b32.xlu0 %v3227, 96
      %v3485 = vpop.permute.xlu0 %3484
      %3486 = vrot.lane.b32.xlu0 %v3228, 96
      %v3487 = vpop.permute.xlu0 %3486
      %3488 = vrot.lane.b32.xlu0 %v3229, 96
      %v3489 = vpop.permute.xlu0 %3488
      %3490 = vrot.lane.b32.xlu0 %v3230, 96
      %v3491 = vpop.permute.xlu0 %3490
      %3492 = vrot.lane.b32.xlu0 %v3231, 96
      %v3493 = vpop.permute.xlu0 %3492
      %3494 = vrot.lane.b32.xlu0 %v3249, 96
      %v3495 = vpop.permute.xlu0 %3494
      %3496 = vrot.lane.b32.xlu0 %v3252, 96
      %v3497 = vpop.permute.xlu0 %3496
      %v3500 = vsel %vm1683, %v3200, %v3271
      %v3503 = vsel %vm1683, %v3201, %v3273
      %v3506 = vsel %vm1683, %v3202, %v3275
      %v3509 = vsel %vm1683, %v3203, %v3277
      %v3512 = vsel %vm1683, %v3204, %v3279
      %v3515 = vsel %vm1683, %v3205, %v3281
      %v3518 = vsel %vm1683, %v3206, %v3283
      %v3521 = vsel %vm1683, %v3207, %v3285
      %v3524 = vsel %vm1683, %v3208, %v3287
      %v3527 = vsel %vm1683, %v3209, %v3289
      %v3530 = vsel %vm1683, %v3210, %v3291
      %v3533 = vsel %vm1683, %v3211, %v3293
      %v3536 = vsel %vm1683, %v3212, %v3295
      %v3539 = vsel %vm1683, %v3213, %v3297
      %v3542 = vsel %vm1683, %v3214, %v3299
      %v3545 = vsel %vm1683, %v3215, %v3301
      %v3547 = vsel %vm2226, %v3500, %v3319
      %v3549 = vsel %vm2226, %v3503, %v3321
      %v3551 = vsel %vm2226, %v3506, %v3323
      %v3553 = vsel %vm2226, %v3509, %v3325
      %v3555 = vsel %vm2226, %v3512, %v3327
      %v3557 = vsel %vm2226, %v3515, %v3329
      %v3559 = vsel %vm2226, %v3518, %v3331
      %v3561 = vsel %vm2226, %v3521, %v3333
      %v3563 = vsel %vm2226, %v3524, %v3335
      %v3565 = vsel %vm2226, %v3527, %v3337
      %v3567 = vsel %vm2226, %v3530, %v3339
      %v3569 = vsel %vm2226, %v3533, %v3341
      %v3571 = vsel %vm2226, %v3536, %v3343
      %v3573 = vsel %vm2226, %v3539, %v3345
      %v3575 = vsel %vm2226, %v3542, %v3347
      %v3577 = vsel %vm2226, %v3545, %v3349
      %v3579 = vsel %vm2259, %v3547, %v3367
      %v3582 = vsel %vm2259, %v3549, %v3369
      %v3585 = vsel %vm2259, %v3551, %v3371
      %v3588 = vsel %vm2259, %v3553, %v3373
      %v3591 = vsel %vm2259, %v3555, %v3375
      %v3594 = vsel %vm2259, %v3557, %v3377
      %v3597 = vsel %vm2259, %v3559, %v3379
      %v3600 = vsel %vm2259, %v3561, %v3381
      %v3603 = vsel %vm2259, %v3563, %v3383
      %v3606 = vsel %vm2259, %v3565, %v3385
      %v3609 = vsel %vm2259, %v3567, %v3387
      %v3612 = vsel %vm2259, %v3569, %v3389
      %v3615 = vsel %vm2259, %v3571, %v3391
      %v3618 = vsel %vm2259, %v3573, %v3393
      %v3621 = vsel %vm2259, %v3575, %v3395
      %v3624 = vsel %vm2259, %v3577, %v3397
      %v3628 = vsel %vm1683, %v3217, %v3400
      %v3631 = vsel %vm1683, %v3218, %v3402
      %v3634 = vsel %vm1683, %v3219, %v3404
      %v3637 = vsel %vm1683, %v3220, %v3406
      %v3640 = vsel %vm1683, %v3221, %v3408
      %v3643 = vsel %vm1683, %v3222, %v3410
      %v3646 = vsel %vm1683, %v3223, %v3412
      %v3649 = vsel %vm1683, %v3224, %v3414
      %v3652 = vsel %vm1683, %v3225, %v3416
      %v3655 = vsel %vm1683, %v3226, %v3418
      %v3658 = vsel %vm1683, %v3227, %v3420
      %v3661 = vsel %vm1683, %v3228, %v3422
      %v3664 = vsel %vm1683, %v3229, %v3424
      %v3667 = vsel %vm1683, %v3230, %v3426
      %v3670 = vsel %vm1683, %v3231, %v3428
      %v3673 = vsel %vm1683, %v3249, %v3430
      %v3675 = vsel %vm2226, %v3628, %v3433
      %v3677 = vsel %vm2226, %v3631, %v3435
      %v3679 = vsel %vm2226, %v3634, %v3437
      %v3681 = vsel %vm2226, %v3637, %v3439
      %v3683 = vsel %vm2226, %v3640, %v3441
      %v3685 = vsel %vm2226, %v3643, %v3443
      %v3687 = vsel %vm2226, %v3646, %v3445
      %v3689 = vsel %vm2226, %v3649, %v3447
      %v3691 = vsel %vm2226, %v3652, %v3449
      %v3693 = vsel %vm2226, %v3655, %v3451
      %v3695 = vsel %vm2226, %v3658, %v3453
      %v3697 = vsel %vm2226, %v3661, %v3455
      %v3699 = vsel %vm2226, %v3664, %v3457
      %v3701 = vsel %vm2226, %v3667, %v3459
      %v3703 = vsel %vm2226, %v3670, %v3461
      %v3705 = vsel %vm2226, %v3673, %v3463
      %v3707 = vsel %vm2259, %v3675, %v3467
      %v3710 = vsel %vm2259, %v3677, %v3469
      %v3713 = vsel %vm2259, %v3679, %v3471
      %v3716 = vsel %vm2259, %v3681, %v3473
      %v3719 = vsel %vm2259, %v3683, %v3475
      %v3722 = vsel %vm2259, %v3685, %v3477
      %v3725 = vsel %vm2259, %v3687, %v3479
      %v3728 = vsel %vm2259, %v3689, %v3481
      %v3731 = vsel %vm2259, %v3691, %v3483
      %v3734 = vsel %vm2259, %v3693, %v3485
      %v3737 = vsel %vm2259, %v3695, %v3487
      %v3740 = vsel %vm2259, %v3697, %v3489
      %v3743 = vsel %vm2259, %v3699, %v3491
      %v3746 = vsel %vm2259, %v3701, %v3493
      %v3749 = vsel %vm2259, %v3703, %v3495
      %v3752 = vsel %vm2259, %v3705, %v3497
      %v3754 = vld [vmem:[%s7] sm:$0xf]
      %v3755 = vld [vmem:[%s7 + $0x4] sm:$0xf]
      %v3756 = vld [vmem:[%s7 + $0x8] sm:$0xf]
      %v3757 = vld [vmem:[%s7 + $0xc] sm:$0xf]
      %v3758 = vld [vmem:[%s7 + $0x10] sm:$0xf]
      %v3759 = vld [vmem:[%s7 + $0x14] sm:$0xf]
      %v3760 = vld [vmem:[%s7 + $0x18] sm:$0xf]
      %v3761 = vld [vmem:[%s7 + $0x1c] sm:$0xf]
      %v3762 = vld [vmem:[%s7 + $0x20] sm:$0xf]
      %v3763 = vld [vmem:[%s7 + $0x24] sm:$0xf]
      %v3764 = vld [vmem:[%s7 + $0x28] sm:$0xf]
      %v3765 = vld [vmem:[%s7 + $0x2c] sm:$0xf]
      %v3766 = vld [vmem:[%s7 + $0x30] sm:$0xf]
      %v3767 = vld [vmem:[%s7 + $0x34] sm:$0xf]
      %v3768 = vld [vmem:[%s7 + $0x38] sm:$0xf]
      %v3769 = vld [vmem:[%s7 + $0x3c] sm:$0xf]
      %v3770 = vld [vmem:[%s7 + $0x40] sm:$0xf]
      %v3771 = vld [vmem:[%s7 + $0x44] sm:$0xf]
      %v3772 = vld [vmem:[%s7 + $0x48] sm:$0xf]
      %v3773 = vld [vmem:[%s7 + $0x4c] sm:$0xf]
      %v3774 = vld [vmem:[%s7 + $0x50] sm:$0xf]
      %v3775 = vld [vmem:[%s7 + $0x54] sm:$0xf]
      %v3776 = vld [vmem:[%s7 + $0x58] sm:$0xf]
      %v3777 = vld [vmem:[%s7 + $0x5c] sm:$0xf]
      %v3778 = vld [vmem:[%s7 + $0x60] sm:$0xf]
      %v3779 = vld [vmem:[%s7 + $0x64] sm:$0xf]
      %v3780 = vld [vmem:[%s7 + $0x68] sm:$0xf]
      %v3781 = vld [vmem:[%s7 + $0x6c] sm:$0xf]
      %v3782 = vld [vmem:[%s7 + $0x70] sm:$0xf]
      %v3783 = vld [vmem:[%s7 + $0x74] sm:$0xf]
      %v3784 = vld [vmem:[%s7 + $0x78] sm:$0xf]
      %v3785 = vld [vmem:[%s7 + $0x7c] sm:$0xf]
      %v3786 = vld [vmem:[%s7 + $0x80] sm:$0xf]
      %v3787 = vld [vmem:[%s7 + $0x84] sm:$0xf]
      %v3788 = vld [vmem:[%s7 + $0x88] sm:$0xf]
      %v3789 = vld [vmem:[%s7 + $0x8c] sm:$0xf]
      %v3790 = vld [vmem:[%s8] sm:$0x1]
      %v3792 = vlaneseq
      %v3793 = vshrl.u32 %v3792, 7
      %v3794 = vsub.s32 0, %v3793
      %v3795 = vrot.slane %v3790, %v3794
      %v3833 = vunpack.c.l.b16 %v3754
      %v3834 = vunpack.c.l.b16 %v3755
      %v3835 = vunpack.c.l.b16 %v3756
      %v3836 = vunpack.c.l.b16 %v3757
      %v3837 = vunpack.c.l.b16 %v3758
      %v3838 = vunpack.c.l.b16 %v3759
      %v3839 = vunpack.c.l.b16 %v3760
      %v3840 = vunpack.c.l.b16 %v3761
      %v3841 = vunpack.c.l.b16 %v3762
      %v3842 = vunpack.c.l.b16 %v3763
      %v3843 = vunpack.c.l.b16 %v3764
      %v3844 = vunpack.c.l.b16 %v3765
      %v3845 = vunpack.c.l.b16 %v3766
      %v3846 = vunpack.c.l.b16 %v3767
      %v3847 = vunpack.c.l.b16 %v3768
      %v3848 = vunpack.c.l.b16 %v3769
      %v3849 = vunpack.c.l.b16 %v3770
      %v3850 = vunpack.c.l.b16 %v3771
      %v3851 = vunpack.c.l.b16 %v3772
      %v3852 = vunpack.c.l.b16 %v3773
      %v3853 = vunpack.c.l.b16 %v3774
      %v3854 = vunpack.c.l.b16 %v3775
      %v3855 = vunpack.c.l.b16 %v3776
      %v3856 = vunpack.c.l.b16 %v3777
      %v3857 = vunpack.c.l.b16 %v3778
      %v3858 = vunpack.c.l.b16 %v3779
      %v3859 = vunpack.c.l.b16 %v3780
      %v3860 = vunpack.c.l.b16 %v3781
      %v3861 = vunpack.c.l.b16 %v3782
      %v3862 = vunpack.c.l.b16 %v3783
      %v3863 = vunpack.c.l.b16 %v3784
      %v3864 = vunpack.c.l.b16 %v3785
      %v3865 = vunpack.c.l.b16 %v3786
      %v3866 = vunpack.c.l.b16 %v3787
      %v3867 = vunpack.c.l.b16 %v3788
      %v3868 = vunpack.c.l.b16 %v3789
      %v3869 = vpack.c.b16 %v3834, %v3833
      %v3870 = vpack.c.b16 %v3836, %v3835
      %v3871 = vpack.c.b16 %v3838, %v3837
      %v3872 = vpack.c.b16 %v3840, %v3839
      %v3873 = vpack.c.b16 %v3842, %v3841
      %v3874 = vpack.c.b16 %v3844, %v3843
      %v3875 = vpack.c.b16 %v3846, %v3845
      %v3876 = vpack.c.b16 %v3848, %v3847
      %v3877 = vpack.c.b16 %v3850, %v3849
      %v3878 = vpack.c.b16 %v3852, %v3851
      %v3879 = vpack.c.b16 %v3854, %v3853
      %v3880 = vpack.c.b16 %v3856, %v3855
      %v3881 = vpack.c.b16 %v3858, %v3857
      %v3882 = vpack.c.b16 %v3860, %v3859
      %v3883 = vpack.c.b16 %v3862, %v3861
      %v3884 = vpack.c.b16 %v3864, %v3863
      %v3885 = vpack.c.b16 %v3866, %v3865
      %v3886 = vpack.c.b16 %v3868, %v3867
      %v3906 = vsel %vm1683, %v3234, 0
      %v3909 = vsel %vm1683, %v3235, 0
      %v3912 = vsel %vm1683, %v3236, 0
      %v3915 = vsel %vm1683, %v3237, 0
      %v3918 = vsel %vm1683, %v3238, 0
      %v3921 = vsel %vm1683, %v3239, 0
      %v3924 = vsel %vm1683, %v3240, 0
      %v3927 = vsel %vm1683, %v3241, 0
      %v3930 = vsel %vm1683, %v3242, 0
      %v3933 = vsel %vm1683, %v3243, 0
      %v3936 = vsel %vm1683, %v3244, 0
      %v3939 = vsel %vm1683, %v3245, 0
      %v3942 = vsel %vm1683, %v3246, 0
      %v3945 = vsel %vm1683, %v3247, 0
      %v3948 = vsel %vm1683, %v3250, 0
      %v3951 = vsel %vm1683, %v3253, 0
      %3953 = vmatprep.subr.bf16.mxu0 0
      %3954 = vmatpush1.bf16.msra.mxu0 %v3876
      %3955 = vmatprep.subr.bf16.mxu0 0
      %3956 = vmatpush1.bf16.msra.mxu0 %v3875
      %3957 = vmatprep.subr.bf16.mxu0 0
      %3958 = vmatpush1.bf16.msra.mxu0 %v3874
      %3959 = vmatprep.subr.bf16.mxu0 0
      %3960 = vmatpush1.bf16.msra.mxu0 %v3873
      %3961 = vmatprep.subr.bf16.mxu0 0
      %3962 = vmatpush1.bf16.msra.mxu0 %v3872
      %3963 = vmatprep.subr.bf16.mxu0 0
      %3964 = vmatpush1.bf16.msra.mxu0 %v3871
      %3965 = vmatprep.subr.bf16.mxu0 0
      %3966 = vmatpush1.bf16.msra.mxu0 %v3870
      %3967 = vmatprep.subr.bf16.mxu0 0
      %3968 = vmatpush1.bf16.msra.mxu0 %v3869
      %3969 = vmatprep.subr.bf16.mxu0 0
      %3970 = vmatpush2.bf16.msra.mxu0 %v3884
      %3971 = vmatprep.subr.bf16.mxu0 0
      %3972 = vmatpush2.bf16.msra.mxu0 %v3883
      %3973 = vmatprep.subr.bf16.mxu0 0
      %3974 = vmatpush2.bf16.msra.mxu0 %v3882
      %3975 = vmatprep.subr.bf16.mxu0 0
      %3976 = vmatpush2.bf16.msra.mxu0 %v3881
      %3977 = vmatprep.subr.bf16.mxu0 0
      %3978 = vmatpush2.bf16.msra.mxu0 %v3880
      %3979 = vmatprep.subr.bf16.mxu0 0
      %3980 = vmatpush2.bf16.msra.mxu0 %v3879
      %3981 = vmatprep.subr.bf16.mxu0 0
      %3982 = vmatpush2.bf16.msra.mxu0 %v3878
      %3983 = vmatprep.subr.bf16.mxu0 0
      %3984 = vmatpush2.bf16.msra.mxu0 %v3877
      %3985 = vmatprep.mubr.bf16.mxu0 %v3707
      %3986 = vmatmul.mubr.bf16.gmra.mxu0 %v3579
      %v3987 = vpop.f32.mrf.mxu0
      %v3988 = vadd.f32 %v3795, %v3987
      %v3989 = vpop.f32.mrf.mxu0
      %v3990 = vpop.f32.mrf.mxu0
      %v3991 = vadd.f32 %v3795, %v3990
      %v3992 = vpop.f32.mrf.mxu0
      %3993 = vmatprep.mubr.bf16.mxu0 %v3710
      %3994 = vmatmul.mubr.bf16.gmra.mxu0 %v3582
      %v3995 = vpop.f32.mrf.mxu0
      %v3996 = vadd.f32 %v3795, %v3995
      %v3997 = vpop.f32.mrf.mxu0
      %v3998 = vpop.f32.mrf.mxu0
      %v3999 = vadd.f32 %v3795, %v3998
      %v4000 = vpop.f32.mrf.mxu0
      %4001 = vmatprep.mubr.bf16.mxu0 %v3713
      %4002 = vmatmul.mubr.bf16.gmra.mxu0 %v3585
      %v4003 = vpop.f32.mrf.mxu0
      %v4004 = vadd.f32 %v3795, %v4003
      %v4005 = vpop.f32.mrf.mxu0
      %v4006 = vpop.f32.mrf.mxu0
      %v4007 = vadd.f32 %v3795, %v4006
      %v4008 = vpop.f32.mrf.mxu0
      %4009 = vmatprep.mubr.bf16.mxu0 %v3716
      %4010 = vmatmul.mubr.bf16.gmra.mxu0 %v3588
      %v4011 = vpop.f32.mrf.mxu0
      %v4012 = vadd.f32 %v3795, %v4011
      %v4013 = vpop.f32.mrf.mxu0
      %v4014 = vpop.f32.mrf.mxu0
      %v4015 = vadd.f32 %v3795, %v4014
      %v4016 = vpop.f32.mrf.mxu0
      %4017 = vmatprep.mubr.bf16.mxu0 %v3719
      %4018 = vmatmul.mubr.bf16.gmra.mxu0 %v3591
      %v4019 = vpop.f32.mrf.mxu0
      %v4020 = vadd.f32 %v3795, %v4019
      %v4021 = vpop.f32.mrf.mxu0
      %v4022 = vpop.f32.mrf.mxu0
      %v4023 = vadd.f32 %v3795, %v4022
      %v4024 = vpop.f32.mrf.mxu0
      %4025 = vmatprep.mubr.bf16.mxu0 %v3722
      %4026 = vmatmul.mubr.bf16.gmra.mxu0 %v3594
      %v4027 = vpop.f32.mrf.mxu0
      %v4028 = vadd.f32 %v3795, %v4027
      %v4029 = vpop.f32.mrf.mxu0
      %v4030 = vpop.f32.mrf.mxu0
      %v4031 = vadd.f32 %v3795, %v4030
      %v4032 = vpop.f32.mrf.mxu0
      %4033 = vmatprep.mubr.bf16.mxu0 %v3725
      %4034 = vmatmul.mubr.bf16.gmra.mxu0 %v3597
      %v4035 = vpop.f32.mrf.mxu0
      %v4036 = vadd.f32 %v3795, %v4035
      %v4037 = vpop.f32.mrf.mxu0
      %v4038 = vpop.f32.mrf.mxu0
      %v4039 = vadd.f32 %v3795, %v4038
      %v4040 = vpop.f32.mrf.mxu0
      %4041 = vmatprep.mubr.bf16.mxu0 %v3728
      %4042 = vmatmul.mubr.bf16.gmra.mxu0 %v3600
      %v4043 = vpop.f32.mrf.mxu0
      %v4044 = vadd.f32 %v3795, %v4043
      %v4045 = vpop.f32.mrf.mxu0
      %v4046 = vpop.f32.mrf.mxu0
      %v4047 = vadd.f32 %v3795, %v4046
      %v4048 = vpop.f32.mrf.mxu0
      %4049 = vmatprep.mubr.bf16.mxu0 %v3731
      %4050 = vmatmul.mubr.bf16.gmra.mxu0 %v3603
      %v4051 = vpop.f32.mrf.mxu0
      %v4052 = vadd.f32 %v3795, %v4051
      %v4053 = vpop.f32.mrf.mxu0
      %v4054 = vpop.f32.mrf.mxu0
      %v4055 = vadd.f32 %v3795, %v4054
      %v4056 = vpop.f32.mrf.mxu0
      %4057 = vmatprep.mubr.bf16.mxu0 %v3734
      %4058 = vmatmul.mubr.bf16.gmra.mxu0 %v3606
      %v4059 = vpop.f32.mrf.mxu0
      %v4060 = vadd.f32 %v3795, %v4059
      %v4061 = vpop.f32.mrf.mxu0
      %v4062 = vpop.f32.mrf.mxu0
      %v4063 = vadd.f32 %v3795, %v4062
      %v4064 = vpop.f32.mrf.mxu0
      %4065 = vmatprep.mubr.bf16.mxu0 %v3737
      %4066 = vmatmul.mubr.bf16.gmra.mxu0 %v3609
      %v4067 = vpop.f32.mrf.mxu0
      %v4068 = vadd.f32 %v3795, %v4067
      %v4069 = vpop.f32.mrf.mxu0
      %v4070 = vpop.f32.mrf.mxu0
      %v4071 = vadd.f32 %v3795, %v4070
      %v4072 = vpop.f32.mrf.mxu0
      %4073 = vmatprep.mubr.bf16.mxu0 %v3740
      %4074 = vmatmul.mubr.bf16.gmra.mxu0 %v3612
      %v4075 = vpop.f32.mrf.mxu0
      %v4076 = vadd.f32 %v3795, %v4075
      %v4077 = vpop.f32.mrf.mxu0
      %v4078 = vpop.f32.mrf.mxu0
      %v4079 = vadd.f32 %v3795, %v4078
      %v4080 = vpop.f32.mrf.mxu0
      %4081 = vmatprep.mubr.bf16.mxu0 %v3743
      %4082 = vmatmul.mubr.bf16.gmra.mxu0 %v3615
      %v4083 = vpop.f32.mrf.mxu0
      %v4084 = vadd.f32 %v3795, %v4083
      %v4085 = vpop.f32.mrf.mxu0
      %v4086 = vpop.f32.mrf.mxu0
      %v4087 = vadd.f32 %v3795, %v4086
      %v4088 = vpop.f32.mrf.mxu0
      %4089 = vmatprep.mubr.bf16.mxu0 %v3746
      %4090 = vmatmul.mubr.bf16.gmra.mxu0 %v3618
      %v4091 = vpop.f32.mrf.mxu0
      %v4092 = vadd.f32 %v3795, %v4091
      %v4093 = vpop.f32.mrf.mxu0
      %v4094 = vpop.f32.mrf.mxu0
      %v4095 = vadd.f32 %v3795, %v4094
      %v4096 = vpop.f32.mrf.mxu0
      %4097 = vmatprep.mubr.bf16.mxu0 %v3749
      %4098 = vmatmul.mubr.bf16.gmra.mxu0 %v3621
      %v4099 = vpop.f32.mrf.mxu0
      %v4100 = vadd.f32 %v3795, %v4099
      %v4101 = vpop.f32.mrf.mxu0
      %v4102 = vpop.f32.mrf.mxu0
      %v4103 = vadd.f32 %v3795, %v4102
      %v4104 = vpop.f32.mrf.mxu0
      %4105 = vmatprep.mubr.bf16.mxu0 %v3752
      %4106 = vmatmul.mubr.bf16.gmra.mxu0 %v3624
      %v4107 = vpop.f32.mrf.mxu0
      %v4108 = vadd.f32 %v3795, %v4107
      %v4109 = vpop.f32.mrf.mxu0
      %v4110 = vpop.f32.mrf.mxu0
      %v4111 = vadd.f32 %v3795, %v4110
      %v4112 = vpop.f32.mrf.mxu0
      %4113 = vdwg.mxu0
      %4114 = vmatprep.subr.bf16.mxu0 0
      %4115 = vmatpush1.bf16.msra.mxu0 0
      %4116 = vmatprep.subr.bf16.mxu0 0
      %4117 = vmatpush1.bf16.msra.mxu0 0
      %4118 = vmatprep.subr.bf16.mxu0 0
      %4119 = vmatpush1.bf16.msra.mxu0 0
      %4120 = vmatprep.subr.bf16.mxu0 0
      %4121 = vmatpush1.bf16.msra.mxu0 0
      %4122 = vmatprep.subr.bf16.mxu0 0
      %4123 = vmatpush1.bf16.msra.mxu0 0
      %4124 = vmatprep.subr.bf16.mxu0 0
      %4125 = vmatpush1.bf16.msra.mxu0 0
      %4126 = vmatprep.subr.bf16.mxu0 0
      %4127 = vmatpush1.bf16.msra.mxu0 %v3886
      %4128 = vmatprep.subr.bf16.mxu0 0
      %4129 = vmatpush1.bf16.msra.mxu0 %v3885
      %4130 = vmatprep.subr.bf16.mxu0 0
      %4131 = vmatpush2.bf16.msra.mxu0 0
      %4132 = vmatprep.subr.bf16.mxu0 0
      %4133 = vmatpush2.bf16.msra.mxu0 0
      %4134 = vmatprep.subr.bf16.mxu0 0
      %4135 = vmatpush2.bf16.msra.mxu0 0
      %4136 = vmatprep.subr.bf16.mxu0 0
      %4137 = vmatpush2.bf16.msra.mxu0 0
      %4138 = vmatprep.subr.bf16.mxu0 0
      %4139 = vmatpush2.bf16.msra.mxu0 0
      %4140 = vmatprep.subr.bf16.mxu0 0
      %4141 = vmatpush2.bf16.msra.mxu0 0
      %4142 = vmatprep.subr.bf16.mxu0 0
      %4143 = vmatpush2.bf16.msra.mxu0 0
      %4144 = vmatprep.subr.bf16.mxu0 0
      %4145 = vmatpush2.bf16.msra.mxu0 0
      %4146 = vmatprep.mubr.bf16.mxu0 0
      %4147 = vmatmul.mubr.bf16.gmra.mxu0 %v3906
      %v4148 = vpop.f32.mrf.mxu0
      %v4149 = vadd.f32 %v3988, %v4148
      %v4150 = vpop.f32.mrf.mxu0
      %v4151 = vpop.f32.mrf.mxu0
      %v4152 = vadd.f32 %v3991, %v4151
      %v4153 = vpop.f32.mrf.mxu0
      %4154 = vmatprep.mubr.bf16.mxu0 0
      %4155 = vmatmul.mubr.bf16.gmra.mxu0 %v3909
      %v4156 = vpop.f32.mrf.mxu0
      %v4157 = vadd.f32 %v3996, %v4156
      %v4158 = vpop.f32.mrf.mxu0
      %v4159 = vpop.f32.mrf.mxu0
      %v4160 = vadd.f32 %v3999, %v4159
      %v4161 = vpop.f32.mrf.mxu0
      %4162 = vmatprep.mubr.bf16.mxu0 0
      %4163 = vmatmul.mubr.bf16.gmra.mxu0 %v3912
      %v4164 = vpop.f32.mrf.mxu0
      %v4165 = vadd.f32 %v4004, %v4164
      %v4166 = vpop.f32.mrf.mxu0
      %v4167 = vpop.f32.mrf.mxu0
      %v4168 = vadd.f32 %v4007, %v4167
      %v4169 = vpop.f32.mrf.mxu0
      %4170 = vmatprep.mubr.bf16.mxu0 0
      %4171 = vmatmul.mubr.bf16.gmra.mxu0 %v3915
      %v4172 = vpop.f32.mrf.mxu0
      %v4173 = vadd.f32 %v4012, %v4172
      %v4174 = vpop.f32.mrf.mxu0
      %v4175 = vpop.f32.mrf.mxu0
      %v4176 = vadd.f32 %v4015, %v4175
      %v4177 = vpop.f32.mrf.mxu0
      %4178 = vmatprep.mubr.bf16.mxu0 0
      %4179 = vmatmul.mubr.bf16.gmra.mxu0 %v3918
      %v4180 = vpop.f32.mrf.mxu0
      %v4181 = vadd.f32 %v4020, %v4180
      %v4182 = vpop.f32.mrf.mxu0
      %v4183 = vpop.f32.mrf.mxu0
      %v4184 = vadd.f32 %v4023, %v4183
      %v4185 = vpop.f32.mrf.mxu0
      %4186 = vmatprep.mubr.bf16.mxu0 0
      %4187 = vmatmul.mubr.bf16.gmra.mxu0 %v3921
      %v4188 = vpop.f32.mrf.mxu0
      %v4189 = vadd.f32 %v4028, %v4188
      %v4190 = vpop.f32.mrf.mxu0
      %v4191 = vpop.f32.mrf.mxu0
      %v4192 = vadd.f32 %v4031, %v4191
      %v4193 = vpop.f32.mrf.mxu0
      %4194 = vmatprep.mubr.bf16.mxu0 0
      %4195 = vmatmul.mubr.bf16.gmra.mxu0 %v3924
      %v4196 = vpop.f32.mrf.mxu0
      %v4197 = vadd.f32 %v4036, %v4196
      %v4198 = vpop.f32.mrf.mxu0
      %v4199 = vpop.f32.mrf.mxu0
      %v4200 = vadd.f32 %v4039, %v4199
      %v4201 = vpop.f32.mrf.mxu0
      %4202 = vmatprep.mubr.bf16.mxu0 0
      %4203 = vmatmul.mubr.bf16.gmra.mxu0 %v3927
      %v4204 = vpop.f32.mrf.mxu0
      %v4205 = vadd.f32 %v4044, %v4204
      %v4206 = vpop.f32.mrf.mxu0
      %v4207 = vpop.f32.mrf.mxu0
      %v4208 = vadd.f32 %v4047, %v4207
      %v4209 = vpop.f32.mrf.mxu0
      %4210 = vmatprep.mubr.bf16.mxu0 0
      %4211 = vmatmul.mubr.bf16.gmra.mxu0 %v3930
      %v4212 = vpop.f32.mrf.mxu0
      %v4213 = vadd.f32 %v4052, %v4212
      %v4214 = vpop.f32.mrf.mxu0
      %v4215 = vpop.f32.mrf.mxu0
      %v4216 = vadd.f32 %v4055, %v4215
      %v4217 = vpop.f32.mrf.mxu0
      %4218 = vmatprep.mubr.bf16.mxu0 0
      %4219 = vmatmul.mubr.bf16.gmra.mxu0 %v3933
      %v4220 = vpop.f32.mrf.mxu0
      %v4221 = vadd.f32 %v4060, %v4220
      %v4222 = vpop.f32.mrf.mxu0
      %v4223 = vpop.f32.mrf.mxu0
      %v4224 = vadd.f32 %v4063, %v4223
      %v4225 = vpop.f32.mrf.mxu0
      %4226 = vmatprep.mubr.bf16.mxu0 0
      %4227 = vmatmul.mubr.bf16.gmra.mxu0 %v3936
      %v4228 = vpop.f32.mrf.mxu0
      %v4229 = vadd.f32 %v4068, %v4228
      %v4230 = vpop.f32.mrf.mxu0
      %v4231 = vpop.f32.mrf.mxu0
      %v4232 = vadd.f32 %v4071, %v4231
      %v4233 = vpop.f32.mrf.mxu0
      %4234 = vmatprep.mubr.bf16.mxu0 0
      %4235 = vmatmul.mubr.bf16.gmra.mxu0 %v3939
      %v4236 = vpop.f32.mrf.mxu0
      %v4237 = vadd.f32 %v4076, %v4236
      %v4238 = vpop.f32.mrf.mxu0
      %v4239 = vpop.f32.mrf.mxu0
      %v4240 = vadd.f32 %v4079, %v4239
      %v4241 = vpop.f32.mrf.mxu0
      %4242 = vmatprep.mubr.bf16.mxu0 0
      %4243 = vmatmul.mubr.bf16.gmra.mxu0 %v3942
      %v4244 = vpop.f32.mrf.mxu0
      %v4245 = vadd.f32 %v4084, %v4244
      %v4246 = vpop.f32.mrf.mxu0
      %v4247 = vpop.f32.mrf.mxu0
      %v4248 = vadd.f32 %v4087, %v4247
      %v4249 = vpop.f32.mrf.mxu0
      %4250 = vmatprep.mubr.bf16.mxu0 0
      %4251 = vmatmul.mubr.bf16.gmra.mxu0 %v3945
      %v4252 = vpop.f32.mrf.mxu0
      %v4253 = vadd.f32 %v4092, %v4252
      %v4254 = vpop.f32.mrf.mxu0
      %v4255 = vpop.f32.mrf.mxu0
      %v4256 = vadd.f32 %v4095, %v4255
      %v4257 = vpop.f32.mrf.mxu0
      %4258 = vmatprep.mubr.bf16.mxu0 0
      %4259 = vmatmul.mubr.bf16.gmra.mxu0 %v3948
      %v4260 = vpop.f32.mrf.mxu0
      %v4261 = vadd.f32 %v4100, %v4260
      %v4262 = vpop.f32.mrf.mxu0
      %v4263 = vpop.f32.mrf.mxu0
      %v4264 = vadd.f32 %v4103, %v4263
      %v4265 = vpop.f32.mrf.mxu0
      %4266 = vmatprep.mubr.bf16.mxu0 0
      %4267 = vmatmul.mubr.bf16.gmra.mxu0 %v3951
      %v4268 = vpop.f32.mrf.mxu0
      %v4269 = vadd.f32 %v4108, %v4268
      %v4270 = vpop.f32.mrf.mxu0
      %v4271 = vpop.f32.mrf.mxu0
      %v4272 = vadd.f32 %v4111, %v4271
      %v4273 = vpop.f32.mrf.mxu0
      %4274 = vdwg.mxu0
      %vm4275 = vcmp.gt.f32.partialorder %v4149, 0.0
      %vm4276 = vcmp.gt.f32.partialorder %v4152, 0.0
      %vm4277 = vcmp.gt.f32.partialorder %v4157, 0.0
      %vm4278 = vcmp.gt.f32.partialorder %v4160, 0.0
      %vm4279 = vcmp.gt.f32.partialorder %v4165, 0.0
      %vm4280 = vcmp.gt.f32.partialorder %v4168, 0.0
      %vm4281 = vcmp.gt.f32.partialorder %v4173, 0.0
      %vm4282 = vcmp.gt.f32.partialorder %v4176, 0.0
      %vm4283 = vcmp.gt.f32.partialorder %v4181, 0.0
      %vm4284 = vcmp.gt.f32.partialorder %v4184, 0.0
      %vm4285 = vcmp.gt.f32.partialorder %v4189, 0.0
      %vm4286 = vcmp.gt.f32.partialorder %v4192, 0.0
      %vm4287 = vcmp.gt.f32.partialorder %v4197, 0.0
      %vm4288 = vcmp.gt.f32.partialorder %v4200, 0.0
      %vm4289 = vcmp.gt.f32.partialorder %v4205, 0.0
      %vm4290 = vcmp.gt.f32.partialorder %v4208, 0.0
      %vm4291 = vcmp.gt.f32.partialorder %v4213, 0.0
      %vm4292 = vcmp.gt.f32.partialorder %v4216, 0.0
      %vm4293 = vcmp.gt.f32.partialorder %v4221, 0.0
      %vm4294 = vcmp.gt.f32.partialorder %v4224, 0.0
      %vm4295 = vcmp.gt.f32.partialorder %v4229, 0.0
      %vm4296 = vcmp.gt.f32.partialorder %v4232, 0.0
      %vm4297 = vcmp.gt.f32.partialorder %v4237, 0.0
      %vm4298 = vcmp.gt.f32.partialorder %v4240, 0.0
      %vm4299 = vcmp.gt.f32.partialorder %v4245, 0.0
      %vm4300 = vcmp.gt.f32.partialorder %v4248, 0.0
      %vm4301 = vcmp.gt.f32.partialorder %v4253, 0.0
      %vm4302 = vcmp.gt.f32.partialorder %v4256, 0.0
      %vm4303 = vcmp.gt.f32.partialorder %v4261, 0.0
      %vm4304 = vcmp.gt.f32.partialorder %v4264, 0.0
      %vm4305 = vcmp.gt.f32.partialorder %v4269, 0.0
      %vm4306 = vcmp.gt.f32.partialorder %v4272, 0.0
      %v4307 = vld [vmem:[%s9] sm:$0x1]
      %v4309 = vlaneseq
      %v4310 = vshrl.u32 %v4309, 7
      %v4311 = vsub.s32 0, %v4310
      %v4312 = vrot.slane %v4307, %v4311
      %v4314 = vmul.f32 %v4312, %v4149
      %v4315 = vmul.f32 %v4312, %v4152
      %v4316 = vmul.f32 %v4312, %v4157
      %v4317 = vmul.f32 %v4312, %v4160
      %v4318 = vmul.f32 %v4312, %v4165
      %v4319 = vmul.f32 %v4312, %v4168
      %v4320 = vmul.f32 %v4312, %v4173
      %v4321 = vmul.f32 %v4312, %v4176
      %v4322 = vmul.f32 %v4312, %v4181
      %v4323 = vmul.f32 %v4312, %v4184
      %v4324 = vmul.f32 %v4312, %v4189
      %v4325 = vmul.f32 %v4312, %v4192
      %v4326 = vmul.f32 %v4312, %v4197
      %v4327 = vmul.f32 %v4312, %v4200
      %v4328 = vmul.f32 %v4312, %v4205
      %v4329 = vmul.f32 %v4312, %v4208
      %v4330 = vmul.f32 %v4312, %v4213
      %v4331 = vmul.f32 %v4312, %v4216
      %v4332 = vmul.f32 %v4312, %v4221
      %v4333 = vmul.f32 %v4312, %v4224
      %v4334 = vmul.f32 %v4312, %v4229
      %v4335 = vmul.f32 %v4312, %v4232
      %v4336 = vmul.f32 %v4312, %v4237
      %v4337 = vmul.f32 %v4312, %v4240
      %v4338 = vmul.f32 %v4312, %v4245
      %v4339 = vmul.f32 %v4312, %v4248
      %v4340 = vmul.f32 %v4312, %v4253
      %v4341 = vmul.f32 %v4312, %v4256
      %v4342 = vmul.f32 %v4312, %v4261
      %v4343 = vmul.f32 %v4312, %v4264
      %v4344 = vmul.f32 %v4312, %v4269
      %v4345 = vmul.f32 %v4312, %v4272
      %v4346 = vsel %vm4275, %v4149, %v4314
      %v4347 = vsel %vm4276, %v4152, %v4315
      %v4348 = vsel %vm4277, %v4157, %v4316
      %v4349 = vsel %vm4278, %v4160, %v4317
      %v4350 = vsel %vm4279, %v4165, %v4318
      %v4351 = vsel %vm4280, %v4168, %v4319
      %v4352 = vsel %vm4281, %v4173, %v4320
      %v4353 = vsel %vm4282, %v4176, %v4321
      %v4354 = vsel %vm4283, %v4181, %v4322
      %v4355 = vsel %vm4284, %v4184, %v4323
      %v4356 = vsel %vm4285, %v4189, %v4324
      %v4357 = vsel %vm4286, %v4192, %v4325
      %v4358 = vsel %vm4287, %v4197, %v4326
      %v4359 = vsel %vm4288, %v4200, %v4327
      %v4360 = vsel %vm4289, %v4205, %v4328
      %v4361 = vsel %vm4290, %v4208, %v4329
      %v4362 = vsel %vm4291, %v4213, %v4330
      %v4363 = vsel %vm4292, %v4216, %v4331
      %v4364 = vsel %vm4293, %v4221, %v4332
      %v4365 = vsel %vm4294, %v4224, %v4333
      %v4366 = vsel %vm4295, %v4229, %v4334
      %v4367 = vsel %vm4296, %v4232, %v4335
      %v4368 = vsel %vm4297, %v4237, %v4336
      %v4369 = vsel %vm4298, %v4240, %v4337
      %v4370 = vsel %vm4299, %v4245, %v4338
      %v4371 = vsel %vm4300, %v4248, %v4339
      %v4372 = vsel %vm4301, %v4253, %v4340
      %v4373 = vsel %vm4302, %v4256, %v4341
      %v4374 = vsel %vm4303, %v4261, %v4342
      %v4375 = vsel %vm4304, %v4264, %v4343
      %v4376 = vsel %vm4305, %v4269, %v4344
      %v4377 = vsel %vm4306, %v4272, %v4345
      %vm4378 = vcmask 97280
      %4379 = vst.msk [vmem:[%s359] sm:$0xff] %vm4378, %v4346
      %4380 = vst.msk [vmem:[%s359 + $0x8] sm:$0xff] %vm4378, %v4347
      %4381 = vst.msk [vmem:[%s359 + $0x10] sm:$0xff] %vm4378, %v4348
      %4382 = vst.msk [vmem:[%s359 + $0x18] sm:$0xff] %vm4378, %v4349
      %4383 = vst.msk [vmem:[%s359 + $0x20] sm:$0xff] %vm4378, %v4350
      %4384 = vst.msk [vmem:[%s359 + $0x28] sm:$0xff] %vm4378, %v4351
      %4385 = vst.msk [vmem:[%s359 + $0x30] sm:$0xff] %vm4378, %v4352
      %4386 = vst.msk [vmem:[%s359 + $0x38] sm:$0xff] %vm4378, %v4353
      %4387 = vst.msk [vmem:[%s359 + $0x40] sm:$0xff] %vm4378, %v4354
      %4388 = vst.msk [vmem:[%s359 + $0x48] sm:$0xff] %vm4378, %v4355
      %4389 = vst.msk [vmem:[%s359 + $0x50] sm:$0xff] %vm4378, %v4356
      %4390 = vst.msk [vmem:[%s359 + $0x58] sm:$0xff] %vm4378, %v4357
      %4391 = vst.msk [vmem:[%s359 + $0x60] sm:$0xff] %vm4378, %v4358
      %4392 = vst.msk [vmem:[%s359 + $0x68] sm:$0xff] %vm4378, %v4359
      %4393 = vst.msk [vmem:[%s359 + $0x70] sm:$0xff] %vm4378, %v4360
      %4394 = vst.msk [vmem:[%s359 + $0x78] sm:$0xff] %vm4378, %v4361
      %4395 = vst.msk [vmem:[%s359 + $0x80] sm:$0xff] %vm4378, %v4362
      %4396 = vst.msk [vmem:[%s359 + $0x88] sm:$0xff] %vm4378, %v4363
      %4397 = vst.msk [vmem:[%s359 + $0x90] sm:$0xff] %vm4378, %v4364
      %4398 = vst.msk [vmem:[%s359 + $0x98] sm:$0xff] %vm4378, %v4365
      %4399 = vst.msk [vmem:[%s359 + $0xa0] sm:$0xff] %vm4378, %v4366
      %4400 = vst.msk [vmem:[%s359 + $0xa8] sm:$0xff] %vm4378, %v4367
      %4401 = vst.msk [vmem:[%s359 + $0xb0] sm:$0xff] %vm4378, %v4368
      %4402 = vst.msk [vmem:[%s359 + $0xb8] sm:$0xff] %vm4378, %v4369
      %4403 = vst.msk [vmem:[%s359 + $0xc0] sm:$0xff] %vm4378, %v4370
      %4404 = vst.msk [vmem:[%s359 + $0xc8] sm:$0xff] %vm4378, %v4371
      %4405 = vst.msk [vmem:[%s359 + $0xd0] sm:$0xff] %vm4378, %v4372
      %4406 = vst.msk [vmem:[%s359 + $0xd8] sm:$0xff] %vm4378, %v4373
      %4407 = vst.msk [vmem:[%s359 + $0xe0] sm:$0xff] %vm4378, %v4374
      %4408 = vst.msk [vmem:[%s359 + $0xe8] sm:$0xff] %vm4378, %v4375
      %4409 = vst.msk [vmem:[%s359 + $0xf0] sm:$0xff] %vm4378, %v4376
      %4410 = vst.msk [vmem:[%s359 + $0xf8] sm:$0xff] %vm4378, %v4377
      %p4411 = scmp.lt.s32.totalorder %s21, 1
      %s4412 = scalar_select %p4411, %s21, 1
      %s4413 = smul.addr %s4412, 32
      %s4414 = smul.addr %s4413, 8
      %s4415 = scalar_lea.vmem %s10, %s4414
      // Predicated region
      $region61: #{ema_backbone_forward.3} parent=59 // pred_check
        %p4416 = pneg %p254
      $region62: #{ema_backbone_forward.3} parent=59 // pred_check_branch
        %4418 = sbr.rel (%p4416) target = $region64
      $region63: #{ema_backbone_forward.3} parent=59 // pred_region
        _
      $region64: #{ema_backbone_forward.3} parent=59 // pred_fallthru
        _
    $region60: #{ema_backbone_forward.3} parent=5 // pred_fallthru
      _
    %p4419 = scmp.le.s32.totalorder 2, %s16
    // Predicated region
    $region65: #{ema_backbone_forward.3} parent=5 // pred_check
      %p4420 = pneg %p4419
    $region66: #{ema_backbone_forward.3} parent=5 // pred_check_branch
      %4422 = sbr.rel (%p4420) target = $region68
    $region67: #{ema_backbone_forward.3} parent=5 // pred_region
      %s4423 = ssub.s32 %s16, 2
      // Predicated region
      $region69: #{ema_backbone_forward.3} parent=67 // pred_check
        %p4424 = pneg %p260
      $region70: #{ema_backbone_forward.3} parent=67 // pred_check_branch
        %4426 = sbr.rel (%p4424) target = $region72
      $region71: #{ema_backbone_forward.3} parent=67 // pred_region
        %p4427 = scmp.lt.s32.totalorder %s22, 1
        %s4428 = scalar_select %p4427, %s22, 1
        %s4429 = smul.addr %s4428, 32
        %s4430 = smul.addr %s4429, 8
        %s4431 = scalar_lea.vmem %s10, %s4430
      $region72: #{ema_backbone_forward.3} parent=67 // pred_fallthru
        _
    $region68: #{ema_backbone_forward.3} parent=5 // pred_fallthru
      _
  $region6: #{ema_backbone_forward.3} parent=0 // loop_footer
    %s20 = sadd.s32 1, %s16
  $region7: #{ema_backbone_forward.3} parent=0 // loop_footer_branch
    %15 = sbr.rel target = $region3
  $region8: #{ema_backbone_forward.3} parent=0 // loop_exit
    _

</llo_original>
